<compile_context>
chip_gen: v7x
topology: tpu7x:2x2x1
jax: 0.10.0
libtpu: 0.0.40
codegen_flags: <defaults>
</compile_context>

<pallas_src>
import numpy as np

import jax
import jax.numpy as jnp
from jax.experimental import pallas as pl
from jax.experimental.pallas import tpu as pltpu

LANE = 128
_GRID_W = 11            # block-grid width: 84 -> pad to 88 -> 11 blocks of 8
_ROWS_PER_IMAGE = 128   # padded width-11 grid rows per image (121 valid)


# ---------------------------------------------------------------------------
# Kernel A: fused conv1 -> conv2 -> conv3 for a block of BI images.
#
# Every stage lives on the same flat per-image "width-11" row grid
# (row = y*11 + x, per-image stride 128), so a conv tap is just a constant
# row-shift and each stage is a handful of long flat matmuls.
#   input : [BI*128, 256] int8   (8x8 space-to-depth blocks, feature =
#                                 (row-in-block, col-in-block, channel))
#   conv1 : 4 taps  [M,256]@[256,128] -> parity-packed h1 (pq*32 + cout)
#   conv2 : 4 taps  [M,128]@[128, 64]
#   conv3 : 9 taps  [M, 64]@[ 64, 64]
#   output: [BI, 7, 7, 64] bf16 (valid rows extracted from the width-11 grid)
# Rows beyond each image's valid range only ever feed other invalid rows and
# are never extracted, so no masking/zeroing is needed.
# ---------------------------------------------------------------------------
def _conv_stack_kernel(x_ref, w1_ref, b1_ref, w2_ref, b2_ref, w3_ref, b3_ref,
                       o_ref, h1_scr, c2_scr):
    f32, bf16 = jnp.float32, jnp.bfloat16
    NR = x_ref.shape[0]                 # BI * 128 rows, image-major
    BI = NR // _ROWS_PER_IMAGE
    M1 = NR - 16                        # rows computed for conv1 / conv2
    M3 = NR - 24                        # rows computed for conv3
    # Max row shifts are 12 (conv1/2) and 24 (conv3), so all shifted reads
    # below stay inside the NR-row buffers for any BI >= 1.

    xin = x_ref[...].astype(f32).astype(bf16)               # [NR, 256]

    # conv1 (k=8, s=4): 4 taps on the 8x8 block grid; output channels are
    # parity-packed (pq*32 + cout) so the stride disappears from later stages.
    acc1 = jnp.dot(xin[0:M1, :], w1_ref[0], preferred_element_type=f32)
    for t, (by, bx) in enumerate(((0, 1), (1, 0), (1, 1)), start=1):
        s = by * _GRID_W + bx
        acc1 = acc1 + jnp.dot(xin[s:s + M1, :], w1_ref[t],
                              preferred_element_type=f32)
    h1_scr[0:M1, :] = jnp.maximum(acc1 + b1_ref[...], 0.0).astype(bf16)

    # conv2 (k=4, s=2): 4 taps with K=128 (the packed conv1 channels).
    acc2 = jnp.dot(h1_scr[0:M1, :], w2_ref[0], preferred_element_type=f32)
    for t, (a0, c0) in enumerate(((0, 1), (1, 0), (1, 1)), start=1):
        s = a0 * _GRID_W + c0
        acc2 = acc2 + jnp.dot(h1_scr[s:s + M1, :], w2_ref[t],
                              preferred_element_type=f32)
    c2_scr[0:M1, :] = jnp.maximum(acc2 + b2_ref[...], 0.0).astype(bf16)

    # conv3 (k=3, s=1): 9 shifted taps.
    acc3 = jnp.dot(c2_scr[0:M3, :], w3_ref[0], preferred_element_type=f32)
    for t in range(1, 9):
        s = (t // 3) * _GRID_W + (t % 3)
        acc3 = acc3 + jnp.dot(c2_scr[s:s + M3, :], w3_ref[t],
                              preferred_element_type=f32)
    h3 = jnp.maximum(acc3 + b3_ref[...], 0.0).astype(o_ref.dtype)   # [M3, 64]

    # Extract each image's valid 7x7 rows from the width-11 grid.
    for k in range(BI):
        base = k * _ROWS_PER_IMAGE
        for y in range(7):
            r = base + y * _GRID_W
            o_ref[k, y, :, :] = h3[r:r + 7, :]


# ---------------------------------------------------------------------------
# Kernel B: fused fc1 (ReLU) + fc2, batched over images (bf16 weights,
# f32 accumulation).
# ---------------------------------------------------------------------------
def _head_kernel(x_ref, w4_ref, b4_ref, w5_ref, b5_ref, o_ref):
    f32 = jnp.float32
    h = jnp.dot(x_ref[...], w4_ref[...], preferred_element_type=f32) + b4_ref[...]
    h = jnp.maximum(h, 0.0).astype(jnp.bfloat16)
    o_ref[...] = jnp.dot(h, w5_ref[...], preferred_element_type=f32) + b5_ref[...]


# ---------------------------------------------------------------------------
# XLA-side prologue: 8-bit space-to-depth (pad + reshape + transpose only).
# ---------------------------------------------------------------------------
def _space_to_depth_int8(x_u8_nchw):
    """[B,4,84,84] uint8 -> [B*128, 256] int8 rows on the width-11 block grid.

    Row k*128 + by*11 + bx holds the 8x8 pixel block (by, bx) of image k with
    features ordered (row-in-block, col-in-block, channel).  Pixels are offset
    by -128 to fit int8 (prepare_params folds the offset back into the conv1
    bias).  Rows 121..127 of each image are zero padding.
    """
    B = x_u8_nchw.shape[0]
    x = (x_u8_nchw.astype(jnp.int16) - 128).astype(jnp.int8)
    x = jnp.transpose(x, (0, 2, 3, 1))                        # [B,84,84,4]
    x = jnp.pad(x, ((0, 0), (0, 4), (0, 4), (0, 0)))          # [B,88,88,4]
    x = x.reshape(B, 11, 8, 11, 8, 4)
    x = jnp.transpose(x, (0, 1, 3, 2, 4, 5))                  # [B,11,11,8,8,4]
    x = x.reshape(B, 121, 256)
    x = jnp.pad(x, ((0, 0), (0, _ROWS_PER_IMAGE - 121), (0, 0)))
    return x.reshape(B * _ROWS_PER_IMAGE, 256)


# ---------------------------------------------------------------------------
# One-time host-side re-layout of the PyTorch-format parameters.
# ---------------------------------------------------------------------------
def prepare_params(params, action_no):
    f32, bf16 = jnp.float32, jnp.bfloat16
    n_pad = ((max(action_no, 1) + LANE - 1) // LANE) * LANE

    c1_w = np.asarray(params["c1_w"], np.float32)     # [32, 4, 8, 8]
    c1_b = np.asarray(params["c1_b"], np.float32)
    c2_w = np.asarray(params["c2_w"], np.float32)     # [64, 32, 4, 4]
    c2_b = np.asarray(params["c2_b"], np.float32)
    c3_w = np.asarray(params["c3_w"], np.float32)     # [64, 64, 3, 3]
    c3_b = np.asarray(params["c3_b"], np.float32)
    fc1_w = np.asarray(params["fc1_w"], np.float32)   # [512, 3136]
    fc1_b = np.asarray(params["fc1_b"], np.float32)
    fc2_w = np.asarray(params["fc2_w"], np.float32)   # [A, 512]
    fc2_b = np.asarray(params["fc2_b"], np.float32)

    # conv1 -> 4 block-grid taps of [256, 128]:
    #   feature f = r0*32 + s0*4 + cin  (position inside an 8x8 pixel block)
    #   output  n = (2p+q)*32 + cout    (parity-packed)
    # /255 is folded into the weight, the int8 -128 offset into the bias.
    w1 = np.zeros((4, 256, 128), np.float32)
    for by in range(2):
        for bx in range(2):
            t = 2 * by + bx
            for p in range(2):
                for q in range(2):
                    n0 = (2 * p + q) * 32
                    for i in range(8):
                        r0 = i + 4 * p - 8 * by
                        if not 0 <= r0 < 8:
                            continue
                        for j in range(8):
                            s0 = j + 4 * q - 8 * bx
                            if not 0 <= s0 < 8:
                                continue
                            f0 = r0 * 32 + s0 * 4
                            w1[t, f0:f0 + 4, n0:n0 + 32] = c1_w[:, :, i, j].T
    w1 *= 1.0 / 255.0
    b1 = np.tile(c1_b + (128.0 / 255.0) * c1_w.sum(axis=(1, 2, 3)), 4)[None, :]

    # conv2 -> 4 taps of [128, 64] over the parity-packed conv1 channels.
    w2 = np.zeros((4, 128, 64), np.float32)
    for a0 in range(2):
        for c0 in range(2):
            for p in range(2):
                for q in range(2):
                    w2[2 * a0 + c0, (2 * p + q) * 32:(2 * p + q) * 32 + 32, :] = \
                        c2_w[:, :, 2 * a0 + p, 2 * c0 + q].T

    # conv3 -> 9 taps of [64, 64].
    w3 = np.stack([c3_w[:, :, i, j].T for i in range(3) for j in range(3)], 0)

    # fc1: rows permuted to the NHWC flatten order of the conv features, so
    # PyTorch's NCHW x.view(B, -1) semantics are preserved with no runtime
    # activation transpose.
    w4 = np.transpose(fc1_w.reshape(512, 64, 7, 7), (2, 3, 1, 0)).reshape(3136, 512)

    # fc2: transpose once and pad N to a lane multiple (dense stores).
    w5 = np.zeros((512, n_pad), np.float32)
    w5[:, :action_no] = fc2_w.T
    b5 = np.zeros((1, n_pad), np.float32)
    b5[0, :action_no] = fc2_b

    return {
        "w1": jnp.asarray(w1, bf16), "b1": jnp.asarray(b1, f32),
        "w2": jnp.asarray(w2, bf16), "b2": jnp.asarray(c2_b[None, :], f32),
        "w3": jnp.asarray(w3, bf16), "b3": jnp.asarray(c3_b[None, :], f32),
        "w4": jnp.asarray(w4, bf16), "b4": jnp.asarray(fc1_b[None, :], f32),
        "w5": jnp.asarray(w5, bf16), "b5": jnp.asarray(b5, f32),
    }


# ---------------------------------------------------------------------------
# Forward
# ---------------------------------------------------------------------------
def atari_net_forward(x_u8_nchw, kp, action_no):
    if x_u8_nchw.dtype != jnp.uint8:
        raise TypeError("The model expects states of type uint8")
    B = x_u8_nchw.shape[0]

    # Images per conv grid step: big enough to amortize per-step overhead and
    # lengthen the matmul M dim, small enough that grid >= 2 (megacore).
    BI = 8 if B >= 16 else max(1, (B + 1) // 2)
    Bp = ((B + BI - 1) // BI) * BI
    if Bp != B:
        x_u8_nchw = jnp.pad(x_u8_nchw, ((0, Bp - B), (0, 0), (0, 0), (0, 0)))

    s2d = _space_to_depth_int8(x_u8_nchw)                  # [Bp*128, 256] int8
    NR = BI * _ROWS_PER_IMAGE
    M1, M3 = NR - 16, NR - 24
    steps = Bp // BI

    conv_flops = 2 * steps * (M1 * 4 * 256 * 128 + M1 * 4 * 128 * 64
                              + M3 * 9 * 64 * 64)
    conv_bytes = int(s2d.size) + 2 * int(
        kp["w1"].size + kp["w2"].size + kp["w3"].size + Bp * 7 * 7 * 64)
    feats = pl.pallas_call(
        _conv_stack_kernel,
        grid=(steps,),
        out_shape=jax.ShapeDtypeStruct((Bp, 7, 7, 64), jnp.bfloat16),
        in_specs=[
            pl.BlockSpec((NR, 256), lambda b: (b, 0)),
            pl.BlockSpec((4, 256, 128), lambda b: (0, 0, 0)),
            pl.BlockSpec((1, 128), lambda b: (0, 0)),
            pl.BlockSpec((4, 128, 64), lambda b: (0, 0, 0)),
            pl.BlockSpec((1, 64), lambda b: (0, 0)),
            pl.BlockSpec((9, 64, 64), lambda b: (0, 0, 0)),
            pl.BlockSpec((1, 64), lambda b: (0, 0)),
        ],
        out_specs=pl.BlockSpec((BI, 7, 7, 64), lambda b: (b, 0, 0, 0)),
        scratch_shapes=[
            pltpu.VMEM((NR, 128), jnp.bfloat16),   # parity-packed conv1 output
            pltpu.VMEM((NR, 64), jnp.bfloat16),    # conv2 output
        ],
        compiler_params=pltpu.CompilerParams(
            dimension_semantics=("parallel",),
            vmem_limit_bytes=32 * 1024 * 1024),
        cost_estimate=pl.CostEstimate(flops=conv_flops, transcendentals=0,
                                      bytes_accessed=conv_bytes),
    )(s2d, kp["w1"], kp["b1"], kp["w2"], kp["b2"], kp["w3"], kp["b3"])

    # NHWC flatten; fc1 rows were pre-permuted to match, so PyTorch's NCHW
    # x.view(B, -1) semantics are preserved.
    flat = feats.reshape(Bp, 7 * 7 * 64)                   # [Bp, 3136] bf16

    n_pad = kp["w5"].shape[1]
    tm = min(256, Bp)
    head_flops = 2 * Bp * (3136 * 512 + 512 * n_pad)
    head_bytes = 2 * int(flat.size + kp["w4"].size + kp["w5"].size) \
        + 4 * Bp * n_pad
    qs_pad = pl.pallas_call(
        _head_kernel,
        grid=(pl.cdiv(Bp, tm),),
        out_shape=jax.ShapeDtypeStruct((Bp, n_pad), jnp.float32),
        in_specs=[
            pl.BlockSpec((tm, 3136), lambda m: (m, 0)),
            pl.BlockSpec((3136, 512), lambda m: (0, 0)),
            pl.BlockSpec((1, 512), lambda m: (0, 0)),
            pl.BlockSpec((512, n_pad), lambda m: (0, 0)),
            pl.BlockSpec((1, n_pad), lambda m: (0, 0)),
        ],
        out_specs=pl.BlockSpec((tm, n_pad), lambda m: (m, 0)),
        compiler_params=pltpu.CompilerParams(
            dimension_semantics=("parallel",),
            vmem_limit_bytes=24 * 1024 * 1024),
        cost_estimate=pl.CostEstimate(flops=head_flops, transcendentals=0,
                                      bytes_accessed=head_bytes),
    )(flat, kp["w4"], kp["b4"], kp["w5"], kp["b5"])

    return qs_pad[:B, :action_no]                          # [B, action_no] f32


# ---------------------------------------------------------------------------
# Parameter init in PyTorch layouts (conv [Cout, Cin, kh, kw]; linear [out, in]).
# ---------------------------------------------------------------------------
def init_params(key, action_no):
    ks = jax.random.split(key, 10)
    scale = 0.05

    def w(k, shape):
        return (scale * jax.random.normal(k, shape)).astype(jnp.float32)

    return {
        "c1_w": w(ks[0], (32, 4, 8, 8)),   "c1_b": w(ks[1], (32,)),
        "c2_w": w(ks[2], (64, 32, 4, 4)),  "c2_b": w(ks[3], (64,)),
        "c3_w": w(ks[4], (64, 64, 3, 3)),  "c3_b": w(ks[5], (64,)),
        "fc1_w": w(ks[6], (512, 64 * 7 * 7)), "fc1_b": w(ks[7], (512,)),
        "fc2_w": w(ks[8], (action_no, 512)),  "fc2_b": w(ks[9], (action_no,)),
    }


def _reference_forward(x_u8, params):
    """Pure-XLA f32 reference (mirrors the PyTorch module)."""
    x = x_u8.astype(jnp.float32) / 255.0

    def conv(h, w, b, stride):
        h = jax.lax.conv_general_dilated(
            h, w, (stride, stride), "VALID",
            dimension_numbers=("NCHW", "OIHW", "NCHW"))
        return jax.nn.relu(h + b[None, :, None, None])

    x = conv(x, params["c1_w"], params["c1_b"], 4)
    x = conv(x, params["c2_w"], params["c2_b"], 2)
    x = conv(x, params["c3_w"], params["c3_b"], 1)
    x = x.reshape(x.shape[0], -1)
    x = jax.nn.relu(x @ params["fc1_w"].T + params["fc1_b"])
    return x @ params["fc2_w"].T + params["fc2_b"]


if __name__ == "__main__":
    ACTION_NO = 6
    key = jax.random.PRNGKey(0)
    k_x, k_p = jax.random.split(key)

    # ATARI frame stack [B, 4, 84, 84] uint8 (84x84 is required by the
    # hard-coded 64*7*7 head, so only the batch is kept small).
    x = jax.random.randint(k_x, (2, 4, 84, 84), 0, 256,
                           dtype=jnp.int32).astype(jnp.uint8)
    params = init_params(k_p, ACTION_NO)
    kparams = prepare_params(params, ACTION_NO)     # one-time weight re-layout

    fwd = jax.jit(atari_net_forward, static_argnums=2)
    qs = jax.block_until_ready(fwd(x, kparams, ACTION_NO))
    assert qs.shape == (2, ACTION_NO) and qs.dtype == jnp.float32
    assert bool(jnp.all(jnp.isfinite(qs)))

    # Loose sanity check vs. an f32 XLA reference (kernels use bf16 operands).
    ref = _reference_forward(x, params)
    max_err = float(jnp.max(jnp.abs(qs - ref)))
    assert max_err < 0.15, f"mismatch vs reference: max abs err = {max_err}"
    print("KERNEL_OK")
</pallas_src>

<mosaic_0001>
module attributes {stable_mosaic.version = 11 : i64} {
  func.func @_conv_stack_kernel(%arg0: i32, %arg1: memref<128x256xi8, #tpu.memory_space<vmem>>, %arg2: memref<4x256x128xbf16, #tpu.memory_space<vmem>>, %arg3: memref<1x128xf32, #tpu.memory_space<vmem>>, %arg4: memref<4x128x64xbf16, #tpu.memory_space<vmem>>, %arg5: memref<1x64xf32, #tpu.memory_space<vmem>>, %arg6: memref<9x64x64xbf16, #tpu.memory_space<vmem>>, %arg7: memref<1x64xf32, #tpu.memory_space<vmem>>, %arg8: memref<1x7x7x64xbf16, #tpu.memory_space<vmem>>, %arg9: memref<128x128xbf16, #tpu.memory_space<vmem>>, %arg10: memref<128x64xbf16, #tpu.memory_space<vmem>>) attributes {dimension_semantics = [#tpu.dimension_semantics<parallel>], iteration_bounds = array<i64: 2>, scalar_prefetch = 0 : i64, scratch_operands = 2 : i64, tpu.core_type = #tpu.core_type<tc>, window_params = [{transform_indices = @transform_0, window_bounds = array<i64: 128, 256>}, {pipeline_mode = #tpu.pipeline_mode<synchronous>, transform_indices = @transform_1, window_bounds = array<i64: 4, 256, 128>}, {pipeline_mode = #tpu.pipeline_mode<synchronous>, transform_indices = @transform_2, window_bounds = array<i64: 1, 128>}, {pipeline_mode = #tpu.pipeline_mode<synchronous>, transform_indices = @transform_3, window_bounds = array<i64: 4, 128, 64>}, {pipeline_mode = #tpu.pipeline_mode<synchronous>, transform_indices = @transform_4, window_bounds = array<i64: 1, 64>}, {pipeline_mode = #tpu.pipeline_mode<synchronous>, transform_indices = @transform_5, window_bounds = array<i64: 9, 64, 64>}, {pipeline_mode = #tpu.pipeline_mode<synchronous>, transform_indices = @transform_6, window_bounds = array<i64: 1, 64>}, {transform_indices = @transform_7, window_bounds = array<i64: 1, 7, 7, 64>}]} {
    %c0 = arith.constant 0 : index
    %c0_0 = arith.constant 0 : index
    %0 = vector.load %arg1[%c0, %c0_0] : memref<128x256xi8, #tpu.memory_space<vmem>>, vector<128x256xi8>
    %1 = arith.sitofp %0 : vector<128x256xi8> to vector<128x256xf32>
    %2 = arith.truncf %1 : vector<128x256xf32> to vector<128x256xbf16>
    %3 = vector.extract_strided_slice %2 {offsets = [0, 0], sizes = [112, 256], strides = [1, 1]} : vector<128x256xbf16> to vector<112x256xbf16>
    %c0_1 = arith.constant 0 : index
    %c0_2 = arith.constant 0 : index
    %c0_3 = arith.constant 0 : index
    %4 = vector.load %arg2[%c0_1, %c0_2, %c0_3] : memref<4x256x128xbf16, #tpu.memory_space<vmem>>, vector<1x256x128xbf16>
    %5 = vector.shape_cast %4 : vector<1x256x128xbf16> to vector<256x128xbf16>
    %cst = arith.constant dense<0.000000e+00> : vector<112x128xf32>
    %6 = tpu.matmul %3, %5, %cst {dimension_numbers = #tpu.dot_dimension_numbers<[1], [0], [0], [1], [0, 0, 1, 1], [], []>} : vector<112x256xbf16>, vector<256x128xbf16>, vector<112x128xf32> -> vector<112x128xf32>
    %7 = vector.extract_strided_slice %2 {offsets = [1, 0], sizes = [112, 256], strides = [1, 1]} : vector<128x256xbf16> to vector<112x256xbf16>
    %c1 = arith.constant 1 : index
    %c0_4 = arith.constant 0 : index
    %c0_5 = arith.constant 0 : index
    %8 = vector.load %arg2[%c1, %c0_4, %c0_5] : memref<4x256x128xbf16, #tpu.memory_space<vmem>>, vector<1x256x128xbf16>
    %9 = vector.shape_cast %8 : vector<1x256x128xbf16> to vector<256x128xbf16>
    %cst_6 = arith.constant dense<0.000000e+00> : vector<112x128xf32>
    %10 = tpu.matmul %7, %9, %cst_6 {dimension_numbers = #tpu.dot_dimension_numbers<[1], [0], [0], [1], [0, 0, 1, 1], [], []>} : vector<112x256xbf16>, vector<256x128xbf16>, vector<112x128xf32> -> vector<112x128xf32>
    %11 = arith.addf %6, %10 : vector<112x128xf32>
    %12 = vector.extract_strided_slice %2 {offsets = [11, 0], sizes = [112, 256], strides = [1, 1]} : vector<128x256xbf16> to vector<112x256xbf16>
    %c2 = arith.constant 2 : index
    %c0_7 = arith.constant 0 : index
    %c0_8 = arith.constant 0 : index
    %13 = vector.load %arg2[%c2, %c0_7, %c0_8] : memref<4x256x128xbf16, #tpu.memory_space<vmem>>, vector<1x256x128xbf16>
    %14 = vector.shape_cast %13 : vector<1x256x128xbf16> to vector<256x128xbf16>
    %cst_9 = arith.constant dense<0.000000e+00> : vector<112x128xf32>
    %15 = tpu.matmul %12, %14, %cst_9 {dimension_numbers = #tpu.dot_dimension_numbers<[1], [0], [0], [1], [0, 0, 1, 1], [], []>} : vector<112x256xbf16>, vector<256x128xbf16>, vector<112x128xf32> -> vector<112x128xf32>
    %16 = arith.addf %11, %15 : vector<112x128xf32>
    %17 = vector.extract_strided_slice %2 {offsets = [12, 0], sizes = [112, 256], strides = [1, 1]} : vector<128x256xbf16> to vector<112x256xbf16>
    %c3 = arith.constant 3 : index
    %c0_10 = arith.constant 0 : index
    %c0_11 = arith.constant 0 : index
    %18 = vector.load %arg2[%c3, %c0_10, %c0_11] : memref<4x256x128xbf16, #tpu.memory_space<vmem>>, vector<1x256x128xbf16>
    %19 = vector.shape_cast %18 : vector<1x256x128xbf16> to vector<256x128xbf16>
    %cst_12 = arith.constant dense<0.000000e+00> : vector<112x128xf32>
    %20 = tpu.matmul %17, %19, %cst_12 {dimension_numbers = #tpu.dot_dimension_numbers<[1], [0], [0], [1], [0, 0, 1, 1], [], []>} : vector<112x256xbf16>, vector<256x128xbf16>, vector<112x128xf32> -> vector<112x128xf32>
    %21 = arith.addf %16, %20 : vector<112x128xf32>
    %c0_13 = arith.constant 0 : index
    %c0_14 = arith.constant 0 : index
    %22 = vector.load %arg3[%c0_13, %c0_14] : memref<1x128xf32, #tpu.memory_space<vmem>>, vector<1x128xf32>
    %23 = vector.broadcast %22 : vector<1x128xf32> to vector<112x128xf32>
    %24 = arith.addf %21, %23 : vector<112x128xf32>
    %cst_15 = arith.constant 0.000000e+00 : f32
    %25 = vector.broadcast %cst_15 : f32 to vector<112x128xf32>
    %26 = arith.maximumf %24, %25 : vector<112x128xf32>
    %27 = arith.truncf %26 : vector<112x128xf32> to vector<112x128xbf16>
    %c0_16 = arith.constant 0 : index
    %c0_17 = arith.constant 0 : index
    %28 = vector.load %arg9[%c0_16, %c0_17] : memref<128x128xbf16, #tpu.memory_space<vmem>>, vector<112x128xbf16>
    tpu.vector_store %arg9[%c0_16, %c0_17], %27 {strides = array<i32>} : memref<128x128xbf16, #tpu.memory_space<vmem>>, vector<112x128xbf16>,
    %c0_18 = arith.constant 0 : index
    %c0_19 = arith.constant 0 : index
    %29 = vector.load %arg9[%c0_18, %c0_19] : memref<128x128xbf16, #tpu.memory_space<vmem>>, vector<112x128xbf16>
    %c0_20 = arith.constant 0 : index
    %c0_21 = arith.constant 0 : index
    %c0_22 = arith.constant 0 : index
    %30 = vector.load %arg4[%c0_20, %c0_21, %c0_22] : memref<4x128x64xbf16, #tpu.memory_space<vmem>>, vector<1x128x64xbf16>
    %31 = vector.shape_cast %30 : vector<1x128x64xbf16> to vector<128x64xbf16>
    %cst_23 = arith.constant dense<0.000000e+00> : vector<112x64xf32>
    %32 = tpu.matmul %29, %31, %cst_23 {dimension_numbers = #tpu.dot_dimension_numbers<[1], [0], [0], [1], [0, 0, 1, 1], [], []>} : vector<112x128xbf16>, vector<128x64xbf16>, vector<112x64xf32> -> vector<112x64xf32>
    %c1_24 = arith.constant 1 : index
    %c0_25 = arith.constant 0 : index
    %33 = vector.load %arg9[%c1_24, %c0_25] : memref<128x128xbf16, #tpu.memory_space<vmem>>, vector<112x128xbf16>
    %c1_26 = arith.constant 1 : index
    %c0_27 = arith.constant 0 : index
    %c0_28 = arith.constant 0 : index
    %34 = vector.load %arg4[%c1_26, %c0_27, %c0_28] : memref<4x128x64xbf16, #tpu.memory_space<vmem>>, vector<1x128x64xbf16>
    %35 = vector.shape_cast %34 : vector<1x128x64xbf16> to vector<128x64xbf16>
    %cst_29 = arith.constant dense<0.000000e+00> : vector<112x64xf32>
    %36 = tpu.matmul %33, %35, %cst_29 {dimension_numbers = #tpu.dot_dimension_numbers<[1], [0], [0], [1], [0, 0, 1, 1], [], []>} : vector<112x128xbf16>, vector<128x64xbf16>, vector<112x64xf32> -> vector<112x64xf32>
    %37 = arith.addf %32, %36 : vector<112x64xf32>
    %c11 = arith.constant 11 : index
    %c0_30 = arith.constant 0 : index
    %38 = vector.load %arg9[%c11, %c0_30] : memref<128x128xbf16, #tpu.memory_space<vmem>>, vector<112x128xbf16>
    %c2_31 = arith.constant 2 : index
    %c0_32 = arith.constant 0 : index
    %c0_33 = arith.constant 0 : index
    %39 = vector.load %arg4[%c2_31, %c0_32, %c0_33] : memref<4x128x64xbf16, #tpu.memory_space<vmem>>, vector<1x128x64xbf16>
    %40 = vector.shape_cast %39 : vector<1x128x64xbf16> to vector<128x64xbf16>
    %cst_34 = arith.constant dense<0.000000e+00> : vector<112x64xf32>
    %41 = tpu.matmul %38, %40, %cst_34 {dimension_numbers = #tpu.dot_dimension_numbers<[1], [0], [0], [1], [0, 0, 1, 1], [], []>} : vector<112x128xbf16>, vector<128x64xbf16>, vector<112x64xf32> -> vector<112x64xf32>
    %42 = arith.addf %37, %41 : vector<112x64xf32>
    %c12 = arith.constant 12 : index
    %c0_35 = arith.constant 0 : index
    %43 = vector.load %arg9[%c12, %c0_35] : memref<128x128xbf16, #tpu.memory_space<vmem>>, vector<112x128xbf16>
    %c3_36 = arith.constant 3 : index
    %c0_37 = arith.constant 0 : index
    %c0_38 = arith.constant 0 : index
    %44 = vector.load %arg4[%c3_36, %c0_37, %c0_38] : memref<4x128x64xbf16, #tpu.memory_space<vmem>>, vector<1x128x64xbf16>
    %45 = vector.shape_cast %44 : vector<1x128x64xbf16> to vector<128x64xbf16>
    %cst_39 = arith.constant dense<0.000000e+00> : vector<112x64xf32>
    %46 = tpu.matmul %43, %45, %cst_39 {dimension_numbers = #tpu.dot_dimension_numbers<[1], [0], [0], [1], [0, 0, 1, 1], [], []>} : vector<112x128xbf16>, vector<128x64xbf16>, vector<112x64xf32> -> vector<112x64xf32>
    %47 = arith.addf %42, %46 : vector<112x64xf32>
    %c0_40 = arith.constant 0 : index
    %c0_41 = arith.constant 0 : index
    %48 = vector.load %arg5[%c0_40, %c0_41] : memref<1x64xf32, #tpu.memory_space<vmem>>, vector<1x64xf32>
    %49 = vector.broadcast %48 : vector<1x64xf32> to vector<112x64xf32>
    %50 = arith.addf %47, %49 : vector<112x64xf32>
    %cst_42 = arith.constant 0.000000e+00 : f32
    %51 = vector.broadcast %cst_42 : f32 to vector<112x64xf32>
    %52 = arith.maximumf %50, %51 : vector<112x64xf32>
    %53 = arith.truncf %52 : vector<112x64xf32> to vector<112x64xbf16>
    %c0_43 = arith.constant 0 : index
    %c0_44 = arith.constant 0 : index
    %54 = vector.load %arg10[%c0_43, %c0_44] : memref<128x64xbf16, #tpu.memory_space<vmem>>, vector<112x64xbf16>
    tpu.vector_store %arg10[%c0_43, %c0_44], %53 {strides = array<i32>} : memref<128x64xbf16, #tpu.memory_space<vmem>>, vector<112x64xbf16>,
    %c0_45 = arith.constant 0 : index
    %c0_46 = arith.constant 0 : index
    %55 = vector.load %arg10[%c0_45, %c0_46] : memref<128x64xbf16, #tpu.memory_space<vmem>>, vector<104x64xbf16>
    %c0_47 = arith.constant 0 : index
    %c0_48 = arith.constant 0 : index
    %c0_49 = arith.constant 0 : index
    %56 = vector.load %arg6[%c0_47, %c0_48, %c0_49] : memref<9x64x64xbf16, #tpu.memory_space<vmem>>, vector<1x64x64xbf16>
    %57 = vector.shape_cast %56 : vector<1x64x64xbf16> to vector<64x64xbf16>
    %cst_50 = arith.constant dense<0.000000e+00> : vector<104x64xf32>
    %58 = tpu.matmul %55, %57, %cst_50 {dimension_numbers = #tpu.dot_dimension_numbers<[1], [0], [0], [1], [0, 0, 1, 1], [], []>} : vector<104x64xbf16>, vector<64x64xbf16>, vector<104x64xf32> -> vector<104x64xf32>
    %c1_51 = arith.constant 1 : index
    %c0_52 = arith.constant 0 : index
    %59 = vector.load %arg10[%c1_51, %c0_52] : memref<128x64xbf16, #tpu.memory_space<vmem>>, vector<104x64xbf16>
    %c1_53 = arith.constant 1 : index
    %c0_54 = arith.constant 0 : index
    %c0_55 = arith.constant 0 : index
    %60 = vector.load %arg6[%c1_53, %c0_54, %c0_55] : memref<9x64x64xbf16, #tpu.memory_space<vmem>>, vector<1x64x64xbf16>
    %61 = vector.shape_cast %60 : vector<1x64x64xbf16> to vector<64x64xbf16>
    %cst_56 = arith.constant dense<0.000000e+00> : vector<104x64xf32>
    %62 = tpu.matmul %59, %61, %cst_56 {dimension_numbers = #tpu.dot_dimension_numbers<[1], [0], [0], [1], [0, 0, 1, 1], [], []>} : vector<104x64xbf16>, vector<64x64xbf16>, vector<104x64xf32> -> vector<104x64xf32>
    %63 = arith.addf %58, %62 : vector<104x64xf32>
    %c2_57 = arith.constant 2 : index
    %c0_58 = arith.constant 0 : index
    %64 = vector.load %arg10[%c2_57, %c0_58] : memref<128x64xbf16, #tpu.memory_space<vmem>>, vector<104x64xbf16>
    %c2_59 = arith.constant 2 : index
    %c0_60 = arith.constant 0 : index
    %c0_61 = arith.constant 0 : index
    %65 = vector.load %arg6[%c2_59, %c0_60, %c0_61] : memref<9x64x64xbf16, #tpu.memory_space<vmem>>, vector<1x64x64xbf16>
    %66 = vector.shape_cast %65 : vector<1x64x64xbf16> to vector<64x64xbf16>
    %cst_62 = arith.constant dense<0.000000e+00> : vector<104x64xf32>
    %67 = tpu.matmul %64, %66, %cst_62 {dimension_numbers = #tpu.dot_dimension_numbers<[1], [0], [0], [1], [0, 0, 1, 1], [], []>} : vector<104x64xbf16>, vector<64x64xbf16>, vector<104x64xf32> -> vector<104x64xf32>
    %68 = arith.addf %63, %67 : vector<104x64xf32>
    %c11_63 = arith.constant 11 : index
    %c0_64 = arith.constant 0 : index
    %69 = vector.load %arg10[%c11_63, %c0_64] : memref<128x64xbf16, #tpu.memory_space<vmem>>, vector<104x64xbf16>
    %c3_65 = arith.constant 3 : index
    %c0_66 = arith.constant 0 : index
    %c0_67 = arith.constant 0 : index
    %70 = vector.load %arg6[%c3_65, %c0_66, %c0_67] : memref<9x64x64xbf16, #tpu.memory_space<vmem>>, vector<1x64x64xbf16>
    %71 = vector.shape_cast %70 : vector<1x64x64xbf16> to vector<64x64xbf16>
    %cst_68 = arith.constant dense<0.000000e+00> : vector<104x64xf32>
    %72 = tpu.matmul %69, %71, %cst_68 {dimension_numbers = #tpu.dot_dimension_numbers<[1], [0], [0], [1], [0, 0, 1, 1], [], []>} : vector<104x64xbf16>, vector<64x64xbf16>, vector<104x64xf32> -> vector<104x64xf32>
    %73 = arith.addf %68, %72 : vector<104x64xf32>
    %c12_69 = arith.constant 12 : index
    %c0_70 = arith.constant 0 : index
    %74 = vector.load %arg10[%c12_69, %c0_70] : memref<128x64xbf16, #tpu.memory_space<vmem>>, vector<104x64xbf16>
    %c4 = arith.constant 4 : index
    %c0_71 = arith.constant 0 : index
    %c0_72 = arith.constant 0 : index
    %75 = vector.load %arg6[%c4, %c0_71, %c0_72] : memref<9x64x64xbf16, #tpu.memory_space<vmem>>, vector<1x64x64xbf16>
    %76 = vector.shape_cast %75 : vector<1x64x64xbf16> to vector<64x64xbf16>
    %cst_73 = arith.constant dense<0.000000e+00> : vector<104x64xf32>
    %77 = tpu.matmul %74, %76, %cst_73 {dimension_numbers = #tpu.dot_dimension_numbers<[1], [0], [0], [1], [0, 0, 1, 1], [], []>} : vector<104x64xbf16>, vector<64x64xbf16>, vector<104x64xf32> -> vector<104x64xf32>
    %78 = arith.addf %73, %77 : vector<104x64xf32>
    %c13 = arith.constant 13 : index
    %c0_74 = arith.constant 0 : index
    %79 = vector.load %arg10[%c13, %c0_74] : memref<128x64xbf16, #tpu.memory_space<vmem>>, vector<104x64xbf16>
    %c5 = arith.constant 5 : index
    %c0_75 = arith.constant 0 : index
    %c0_76 = arith.constant 0 : index
    %80 = vector.load %arg6[%c5, %c0_75, %c0_76] : memref<9x64x64xbf16, #tpu.memory_space<vmem>>, vector<1x64x64xbf16>
    %81 = vector.shape_cast %80 : vector<1x64x64xbf16> to vector<64x64xbf16>
    %cst_77 = arith.constant dense<0.000000e+00> : vector<104x64xf32>
    %82 = tpu.matmul %79, %81, %cst_77 {dimension_numbers = #tpu.dot_dimension_numbers<[1], [0], [0], [1], [0, 0, 1, 1], [], []>} : vector<104x64xbf16>, vector<64x64xbf16>, vector<104x64xf32> -> vector<104x64xf32>
    %83 = arith.addf %78, %82 : vector<104x64xf32>
    %c22 = arith.constant 22 : index
    %c0_78 = arith.constant 0 : index
    %84 = vector.load %arg10[%c22, %c0_78] : memref<128x64xbf16, #tpu.memory_space<vmem>>, vector<104x64xbf16>
    %c6 = arith.constant 6 : index
    %c0_79 = arith.constant 0 : index
    %c0_80 = arith.constant 0 : index
    %85 = vector.load %arg6[%c6, %c0_79, %c0_80] : memref<9x64x64xbf16, #tpu.memory_space<vmem>>, vector<1x64x64xbf16>
    %86 = vector.shape_cast %85 : vector<1x64x64xbf16> to vector<64x64xbf16>
    %cst_81 = arith.constant dense<0.000000e+00> : vector<104x64xf32>
    %87 = tpu.matmul %84, %86, %cst_81 {dimension_numbers = #tpu.dot_dimension_numbers<[1], [0], [0], [1], [0, 0, 1, 1], [], []>} : vector<104x64xbf16>, vector<64x64xbf16>, vector<104x64xf32> -> vector<104x64xf32>
    %88 = arith.addf %83, %87 : vector<104x64xf32>
    %c23 = arith.constant 23 : index
    %c0_82 = arith.constant 0 : index
    %89 = vector.load %arg10[%c23, %c0_82] : memref<128x64xbf16, #tpu.memory_space<vmem>>, vector<104x64xbf16>
    %c7 = arith.constant 7 : index
    %c0_83 = arith.constant 0 : index
    %c0_84 = arith.constant 0 : index
    %90 = vector.load %arg6[%c7, %c0_83, %c0_84] : memref<9x64x64xbf16, #tpu.memory_space<vmem>>, vector<1x64x64xbf16>
    %91 = vector.shape_cast %90 : vector<1x64x64xbf16> to vector<64x64xbf16>
    %cst_85 = arith.constant dense<0.000000e+00> : vector<104x64xf32>
    %92 = tpu.matmul %89, %91, %cst_85 {dimension_numbers = #tpu.dot_dimension_numbers<[1], [0], [0], [1], [0, 0, 1, 1], [], []>} : vector<104x64xbf16>, vector<64x64xbf16>, vector<104x64xf32> -> vector<104x64xf32>
    %93 = arith.addf %88, %92 : vector<104x64xf32>
    %c24 = arith.constant 24 : index
    %c0_86 = arith.constant 0 : index
    %94 = vector.load %arg10[%c24, %c0_86] : memref<128x64xbf16, #tpu.memory_space<vmem>>, vector<104x64xbf16>
    %c8 = arith.constant 8 : index
    %c0_87 = arith.constant 0 : index
    %c0_88 = arith.constant 0 : index
    %95 = vector.load %arg6[%c8, %c0_87, %c0_88] : memref<9x64x64xbf16, #tpu.memory_space<vmem>>, vector<1x64x64xbf16>
    %96 = vector.shape_cast %95 : vector<1x64x64xbf16> to vector<64x64xbf16>
    %cst_89 = arith.constant dense<0.000000e+00> : vector<104x64xf32>
    %97 = tpu.matmul %94, %96, %cst_89 {dimension_numbers = #tpu.dot_dimension_numbers<[1], [0], [0], [1], [0, 0, 1, 1], [], []>} : vector<104x64xbf16>, vector<64x64xbf16>, vector<104x64xf32> -> vector<104x64xf32>
    %98 = arith.addf %93, %97 : vector<104x64xf32>
    %c0_90 = arith.constant 0 : index
    %c0_91 = arith.constant 0 : index
    %99 = vector.load %arg7[%c0_90, %c0_91] : memref<1x64xf32, #tpu.memory_space<vmem>>, vector<1x64xf32>
    %100 = vector.broadcast %99 : vector<1x64xf32> to vector<104x64xf32>
    %101 = arith.addf %98, %100 : vector<104x64xf32>
    %cst_92 = arith.constant 0.000000e+00 : f32
    %102 = vector.broadcast %cst_92 : f32 to vector<104x64xf32>
    %103 = arith.maximumf %101, %102 : vector<104x64xf32>
    %104 = arith.truncf %103 : vector<104x64xf32> to vector<104x64xbf16>
    %105 = vector.extract_strided_slice %104 {offsets = [0, 0], sizes = [7, 64], strides = [1, 1]} : vector<104x64xbf16> to vector<7x64xbf16>
    %c0_93 = arith.constant 0 : index
    %c0_94 = arith.constant 0 : index
    %c0_95 = arith.constant 0 : index
    %c0_96 = arith.constant 0 : index
    %106 = vector.load %arg8[%c0_93, %c0_94, %c0_95, %c0_96] : memref<1x7x7x64xbf16, #tpu.memory_space<vmem>>, vector<1x1x7x64xbf16>
    %107 = vector.shape_cast %106 : vector<1x1x7x64xbf16> to vector<7x64xbf16>
    %108 = vector.shape_cast %105 : vector<7x64xbf16> to vector<1x1x7x64xbf16>
    tpu.vector_store %arg8[%c0_93, %c0_94, %c0_95, %c0_96], %108 {strides = array<i32>} : memref<1x7x7x64xbf16, #tpu.memory_space<vmem>>, vector<1x1x7x64xbf16>,
    %109 = vector.extract_strided_slice %104 {offsets = [11, 0], sizes = [7, 64], strides = [1, 1]} : vector<104x64xbf16> to vector<7x64xbf16>
    %c0_97 = arith.constant 0 : index
    %c1_98 = arith.constant 1 : index
    %c0_99 = arith.constant 0 : index
    %c0_100 = arith.constant 0 : index
    %110 = vector.load %arg8[%c0_97, %c1_98, %c0_99, %c0_100] : memref<1x7x7x64xbf16, #tpu.memory_space<vmem>>, vector<1x1x7x64xbf16>
    %111 = vector.shape_cast %110 : vector<1x1x7x64xbf16> to vector<7x64xbf16>
    %112 = vector.shape_cast %109 : vector<7x64xbf16> to vector<1x1x7x64xbf16>
    tpu.vector_store %arg8[%c0_97, %c1_98, %c0_99, %c0_100], %112 {strides = array<i32>} : memref<1x7x7x64xbf16, #tpu.memory_space<vmem>>, vector<1x1x7x64xbf16>,
    %113 = vector.extract_strided_slice %104 {offsets = [22, 0], sizes = [7, 64], strides = [1, 1]} : vector<104x64xbf16> to vector<7x64xbf16>
    %c0_101 = arith.constant 0 : index
    %c2_102 = arith.constant 2 : index
    %c0_103 = arith.constant 0 : index
    %c0_104 = arith.constant 0 : index
    %114 = vector.load %arg8[%c0_101, %c2_102, %c0_103, %c0_104] : memref<1x7x7x64xbf16, #tpu.memory_space<vmem>>, vector<1x1x7x64xbf16>
    %115 = vector.shape_cast %114 : vector<1x1x7x64xbf16> to vector<7x64xbf16>
    %116 = vector.shape_cast %113 : vector<7x64xbf16> to vector<1x1x7x64xbf16>
    tpu.vector_store %arg8[%c0_101, %c2_102, %c0_103, %c0_104], %116 {strides = array<i32>} : memref<1x7x7x64xbf16, #tpu.memory_space<vmem>>, vector<1x1x7x64xbf16>,
    %117 = vector.extract_strided_slice %104 {offsets = [33, 0], sizes = [7, 64], strides = [1, 1]} : vector<104x64xbf16> to vector<7x64xbf16>
    %c0_105 = arith.constant 0 : index
    %c3_106 = arith.constant 3 : index
    %c0_107 = arith.constant 0 : index
    %c0_108 = arith.constant 0 : index
    %118 = vector.load %arg8[%c0_105, %c3_106, %c0_107, %c0_108] : memref<1x7x7x64xbf16, #tpu.memory_space<vmem>>, vector<1x1x7x64xbf16>
    %119 = vector.shape_cast %118 : vector<1x1x7x64xbf16> to vector<7x64xbf16>
    %120 = vector.shape_cast %117 : vector<7x64xbf16> to vector<1x1x7x64xbf16>
    tpu.vector_store %arg8[%c0_105, %c3_106, %c0_107, %c0_108], %120 {strides = array<i32>} : memref<1x7x7x64xbf16, #tpu.memory_space<vmem>>, vector<1x1x7x64xbf16>,
    %121 = vector.extract_strided_slice %104 {offsets = [44, 0], sizes = [7, 64], strides = [1, 1]} : vector<104x64xbf16> to vector<7x64xbf16>
    %c0_109 = arith.constant 0 : index
    %c4_110 = arith.constant 4 : index
    %c0_111 = arith.constant 0 : index
    %c0_112 = arith.constant 0 : index
    %122 = vector.load %arg8[%c0_109, %c4_110, %c0_111, %c0_112] : memref<1x7x7x64xbf16, #tpu.memory_space<vmem>>, vector<1x1x7x64xbf16>
    %123 = vector.shape_cast %122 : vector<1x1x7x64xbf16> to vector<7x64xbf16>
    %124 = vector.shape_cast %121 : vector<7x64xbf16> to vector<1x1x7x64xbf16>
    tpu.vector_store %arg8[%c0_109, %c4_110, %c0_111, %c0_112], %124 {strides = array<i32>} : memref<1x7x7x64xbf16, #tpu.memory_space<vmem>>, vector<1x1x7x64xbf16>,
    %125 = vector.extract_strided_slice %104 {offsets = [55, 0], sizes = [7, 64], strides = [1, 1]} : vector<104x64xbf16> to vector<7x64xbf16>
    %c0_113 = arith.constant 0 : index
    %c5_114 = arith.constant 5 : index
    %c0_115 = arith.constant 0 : index
    %c0_116 = arith.constant 0 : index
    %126 = vector.load %arg8[%c0_113, %c5_114, %c0_115, %c0_116] : memref<1x7x7x64xbf16, #tpu.memory_space<vmem>>, vector<1x1x7x64xbf16>
    %127 = vector.shape_cast %126 : vector<1x1x7x64xbf16> to vector<7x64xbf16>
    %128 = vector.shape_cast %125 : vector<7x64xbf16> to vector<1x1x7x64xbf16>
    tpu.vector_store %arg8[%c0_113, %c5_114, %c0_115, %c0_116], %128 {strides = array<i32>} : memref<1x7x7x64xbf16, #tpu.memory_space<vmem>>, vector<1x1x7x64xbf16>,
    %129 = vector.extract_strided_slice %104 {offsets = [66, 0], sizes = [7, 64], strides = [1, 1]} : vector<104x64xbf16> to vector<7x64xbf16>
    %c0_117 = arith.constant 0 : index
    %c6_118 = arith.constant 6 : index
    %c0_119 = arith.constant 0 : index
    %c0_120 = arith.constant 0 : index
    %130 = vector.load %arg8[%c0_117, %c6_118, %c0_119, %c0_120] : memref<1x7x7x64xbf16, #tpu.memory_space<vmem>>, vector<1x1x7x64xbf16>
    %131 = vector.shape_cast %130 : vector<1x1x7x64xbf16> to vector<7x64xbf16>
    %132 = vector.shape_cast %129 : vector<7x64xbf16> to vector<1x1x7x64xbf16>
    tpu.vector_store %arg8[%c0_117, %c6_118, %c0_119, %c0_120], %132 {strides = array<i32>} : memref<1x7x7x64xbf16, #tpu.memory_space<vmem>>, vector<1x1x7x64xbf16>,
    return
  }
  func.func @transform_0(%arg0: i32) -> (i32, i32) {
    %c0_i32 = arith.constant 0 : i32
    %c0_i32_0 = arith.constant 0 : i32
    return %arg0, %c0_i32 : i32, i32
  }
  func.func @transform_1(%arg0: i32) -> (i32, i32, i32) {
    %c0_i32 = arith.constant 0 : i32
    %c0_i32_0 = arith.constant 0 : i32
    %c0_i32_1 = arith.constant 0 : i32
    %c0_i32_2 = arith.constant 0 : i32
    return %c0_i32, %c0_i32_0, %c0_i32_1 : i32, i32, i32
  }
  func.func @transform_2(%arg0: i32) -> (i32, i32) {
    %c0_i32 = arith.constant 0 : i32
    %c0_i32_0 = arith.constant 0 : i32
    %c0_i32_1 = arith.constant 0 : i32
    return %c0_i32, %c0_i32_0 : i32, i32
  }
  func.func @transform_3(%arg0: i32) -> (i32, i32, i32) {
    %c0_i32 = arith.constant 0 : i32
    %c0_i32_0 = arith.constant 0 : i32
    %c0_i32_1 = arith.constant 0 : i32
    %c0_i32_2 = arith.constant 0 : i32
    return %c0_i32, %c0_i32_0, %c0_i32_1 : i32, i32, i32
  }
  func.func @transform_4(%arg0: i32) -> (i32, i32) {
    %c0_i32 = arith.constant 0 : i32
    %c0_i32_0 = arith.constant 0 : i32
    %c0_i32_1 = arith.constant 0 : i32
    return %c0_i32, %c0_i32_0 : i32, i32
  }
  func.func @transform_5(%arg0: i32) -> (i32, i32, i32) {
    %c0_i32 = arith.constant 0 : i32
    %c0_i32_0 = arith.constant 0 : i32
    %c0_i32_1 = arith.constant 0 : i32
    %c0_i32_2 = arith.constant 0 : i32
    return %c0_i32, %c0_i32_0, %c0_i32_1 : i32, i32, i32
  }
  func.func @transform_6(%arg0: i32) -> (i32, i32) {
    %c0_i32 = arith.constant 0 : i32
    %c0_i32_0 = arith.constant 0 : i32
    %c0_i32_1 = arith.constant 0 : i32
    return %c0_i32, %c0_i32_0 : i32, i32
  }
  func.func @transform_7(%arg0: i32) -> (i32, i32, i32, i32) {
    %c0_i32 = arith.constant 0 : i32
    %c0_i32_0 = arith.constant 0 : i32
    %c0_i32_1 = arith.constant 0 : i32
    %c0_i32_2 = arith.constant 0 : i32
    return %arg0, %c0_i32, %c0_i32_0, %c0_i32_1 : i32, i32, i32, i32
  }
}

module attributes {stable_mosaic.version = 11 : i64} {
  func.func @_head_kernel(%arg0: i32, %arg1: memref<2x3136xbf16, #tpu.memory_space<vmem>>, %arg2: memref<3136x512xbf16, #tpu.memory_space<vmem>>, %arg3: memref<1x512xf32, #tpu.memory_space<vmem>>, %arg4: memref<512x128xbf16, #tpu.memory_space<vmem>>, %arg5: memref<1x128xf32, #tpu.memory_space<vmem>>, %arg6: memref<2x128xf32, #tpu.memory_space<vmem>>) attributes {dimension_semantics = [#tpu.dimension_semantics<parallel>], iteration_bounds = array<i64: 1>, scalar_prefetch = 0 : i64, scratch_operands = 0 : i64, tpu.core_type = #tpu.core_type<tc>, window_params = [{transform_indices = @transform_0, window_bounds = array<i64: 2, 3136>}, {pipeline_mode = #tpu.pipeline_mode<synchronous>, transform_indices = @transform_1, window_bounds = array<i64: 3136, 512>}, {pipeline_mode = #tpu.pipeline_mode<synchronous>, transform_indices = @transform_2, window_bounds = array<i64: 1, 512>}, {pipeline_mode = #tpu.pipeline_mode<synchronous>, transform_indices = @transform_3, window_bounds = array<i64: 512, 128>}, {pipeline_mode = #tpu.pipeline_mode<synchronous>, transform_indices = @transform_4, window_bounds = array<i64: 1, 128>}, {transform_indices = @transform_5, window_bounds = array<i64: 2, 128>}]} {
    %c0 = arith.constant 0 : index
    %c0_0 = arith.constant 0 : index
    %0 = vector.load %arg1[%c0, %c0_0] : memref<2x3136xbf16, #tpu.memory_space<vmem>>, vector<2x3136xbf16>
    %c0_1 = arith.constant 0 : index
    %c0_2 = arith.constant 0 : index
    %1 = vector.load %arg2[%c0_1, %c0_2] : memref<3136x512xbf16, #tpu.memory_space<vmem>>, vector<3136x512xbf16>
    %cst = arith.constant dense<0.000000e+00> : vector<2x512xf32>
    %2 = tpu.matmul %0, %1, %cst {dimension_numbers = #tpu.dot_dimension_numbers<[1], [0], [0], [1], [0, 0, 1, 1], [], []>} : vector<2x3136xbf16>, vector<3136x512xbf16>, vector<2x512xf32> -> vector<2x512xf32>
    %c0_3 = arith.constant 0 : index
    %c0_4 = arith.constant 0 : index
    %3 = vector.load %arg3[%c0_3, %c0_4] : memref<1x512xf32, #tpu.memory_space<vmem>>, vector<1x512xf32>
    %4 = vector.broadcast %3 : vector<1x512xf32> to vector<2x512xf32>
    %5 = arith.addf %2, %4 : vector<2x512xf32>
    %cst_5 = arith.constant 0.000000e+00 : f32
    %6 = vector.broadcast %cst_5 : f32 to vector<2x512xf32>
    %7 = arith.maximumf %5, %6 : vector<2x512xf32>
    %8 = arith.truncf %7 : vector<2x512xf32> to vector<2x512xbf16>
    %c0_6 = arith.constant 0 : index
    %c0_7 = arith.constant 0 : index
    %9 = vector.load %arg4[%c0_6, %c0_7] : memref<512x128xbf16, #tpu.memory_space<vmem>>, vector<512x128xbf16>
    %cst_8 = arith.constant dense<0.000000e+00> : vector<2x128xf32>
    %10 = tpu.matmul %8, %9, %cst_8 {dimension_numbers = #tpu.dot_dimension_numbers<[1], [0], [0], [1], [0, 0, 1, 1], [], []>} : vector<2x512xbf16>, vector<512x128xbf16>, vector<2x128xf32> -> vector<2x128xf32>
    %c0_9 = arith.constant 0 : index
    %c0_10 = arith.constant 0 : index
    %11 = vector.load %arg5[%c0_9, %c0_10] : memref<1x128xf32, #tpu.memory_space<vmem>>, vector<1x128xf32>
    %12 = vector.broadcast %11 : vector<1x128xf32> to vector<2x128xf32>
    %13 = arith.addf %10, %12 : vector<2x128xf32>
    %c0_11 = arith.constant 0 : index
    %c0_12 = arith.constant 0 : index
    %14 = vector.load %arg6[%c0_11, %c0_12] : memref<2x128xf32, #tpu.memory_space<vmem>>, vector<2x128xf32>
    tpu.vector_store %arg6[%c0_11, %c0_12], %13 {strides = array<i32>} : memref<2x128xf32, #tpu.memory_space<vmem>>, vector<2x128xf32>,
    return
  }
  func.func @transform_0(%arg0: i32) -> (i32, i32) {
    %c0_i32 = arith.constant 0 : i32
    %c0_i32_0 = arith.constant 0 : i32
    return %arg0, %c0_i32 : i32, i32
  }
  func.func @transform_1(%arg0: i32) -> (i32, i32) {
    %c0_i32 = arith.constant 0 : i32
    %c0_i32_0 = arith.constant 0 : i32
    %c0_i32_1 = arith.constant 0 : i32
    return %c0_i32, %c0_i32_0 : i32, i32
  }
  func.func @transform_2(%arg0: i32) -> (i32, i32) {
    %c0_i32 = arith.constant 0 : i32
    %c0_i32_0 = arith.constant 0 : i32
    %c0_i32_1 = arith.constant 0 : i32
    return %c0_i32, %c0_i32_0 : i32, i32
  }
  func.func @transform_3(%arg0: i32) -> (i32, i32) {
    %c0_i32 = arith.constant 0 : i32
    %c0_i32_0 = arith.constant 0 : i32
    %c0_i32_1 = arith.constant 0 : i32
    return %c0_i32, %c0_i32_0 : i32, i32
  }
  func.func @transform_4(%arg0: i32) -> (i32, i32) {
    %c0_i32 = arith.constant 0 : i32
    %c0_i32_0 = arith.constant 0 : i32
    %c0_i32_1 = arith.constant 0 : i32
    return %c0_i32, %c0_i32_0 : i32, i32
  }
  func.func @transform_5(%arg0: i32) -> (i32, i32) {
    %c0_i32 = arith.constant 0 : i32
    %c0_i32_0 = arith.constant 0 : i32
    return %arg0, %c0_i32 : i32, i32
  }
}

</mosaic_0001>

<llo_original>
// kernel: atari_net_forward.2
$region0: #{atari_net_forward.2}
  #allocation0 [shape = 'u32[]', space=smem, size = 0x4, offset = 0x4, fixed_abs, tag = 'smem constant byte address 0x4 - core index']
  #allocation1 [shape = 'u32[144,128]{1,0:T(1,128)}', space=vmem, size = 0x12000, scoped, tag = 'internal scratch']
  #allocation2 [shape = 'bf16[128,128]{1,0:T(16,128)(2,1)}', space=vmem, size = 0x8000, scoped, tag = 'scratch operand']
  #allocation3 [shape = 'bf16[128,64]{1,0:T(16,128)(2,1)}', space=vmem, size = 0x8000, scoped, tag = 'scratch operand']
  %s0 = inlined_call_operand.vmem [shape: s8[256,256], index: 0, kind: input, shape index: {}]
  %s1 = inlined_call_operand.vmem [shape: bf16[4,256,128], index: 1, kind: input, shape index: {}]
  %s2 = inlined_call_operand.vmem [shape: f32[1,128], index: 2, kind: input, shape index: {}]
  %s3 = inlined_call_operand.vmem [shape: bf16[4,128,64], index: 3, kind: input, shape index: {}]
  %s4 = inlined_call_operand.vmem [shape: f32[1,64], index: 4, kind: input, shape index: {}]
  %s5 = inlined_call_operand.vmem [shape: bf16[9,64,64], index: 5, kind: input, shape index: {}]
  %s6 = inlined_call_operand.vmem [shape: f32[1,64], index: 6, kind: input, shape index: {}]
  %s7 = inlined_call_operand.vmem [shape: bf16[2,7,7,64], index: 7, kind: output, shape index: {}]
  %s8 = sld [smem:[#allocation0]]
  $region61: #{atari_net_forward.2} parent=0
    _
  %s10 = ssub.s32 1, %s8
  %s11 = scalar_select 0, %s10, %s8
  loop: start=0, step=1, limit=4
  $region2: #{atari_net_forward.2} parent=0 // loop_pre_header
    _
  $region3: #{atari_net_forward.2} parent=0 // loop_header
    %s13 = sphi 0, %s17
    %p14 = scmp.ge.s32.totalorder %s13, 4
    %s23 = sphi 0, %s25
    %s26 = sphi 0, %s23
    %s27 = sphi 0, %s26
    %s43 = sphi 0, %s27
    %s47 = sphi 0, %s47
    %s49 = sphi 0, %s47
    %s50 = sphi 0, %s49
    %s64 = sphi 0, %s50
    %s68 = sphi 0, %s68
    %s70 = sphi 0, %s68
    %s71 = sphi 0, %s70
    %s85 = sphi 0, %s71
    %s89 = sphi 0, %s89
    %s91 = sphi 0, %s89
    %s92 = sphi 0, %s91
    %s106 = sphi 0, %s92
    %s110 = sphi 0, %s110
    %s112 = sphi 0, %s110
    %s113 = sphi 0, %s112
    %s127 = sphi 0, %s113
    %s131 = sphi 0, %s131
    %s133 = sphi 0, %s131
    %s134 = sphi 0, %s133
    %s148 = sphi 0, %s134
    %s152 = sphi 0, %s152
    %s154 = sphi 0, %s152
    %s155 = sphi 0, %s154
    %s169 = sphi 0, %s155
    %s175 = sphi 0, %s177
    %s178 = sphi 0, %s175
    %s179 = sphi 0, %s178
    %s195 = sphi 0, %s179
  $region4: #{atari_net_forward.2} parent=0 // loop_header_branch
    %16 = sbr.rel (%p14) target = $region8
  $region5: #{atari_net_forward.2} parent=0 // loop_body
    %s18 = ssub.s32 %s13, 1
    %s19 = ssub.s32 %s13, 2
    %s20 = sadd.s32 %s13, 1
    %s21 = ssub.s32 %s13, %s20
    %p22 = scmp.eq.s32.totalorder %s21, 0
    %s24 = sadd.s32 %s23, 1
    %s25 = scalar_select %p22, %s23, %s24
    %p28 = pneg %p22
    %p29 = scmp.eq.s32.totalorder %s13, 1
    %p30 = por %p28, %p29
    %p31 = scmp.ne.s32.totalorder %s23, %s26
    %p32 = scmp.eq.s32.totalorder %s13, 0
    %p33 = por %p31, %p32
    %p34 = scmp.ne.s32.totalorder %s23, %s26
    %p35 = scmp.eq.s32.totalorder %s18, 1
    %p36 = por %p34, %p35
    %p37 = scmp.ne.s32.totalorder %s26, %s27
    %p38 = scmp.eq.s32.totalorder %s18, 0
    %p39 = por %p37, %p38
    %p40 = scmp.ne.s32.totalorder %s26, %s27
    %p41 = scmp.eq.s32.totalorder %s19, 1
    %p42 = por %p40, %p41
    %p44 = scmp.ne.s32.totalorder %s27, %s43
    %p45 = scmp.eq.s32.totalorder %s19, 0
    %p46 = por %p44, %p45
    %s48 = sadd.s32 %s47, 1
    %p51 = scmp.eq.s32.totalorder %s13, 1
    %p52 = scmp.ne.s32.totalorder %s47, %s49
    %p53 = scmp.eq.s32.totalorder %s13, 0
    %p54 = por %p52, %p53
    %p55 = scmp.ne.s32.totalorder %s47, %s49
    %p56 = scmp.eq.s32.totalorder %s18, 1
    %p57 = por %p55, %p56
    %p58 = scmp.ne.s32.totalorder %s49, %s50
    %p59 = scmp.eq.s32.totalorder %s18, 0
    %p60 = por %p58, %p59
    %p61 = scmp.ne.s32.totalorder %s49, %s50
    %p62 = scmp.eq.s32.totalorder %s19, 1
    %p63 = por %p61, %p62
    %p65 = scmp.ne.s32.totalorder %s50, %s64
    %p66 = scmp.eq.s32.totalorder %s19, 0
    %p67 = por %p65, %p66
    %s69 = sadd.s32 %s68, 1
    %p72 = scmp.eq.s32.totalorder %s13, 1
    %p73 = scmp.ne.s32.totalorder %s68, %s70
    %p74 = scmp.eq.s32.totalorder %s13, 0
    %p75 = por %p73, %p74
    %p76 = scmp.ne.s32.totalorder %s68, %s70
    %p77 = scmp.eq.s32.totalorder %s18, 1
    %p78 = por %p76, %p77
    %p79 = scmp.ne.s32.totalorder %s70, %s71
    %p80 = scmp.eq.s32.totalorder %s18, 0
    %p81 = por %p79, %p80
    %p82 = scmp.ne.s32.totalorder %s70, %s71
    %p83 = scmp.eq.s32.totalorder %s19, 1
    %p84 = por %p82, %p83
    %p86 = scmp.ne.s32.totalorder %s71, %s85
    %p87 = scmp.eq.s32.totalorder %s19, 0
    %p88 = por %p86, %p87
    %s90 = sadd.s32 %s89, 1
    %p93 = scmp.eq.s32.totalorder %s13, 1
    %p94 = scmp.ne.s32.totalorder %s89, %s91
    %p95 = scmp.eq.s32.totalorder %s13, 0
    %p96 = por %p94, %p95
    %p97 = scmp.ne.s32.totalorder %s89, %s91
    %p98 = scmp.eq.s32.totalorder %s18, 1
    %p99 = por %p97, %p98
    %p100 = scmp.ne.s32.totalorder %s91, %s92
    %p101 = scmp.eq.s32.totalorder %s18, 0
    %p102 = por %p100, %p101
    %p103 = scmp.ne.s32.totalorder %s91, %s92
    %p104 = scmp.eq.s32.totalorder %s19, 1
    %p105 = por %p103, %p104
    %p107 = scmp.ne.s32.totalorder %s92, %s106
    %p108 = scmp.eq.s32.totalorder %s19, 0
    %p109 = por %p107, %p108
    %s111 = sadd.s32 %s110, 1
    %p114 = scmp.eq.s32.totalorder %s13, 1
    %p115 = scmp.ne.s32.totalorder %s110, %s112
    %p116 = scmp.eq.s32.totalorder %s13, 0
    %p117 = por %p115, %p116
    %p118 = scmp.ne.s32.totalorder %s110, %s112
    %p119 = scmp.eq.s32.totalorder %s18, 1
    %p120 = por %p118, %p119
    %p121 = scmp.ne.s32.totalorder %s112, %s113
    %p122 = scmp.eq.s32.totalorder %s18, 0
    %p123 = por %p121, %p122
    %p124 = scmp.ne.s32.totalorder %s112, %s113
    %p125 = scmp.eq.s32.totalorder %s19, 1
    %p126 = por %p124, %p125
    %p128 = scmp.ne.s32.totalorder %s113, %s127
    %p129 = scmp.eq.s32.totalorder %s19, 0
    %p130 = por %p128, %p129
    %s132 = sadd.s32 %s131, 1
    %p135 = scmp.eq.s32.totalorder %s13, 1
    %p136 = scmp.ne.s32.totalorder %s131, %s133
    %p137 = scmp.eq.s32.totalorder %s13, 0
    %p138 = por %p136, %p137
    %p139 = scmp.ne.s32.totalorder %s131, %s133
    %p140 = scmp.eq.s32.totalorder %s18, 1
    %p141 = por %p139, %p140
    %p142 = scmp.ne.s32.totalorder %s133, %s134
    %p143 = scmp.eq.s32.totalorder %s18, 0
    %p144 = por %p142, %p143
    %p145 = scmp.ne.s32.totalorder %s133, %s134
    %p146 = scmp.eq.s32.totalorder %s19, 1
    %p147 = por %p145, %p146
    %p149 = scmp.ne.s32.totalorder %s134, %s148
    %p150 = scmp.eq.s32.totalorder %s19, 0
    %p151 = por %p149, %p150
    %s153 = sadd.s32 %s152, 1
    %p156 = scmp.eq.s32.totalorder %s13, 1
    %p157 = scmp.ne.s32.totalorder %s152, %s154
    %p158 = scmp.eq.s32.totalorder %s13, 0
    %p159 = por %p157, %p158
    %p160 = scmp.ne.s32.totalorder %s152, %s154
    %p161 = scmp.eq.s32.totalorder %s18, 1
    %p162 = por %p160, %p161
    %p163 = scmp.ne.s32.totalorder %s154, %s155
    %p164 = scmp.eq.s32.totalorder %s18, 0
    %p165 = por %p163, %p164
    %p166 = scmp.ne.s32.totalorder %s154, %s155
    %p167 = scmp.eq.s32.totalorder %s19, 1
    %p168 = por %p166, %p167
    %p170 = scmp.ne.s32.totalorder %s155, %s169
    %p171 = scmp.eq.s32.totalorder %s19, 0
    %p172 = por %p170, %p171
    %s173 = ssub.s32 %s13, %s20
    %p174 = scmp.eq.s32.totalorder %s173, 0
    %s176 = sadd.s32 %s175, 1
    %s177 = scalar_select %p174, %s175, %s176
    %p180 = pneg %p174
    %p181 = scmp.eq.s32.totalorder %s13, 1
    %p182 = por %p180, %p181
    %p183 = scmp.ne.s32.totalorder %s175, %s178
    %p184 = scmp.eq.s32.totalorder %s13, 0
    %p185 = por %p183, %p184
    %p186 = scmp.ne.s32.totalorder %s175, %s178
    %p187 = scmp.eq.s32.totalorder %s18, 1
    %p188 = por %p186, %p187
    %p189 = scmp.ne.s32.totalorder %s178, %s179
    %p190 = scmp.eq.s32.totalorder %s18, 0
    %p191 = por %p189, %p190
    %p192 = scmp.ne.s32.totalorder %s178, %s179
    %p193 = scmp.eq.s32.totalorder %s19, 1
    %p194 = por %p192, %p193
    %p196 = scmp.ne.s32.totalorder %s179, %s195
    %p197 = scmp.eq.s32.totalorder %s19, 0
    %p198 = por %p196, %p197
    %p199 = scmp.le.s32.totalorder 1, %s13
    %p200 = scmp.lt.s32.totalorder %s13, 3
    %p201 = pnand %p199, %p200
    %p202 = pneg %p201
    // Predicated region
    $region9: #{atari_net_forward.2} parent=5 // pred_check
      _
    $region10: #{atari_net_forward.2} parent=5 // pred_check_branch
      %204 = sbr.rel (%p201) target = $region12
    $region11: #{atari_net_forward.2} parent=5 // pred_region
      %s205 = ssub.s32 %s13, 1
      // Predicated region
      $region13: #{atari_net_forward.2} parent=11 // pred_check
        %p206 = pneg %p60
      $region14: #{atari_net_forward.2} parent=11 // pred_check_branch
        %208 = sbr.rel (%p206) target = $region16
      $region15: #{atari_net_forward.2} parent=11 // pred_region
        _
      $region16: #{atari_net_forward.2} parent=11 // pred_fallthru
        _
      // Predicated region
      $region17: #{atari_net_forward.2} parent=11 // pred_check
        %p209 = pneg %p81
      $region18: #{atari_net_forward.2} parent=11 // pred_check_branch
        %211 = sbr.rel (%p209) target = $region20
      $region19: #{atari_net_forward.2} parent=11 // pred_region
        _
      $region20: #{atari_net_forward.2} parent=11 // pred_fallthru
        _
      // Predicated region
      $region21: #{atari_net_forward.2} parent=11 // pred_check
        %p212 = pneg %p102
      $region22: #{atari_net_forward.2} parent=11 // pred_check_branch
        %214 = sbr.rel (%p212) target = $region24
      $region23: #{atari_net_forward.2} parent=11 // pred_region
        _
      $region24: #{atari_net_forward.2} parent=11 // pred_fallthru
        _
      // Predicated region
      $region25: #{atari_net_forward.2} parent=11 // pred_check
        %p215 = pneg %p123
      $region26: #{atari_net_forward.2} parent=11 // pred_check_branch
        %217 = sbr.rel (%p215) target = $region28
      $region27: #{atari_net_forward.2} parent=11 // pred_region
        _
      $region28: #{atari_net_forward.2} parent=11 // pred_fallthru
        _
      // Predicated region
      $region29: #{atari_net_forward.2} parent=11 // pred_check
        %p218 = pneg %p144
      $region30: #{atari_net_forward.2} parent=11 // pred_check_branch
        %220 = sbr.rel (%p218) target = $region32
      $region31: #{atari_net_forward.2} parent=11 // pred_region
        _
      $region32: #{atari_net_forward.2} parent=11 // pred_fallthru
        _
      // Predicated region
      $region33: #{atari_net_forward.2} parent=11 // pred_check
        %p221 = pneg %p165
      $region34: #{atari_net_forward.2} parent=11 // pred_check_branch
        %223 = sbr.rel (%p221) target = $region36
      $region35: #{atari_net_forward.2} parent=11 // pred_region
        _
      $region36: #{atari_net_forward.2} parent=11 // pred_fallthru
        _
    $region12: #{atari_net_forward.2} parent=5 // pred_fallthru
      _
    %p224 = scmp.lt.s32.totalorder %s13, 2
    // Predicated region
    $region37: #{atari_net_forward.2} parent=5 // pred_check
      %p225 = pneg %p224
    $region38: #{atari_net_forward.2} parent=5 // pred_check_branch
      %227 = sbr.rel (%p225) target = $region40
    $region39: #{atari_net_forward.2} parent=5 // pred_region
      // Predicated region
      $region41: #{atari_net_forward.2} parent=39 // pred_check
        %p228 = pneg %p33
      $region42: #{atari_net_forward.2} parent=39 // pred_check_branch
        %230 = sbr.rel (%p228) target = $region44
      $region43: #{atari_net_forward.2} parent=39 // pred_region
        %s231 = smul.u32 4, %s13
        %p232 = scmp.lt.s32.totalorder %s231, 7
        %s233 = scalar_select %p232, %s231, 7
        %s234 = smul.addr %s233, 2
        %s235 = smul.addr %s234, 8
        %s236 = scalar_lea.vmem %s0, %s235
        %s237 = smul.u32 4, %s13
      $region44: #{atari_net_forward.2} parent=39 // pred_fallthru
        _
    $region40: #{atari_net_forward.2} parent=5 // pred_fallthru
      _
    %p238 = scmp.le.s32.totalorder 1, %s13
    %p239 = scmp.lt.s32.totalorder %s13, 3
    %p240 = pnand %p238, %p239
    %p241 = pneg %p240
    // Predicated region
    $region45: #{atari_net_forward.2} parent=5 // pred_check
      _
    $region46: #{atari_net_forward.2} parent=5 // pred_check_branch
      %243 = sbr.rel (%p240) target = $region48
    $region47: #{atari_net_forward.2} parent=5 // pred_region
      %s244 = ssub.s32 %s13, 1
      %s245 = smul.u32 4, %s18
      %p246 = scmp.lt.s32.totalorder %s245, 7
      %s247 = scalar_select %p246, %s245, 7
      %s248 = smul.addr %s247, 2
      %s249 = smul.addr %s248, 8
      %s250 = scalar_lea.vmem %s0, %s249
      %p251 = pneg %p39
      %p252 = pneg %p36
      %p253 = pneg %p60
      %p254 = pneg %p57
      %p255 = pneg %p81
      %p256 = pneg %p78
      %p257 = pneg %p102
      %p258 = pneg %p99
      %p259 = pneg %p123
      %p260 = pneg %p120
      %p261 = pneg %p144
      %p262 = pneg %p141
      %p263 = pneg %p165
      %p264 = pneg %p162
      %p265 = pneg %p191
      %p266 = pneg %p188
      %p267 = scmp.lt.s32.totalorder %s18, 1
      %s268 = scalar_select %p267, %s18, 1
      %s269 = smul.addr %s268, 7
      %s270 = smul.addr %s269, 4
      %s271 = scalar_lea.vmem %s7, %s270
      %s272 = smul.u32 4, %s18
      %p273 = scmp.lt.s32.totalorder %s272, 7
      %s274 = scalar_select %p273, %s272, 7
      %s275 = smul.addr %s274, 2
      %s276 = smul.addr %s275, 8
      %s277 = scalar_lea.vmem %s0, %s276
      %s278 = smul.u32 4, %s18
      %p279 = scmp.lt.s32.totalorder %s18, 1
      %s280 = scalar_select %p279, %s18, 1
      %s281 = smul.addr %s280, 7
      %s282 = smul.addr %s281, 4
      %s283 = scalar_lea.vmem %s7, %s282
      %v285 = vld [vmem:[%s277] sm:$0xff]
      %v286 = vld [vmem:[%s277 + $0x8] sm:$0xff]
      %v287 = vld [vmem:[%s277 + $0x10] sm:$0xff]
      %v288 = vld [vmem:[%s277 + $0x18] sm:$0xff]
      %v289 = vld [vmem:[%s277 + $0x20] sm:$0xff]
      %v290 = vld [vmem:[%s277 + $0x28] sm:$0xff]
      %v291 = vld [vmem:[%s277 + $0x30] sm:$0xff]
      %v292 = vld [vmem:[%s277 + $0x38] sm:$0xff]
      %v293 = vunpack.c.l.s8.bf16 %v285
      %v294 = vunpack.c.l.s8.bf16 %v286
      %v295 = vunpack.c.h.s8.bf16 %v285
      %v296 = vunpack.c.h.s8.bf16 %v286
      %v297 = vunpack.c.l.s8.bf16 %v287
      %v298 = vunpack.c.l.s8.bf16 %v288
      %v299 = vunpack.c.h.s8.bf16 %v287
      %v300 = vunpack.c.h.s8.bf16 %v288
      %v301 = vunpack.c.l.s8.bf16 %v289
      %v302 = vunpack.c.l.s8.bf16 %v290
      %v303 = vunpack.c.h.s8.bf16 %v289
      %v304 = vunpack.c.h.s8.bf16 %v290
      %v305 = vunpack.c.l.s8.bf16 %v291
      %v306 = vunpack.c.l.s8.bf16 %v292
      %v307 = vunpack.c.h.s8.bf16 %v291
      %v308 = vunpack.c.h.s8.bf16 %v292
      %v309 = vld [vmem:[%s1] sm:$0xf]
      %v310 = vld [vmem:[%s1 + $0x4] sm:$0xf]
      %v311 = vld [vmem:[%s1 + $0x8] sm:$0xf]
      %v312 = vld [vmem:[%s1 + $0xc] sm:$0xf]
      %v313 = vld [vmem:[%s1 + $0x10] sm:$0xf]
      %v314 = vld [vmem:[%s1 + $0x14] sm:$0xf]
      %v315 = vld [vmem:[%s1 + $0x18] sm:$0xf]
      %v316 = vld [vmem:[%s1 + $0x1c] sm:$0xf]
      %v317 = vld [vmem:[%s1 + $0x20] sm:$0xf]
      %v318 = vld [vmem:[%s1 + $0x24] sm:$0xf]
      %v319 = vld [vmem:[%s1 + $0x28] sm:$0xf]
      %v320 = vld [vmem:[%s1 + $0x2c] sm:$0xf]
      %v321 = vld [vmem:[%s1 + $0x30] sm:$0xf]
      %v322 = vld [vmem:[%s1 + $0x34] sm:$0xf]
      %v323 = vld [vmem:[%s1 + $0x38] sm:$0xf]
      %v324 = vld [vmem:[%s1 + $0x3c] sm:$0xf]
      %v325 = vld [vmem:[%s1 + $0x40] sm:$0xf]
      %v326 = vld [vmem:[%s1 + $0x44] sm:$0xf]
      %v327 = vld [vmem:[%s1 + $0x48] sm:$0xf]
      %v328 = vld [vmem:[%s1 + $0x4c] sm:$0xf]
      %v329 = vld [vmem:[%s1 + $0x50] sm:$0xf]
      %v330 = vld [vmem:[%s1 + $0x54] sm:$0xf]
      %v331 = vld [vmem:[%s1 + $0x58] sm:$0xf]
      %v332 = vld [vmem:[%s1 + $0x5c] sm:$0xf]
      %v333 = vld [vmem:[%s1 + $0x60] sm:$0xf]
      %v334 = vld [vmem:[%s1 + $0x64] sm:$0xf]
      %v335 = vld [vmem:[%s1 + $0x68] sm:$0xf]
      %v336 = vld [vmem:[%s1 + $0x6c] sm:$0xf]
      %v337 = vld [vmem:[%s1 + $0x70] sm:$0xf]
      %v338 = vld [vmem:[%s1 + $0x74] sm:$0xf]
      %v339 = vld [vmem:[%s1 + $0x78] sm:$0xf]
      %v340 = vld [vmem:[%s1 + $0x7c] sm:$0xf]
      %s341 = scalar_lea.vmem %s1, 128
      %v342 = vld [vmem:[%s341] sm:$0xf]
      %v343 = vld [vmem:[%s341 + $0x4] sm:$0xf]
      %v344 = vld [vmem:[%s341 + $0x8] sm:$0xf]
      %v345 = vld [vmem:[%s341 + $0xc] sm:$0xf]
      %v346 = vld [vmem:[%s341 + $0x10] sm:$0xf]
      %v347 = vld [vmem:[%s341 + $0x14] sm:$0xf]
      %v348 = vld [vmem:[%s341 + $0x18] sm:$0xf]
      %v349 = vld [vmem:[%s341 + $0x1c] sm:$0xf]
      %v350 = vld [vmem:[%s341 + $0x20] sm:$0xf]
      %v351 = vld [vmem:[%s341 + $0x24] sm:$0xf]
      %v352 = vld [vmem:[%s341 + $0x28] sm:$0xf]
      %v353 = vld [vmem:[%s341 + $0x2c] sm:$0xf]
      %v354 = vld [vmem:[%s341 + $0x30] sm:$0xf]
      %v355 = vld [vmem:[%s341 + $0x34] sm:$0xf]
      %v356 = vld [vmem:[%s341 + $0x38] sm:$0xf]
      %v357 = vld [vmem:[%s341 + $0x3c] sm:$0xf]
      %v358 = vld [vmem:[%s341 + $0x40] sm:$0xf]
      %v359 = vld [vmem:[%s341 + $0x44] sm:$0xf]
      %v360 = vld [vmem:[%s341 + $0x48] sm:$0xf]
      %v361 = vld [vmem:[%s341 + $0x4c] sm:$0xf]
      %v362 = vld [vmem:[%s341 + $0x50] sm:$0xf]
      %v363 = vld [vmem:[%s341 + $0x54] sm:$0xf]
      %v364 = vld [vmem:[%s341 + $0x58] sm:$0xf]
      %v365 = vld [vmem:[%s341 + $0x5c] sm:$0xf]
      %v366 = vld [vmem:[%s341 + $0x60] sm:$0xf]
      %v367 = vld [vmem:[%s341 + $0x64] sm:$0xf]
      %v368 = vld [vmem:[%s341 + $0x68] sm:$0xf]
      %v369 = vld [vmem:[%s341 + $0x6c] sm:$0xf]
      %v370 = vld [vmem:[%s341 + $0x70] sm:$0xf]
      %v371 = vld [vmem:[%s341 + $0x74] sm:$0xf]
      %v372 = vld [vmem:[%s341 + $0x78] sm:$0xf]
      %v373 = vld [vmem:[%s341 + $0x7c] sm:$0xf]
      %vm374 = vsmask.f32 7424
      %v376 = vshrl.u32 %v293, 16
      %v378 = vshll.u32 %v293, 16
      %v380 = vrot.slane %v378, 1
      %v381 = vor.u32 %v376, %v380
      %v383 = vshll.u32 %v295, 16
      %v385 = vrot.slane %v383, 1
      %v386 = vsel %vm374, %v381, %v385
      %v388 = vshrl.u32 %v294, 16
      %v390 = vshll.u32 %v294, 16
      %v392 = vrot.slane %v390, 1
      %v393 = vor.u32 %v388, %v392
      %v395 = vshll.u32 %v296, 16
      %v397 = vrot.slane %v395, 1
      %v398 = vsel %vm374, %v393, %v397
      %v399 = vshrl.u32 %v295, 16
      %v401 = vor.u32 %v399, %v385
      %v403 = vshll.u32 %v297, 16
      %v405 = vrot.slane %v403, 1
      %v406 = vsel %vm374, %v401, %v405
      %v407 = vshrl.u32 %v296, 16
      %v409 = vor.u32 %v407, %v397
      %v411 = vshll.u32 %v298, 16
      %v413 = vrot.slane %v411, 1
      %v414 = vsel %vm374, %v409, %v413
      %v415 = vshrl.u32 %v297, 16
      %v417 = vor.u32 %v415, %v405
      %v419 = vshll.u32 %v299, 16
      %v421 = vrot.slane %v419, 1
      %v422 = vsel %vm374, %v417, %v421
      %v423 = vshrl.u32 %v298, 16
      %v425 = vor.u32 %v423, %v413
      %v427 = vshll.u32 %v300, 16
      %v429 = vrot.slane %v427, 1
      %v430 = vsel %vm374, %v425, %v429
      %v431 = vshrl.u32 %v299, 16
      %v433 = vor.u32 %v431, %v421
      %v435 = vshll.u32 %v301, 16
      %v437 = vrot.slane %v435, 1
      %v438 = vsel %vm374, %v433, %v437
      %v439 = vshrl.u32 %v300, 16
      %v441 = vor.u32 %v439, %v429
      %v443 = vshll.u32 %v302, 16
      %v445 = vrot.slane %v443, 1
      %v446 = vsel %vm374, %v441, %v445
      %v447 = vshrl.u32 %v301, 16
      %v449 = vor.u32 %v447, %v437
      %v451 = vshll.u32 %v303, 16
      %v453 = vrot.slane %v451, 1
      %v454 = vsel %vm374, %v449, %v453
      %v455 = vshrl.u32 %v302, 16
      %v457 = vor.u32 %v455, %v445
      %v459 = vshll.u32 %v304, 16
      %v461 = vrot.slane %v459, 1
      %v462 = vsel %vm374, %v457, %v461
      %v463 = vshrl.u32 %v303, 16
      %v465 = vor.u32 %v463, %v453
      %v467 = vshll.u32 %v305, 16
      %v469 = vrot.slane %v467, 1
      %v470 = vsel %vm374, %v465, %v469
      %v471 = vshrl.u32 %v304, 16
      %v473 = vor.u32 %v471, %v461
      %v475 = vshll.u32 %v306, 16
      %v477 = vrot.slane %v475, 1
      %v478 = vsel %vm374, %v473, %v477
      %v479 = vshrl.u32 %v305, 16
      %v481 = vor.u32 %v479, %v469
      %v483 = vshll.u32 %v307, 16
      %v485 = vrot.slane %v483, 1
      %v486 = vsel %vm374, %v481, %v485
      %v487 = vshrl.u32 %v306, 16
      %v489 = vor.u32 %v487, %v477
      %v491 = vshll.u32 %v308, 16
      %v493 = vrot.slane %v491, 1
      %v494 = vsel %vm374, %v489, %v493
      %v541 = vunpack.c.l.b16 %v342
      %v542 = vunpack.c.l.b16 %v343
      %v543 = vunpack.c.l.b16 %v344
      %v544 = vunpack.c.l.b16 %v345
      %v545 = vunpack.c.l.b16 %v346
      %v546 = vunpack.c.l.b16 %v347
      %v547 = vunpack.c.l.b16 %v348
      %v548 = vunpack.c.l.b16 %v349
      %v549 = vunpack.c.l.b16 %v350
      %v550 = vunpack.c.l.b16 %v351
      %v551 = vunpack.c.l.b16 %v352
      %v552 = vunpack.c.l.b16 %v353
      %v553 = vunpack.c.l.b16 %v354
      %v554 = vunpack.c.l.b16 %v355
      %v555 = vunpack.c.l.b16 %v356
      %v556 = vunpack.c.l.b16 %v357
      %v557 = vunpack.c.l.b16 %v358
      %v558 = vunpack.c.l.b16 %v359
      %v559 = vunpack.c.l.b16 %v360
      %v560 = vunpack.c.l.b16 %v361
      %v561 = vunpack.c.l.b16 %v362
      %v562 = vunpack.c.l.b16 %v363
      %v563 = vunpack.c.l.b16 %v364
      %v564 = vunpack.c.l.b16 %v365
      %v565 = vunpack.c.l.b16 %v366
      %v566 = vunpack.c.l.b16 %v367
      %v567 = vunpack.c.l.b16 %v368
      %v568 = vunpack.c.l.b16 %v369
      %v569 = vunpack.c.l.b16 %v370
      %v570 = vunpack.c.l.b16 %v371
      %v571 = vunpack.c.l.b16 %v372
      %v572 = vunpack.c.l.b16 %v373
      %v573 = vpack.c.b16 %v542, %v541
      %v574 = vpack.c.b16 %v544, %v543
      %v575 = vpack.c.b16 %v546, %v545
      %v576 = vpack.c.b16 %v548, %v547
      %v577 = vpack.c.b16 %v550, %v549
      %v578 = vpack.c.b16 %v552, %v551
      %v579 = vpack.c.b16 %v554, %v553
      %v580 = vpack.c.b16 %v556, %v555
      %v581 = vpack.c.b16 %v558, %v557
      %v582 = vpack.c.b16 %v560, %v559
      %v583 = vpack.c.b16 %v562, %v561
      %v584 = vpack.c.b16 %v564, %v563
      %v585 = vpack.c.b16 %v566, %v565
      %v586 = vpack.c.b16 %v568, %v567
      %v587 = vpack.c.b16 %v570, %v569
      %v588 = vpack.c.b16 %v572, %v571
      %605 = vmatprep.subr.bf16.mxu0 0
      %606 = vmatpush1.bf16.msra.mxu0 %v573
      %607 = vmatprep.subr.bf16.mxu0 0
      %608 = vmatpush1.bf16.msra.mxu0 %v574
      %609 = vmatprep.subr.bf16.mxu0 0
      %610 = vmatpush1.bf16.msra.mxu0 %v575
      %611 = vmatprep.subr.bf16.mxu0 0
      %612 = vmatpush1.bf16.msra.mxu0 %v576
      %613 = vmatprep.subr.bf16.mxu0 0
      %614 = vmatpush1.bf16.msra.mxu0 %v577
      %615 = vmatprep.subr.bf16.mxu0 0
      %616 = vmatpush1.bf16.msra.mxu0 %v578
      %617 = vmatprep.subr.bf16.mxu0 0
      %618 = vmatpush1.bf16.msra.mxu0 %v579
      %619 = vmatprep.subr.bf16.mxu0 0
      %620 = vmatpush1.bf16.msra.mxu0 %v580
      %621 = vmatprep.subr.bf16.mxu0 0
      %622 = vmatpush1.bf16.msra.mxu0 %v581
      %623 = vmatprep.subr.bf16.mxu0 0
      %624 = vmatpush1.bf16.msra.mxu0 %v582
      %625 = vmatprep.subr.bf16.mxu0 0
      %626 = vmatpush1.bf16.msra.mxu0 %v583
      %627 = vmatprep.subr.bf16.mxu0 0
      %628 = vmatpush1.bf16.msra.mxu0 %v584
      %629 = vmatprep.subr.bf16.mxu0 0
      %630 = vmatpush1.bf16.msra.mxu0 %v585
      %631 = vmatprep.subr.bf16.mxu0 0
      %632 = vmatpush1.bf16.msra.mxu0 %v586
      %633 = vmatprep.subr.bf16.mxu0 0
      %634 = vmatpush1.bf16.msra.mxu0 %v587
      %635 = vmatprep.subr.bf16.mxu0 0
      %636 = vmatpush1.bf16.msra.mxu0 %v588
      %637 = vmatprep.mubr.bf16.mxu0 %v398
      %638 = vmatmul.mubr.bf16.gmra.mrb[0].mxu0 %v386
      %v639 = vpop.f32.mrb[0].mxu0
      %v640 = vadd.f32 0.0, %v639
      %v641 = vpop.f32.mrb[0].mxu0
      %v642 = vpop.f32.mrb[0].mxu0
      %v643 = vadd.f32 0.0, %v642
      %v644 = vpop.f32.mrb[0].mxu0
      %645 = vmatprep.mubr.bf16.mxu0 %v414
      %646 = vmatmul.mubr.bf16.gmra.mrb[0].mxu0 %v406
      %v647 = vpop.f32.mrb[0].mxu0
      %v648 = vadd.f32 0.0, %v647
      %v649 = vpop.f32.mrb[0].mxu0
      %v650 = vpop.f32.mrb[0].mxu0
      %v651 = vadd.f32 0.0, %v650
      %v652 = vpop.f32.mrb[0].mxu0
      %653 = vmatprep.mubr.bf16.mxu0 %v430
      %654 = vmatmul.mubr.bf16.gmra.mrb[0].mxu0 %v422
      %v655 = vpop.f32.mrb[0].mxu0
      %v656 = vadd.f32 0.0, %v655
      %v657 = vpop.f32.mrb[0].mxu0
      %v658 = vpop.f32.mrb[0].mxu0
      %v659 = vadd.f32 0.0, %v658
      %v660 = vpop.f32.mrb[0].mxu0
      %661 = vmatprep.mubr.bf16.mxu0 %v446
      %662 = vmatmul.mubr.bf16.gmra.mrb[0].mxu0 %v438
      %v663 = vpop.f32.mrb[0].mxu0
      %v664 = vadd.f32 0.0, %v663
      %v665 = vpop.f32.mrb[0].mxu0
      %v666 = vpop.f32.mrb[0].mxu0
      %v667 = vadd.f32 0.0, %v666
      %v668 = vpop.f32.mrb[0].mxu0
      %669 = vmatprep.mubr.bf16.mxu0 %v462
      %670 = vmatmul.mubr.bf16.gmra.mrb[0].mxu0 %v454
      %v671 = vpop.f32.mrb[0].mxu0
      %v672 = vadd.f32 0.0, %v671
      %v673 = vpop.f32.mrb[0].mxu0
      %v674 = vpop.f32.mrb[0].mxu0
      %v675 = vadd.f32 0.0, %v674
      %v676 = vpop.f32.mrb[0].mxu0
      %677 = vmatprep.mubr.bf16.mxu0 %v478
      %678 = vmatmul.mubr.bf16.gmra.mrb[0].mxu0 %v470
      %v679 = vpop.f32.mrb[0].mxu0
      %v680 = vadd.f32 0.0, %v679
      %v681 = vpop.f32.mrb[0].mxu0
      %v682 = vpop.f32.mrb[0].mxu0
      %v683 = vadd.f32 0.0, %v682
      %v684 = vpop.f32.mrb[0].mxu0
      %685 = vmatprep.mubr.bf16.mxu0 %v494
      %686 = vmatmul.mubr.bf16.gmra.mrb[0].mxu0 %v486
      %v687 = vpop.f32.mrb[0].mxu0
      %v688 = vadd.f32 0.0, %v687
      %v689 = vpop.f32.mrb[0].mxu0
      %v690 = vpop.f32.mrb[0].mxu0
      %v691 = vadd.f32 0.0, %v690
      %v692 = vpop.f32.mrb[0].mxu0
      %693 = vdwg.mxu0
      %v726 = vunpack.c.l.b16 %v309
      %v727 = vunpack.c.l.b16 %v310
      %v728 = vunpack.c.l.b16 %v311
      %v729 = vunpack.c.l.b16 %v312
      %v730 = vunpack.c.l.b16 %v313
      %v731 = vunpack.c.l.b16 %v314
      %v732 = vunpack.c.l.b16 %v315
      %v733 = vunpack.c.l.b16 %v316
      %v734 = vunpack.c.l.b16 %v317
      %v735 = vunpack.c.l.b16 %v318
      %v736 = vunpack.c.l.b16 %v319
      %v737 = vunpack.c.l.b16 %v320
      %v738 = vunpack.c.l.b16 %v321
      %v739 = vunpack.c.l.b16 %v322
      %v740 = vunpack.c.l.b16 %v323
      %v741 = vunpack.c.l.b16 %v324
      %v742 = vunpack.c.l.b16 %v325
      %v743 = vunpack.c.l.b16 %v326
      %v744 = vunpack.c.l.b16 %v327
      %v745 = vunpack.c.l.b16 %v328
      %v746 = vunpack.c.l.b16 %v329
      %v747 = vunpack.c.l.b16 %v330
      %v748 = vunpack.c.l.b16 %v331
      %v749 = vunpack.c.l.b16 %v332
      %v750 = vunpack.c.l.b16 %v333
      %v751 = vunpack.c.l.b16 %v334
      %v752 = vunpack.c.l.b16 %v335
      %v753 = vunpack.c.l.b16 %v336
      %v754 = vunpack.c.l.b16 %v337
      %v755 = vunpack.c.l.b16 %v338
      %v756 = vunpack.c.l.b16 %v339
      %v757 = vunpack.c.l.b16 %v340
      %v758 = vpack.c.b16 %v727, %v726
      %v759 = vpack.c.b16 %v729, %v728
      %v760 = vpack.c.b16 %v731, %v730
      %v761 = vpack.c.b16 %v733, %v732
      %v762 = vpack.c.b16 %v735, %v734
      %v763 = vpack.c.b16 %v737, %v736
      %v764 = vpack.c.b16 %v739, %v738
      %v765 = vpack.c.b16 %v741, %v740
      %v766 = vpack.c.b16 %v743, %v742
      %v767 = vpack.c.b16 %v745, %v744
      %v768 = vpack.c.b16 %v747, %v746
      %v769 = vpack.c.b16 %v749, %v748
      %v770 = vpack.c.b16 %v751, %v750
      %v771 = vpack.c.b16 %v753, %v752
      %v772 = vpack.c.b16 %v755, %v754
      %v773 = vpack.c.b16 %v757, %v756
      %790 = vmatprep.subr.bf16.mxu0 0
      %791 = vmatpush1.bf16.msra.mxu0 %v758
      %792 = vmatprep.subr.bf16.mxu0 0
      %793 = vmatpush1.bf16.msra.mxu0 %v759
      %794 = vmatprep.subr.bf16.mxu0 0
      %795 = vmatpush1.bf16.msra.mxu0 %v760
      %796 = vmatprep.subr.bf16.mxu0 0
      %797 = vmatpush1.bf16.msra.mxu0 %v761
      %798 = vmatprep.subr.bf16.mxu0 0
      %799 = vmatpush1.bf16.msra.mxu0 %v762
      %800 = vmatprep.subr.bf16.mxu0 0
      %801 = vmatpush1.bf16.msra.mxu0 %v763
      %802 = vmatprep.subr.bf16.mxu0 0
      %803 = vmatpush1.bf16.msra.mxu0 %v764
      %804 = vmatprep.subr.bf16.mxu0 0
      %805 = vmatpush1.bf16.msra.mxu0 %v765
      %806 = vmatprep.subr.bf16.mxu0 0
      %807 = vmatpush1.bf16.msra.mxu0 %v766
      %808 = vmatprep.subr.bf16.mxu0 0
      %809 = vmatpush1.bf16.msra.mxu0 %v767
      %810 = vmatprep.subr.bf16.mxu0 0
      %811 = vmatpush1.bf16.msra.mxu0 %v768
      %812 = vmatprep.subr.bf16.mxu0 0
      %813 = vmatpush1.bf16.msra.mxu0 %v769
      %814 = vmatprep.subr.bf16.mxu0 0
      %815 = vmatpush1.bf16.msra.mxu0 %v770
      %816 = vmatprep.subr.bf16.mxu0 0
      %817 = vmatpush1.bf16.msra.mxu0 %v771
      %818 = vmatprep.subr.bf16.mxu0 0
      %819 = vmatpush1.bf16.msra.mxu0 %v772
      %820 = vmatprep.subr.bf16.mxu0 0
      %821 = vmatpush1.bf16.msra.mxu0 %v773
      %822 = vmatprep.mubr.bf16.mxu0 %v294
      %823 = vmatmul.mubr.bf16.gmra.mrb[0].mxu0 %v293
      %v824 = vpop.f32.mrb[0].mxu0
      %v825 = vadd.f32 %v640, %v824
      %v826 = vpop.f32.mrb[0].mxu0
      %v827 = vpop.f32.mrb[0].mxu0
      %v828 = vadd.f32 %v643, %v827
      %v829 = vpop.f32.mrb[0].mxu0
      %830 = vmatprep.mubr.bf16.mxu0 %v296
      %831 = vmatmul.mubr.bf16.gmra.mrb[0].mxu0 %v295
      %v832 = vpop.f32.mrb[0].mxu0
      %v833 = vadd.f32 %v648, %v832
      %v834 = vpop.f32.mrb[0].mxu0
      %v835 = vpop.f32.mrb[0].mxu0
      %v836 = vadd.f32 %v651, %v835
      %v837 = vpop.f32.mrb[0].mxu0
      %838 = vmatprep.mubr.bf16.mxu0 %v298
      %839 = vmatmul.mubr.bf16.gmra.mrb[0].mxu0 %v297
      %v840 = vpop.f32.mrb[0].mxu0
      %v841 = vadd.f32 %v656, %v840
      %v842 = vpop.f32.mrb[0].mxu0
      %v843 = vpop.f32.mrb[0].mxu0
      %v844 = vadd.f32 %v659, %v843
      %v845 = vpop.f32.mrb[0].mxu0
      %846 = vmatprep.mubr.bf16.mxu0 %v300
      %847 = vmatmul.mubr.bf16.gmra.mrb[0].mxu0 %v299
      %v848 = vpop.f32.mrb[0].mxu0
      %v849 = vadd.f32 %v664, %v848
      %v850 = vpop.f32.mrb[0].mxu0
      %v851 = vpop.f32.mrb[0].mxu0
      %v852 = vadd.f32 %v667, %v851
      %v853 = vpop.f32.mrb[0].mxu0
      %854 = vmatprep.mubr.bf16.mxu0 %v302
      %855 = vmatmul.mubr.bf16.gmra.mrb[0].mxu0 %v301
      %v856 = vpop.f32.mrb[0].mxu0
      %v857 = vadd.f32 %v672, %v856
      %v858 = vpop.f32.mrb[0].mxu0
      %v859 = vpop.f32.mrb[0].mxu0
      %v860 = vadd.f32 %v675, %v859
      %v861 = vpop.f32.mrb[0].mxu0
      %862 = vmatprep.mubr.bf16.mxu0 %v304
      %863 = vmatmul.mubr.bf16.gmra.mrb[0].mxu0 %v303
      %v864 = vpop.f32.mrb[0].mxu0
      %v865 = vadd.f32 %v680, %v864
      %v866 = vpop.f32.mrb[0].mxu0
      %v867 = vpop.f32.mrb[0].mxu0
      %v868 = vadd.f32 %v683, %v867
      %v869 = vpop.f32.mrb[0].mxu0
      %870 = vmatprep.mubr.bf16.mxu0 %v306
      %871 = vmatmul.mubr.bf16.gmra.mrb[0].mxu0 %v305
      %v872 = vpop.f32.mrb[0].mxu0
      %v873 = vadd.f32 %v688, %v872
      %v874 = vpop.f32.mrb[0].mxu0
      %v875 = vpop.f32.mrb[0].mxu0
      %v876 = vadd.f32 %v691, %v875
      %v877 = vpop.f32.mrb[0].mxu0
      %878 = vdwg.mxu0
      %s879 = scalar_lea.vmem %s1, 256
      %v880 = vld [vmem:[%s879] sm:$0xf]
      %v881 = vld [vmem:[%s879 + $0x4] sm:$0xf]
      %v882 = vld [vmem:[%s879 + $0x8] sm:$0xf]
      %v883 = vld [vmem:[%s879 + $0xc] sm:$0xf]
      %v884 = vld [vmem:[%s879 + $0x10] sm:$0xf]
      %v885 = vld [vmem:[%s879 + $0x14] sm:$0xf]
      %v886 = vld [vmem:[%s879 + $0x18] sm:$0xf]
      %v887 = vld [vmem:[%s879 + $0x1c] sm:$0xf]
      %v888 = vld [vmem:[%s879 + $0x20] sm:$0xf]
      %v889 = vld [vmem:[%s879 + $0x24] sm:$0xf]
      %v890 = vld [vmem:[%s879 + $0x28] sm:$0xf]
      %v891 = vld [vmem:[%s879 + $0x2c] sm:$0xf]
      %v892 = vld [vmem:[%s879 + $0x30] sm:$0xf]
      %v893 = vld [vmem:[%s879 + $0x34] sm:$0xf]
      %v894 = vld [vmem:[%s879 + $0x38] sm:$0xf]
      %v895 = vld [vmem:[%s879 + $0x3c] sm:$0xf]
      %v896 = vld [vmem:[%s879 + $0x40] sm:$0xf]
      %v897 = vld [vmem:[%s879 + $0x44] sm:$0xf]
      %v898 = vld [vmem:[%s879 + $0x48] sm:$0xf]
      %v899 = vld [vmem:[%s879 + $0x4c] sm:$0xf]
      %v900 = vld [vmem:[%s879 + $0x50] sm:$0xf]
      %v901 = vld [vmem:[%s879 + $0x54] sm:$0xf]
      %v902 = vld [vmem:[%s879 + $0x58] sm:$0xf]
      %v903 = vld [vmem:[%s879 + $0x5c] sm:$0xf]
      %v904 = vld [vmem:[%s879 + $0x60] sm:$0xf]
      %v905 = vld [vmem:[%s879 + $0x64] sm:$0xf]
      %v906 = vld [vmem:[%s879 + $0x68] sm:$0xf]
      %v907 = vld [vmem:[%s879 + $0x6c] sm:$0xf]
      %v908 = vld [vmem:[%s879 + $0x70] sm:$0xf]
      %v909 = vld [vmem:[%s879 + $0x74] sm:$0xf]
      %v910 = vld [vmem:[%s879 + $0x78] sm:$0xf]
      %v911 = vld [vmem:[%s879 + $0x7c] sm:$0xf]
      %vm912 = vsmask.f32 2304
      %v913 = vrot.slane %v376, 5
      %v914 = vrot.slane %v378, 6
      %v915 = vor.u32 %v913, %v914
      %v916 = vrot.slane %v399, 5
      %v917 = vrot.slane %v383, 6
      %v918 = vor.u32 %v916, %v917
      %v919 = vsel %vm912, %v915, %v918
      %v920 = vrot.slane %v388, 5
      %v921 = vrot.slane %v390, 6
      %v922 = vor.u32 %v920, %v921
      %v923 = vrot.slane %v407, 5
      %v924 = vrot.slane %v395, 6
      %v925 = vor.u32 %v923, %v924
      %v926 = vsel %vm912, %v922, %v925
      %v927 = vrot.slane %v415, 5
      %v928 = vrot.slane %v403, 6
      %v929 = vor.u32 %v927, %v928
      %v930 = vsel %vm912, %v918, %v929
      %v931 = vrot.slane %v423, 5
      %v932 = vrot.slane %v411, 6
      %v933 = vor.u32 %v931, %v932
      %v934 = vsel %vm912, %v925, %v933
      %v935 = vrot.slane %v431, 5
      %v936 = vrot.slane %v419, 6
      %v937 = vor.u32 %v935, %v936
      %v938 = vsel %vm912, %v929, %v937
      %v939 = vrot.slane %v439, 5
      %v940 = vrot.slane %v427, 6
      %v941 = vor.u32 %v939, %v940
      %v942 = vsel %vm912, %v933, %v941
      %v943 = vrot.slane %v447, 5
      %v944 = vrot.slane %v435, 6
      %v945 = vor.u32 %v943, %v944
      %v946 = vsel %vm912, %v937, %v945
      %v947 = vrot.slane %v455, 5
      %v948 = vrot.slane %v443, 6
      %v949 = vor.u32 %v947, %v948
      %v950 = vsel %vm912, %v941, %v949
      %v951 = vrot.slane %v463, 5
      %v952 = vrot.slane %v451, 6
      %v953 = vor.u32 %v951, %v952
      %v954 = vsel %vm912, %v945, %v953
      %v955 = vrot.slane %v471, 5
      %v956 = vrot.slane %v459, 6
      %v957 = vor.u32 %v955, %v956
      %v958 = vsel %vm912, %v949, %v957
      %v959 = vrot.slane %v479, 5
      %v960 = vrot.slane %v467, 6
      %v961 = vor.u32 %v959, %v960
      %v962 = vsel %vm912, %v953, %v961
      %v963 = vrot.slane %v487, 5
      %v964 = vrot.slane %v475, 6
      %v965 = vor.u32 %v963, %v964
      %v966 = vsel %vm912, %v957, %v965
      %v967 = vshrl.u32 %v307, 16
      %v969 = vrot.slane %v967, 5
      %v970 = vrot.slane %v483, 6
      %v971 = vor.u32 %v969, %v970
      %v972 = vsel %vm912, %v961, %v971
      %v973 = vshrl.u32 %v308, 16
      %v975 = vrot.slane %v973, 5
      %v976 = vrot.slane %v491, 6
      %v977 = vor.u32 %v975, %v976
      %v978 = vsel %vm912, %v965, %v977
      %v1025 = vunpack.c.l.b16 %v880
      %v1026 = vunpack.c.l.b16 %v881
      %v1027 = vunpack.c.l.b16 %v882
      %v1028 = vunpack.c.l.b16 %v883
      %v1029 = vunpack.c.l.b16 %v884
      %v1030 = vunpack.c.l.b16 %v885
      %v1031 = vunpack.c.l.b16 %v886
      %v1032 = vunpack.c.l.b16 %v887
      %v1033 = vunpack.c.l.b16 %v888
      %v1034 = vunpack.c.l.b16 %v889
      %v1035 = vunpack.c.l.b16 %v890
      %v1036 = vunpack.c.l.b16 %v891
      %v1037 = vunpack.c.l.b16 %v892
      %v1038 = vunpack.c.l.b16 %v893
      %v1039 = vunpack.c.l.b16 %v894
      %v1040 = vunpack.c.l.b16 %v895
      %v1041 = vunpack.c.l.b16 %v896
      %v1042 = vunpack.c.l.b16 %v897
      %v1043 = vunpack.c.l.b16 %v898
      %v1044 = vunpack.c.l.b16 %v899
      %v1045 = vunpack.c.l.b16 %v900
      %v1046 = vunpack.c.l.b16 %v901
      %v1047 = vunpack.c.l.b16 %v902
      %v1048 = vunpack.c.l.b16 %v903
      %v1049 = vunpack.c.l.b16 %v904
      %v1050 = vunpack.c.l.b16 %v905
      %v1051 = vunpack.c.l.b16 %v906
      %v1052 = vunpack.c.l.b16 %v907
      %v1053 = vunpack.c.l.b16 %v908
      %v1054 = vunpack.c.l.b16 %v909
      %v1055 = vunpack.c.l.b16 %v910
      %v1056 = vunpack.c.l.b16 %v911
      %v1057 = vpack.c.b16 %v1026, %v1025
      %v1058 = vpack.c.b16 %v1028, %v1027
      %v1059 = vpack.c.b16 %v1030, %v1029
      %v1060 = vpack.c.b16 %v1032, %v1031
      %v1061 = vpack.c.b16 %v1034, %v1033
      %v1062 = vpack.c.b16 %v1036, %v1035
      %v1063 = vpack.c.b16 %v1038, %v1037
      %v1064 = vpack.c.b16 %v1040, %v1039
      %v1065 = vpack.c.b16 %v1042, %v1041
      %v1066 = vpack.c.b16 %v1044, %v1043
      %v1067 = vpack.c.b16 %v1046, %v1045
      %v1068 = vpack.c.b16 %v1048, %v1047
      %v1069 = vpack.c.b16 %v1050, %v1049
      %v1070 = vpack.c.b16 %v1052, %v1051
      %v1071 = vpack.c.b16 %v1054, %v1053
      %v1072 = vpack.c.b16 %v1056, %v1055
      %1089 = vmatprep.subr.bf16.mxu0 0
      %1090 = vmatpush1.bf16.msra.mxu0 %v1057
      %1091 = vmatprep.subr.bf16.mxu0 0
      %1092 = vmatpush1.bf16.msra.mxu0 %v1058
      %1093 = vmatprep.subr.bf16.mxu0 0
      %1094 = vmatpush1.bf16.msra.mxu0 %v1059
      %1095 = vmatprep.subr.bf16.mxu0 0
      %1096 = vmatpush1.bf16.msra.mxu0 %v1060
      %1097 = vmatprep.subr.bf16.mxu0 0
      %1098 = vmatpush1.bf16.msra.mxu0 %v1061
      %1099 = vmatprep.subr.bf16.mxu0 0
      %1100 = vmatpush1.bf16.msra.mxu0 %v1062
      %1101 = vmatprep.subr.bf16.mxu0 0
      %1102 = vmatpush1.bf16.msra.mxu0 %v1063
      %1103 = vmatprep.subr.bf16.mxu0 0
      %1104 = vmatpush1.bf16.msra.mxu0 %v1064
      %1105 = vmatprep.subr.bf16.mxu0 0
      %1106 = vmatpush1.bf16.msra.mxu0 %v1065
      %1107 = vmatprep.subr.bf16.mxu0 0
      %1108 = vmatpush1.bf16.msra.mxu0 %v1066
      %1109 = vmatprep.subr.bf16.mxu0 0
      %1110 = vmatpush1.bf16.msra.mxu0 %v1067
      %1111 = vmatprep.subr.bf16.mxu0 0
      %1112 = vmatpush1.bf16.msra.mxu0 %v1068
      %1113 = vmatprep.subr.bf16.mxu0 0
      %1114 = vmatpush1.bf16.msra.mxu0 %v1069
      %1115 = vmatprep.subr.bf16.mxu0 0
      %1116 = vmatpush1.bf16.msra.mxu0 %v1070
      %1117 = vmatprep.subr.bf16.mxu0 0
      %1118 = vmatpush1.bf16.msra.mxu0 %v1071
      %1119 = vmatprep.subr.bf16.mxu0 0
      %1120 = vmatpush1.bf16.msra.mxu0 %v1072
      %1121 = vmatprep.mubr.bf16.mxu0 %v926
      %1122 = vmatmul.mubr.bf16.gmra.mrb[0].mxu0 %v919
      %v1123 = vpop.f32.mrb[0].mxu0
      %v1124 = vadd.f32 0.0, %v1123
      %v1125 = vpop.f32.mrb[0].mxu0
      %v1126 = vpop.f32.mrb[0].mxu0
      %v1127 = vadd.f32 0.0, %v1126
      %v1128 = vpop.f32.mrb[0].mxu0
      %1129 = vmatprep.mubr.bf16.mxu0 %v934
      %1130 = vmatmul.mubr.bf16.gmra.mrb[0].mxu0 %v930
      %v1131 = vpop.f32.mrb[0].mxu0
      %v1132 = vadd.f32 0.0, %v1131
      %v1133 = vpop.f32.mrb[0].mxu0
      %v1134 = vpop.f32.mrb[0].mxu0
      %v1135 = vadd.f32 0.0, %v1134
      %v1136 = vpop.f32.mrb[0].mxu0
      %1137 = vmatprep.mubr.bf16.mxu0 %v942
      %1138 = vmatmul.mubr.bf16.gmra.mrb[0].mxu0 %v938
      %v1139 = vpop.f32.mrb[0].mxu0
      %v1140 = vadd.f32 0.0, %v1139
      %v1141 = vpop.f32.mrb[0].mxu0
      %v1142 = vpop.f32.mrb[0].mxu0
      %v1143 = vadd.f32 0.0, %v1142
      %v1144 = vpop.f32.mrb[0].mxu0
      %1145 = vmatprep.mubr.bf16.mxu0 %v950
      %1146 = vmatmul.mubr.bf16.gmra.mrb[0].mxu0 %v946
      %v1147 = vpop.f32.mrb[0].mxu0
      %v1148 = vadd.f32 0.0, %v1147
      %v1149 = vpop.f32.mrb[0].mxu0
      %v1150 = vpop.f32.mrb[0].mxu0
      %v1151 = vadd.f32 0.0, %v1150
      %v1152 = vpop.f32.mrb[0].mxu0
      %1153 = vmatprep.mubr.bf16.mxu0 %v958
      %1154 = vmatmul.mubr.bf16.gmra.mrb[0].mxu0 %v954
      %v1155 = vpop.f32.mrb[0].mxu0
      %v1156 = vadd.f32 0.0, %v1155
      %v1157 = vpop.f32.mrb[0].mxu0
      %v1158 = vpop.f32.mrb[0].mxu0
      %v1159 = vadd.f32 0.0, %v1158
      %v1160 = vpop.f32.mrb[0].mxu0
      %1161 = vmatprep.mubr.bf16.mxu0 %v966
      %1162 = vmatmul.mubr.bf16.gmra.mrb[0].mxu0 %v962
      %v1163 = vpop.f32.mrb[0].mxu0
      %v1164 = vadd.f32 0.0, %v1163
      %v1165 = vpop.f32.mrb[0].mxu0
      %v1166 = vpop.f32.mrb[0].mxu0
      %v1167 = vadd.f32 0.0, %v1166
      %v1168 = vpop.f32.mrb[0].mxu0
      %1169 = vmatprep.mubr.bf16.mxu0 %v978
      %1170 = vmatmul.mubr.bf16.gmra.mrb[0].mxu0 %v972
      %v1171 = vpop.f32.mrb[0].mxu0
      %v1172 = vadd.f32 0.0, %v1171
      %v1173 = vpop.f32.mrb[0].mxu0
      %v1174 = vpop.f32.mrb[0].mxu0
      %v1175 = vadd.f32 0.0, %v1174
      %v1176 = vpop.f32.mrb[0].mxu0
      %1177 = vdwg.mxu0
      %v1178 = vadd.f32 %v825, %v1124
      %v1179 = vadd.f32 %v828, %v1127
      %v1180 = vadd.f32 %v833, %v1132
      %v1181 = vadd.f32 %v836, %v1135
      %v1182 = vadd.f32 %v841, %v1140
      %v1183 = vadd.f32 %v844, %v1143
      %v1184 = vadd.f32 %v849, %v1148
      %v1185 = vadd.f32 %v852, %v1151
      %v1186 = vadd.f32 %v857, %v1156
      %v1187 = vadd.f32 %v860, %v1159
      %v1188 = vadd.f32 %v865, %v1164
      %v1189 = vadd.f32 %v868, %v1167
      %v1190 = vadd.f32 %v873, %v1172
      %v1191 = vadd.f32 %v876, %v1175
      %s1192 = scalar_lea.vmem %s1, 384
      %v1193 = vld [vmem:[%s1192] sm:$0xf]
      %v1194 = vld [vmem:[%s1192 + $0x4] sm:$0xf]
      %v1195 = vld [vmem:[%s1192 + $0x8] sm:$0xf]
      %v1196 = vld [vmem:[%s1192 + $0xc] sm:$0xf]
      %v1197 = vld [vmem:[%s1192 + $0x10] sm:$0xf]
      %v1198 = vld [vmem:[%s1192 + $0x14] sm:$0xf]
      %v1199 = vld [vmem:[%s1192 + $0x18] sm:$0xf]
      %v1200 = vld [vmem:[%s1192 + $0x1c] sm:$0xf]
      %v1201 = vld [vmem:[%s1192 + $0x20] sm:$0xf]
      %v1202 = vld [vmem:[%s1192 + $0x24] sm:$0xf]
      %v1203 = vld [vmem:[%s1192 + $0x28] sm:$0xf]
      %v1204 = vld [vmem:[%s1192 + $0x2c] sm:$0xf]
      %v1205 = vld [vmem:[%s1192 + $0x30] sm:$0xf]
      %v1206 = vld [vmem:[%s1192 + $0x34] sm:$0xf]
      %v1207 = vld [vmem:[%s1192 + $0x38] sm:$0xf]
      %v1208 = vld [vmem:[%s1192 + $0x3c] sm:$0xf]
      %v1209 = vld [vmem:[%s1192 + $0x40] sm:$0xf]
      %v1210 = vld [vmem:[%s1192 + $0x44] sm:$0xf]
      %v1211 = vld [vmem:[%s1192 + $0x48] sm:$0xf]
      %v1212 = vld [vmem:[%s1192 + $0x4c] sm:$0xf]
      %v1213 = vld [vmem:[%s1192 + $0x50] sm:$0xf]
      %v1214 = vld [vmem:[%s1192 + $0x54] sm:$0xf]
      %v1215 = vld [vmem:[%s1192 + $0x58] sm:$0xf]
      %v1216 = vld [vmem:[%s1192 + $0x5c] sm:$0xf]
      %v1217 = vld [vmem:[%s1192 + $0x60] sm:$0xf]
      %v1218 = vld [vmem:[%s1192 + $0x64] sm:$0xf]
      %v1219 = vld [vmem:[%s1192 + $0x68] sm:$0xf]
      %v1220 = vld [vmem:[%s1192 + $0x6c] sm:$0xf]
      %v1221 = vld [vmem:[%s1192 + $0x70] sm:$0xf]
      %v1222 = vld [vmem:[%s1192 + $0x74] sm:$0xf]
      %v1223 = vld [vmem:[%s1192 + $0x78] sm:$0xf]
      %v1224 = vld [vmem:[%s1192 + $0x7c] sm:$0xf]
      %vm1241 = vcmask 1041408
      %v1242 = vrot.slane %v293, 6
      %v1243 = vrot.slane %v295, 6
      %v1244 = vsel %vm1241, %v1242, %v1243
      %v1245 = vrot.slane %v294, 6
      %v1246 = vrot.slane %v296, 6
      %v1247 = vsel %vm1241, %v1245, %v1246
      %v1248 = vrot.slane %v297, 6
      %v1249 = vsel %vm1241, %v1243, %v1248
      %v1250 = vrot.slane %v298, 6
      %v1251 = vsel %vm1241, %v1246, %v1250
      %v1252 = vrot.slane %v299, 6
      %v1253 = vsel %vm1241, %v1248, %v1252
      %v1254 = vrot.slane %v300, 6
      %v1255 = vsel %vm1241, %v1250, %v1254
      %v1256 = vrot.slane %v301, 6
      %v1257 = vsel %vm1241, %v1252, %v1256
      %v1258 = vrot.slane %v302, 6
      %v1259 = vsel %vm1241, %v1254, %v1258
      %v1260 = vrot.slane %v303, 6
      %v1261 = vsel %vm1241, %v1256, %v1260
      %v1262 = vrot.slane %v304, 6
      %v1263 = vsel %vm1241, %v1258, %v1262
      %v1264 = vrot.slane %v305, 6
      %v1265 = vsel %vm1241, %v1260, %v1264
      %v1266 = vrot.slane %v306, 6
      %v1267 = vsel %vm1241, %v1262, %v1266
      %v1268 = vrot.slane %v307, 6
      %v1269 = vsel %vm1241, %v1264, %v1268
      %v1270 = vrot.slane %v308, 6
      %v1271 = vsel %vm1241, %v1266, %v1270
      %v1318 = vunpack.c.l.b16 %v1193
      %v1319 = vunpack.c.l.b16 %v1194
      %v1320 = vunpack.c.l.b16 %v1195
      %v1321 = vunpack.c.l.b16 %v1196
      %v1322 = vunpack.c.l.b16 %v1197
      %v1323 = vunpack.c.l.b16 %v1198
      %v1324 = vunpack.c.l.b16 %v1199
      %v1325 = vunpack.c.l.b16 %v1200
      %v1326 = vunpack.c.l.b16 %v1201
      %v1327 = vunpack.c.l.b16 %v1202
      %v1328 = vunpack.c.l.b16 %v1203
      %v1329 = vunpack.c.l.b16 %v1204
      %v1330 = vunpack.c.l.b16 %v1205
      %v1331 = vunpack.c.l.b16 %v1206
      %v1332 = vunpack.c.l.b16 %v1207
      %v1333 = vunpack.c.l.b16 %v1208
      %v1334 = vunpack.c.l.b16 %v1209
      %v1335 = vunpack.c.l.b16 %v1210
      %v1336 = vunpack.c.l.b16 %v1211
      %v1337 = vunpack.c.l.b16 %v1212
      %v1338 = vunpack.c.l.b16 %v1213
      %v1339 = vunpack.c.l.b16 %v1214
      %v1340 = vunpack.c.l.b16 %v1215
      %v1341 = vunpack.c.l.b16 %v1216
      %v1342 = vunpack.c.l.b16 %v1217
      %v1343 = vunpack.c.l.b16 %v1218
      %v1344 = vunpack.c.l.b16 %v1219
      %v1345 = vunpack.c.l.b16 %v1220
      %v1346 = vunpack.c.l.b16 %v1221
      %v1347 = vunpack.c.l.b16 %v1222
      %v1348 = vunpack.c.l.b16 %v1223
      %v1349 = vunpack.c.l.b16 %v1224
      %v1350 = vpack.c.b16 %v1319, %v1318
      %v1351 = vpack.c.b16 %v1321, %v1320
      %v1352 = vpack.c.b16 %v1323, %v1322
      %v1353 = vpack.c.b16 %v1325, %v1324
      %v1354 = vpack.c.b16 %v1327, %v1326
      %v1355 = vpack.c.b16 %v1329, %v1328
      %v1356 = vpack.c.b16 %v1331, %v1330
      %v1357 = vpack.c.b16 %v1333, %v1332
      %v1358 = vpack.c.b16 %v1335, %v1334
      %v1359 = vpack.c.b16 %v1337, %v1336
      %v1360 = vpack.c.b16 %v1339, %v1338
      %v1361 = vpack.c.b16 %v1341, %v1340
      %v1362 = vpack.c.b16 %v1343, %v1342
      %v1363 = vpack.c.b16 %v1345, %v1344
      %v1364 = vpack.c.b16 %v1347, %v1346
      %v1365 = vpack.c.b16 %v1349, %v1348
      %1382 = vmatprep.subr.bf16.mxu0 0
      %1383 = vmatpush1.bf16.msra.mxu0 %v1350
      %1384 = vmatprep.subr.bf16.mxu0 0
      %1385 = vmatpush1.bf16.msra.mxu0 %v1351
      %1386 = vmatprep.subr.bf16.mxu0 0
      %1387 = vmatpush1.bf16.msra.mxu0 %v1352
      %1388 = vmatprep.subr.bf16.mxu0 0
      %1389 = vmatpush1.bf16.msra.mxu0 %v1353
      %1390 = vmatprep.subr.bf16.mxu0 0
      %1391 = vmatpush1.bf16.msra.mxu0 %v1354
      %1392 = vmatprep.subr.bf16.mxu0 0
      %1393 = vmatpush1.bf16.msra.mxu0 %v1355
      %1394 = vmatprep.subr.bf16.mxu0 0
      %1395 = vmatpush1.bf16.msra.mxu0 %v1356
      %1396 = vmatprep.subr.bf16.mxu0 0
      %1397 = vmatpush1.bf16.msra.mxu0 %v1357
      %1398 = vmatprep.subr.bf16.mxu0 0
      %1399 = vmatpush1.bf16.msra.mxu0 %v1358
      %1400 = vmatprep.subr.bf16.mxu0 0
      %1401 = vmatpush1.bf16.msra.mxu0 %v1359
      %1402 = vmatprep.subr.bf16.mxu0 0
      %1403 = vmatpush1.bf16.msra.mxu0 %v1360
      %1404 = vmatprep.subr.bf16.mxu0 0
      %1405 = vmatpush1.bf16.msra.mxu0 %v1361
      %1406 = vmatprep.subr.bf16.mxu0 0
      %1407 = vmatpush1.bf16.msra.mxu0 %v1362
      %1408 = vmatprep.subr.bf16.mxu0 0
      %1409 = vmatpush1.bf16.msra.mxu0 %v1363
      %1410 = vmatprep.subr.bf16.mxu0 0
      %1411 = vmatpush1.bf16.msra.mxu0 %v1364
      %1412 = vmatprep.subr.bf16.mxu0 0
      %1413 = vmatpush1.bf16.msra.mxu0 %v1365
      %1414 = vmatprep.mubr.bf16.mxu0 %v1247
      %1415 = vmatmul.mubr.bf16.gmra.mrb[0].mxu0 %v1244
      %v1416 = vpop.f32.mrb[0].mxu0
      %v1417 = vadd.f32 0.0, %v1416
      %v1418 = vpop.f32.mrb[0].mxu0
      %v1419 = vpop.f32.mrb[0].mxu0
      %v1420 = vadd.f32 0.0, %v1419
      %v1421 = vpop.f32.mrb[0].mxu0
      %1422 = vmatprep.mubr.bf16.mxu0 %v1251
      %1423 = vmatmul.mubr.bf16.gmra.mrb[0].mxu0 %v1249
      %v1424 = vpop.f32.mrb[0].mxu0
      %v1425 = vadd.f32 0.0, %v1424
      %v1426 = vpop.f32.mrb[0].mxu0
      %v1427 = vpop.f32.mrb[0].mxu0
      %v1428 = vadd.f32 0.0, %v1427
      %v1429 = vpop.f32.mrb[0].mxu0
      %1430 = vmatprep.mubr.bf16.mxu0 %v1255
      %1431 = vmatmul.mubr.bf16.gmra.mrb[0].mxu0 %v1253
      %v1432 = vpop.f32.mrb[0].mxu0
      %v1433 = vadd.f32 0.0, %v1432
      %v1434 = vpop.f32.mrb[0].mxu0
      %v1435 = vpop.f32.mrb[0].mxu0
      %v1436 = vadd.f32 0.0, %v1435
      %v1437 = vpop.f32.mrb[0].mxu0
      %1438 = vmatprep.mubr.bf16.mxu0 %v1259
      %1439 = vmatmul.mubr.bf16.gmra.mrb[0].mxu0 %v1257
      %v1440 = vpop.f32.mrb[0].mxu0
      %v1441 = vadd.f32 0.0, %v1440
      %v1442 = vpop.f32.mrb[0].mxu0
      %v1443 = vpop.f32.mrb[0].mxu0
      %v1444 = vadd.f32 0.0, %v1443
      %v1445 = vpop.f32.mrb[0].mxu0
      %1446 = vmatprep.mubr.bf16.mxu0 %v1263
      %1447 = vmatmul.mubr.bf16.gmra.mrb[0].mxu0 %v1261
      %v1448 = vpop.f32.mrb[0].mxu0
      %v1449 = vadd.f32 0.0, %v1448
      %v1450 = vpop.f32.mrb[0].mxu0
      %v1451 = vpop.f32.mrb[0].mxu0
      %v1452 = vadd.f32 0.0, %v1451
      %v1453 = vpop.f32.mrb[0].mxu0
      %1454 = vmatprep.mubr.bf16.mxu0 %v1267
      %1455 = vmatmul.mubr.bf16.gmra.mrb[0].mxu0 %v1265
      %v1456 = vpop.f32.mrb[0].mxu0
      %v1457 = vadd.f32 0.0, %v1456
      %v1458 = vpop.f32.mrb[0].mxu0
      %v1459 = vpop.f32.mrb[0].mxu0
      %v1460 = vadd.f32 0.0, %v1459
      %v1461 = vpop.f32.mrb[0].mxu0
      %1462 = vmatprep.mubr.bf16.mxu0 %v1271
      %1463 = vmatmul.mubr.bf16.gmra.mrb[0].mxu0 %v1269
      %v1464 = vpop.f32.mrb[0].mxu0
      %v1465 = vadd.f32 0.0, %v1464
      %v1466 = vpop.f32.mrb[0].mxu0
      %v1467 = vpop.f32.mrb[0].mxu0
      %v1468 = vadd.f32 0.0, %v1467
      %v1469 = vpop.f32.mrb[0].mxu0
      %1470 = vdwg.mxu0
      %v1471 = vadd.f32 %v1178, %v1417
      %v1472 = vadd.f32 %v1179, %v1420
      %v1473 = vadd.f32 %v1180, %v1425
      %v1474 = vadd.f32 %v1181, %v1428
      %v1475 = vadd.f32 %v1182, %v1433
      %v1476 = vadd.f32 %v1183, %v1436
      %v1477 = vadd.f32 %v1184, %v1441
      %v1478 = vadd.f32 %v1185, %v1444
      %v1479 = vadd.f32 %v1186, %v1449
      %v1480 = vadd.f32 %v1187, %v1452
      %v1481 = vadd.f32 %v1188, %v1457
      %v1482 = vadd.f32 %v1189, %v1460
      %v1483 = vadd.f32 %v1190, %v1465
      %v1484 = vadd.f32 %v1191, %v1468
      %v1485 = vld [vmem:[%s2] sm:$0x1]
      %v1487 = vlaneseq
      %v1488 = vshrl.u32 %v1487, 7
      %v1489 = vsub.s32 0, %v1488
      %v1490 = vrot.slane %v1485, %v1489
      %v1492 = vadd.f32 %v1471, %v1490
      %v1493 = vadd.f32 %v1472, %v1490
      %v1494 = vadd.f32 %v1473, %v1490
      %v1495 = vadd.f32 %v1474, %v1490
      %v1496 = vadd.f32 %v1475, %v1490
      %v1497 = vadd.f32 %v1476, %v1490
      %v1498 = vadd.f32 %v1477, %v1490
      %v1499 = vadd.f32 %v1478, %v1490
      %v1500 = vadd.f32 %v1479, %v1490
      %v1501 = vadd.f32 %v1480, %v1490
      %v1502 = vadd.f32 %v1481, %v1490
      %v1503 = vadd.f32 %v1482, %v1490
      %v1504 = vadd.f32 %v1483, %v1490
      %v1505 = vadd.f32 %v1484, %v1490
      %v1506 = vmax.f32 %v1492, 0.0
      %v1507 = vmax.f32 %v1493, 0.0
      %v1508 = vmax.f32 %v1494, 0.0
      %v1509 = vmax.f32 %v1495, 0.0
      %v1510 = vmax.f32 %v1496, 0.0
      %v1511 = vmax.f32 %v1497, 0.0
      %v1512 = vmax.f32 %v1498, 0.0
      %v1513 = vmax.f32 %v1499, 0.0
      %v1514 = vmax.f32 %v1500, 0.0
      %v1515 = vmax.f32 %v1501, 0.0
      %v1516 = vmax.f32 %v1502, 0.0
      %v1517 = vmax.f32 %v1503, 0.0
      %v1518 = vmax.f32 %v1504, 0.0
      %v1519 = vmax.f32 %v1505, 0.0
      %v1520 = vpack.c.bf16 %v1507, %v1506
      %v1521 = vpack.c.bf16 %v1509, %v1508
      %v1522 = vpack.c.bf16 %v1511, %v1510
      %v1523 = vpack.c.bf16 %v1513, %v1512
      %v1524 = vpack.c.bf16 %v1515, %v1514
      %v1525 = vpack.c.bf16 %v1517, %v1516
      %v1526 = vpack.c.bf16 %v1519, %v1518
      %1527 = vst [vmem:[#allocation2] sm:$0xff] %v1520
      %1528 = vst [vmem:[#allocation2 + $0x8] sm:$0xff] %v1521
      %1529 = vst [vmem:[#allocation2 + $0x10] sm:$0xff] %v1522
      %1530 = vst [vmem:[#allocation2 + $0x18] sm:$0xff] %v1523
      %1531 = vst [vmem:[#allocation2 + $0x20] sm:$0xff] %v1524
      %1532 = vst [vmem:[#allocation2 + $0x28] sm:$0xff] %v1525
      %1533 = vst [vmem:[#allocation2 + $0x30] sm:$0xff] %v1526
      %v1534 = vld [vmem:[#allocation2] sm:$0xff]
      %v1535 = vld [vmem:[#allocation2 + $0x8] sm:$0xff]
      %v1536 = vld [vmem:[#allocation2 + $0x10] sm:$0xff]
      %v1537 = vld [vmem:[#allocation2 + $0x18] sm:$0xff]
      %v1538 = vld [vmem:[#allocation2 + $0x20] sm:$0xff]
      %v1539 = vld [vmem:[#allocation2 + $0x28] sm:$0xff]
      %v1540 = vld [vmem:[#allocation2 + $0x30] sm:$0xff]
      %v1541 = vld [vmem:[%s3] sm:$0xf]
      %v1542 = vld [vmem:[%s3 + $0x4] sm:$0xf]
      %v1543 = vld [vmem:[%s3 + $0x8] sm:$0xf]
      %v1544 = vld [vmem:[%s3 + $0xc] sm:$0xf]
      %v1545 = vld [vmem:[%s3 + $0x10] sm:$0xf]
      %v1546 = vld [vmem:[%s3 + $0x14] sm:$0xf]
      %v1547 = vld [vmem:[%s3 + $0x18] sm:$0xf]
      %v1548 = vld [vmem:[%s3 + $0x1c] sm:$0xf]
      %v1549 = vld [vmem:[%s3 + $0x20] sm:$0xf]
      %v1550 = vld [vmem:[%s3 + $0x24] sm:$0xf]
      %v1551 = vld [vmem:[%s3 + $0x28] sm:$0xf]
      %v1552 = vld [vmem:[%s3 + $0x2c] sm:$0xf]
      %v1553 = vld [vmem:[%s3 + $0x30] sm:$0xf]
      %v1554 = vld [vmem:[%s3 + $0x34] sm:$0xf]
      %v1555 = vld [vmem:[%s3 + $0x38] sm:$0xf]
      %v1556 = vld [vmem:[%s3 + $0x3c] sm:$0xf]
      %v1557 = vld [vmem:[#allocation2] sm:$0xff]
      %v1558 = vld [vmem:[#allocation2 + $0x8] sm:$0xff]
      %v1559 = vld [vmem:[#allocation2 + $0x10] sm:$0xff]
      %v1560 = vld [vmem:[#allocation2 + $0x18] sm:$0xff]
      %v1561 = vld [vmem:[#allocation2 + $0x20] sm:$0xff]
      %v1562 = vld [vmem:[#allocation2 + $0x28] sm:$0xff]
      %v1563 = vld [vmem:[#allocation2 + $0x30] sm:$0xff]
      %v1564 = vld [vmem:[#allocation2 + $0x38] sm:$0x1]
      %s1565 = scalar_lea.vmem %s3, 64
      %v1566 = vld [vmem:[%s1565] sm:$0xf]
      %v1567 = vld [vmem:[%s1565 + $0x4] sm:$0xf]
      %v1568 = vld [vmem:[%s1565 + $0x8] sm:$0xf]
      %v1569 = vld [vmem:[%s1565 + $0xc] sm:$0xf]
      %v1570 = vld [vmem:[%s1565 + $0x10] sm:$0xf]
      %v1571 = vld [vmem:[%s1565 + $0x14] sm:$0xf]
      %v1572 = vld [vmem:[%s1565 + $0x18] sm:$0xf]
      %v1573 = vld [vmem:[%s1565 + $0x1c] sm:$0xf]
      %v1574 = vld [vmem:[%s1565 + $0x20] sm:$0xf]
      %v1575 = vld [vmem:[%s1565 + $0x24] sm:$0xf]
      %v1576 = vld [vmem:[%s1565 + $0x28] sm:$0xf]
      %v1577 = vld [vmem:[%s1565 + $0x2c] sm:$0xf]
      %v1578 = vld [vmem:[%s1565 + $0x30] sm:$0xf]
      %v1579 = vld [vmem:[%s1565 + $0x34] sm:$0xf]
      %v1580 = vld [vmem:[%s1565 + $0x38] sm:$0xf]
      %v1581 = vld [vmem:[%s1565 + $0x3c] sm:$0xf]
      %v1583 = vshrl.u32 %v1557, 16
      %v1585 = vshll.u32 %v1557, 16
      %v1587 = vrot.slane %v1585, 1
      %v1588 = vor.u32 %v1583, %v1587
      %v1590 = vshll.u32 %v1558, 16
      %v1592 = vrot.slane %v1590, 1
      %v1593 = vsel %vm374, %v1588, %v1592
      %v1594 = vshrl.u32 %v1558, 16
      %v1596 = vor.u32 %v1594, %v1592
      %v1598 = vshll.u32 %v1559, 16
      %v1600 = vrot.slane %v1598, 1
      %v1601 = vsel %vm374, %v1596, %v1600
      %v1602 = vshrl.u32 %v1559, 16
      %v1604 = vor.u32 %v1602, %v1600
      %v1606 = vshll.u32 %v1560, 16
      %v1608 = vrot.slane %v1606, 1
      %v1609 = vsel %vm374, %v1604, %v1608
      %v1610 = vshrl.u32 %v1560, 16
      %v1612 = vor.u32 %v1610, %v1608
      %v1614 = vshll.u32 %v1561, 16
      %v1616 = vrot.slane %v1614, 1
      %v1617 = vsel %vm374, %v1612, %v1616
      %v1618 = vshrl.u32 %v1561, 16
      %v1620 = vor.u32 %v1618, %v1616
      %v1622 = vshll.u32 %v1562, 16
      %v1624 = vrot.slane %v1622, 1
      %v1625 = vsel %vm374, %v1620, %v1624
      %v1626 = vshrl.u32 %v1562, 16
      %v1628 = vor.u32 %v1626, %v1624
      %v1630 = vshll.u32 %v1563, 16
      %v1632 = vrot.slane %v1630, 1
      %v1633 = vsel %vm374, %v1628, %v1632
      %v1634 = vshrl.u32 %v1563, 16
      %v1636 = vor.u32 %v1634, %v1632
      %v1638 = vshll.u32 %v1564, 16
      %v1640 = vrot.slane %v1638, 1
      %v1641 = vsel %vm374, %v1636, %v1640
      %v1665 = vunpack.c.l.b16 %v1566
      %v1666 = vunpack.c.l.b16 %v1567
      %v1667 = vunpack.c.l.b16 %v1568
      %v1668 = vunpack.c.l.b16 %v1569
      %v1669 = vunpack.c.l.b16 %v1570
      %v1670 = vunpack.c.l.b16 %v1571
      %v1671 = vunpack.c.l.b16 %v1572
      %v1672 = vunpack.c.l.b16 %v1573
      %v1673 = vunpack.c.l.b16 %v1574
      %v1674 = vunpack.c.l.b16 %v1575
      %v1675 = vunpack.c.l.b16 %v1576
      %v1676 = vunpack.c.l.b16 %v1577
      %v1677 = vunpack.c.l.b16 %v1578
      %v1678 = vunpack.c.l.b16 %v1579
      %v1679 = vunpack.c.l.b16 %v1580
      %v1680 = vunpack.c.l.b16 %v1581
      %v1681 = vpack.c.b16 %v1666, %v1665
      %v1682 = vpack.c.b16 %v1668, %v1667
      %v1683 = vpack.c.b16 %v1670, %v1669
      %v1684 = vpack.c.b16 %v1672, %v1671
      %v1685 = vpack.c.b16 %v1674, %v1673
      %v1686 = vpack.c.b16 %v1676, %v1675
      %v1687 = vpack.c.b16 %v1678, %v1677
      %v1688 = vpack.c.b16 %v1680, %v1679
      %1697 = vmatprep.subr.bf16.mxu0 0
      %1698 = vmatpush1.bf16.msra.mxu0 %v1681
      %1699 = vmatprep.subr.bf16.mxu0 0
      %1700 = vmatpush1.bf16.msra.mxu0 %v1682
      %1701 = vmatprep.subr.bf16.mxu0 0
      %1702 = vmatpush1.bf16.msra.mxu0 %v1683
      %1703 = vmatprep.subr.bf16.mxu0 0
      %1704 = vmatpush1.bf16.msra.mxu0 %v1684
      %1705 = vmatprep.subr.bf16.mxu0 0
      %1706 = vmatpush1.bf16.msra.mxu0 %v1685
      %1707 = vmatprep.subr.bf16.mxu0 0
      %1708 = vmatpush1.bf16.msra.mxu0 %v1686
      %1709 = vmatprep.subr.bf16.mxu0 0
      %1710 = vmatpush1.bf16.msra.mxu0 %v1687
      %1711 = vmatprep.subr.bf16.mxu0 0
      %1712 = vmatpush1.bf16.msra.mxu0 %v1688
      %1713 = vmatprep.subr.bf16.mxu0 0
      %1714 = vmatpush1.bf16.msra.mxu0 0
      %1715 = vmatprep.subr.bf16.mxu0 0
      %1716 = vmatpush1.bf16.msra.mxu0 0
      %1717 = vmatprep.subr.bf16.mxu0 0
      %1718 = vmatpush1.bf16.msra.mxu0 0
      %1719 = vmatprep.subr.bf16.mxu0 0
      %1720 = vmatpush1.bf16.msra.mxu0 0
      %1721 = vmatprep.subr.bf16.mxu0 0
      %1722 = vmatpush1.bf16.msra.mxu0 0
      %1723 = vmatprep.subr.bf16.mxu0 0
      %1724 = vmatpush1.bf16.msra.mxu0 0
      %1725 = vmatprep.subr.bf16.mxu0 0
      %1726 = vmatpush1.bf16.msra.mxu0 0
      %1727 = vmatprep.subr.bf16.mxu0 0
      %1728 = vmatpush1.bf16.msra.mxu0 0
      %1729 = vmatprep.mubr.bf16.mxu0 0
      %1730 = vmatmul.mubr.bf16.gmra.mrb[0].mxu0 %v1593
      %v1731 = vpop.f32.mrb[0].mxu0
      %v1732 = vadd.f32 0.0, %v1731
      %v1733 = vpop.f32.mrb[0].mxu0
      %v1734 = vpop.f32.mrb[0].mxu0
      %v1735 = vadd.f32 0.0, %v1734
      %v1736 = vpop.f32.mrb[0].mxu0
      %1737 = vmatprep.mubr.bf16.mxu0 0
      %1738 = vmatmul.mubr.bf16.gmra.mrb[0].mxu0 %v1601
      %v1739 = vpop.f32.mrb[0].mxu0
      %v1740 = vadd.f32 0.0, %v1739
      %v1741 = vpop.f32.mrb[0].mxu0
      %v1742 = vpop.f32.mrb[0].mxu0
      %v1743 = vadd.f32 0.0, %v1742
      %v1744 = vpop.f32.mrb[0].mxu0
      %1745 = vmatprep.mubr.bf16.mxu0 0
      %1746 = vmatmul.mubr.bf16.gmra.mrb[0].mxu0 %v1609
      %v1747 = vpop.f32.mrb[0].mxu0
      %v1748 = vadd.f32 0.0, %v1747
      %v1749 = vpop.f32.mrb[0].mxu0
      %v1750 = vpop.f32.mrb[0].mxu0
      %v1751 = vadd.f32 0.0, %v1750
      %v1752 = vpop.f32.mrb[0].mxu0
      %1753 = vmatprep.mubr.bf16.mxu0 0
      %1754 = vmatmul.mubr.bf16.gmra.mrb[0].mxu0 %v1617
      %v1755 = vpop.f32.mrb[0].mxu0
      %v1756 = vadd.f32 0.0, %v1755
      %v1757 = vpop.f32.mrb[0].mxu0
      %v1758 = vpop.f32.mrb[0].mxu0
      %v1759 = vadd.f32 0.0, %v1758
      %v1760 = vpop.f32.mrb[0].mxu0
      %1761 = vmatprep.mubr.bf16.mxu0 0
      %1762 = vmatmul.mubr.bf16.gmra.mrb[0].mxu0 %v1625
      %v1763 = vpop.f32.mrb[0].mxu0
      %v1764 = vadd.f32 0.0, %v1763
      %v1765 = vpop.f32.mrb[0].mxu0
      %v1766 = vpop.f32.mrb[0].mxu0
      %v1767 = vadd.f32 0.0, %v1766
      %v1768 = vpop.f32.mrb[0].mxu0
      %1769 = vmatprep.mubr.bf16.mxu0 0
      %1770 = vmatmul.mubr.bf16.gmra.mrb[0].mxu0 %v1633
      %v1771 = vpop.f32.mrb[0].mxu0
      %v1772 = vadd.f32 0.0, %v1771
      %v1773 = vpop.f32.mrb[0].mxu0
      %v1774 = vpop.f32.mrb[0].mxu0
      %v1775 = vadd.f32 0.0, %v1774
      %v1776 = vpop.f32.mrb[0].mxu0
      %1777 = vmatprep.mubr.bf16.mxu0 0
      %1778 = vmatmul.mubr.bf16.gmra.mrb[0].mxu0 %v1641
      %v1779 = vpop.f32.mrb[0].mxu0
      %v1780 = vadd.f32 0.0, %v1779
      %v1781 = vpop.f32.mrb[0].mxu0
      %v1782 = vpop.f32.mrb[0].mxu0
      %v1783 = vadd.f32 0.0, %v1782
      %v1784 = vpop.f32.mrb[0].mxu0
      %1785 = vdwg.mxu0
      %v1802 = vunpack.c.l.b16 %v1541
      %v1803 = vunpack.c.l.b16 %v1542
      %v1804 = vunpack.c.l.b16 %v1543
      %v1805 = vunpack.c.l.b16 %v1544
      %v1806 = vunpack.c.l.b16 %v1545
      %v1807 = vunpack.c.l.b16 %v1546
      %v1808 = vunpack.c.l.b16 %v1547
      %v1809 = vunpack.c.l.b16 %v1548
      %v1810 = vunpack.c.l.b16 %v1549
      %v1811 = vunpack.c.l.b16 %v1550
      %v1812 = vunpack.c.l.b16 %v1551
      %v1813 = vunpack.c.l.b16 %v1552
      %v1814 = vunpack.c.l.b16 %v1553
      %v1815 = vunpack.c.l.b16 %v1554
      %v1816 = vunpack.c.l.b16 %v1555
      %v1817 = vunpack.c.l.b16 %v1556
      %v1818 = vpack.c.b16 %v1803, %v1802
      %v1819 = vpack.c.b16 %v1805, %v1804
      %v1820 = vpack.c.b16 %v1807, %v1806
      %v1821 = vpack.c.b16 %v1809, %v1808
      %v1822 = vpack.c.b16 %v1811, %v1810
      %v1823 = vpack.c.b16 %v1813, %v1812
      %v1824 = vpack.c.b16 %v1815, %v1814
      %v1825 = vpack.c.b16 %v1817, %v1816
      %1834 = vmatprep.subr.bf16.mxu0 0
      %1835 = vmatpush1.bf16.msra.mxu0 %v1818
      %1836 = vmatprep.subr.bf16.mxu0 0
      %1837 = vmatpush1.bf16.msra.mxu0 %v1819
      %1838 = vmatprep.subr.bf16.mxu0 0
      %1839 = vmatpush1.bf16.msra.mxu0 %v1820
      %1840 = vmatprep.subr.bf16.mxu0 0
      %1841 = vmatpush1.bf16.msra.mxu0 %v1821
      %1842 = vmatprep.subr.bf16.mxu0 0
      %1843 = vmatpush1.bf16.msra.mxu0 %v1822
      %1844 = vmatprep.subr.bf16.mxu0 0
      %1845 = vmatpush1.bf16.msra.mxu0 %v1823
      %1846 = vmatprep.subr.bf16.mxu0 0
      %1847 = vmatpush1.bf16.msra.mxu0 %v1824
      %1848 = vmatprep.subr.bf16.mxu0 0
      %1849 = vmatpush1.bf16.msra.mxu0 %v1825
      %1850 = vmatprep.subr.bf16.mxu0 0
      %1851 = vmatpush1.bf16.msra.mxu0 0
      %1852 = vmatprep.subr.bf16.mxu0 0
      %1853 = vmatpush1.bf16.msra.mxu0 0
      %1854 = vmatprep.subr.bf16.mxu0 0
      %1855 = vmatpush1.bf16.msra.mxu0 0
      %1856 = vmatprep.subr.bf16.mxu0 0
      %1857 = vmatpush1.bf16.msra.mxu0 0
      %1858 = vmatprep.subr.bf16.mxu0 0
      %1859 = vmatpush1.bf16.msra.mxu0 0
      %1860 = vmatprep.subr.bf16.mxu0 0
      %1861 = vmatpush1.bf16.msra.mxu0 0
      %1862 = vmatprep.subr.bf16.mxu0 0
      %1863 = vmatpush1.bf16.msra.mxu0 0
      %1864 = vmatprep.subr.bf16.mxu0 0
      %1865 = vmatpush1.bf16.msra.mxu0 0
      %1866 = vmatprep.mubr.bf16.mxu0 0
      %1867 = vmatmul.mubr.bf16.gmra.mrb[0].mxu0 %v1534
      %v1868 = vpop.f32.mrb[0].mxu0
      %v1869 = vadd.f32 %v1732, %v1868
      %v1870 = vpop.f32.mrb[0].mxu0
      %v1871 = vpop.f32.mrb[0].mxu0
      %v1872 = vadd.f32 %v1735, %v1871
      %v1873 = vpop.f32.mrb[0].mxu0
      %1874 = vmatprep.mubr.bf16.mxu0 0
      %1875 = vmatmul.mubr.bf16.gmra.mrb[0].mxu0 %v1535
      %v1876 = vpop.f32.mrb[0].mxu0
      %v1877 = vadd.f32 %v1740, %v1876
      %v1878 = vpop.f32.mrb[0].mxu0
      %v1879 = vpop.f32.mrb[0].mxu0
      %v1880 = vadd.f32 %v1743, %v1879
      %v1881 = vpop.f32.mrb[0].mxu0
      %1882 = vmatprep.mubr.bf16.mxu0 0
      %1883 = vmatmul.mubr.bf16.gmra.mrb[0].mxu0 %v1536
      %v1884 = vpop.f32.mrb[0].mxu0
      %v1885 = vadd.f32 %v1748, %v1884
      %v1886 = vpop.f32.mrb[0].mxu0
      %v1887 = vpop.f32.mrb[0].mxu0
      %v1888 = vadd.f32 %v1751, %v1887
      %v1889 = vpop.f32.mrb[0].mxu0
      %1890 = vmatprep.mubr.bf16.mxu0 0
      %1891 = vmatmul.mubr.bf16.gmra.mrb[0].mxu0 %v1537
      %v1892 = vpop.f32.mrb[0].mxu0
      %v1893 = vadd.f32 %v1756, %v1892
      %v1894 = vpop.f32.mrb[0].mxu0
      %v1895 = vpop.f32.mrb[0].mxu0
      %v1896 = vadd.f32 %v1759, %v1895
      %v1897 = vpop.f32.mrb[0].mxu0
      %1898 = vmatprep.mubr.bf16.mxu0 0
      %1899 = vmatmul.mubr.bf16.gmra.mrb[0].mxu0 %v1538
      %v1900 = vpop.f32.mrb[0].mxu0
      %v1901 = vadd.f32 %v1764, %v1900
      %v1902 = vpop.f32.mrb[0].mxu0
      %v1903 = vpop.f32.mrb[0].mxu0
      %v1904 = vadd.f32 %v1767, %v1903
      %v1905 = vpop.f32.mrb[0].mxu0
      %1906 = vmatprep.mubr.bf16.mxu0 0
      %1907 = vmatmul.mubr.bf16.gmra.mrb[0].mxu0 %v1539
      %v1908 = vpop.f32.mrb[0].mxu0
      %v1909 = vadd.f32 %v1772, %v1908
      %v1910 = vpop.f32.mrb[0].mxu0
      %v1911 = vpop.f32.mrb[0].mxu0
      %v1912 = vadd.f32 %v1775, %v1911
      %v1913 = vpop.f32.mrb[0].mxu0
      %1914 = vmatprep.mubr.bf16.mxu0 0
      %1915 = vmatmul.mubr.bf16.gmra.mrb[0].mxu0 %v1540
      %v1916 = vpop.f32.mrb[0].mxu0
      %v1917 = vadd.f32 %v1780, %v1916
      %v1918 = vpop.f32.mrb[0].mxu0
      %v1919 = vpop.f32.mrb[0].mxu0
      %v1920 = vadd.f32 %v1783, %v1919
      %v1921 = vpop.f32.mrb[0].mxu0
      %1922 = vdwg.mxu0
      %v1923 = vld [vmem:[#allocation2] sm:$0xe0]
      %v1924 = vld [vmem:[#allocation2 + $0x38] sm:$0x3f]
      %s1925 = scalar_lea.vmem %s3, 128
      %v1926 = vld [vmem:[%s1925] sm:$0xf]
      %v1927 = vld [vmem:[%s1925 + $0x4] sm:$0xf]
      %v1928 = vld [vmem:[%s1925 + $0x8] sm:$0xf]
      %v1929 = vld [vmem:[%s1925 + $0xc] sm:$0xf]
      %v1930 = vld [vmem:[%s1925 + $0x10] sm:$0xf]
      %v1931 = vld [vmem:[%s1925 + $0x14] sm:$0xf]
      %v1932 = vld [vmem:[%s1925 + $0x18] sm:$0xf]
      %v1933 = vld [vmem:[%s1925 + $0x1c] sm:$0xf]
      %v1934 = vld [vmem:[%s1925 + $0x20] sm:$0xf]
      %v1935 = vld [vmem:[%s1925 + $0x24] sm:$0xf]
      %v1936 = vld [vmem:[%s1925 + $0x28] sm:$0xf]
      %v1937 = vld [vmem:[%s1925 + $0x2c] sm:$0xf]
      %v1938 = vld [vmem:[%s1925 + $0x30] sm:$0xf]
      %v1939 = vld [vmem:[%s1925 + $0x34] sm:$0xf]
      %v1940 = vld [vmem:[%s1925 + $0x38] sm:$0xf]
      %v1941 = vld [vmem:[%s1925 + $0x3c] sm:$0xf]
      %v1943 = vshrl.u32 %v1923, 16
      %v1945 = vrot.slane %v1943, 5
      %v1946 = vshll.u32 %v1923, 16
      %v1948 = vrot.slane %v1946, 6
      %v1949 = vor.u32 %v1945, %v1948
      %v1950 = vrot.slane %v1594, 5
      %v1951 = vrot.slane %v1590, 6
      %v1952 = vor.u32 %v1950, %v1951
      %v1953 = vsel %vm912, %v1949, %v1952
      %v1954 = vrot.slane %v1602, 5
      %v1955 = vrot.slane %v1598, 6
      %v1956 = vor.u32 %v1954, %v1955
      %v1957 = vsel %vm912, %v1952, %v1956
      %v1958 = vrot.slane %v1610, 5
      %v1959 = vrot.slane %v1606, 6
      %v1960 = vor.u32 %v1958, %v1959
      %v1961 = vsel %vm912, %v1956, %v1960
      %v1962 = vrot.slane %v1618, 5
      %v1963 = vrot.slane %v1614, 6
      %v1964 = vor.u32 %v1962, %v1963
      %v1965 = vsel %vm912, %v1960, %v1964
      %v1966 = vrot.slane %v1626, 5
      %v1967 = vrot.slane %v1622, 6
      %v1968 = vor.u32 %v1966, %v1967
      %v1969 = vsel %vm912, %v1964, %v1968
      %v1970 = vrot.slane %v1634, 5
      %v1971 = vrot.slane %v1630, 6
      %v1972 = vor.u32 %v1970, %v1971
      %v1973 = vsel %vm912, %v1968, %v1972
      %v1975 = vshrl.u32 %v1924, 16
      %v1977 = vrot.slane %v1975, 5
      %v1978 = vshll.u32 %v1924, 16
      %v1980 = vrot.slane %v1978, 6
      %v1981 = vor.u32 %v1977, %v1980
      %v1982 = vsel %vm912, %v1972, %v1981
      %v2006 = vunpack.c.l.b16 %v1926
      %v2007 = vunpack.c.l.b16 %v1927
      %v2008 = vunpack.c.l.b16 %v1928
      %v2009 = vunpack.c.l.b16 %v1929
      %v2010 = vunpack.c.l.b16 %v1930
      %v2011 = vunpack.c.l.b16 %v1931
      %v2012 = vunpack.c.l.b16 %v1932
      %v2013 = vunpack.c.l.b16 %v1933
      %v2014 = vunpack.c.l.b16 %v1934
      %v2015 = vunpack.c.l.b16 %v1935
      %v2016 = vunpack.c.l.b16 %v1936
      %v2017 = vunpack.c.l.b16 %v1937
      %v2018 = vunpack.c.l.b16 %v1938
      %v2019 = vunpack.c.l.b16 %v1939
      %v2020 = vunpack.c.l.b16 %v1940
      %v2021 = vunpack.c.l.b16 %v1941
      %v2022 = vpack.c.b16 %v2007, %v2006
      %v2023 = vpack.c.b16 %v2009, %v2008
      %v2024 = vpack.c.b16 %v2011, %v2010
      %v2025 = vpack.c.b16 %v2013, %v2012
      %v2026 = vpack.c.b16 %v2015, %v2014
      %v2027 = vpack.c.b16 %v2017, %v2016
      %v2028 = vpack.c.b16 %v2019, %v2018
      %v2029 = vpack.c.b16 %v2021, %v2020
      %2038 = vmatprep.subr.bf16.mxu0 0
      %2039 = vmatpush1.bf16.msra.mxu0 %v2022
      %2040 = vmatprep.subr.bf16.mxu0 0
      %2041 = vmatpush1.bf16.msra.mxu0 %v2023
      %2042 = vmatprep.subr.bf16.mxu0 0
      %2043 = vmatpush1.bf16.msra.mxu0 %v2024
      %2044 = vmatprep.subr.bf16.mxu0 0
      %2045 = vmatpush1.bf16.msra.mxu0 %v2025
      %2046 = vmatprep.subr.bf16.mxu0 0
      %2047 = vmatpush1.bf16.msra.mxu0 %v2026
      %2048 = vmatprep.subr.bf16.mxu0 0
      %2049 = vmatpush1.bf16.msra.mxu0 %v2027
      %2050 = vmatprep.subr.bf16.mxu0 0
      %2051 = vmatpush1.bf16.msra.mxu0 %v2028
      %2052 = vmatprep.subr.bf16.mxu0 0
      %2053 = vmatpush1.bf16.msra.mxu0 %v2029
      %2054 = vmatprep.subr.bf16.mxu0 0
      %2055 = vmatpush1.bf16.msra.mxu0 0
      %2056 = vmatprep.subr.bf16.mxu0 0
      %2057 = vmatpush1.bf16.msra.mxu0 0
      %2058 = vmatprep.subr.bf16.mxu0 0
      %2059 = vmatpush1.bf16.msra.mxu0 0
      %2060 = vmatprep.subr.bf16.mxu0 0
      %2061 = vmatpush1.bf16.msra.mxu0 0
      %2062 = vmatprep.subr.bf16.mxu0 0
      %2063 = vmatpush1.bf16.msra.mxu0 0
      %2064 = vmatprep.subr.bf16.mxu0 0
      %2065 = vmatpush1.bf16.msra.mxu0 0
      %2066 = vmatprep.subr.bf16.mxu0 0
      %2067 = vmatpush1.bf16.msra.mxu0 0
      %2068 = vmatprep.subr.bf16.mxu0 0
      %2069 = vmatpush1.bf16.msra.mxu0 0
      %2070 = vmatprep.mubr.bf16.mxu0 0
      %2071 = vmatmul.mubr.bf16.gmra.mrb[0].mxu0 %v1953
      %v2072 = vpop.f32.mrb[0].mxu0
      %v2073 = vadd.f32 0.0, %v2072
      %v2074 = vpop.f32.mrb[0].mxu0
      %v2075 = vpop.f32.mrb[0].mxu0
      %v2076 = vadd.f32 0.0, %v2075
      %v2077 = vpop.f32.mrb[0].mxu0
      %2078 = vmatprep.mubr.bf16.mxu0 0
      %2079 = vmatmul.mubr.bf16.gmra.mrb[0].mxu0 %v1957
      %v2080 = vpop.f32.mrb[0].mxu0
      %v2081 = vadd.f32 0.0, %v2080
      %v2082 = vpop.f32.mrb[0].mxu0
      %v2083 = vpop.f32.mrb[0].mxu0
      %v2084 = vadd.f32 0.0, %v2083
      %v2085 = vpop.f32.mrb[0].mxu0
      %2086 = vmatprep.mubr.bf16.mxu0 0
      %2087 = vmatmul.mubr.bf16.gmra.mrb[0].mxu0 %v1961
      %v2088 = vpop.f32.mrb[0].mxu0
      %v2089 = vadd.f32 0.0, %v2088
      %v2090 = vpop.f32.mrb[0].mxu0
      %v2091 = vpop.f32.mrb[0].mxu0
      %v2092 = vadd.f32 0.0, %v2091
      %v2093 = vpop.f32.mrb[0].mxu0
      %2094 = vmatprep.mubr.bf16.mxu0 0
      %2095 = vmatmul.mubr.bf16.gmra.mrb[0].mxu0 %v1965
      %v2096 = vpop.f32.mrb[0].mxu0
      %v2097 = vadd.f32 0.0, %v2096
      %v2098 = vpop.f32.mrb[0].mxu0
      %v2099 = vpop.f32.mrb[0].mxu0
      %v2100 = vadd.f32 0.0, %v2099
      %v2101 = vpop.f32.mrb[0].mxu0
      %2102 = vmatprep.mubr.bf16.mxu0 0
      %2103 = vmatmul.mubr.bf16.gmra.mrb[0].mxu0 %v1969
      %v2104 = vpop.f32.mrb[0].mxu0
      %v2105 = vadd.f32 0.0, %v2104
      %v2106 = vpop.f32.mrb[0].mxu0
      %v2107 = vpop.f32.mrb[0].mxu0
      %v2108 = vadd.f32 0.0, %v2107
      %v2109 = vpop.f32.mrb[0].mxu0
      %2110 = vmatprep.mubr.bf16.mxu0 0
      %2111 = vmatmul.mubr.bf16.gmra.mrb[0].mxu0 %v1973
      %v2112 = vpop.f32.mrb[0].mxu0
      %v2113 = vadd.f32 0.0, %v2112
      %v2114 = vpop.f32.mrb[0].mxu0
      %v2115 = vpop.f32.mrb[0].mxu0
      %v2116 = vadd.f32 0.0, %v2115
      %v2117 = vpop.f32.mrb[0].mxu0
      %2118 = vmatprep.mubr.bf16.mxu0 0
      %2119 = vmatmul.mubr.bf16.gmra.mrb[0].mxu0 %v1982
      %v2120 = vpop.f32.mrb[0].mxu0
      %v2121 = vadd.f32 0.0, %v2120
      %v2122 = vpop.f32.mrb[0].mxu0
      %v2123 = vpop.f32.mrb[0].mxu0
      %v2124 = vadd.f32 0.0, %v2123
      %v2125 = vpop.f32.mrb[0].mxu0
      %2126 = vdwg.mxu0
      %v2127 = vadd.f32 %v1869, %v2073
      %v2128 = vadd.f32 %v1872, %v2076
      %v2129 = vadd.f32 %v1877, %v2081
      %v2130 = vadd.f32 %v1880, %v2084
      %v2131 = vadd.f32 %v1885, %v2089
      %v2132 = vadd.f32 %v1888, %v2092
      %v2133 = vadd.f32 %v1893, %v2097
      %v2134 = vadd.f32 %v1896, %v2100
      %v2135 = vadd.f32 %v1901, %v2105
      %v2136 = vadd.f32 %v1904, %v2108
      %v2137 = vadd.f32 %v1909, %v2113
      %v2138 = vadd.f32 %v1912, %v2116
      %v2139 = vadd.f32 %v1917, %v2121
      %v2140 = vadd.f32 %v1920, %v2124
      %v2141 = vld [vmem:[#allocation2] sm:$0xc0]
      %s2142 = scalar_lea.vmem %s3, 192
      %v2143 = vld [vmem:[%s2142] sm:$0xf]
      %v2144 = vld [vmem:[%s2142 + $0x4] sm:$0xf]
      %v2145 = vld [vmem:[%s2142 + $0x8] sm:$0xf]
      %v2146 = vld [vmem:[%s2142 + $0xc] sm:$0xf]
      %v2147 = vld [vmem:[%s2142 + $0x10] sm:$0xf]
      %v2148 = vld [vmem:[%s2142 + $0x14] sm:$0xf]
      %v2149 = vld [vmem:[%s2142 + $0x18] sm:$0xf]
      %v2150 = vld [vmem:[%s2142 + $0x1c] sm:$0xf]
      %v2151 = vld [vmem:[%s2142 + $0x20] sm:$0xf]
      %v2152 = vld [vmem:[%s2142 + $0x24] sm:$0xf]
      %v2153 = vld [vmem:[%s2142 + $0x28] sm:$0xf]
      %v2154 = vld [vmem:[%s2142 + $0x2c] sm:$0xf]
      %v2155 = vld [vmem:[%s2142 + $0x30] sm:$0xf]
      %v2156 = vld [vmem:[%s2142 + $0x34] sm:$0xf]
      %v2157 = vld [vmem:[%s2142 + $0x38] sm:$0xf]
      %v2158 = vld [vmem:[%s2142 + $0x3c] sm:$0xf]
      %v2167 = vrot.slane %v2141, 6
      %v2168 = vrot.slane %v1558, 6
      %v2169 = vsel %vm1241, %v2167, %v2168
      %v2170 = vrot.slane %v1559, 6
      %v2171 = vsel %vm1241, %v2168, %v2170
      %v2172 = vrot.slane %v1560, 6
      %v2173 = vsel %vm1241, %v2170, %v2172
      %v2174 = vrot.slane %v1561, 6
      %v2175 = vsel %vm1241, %v2172, %v2174
      %v2176 = vrot.slane %v1562, 6
      %v2177 = vsel %vm1241, %v2174, %v2176
      %v2178 = vrot.slane %v1563, 6
      %v2179 = vsel %vm1241, %v2176, %v2178
      %v2180 = vrot.slane %v1924, 6
      %v2181 = vsel %vm1241, %v2178, %v2180
      %v2205 = vunpack.c.l.b16 %v2143
      %v2206 = vunpack.c.l.b16 %v2144
      %v2207 = vunpack.c.l.b16 %v2145
      %v2208 = vunpack.c.l.b16 %v2146
      %v2209 = vunpack.c.l.b16 %v2147
      %v2210 = vunpack.c.l.b16 %v2148
      %v2211 = vunpack.c.l.b16 %v2149
      %v2212 = vunpack.c.l.b16 %v2150
      %v2213 = vunpack.c.l.b16 %v2151
      %v2214 = vunpack.c.l.b16 %v2152
      %v2215 = vunpack.c.l.b16 %v2153
      %v2216 = vunpack.c.l.b16 %v2154
      %v2217 = vunpack.c.l.b16 %v2155
      %v2218 = vunpack.c.l.b16 %v2156
      %v2219 = vunpack.c.l.b16 %v2157
      %v2220 = vunpack.c.l.b16 %v2158
      %v2221 = vpack.c.b16 %v2206, %v2205
      %v2222 = vpack.c.b16 %v2208, %v2207
      %v2223 = vpack.c.b16 %v2210, %v2209
      %v2224 = vpack.c.b16 %v2212, %v2211
      %v2225 = vpack.c.b16 %v2214, %v2213
      %v2226 = vpack.c.b16 %v2216, %v2215
      %v2227 = vpack.c.b16 %v2218, %v2217
      %v2228 = vpack.c.b16 %v2220, %v2219
      %2237 = vmatprep.subr.bf16.mxu0 0
      %2238 = vmatpush1.bf16.msra.mxu0 %v2221
      %2239 = vmatprep.subr.bf16.mxu0 0
      %2240 = vmatpush1.bf16.msra.mxu0 %v2222
      %2241 = vmatprep.subr.bf16.mxu0 0
      %2242 = vmatpush1.bf16.msra.mxu0 %v2223
      %2243 = vmatprep.subr.bf16.mxu0 0
      %2244 = vmatpush1.bf16.msra.mxu0 %v2224
      %2245 = vmatprep.subr.bf16.mxu0 0
      %2246 = vmatpush1.bf16.msra.mxu0 %v2225
      %2247 = vmatprep.subr.bf16.mxu0 0
      %2248 = vmatpush1.bf16.msra.mxu0 %v2226
      %2249 = vmatprep.subr.bf16.mxu0 0
      %2250 = vmatpush1.bf16.msra.mxu0 %v2227
      %2251 = vmatprep.subr.bf16.mxu0 0
      %2252 = vmatpush1.bf16.msra.mxu0 %v2228
      %2253 = vmatprep.subr.bf16.mxu0 0
      %2254 = vmatpush1.bf16.msra.mxu0 0
      %2255 = vmatprep.subr.bf16.mxu0 0
      %2256 = vmatpush1.bf16.msra.mxu0 0
      %2257 = vmatprep.subr.bf16.mxu0 0
      %2258 = vmatpush1.bf16.msra.mxu0 0
      %2259 = vmatprep.subr.bf16.mxu0 0
      %2260 = vmatpush1.bf16.msra.mxu0 0
      %2261 = vmatprep.subr.bf16.mxu0 0
      %2262 = vmatpush1.bf16.msra.mxu0 0
      %2263 = vmatprep.subr.bf16.mxu0 0
      %2264 = vmatpush1.bf16.msra.mxu0 0
      %2265 = vmatprep.subr.bf16.mxu0 0
      %2266 = vmatpush1.bf16.msra.mxu0 0
      %2267 = vmatprep.subr.bf16.mxu0 0
      %2268 = vmatpush1.bf16.msra.mxu0 0
      %2269 = vmatprep.mubr.bf16.mxu0 0
      %2270 = vmatmul.mubr.bf16.gmra.mrb[0].mxu0 %v2169
      %v2271 = vpop.f32.mrb[0].mxu0
      %v2272 = vadd.f32 0.0, %v2271
      %v2273 = vpop.f32.mrb[0].mxu0
      %v2274 = vpop.f32.mrb[0].mxu0
      %v2275 = vadd.f32 0.0, %v2274
      %v2276 = vpop.f32.mrb[0].mxu0
      %2277 = vmatprep.mubr.bf16.mxu0 0
      %2278 = vmatmul.mubr.bf16.gmra.mrb[0].mxu0 %v2171
      %v2279 = vpop.f32.mrb[0].mxu0
      %v2280 = vadd.f32 0.0, %v2279
      %v2281 = vpop.f32.mrb[0].mxu0
      %v2282 = vpop.f32.mrb[0].mxu0
      %v2283 = vadd.f32 0.0, %v2282
      %v2284 = vpop.f32.mrb[0].mxu0
      %2285 = vmatprep.mubr.bf16.mxu0 0
      %2286 = vmatmul.mubr.bf16.gmra.mrb[0].mxu0 %v2173
      %v2287 = vpop.f32.mrb[0].mxu0
      %v2288 = vadd.f32 0.0, %v2287
      %v2289 = vpop.f32.mrb[0].mxu0
      %v2290 = vpop.f32.mrb[0].mxu0
      %v2291 = vadd.f32 0.0, %v2290
      %v2292 = vpop.f32.mrb[0].mxu0
      %2293 = vmatprep.mubr.bf16.mxu0 0
      %2294 = vmatmul.mubr.bf16.gmra.mrb[0].mxu0 %v2175
      %v2295 = vpop.f32.mrb[0].mxu0
      %v2296 = vadd.f32 0.0, %v2295
      %v2297 = vpop.f32.mrb[0].mxu0
      %v2298 = vpop.f32.mrb[0].mxu0
      %v2299 = vadd.f32 0.0, %v2298
      %v2300 = vpop.f32.mrb[0].mxu0
      %2301 = vmatprep.mubr.bf16.mxu0 0
      %2302 = vmatmul.mubr.bf16.gmra.mrb[0].mxu0 %v2177
      %v2303 = vpop.f32.mrb[0].mxu0
      %v2304 = vadd.f32 0.0, %v2303
      %v2305 = vpop.f32.mrb[0].mxu0
      %v2306 = vpop.f32.mrb[0].mxu0
      %v2307 = vadd.f32 0.0, %v2306
      %v2308 = vpop.f32.mrb[0].mxu0
      %2309 = vmatprep.mubr.bf16.mxu0 0
      %2310 = vmatmul.mubr.bf16.gmra.mrb[0].mxu0 %v2179
      %v2311 = vpop.f32.mrb[0].mxu0
      %v2312 = vadd.f32 0.0, %v2311
      %v2313 = vpop.f32.mrb[0].mxu0
      %v2314 = vpop.f32.mrb[0].mxu0
      %v2315 = vadd.f32 0.0, %v2314
      %v2316 = vpop.f32.mrb[0].mxu0
      %2317 = vmatprep.mubr.bf16.mxu0 0
      %2318 = vmatmul.mubr.bf16.gmra.mrb[0].mxu0 %v2181
      %v2319 = vpop.f32.mrb[0].mxu0
      %v2320 = vadd.f32 0.0, %v2319
      %v2321 = vpop.f32.mrb[0].mxu0
      %v2322 = vpop.f32.mrb[0].mxu0
      %v2323 = vadd.f32 0.0, %v2322
      %v2324 = vpop.f32.mrb[0].mxu0
      %2325 = vdwg.mxu0
      %v2326 = vadd.f32 %v2127, %v2272
      %v2327 = vadd.f32 %v2128, %v2275
      %v2328 = vadd.f32 %v2129, %v2280
      %v2329 = vadd.f32 %v2130, %v2283
      %v2330 = vadd.f32 %v2131, %v2288
      %v2331 = vadd.f32 %v2132, %v2291
      %v2332 = vadd.f32 %v2133, %v2296
      %v2333 = vadd.f32 %v2134, %v2299
      %v2334 = vadd.f32 %v2135, %v2304
      %v2335 = vadd.f32 %v2136, %v2307
      %v2336 = vadd.f32 %v2137, %v2312
      %v2337 = vadd.f32 %v2138, %v2315
      %v2338 = vadd.f32 %v2139, %v2320
      %v2339 = vadd.f32 %v2140, %v2323
      %v2340 = vld [vmem:[%s4] sm:$0x1]
      %v2342 = vlaneseq
      %v2343 = vshrl.u32 %v2342, 7
      %v2344 = vsub.s32 0, %v2343
      %v2345 = vrot.slane %v2340, %v2344
      %v2347 = vadd.f32 %v2326, %v2345
      %v2348 = vadd.f32 %v2327, %v2345
      %v2349 = vadd.f32 %v2328, %v2345
      %v2350 = vadd.f32 %v2329, %v2345
      %v2351 = vadd.f32 %v2330, %v2345
      %v2352 = vadd.f32 %v2331, %v2345
      %v2353 = vadd.f32 %v2332, %v2345
      %v2354 = vadd.f32 %v2333, %v2345
      %v2355 = vadd.f32 %v2334, %v2345
      %v2356 = vadd.f32 %v2335, %v2345
      %v2357 = vadd.f32 %v2336, %v2345
      %v2358 = vadd.f32 %v2337, %v2345
      %v2359 = vadd.f32 %v2338, %v2345
      %v2360 = vadd.f32 %v2339, %v2345
      %v2361 = vmax.f32 %v2347, 0.0
      %v2362 = vmax.f32 %v2348, 0.0
      %v2363 = vmax.f32 %v2349, 0.0
      %v2364 = vmax.f32 %v2350, 0.0
      %v2365 = vmax.f32 %v2351, 0.0
      %v2366 = vmax.f32 %v2352, 0.0
      %v2367 = vmax.f32 %v2353, 0.0
      %v2368 = vmax.f32 %v2354, 0.0
      %v2369 = vmax.f32 %v2355, 0.0
      %v2370 = vmax.f32 %v2356, 0.0
      %v2371 = vmax.f32 %v2357, 0.0
      %v2372 = vmax.f32 %v2358, 0.0
      %v2373 = vmax.f32 %v2359, 0.0
      %v2374 = vmax.f32 %v2360, 0.0
      %v2375 = vpack.c.bf16 %v2362, %v2361
      %v2376 = vpack.c.bf16 %v2364, %v2363
      %v2377 = vpack.c.bf16 %v2366, %v2365
      %v2378 = vpack.c.bf16 %v2368, %v2367
      %v2379 = vpack.c.bf16 %v2370, %v2369
      %v2380 = vpack.c.bf16 %v2372, %v2371
      %v2381 = vpack.c.bf16 %v2374, %v2373
      %vm2382 = vcmask 523264
      %2383 = vst.msk [vmem:[#allocation3] sm:$0xff] %vm2382, %v2375
      %2384 = vst.msk [vmem:[#allocation3 + $0x8] sm:$0xff] %vm2382, %v2376
      %2385 = vst.msk [vmem:[#allocation3 + $0x10] sm:$0xff] %vm2382, %v2377
      %2386 = vst.msk [vmem:[#allocation3 + $0x18] sm:$0xff] %vm2382, %v2378
      %2387 = vst.msk [vmem:[#allocation3 + $0x20] sm:$0xff] %vm2382, %v2379
      %2388 = vst.msk [vmem:[#allocation3 + $0x28] sm:$0xff] %vm2382, %v2380
      %2389 = vst.msk [vmem:[#allocation3 + $0x30] sm:$0xff] %vm2382, %v2381
      %v2390 = vld [vmem:[#allocation3] sm:$0xff]
      %v2391 = vld [vmem:[#allocation3 + $0x8] sm:$0xff]
      %v2392 = vld [vmem:[#allocation3 + $0x10] sm:$0xff]
      %v2393 = vld [vmem:[#allocation3 + $0x18] sm:$0xff]
      %v2394 = vld [vmem:[#allocation3 + $0x20] sm:$0xff]
      %v2395 = vld [vmem:[#allocation3 + $0x28] sm:$0xff]
      %v2396 = vld [vmem:[#allocation3 + $0x30] sm:$0xf]
      %v2397 = vld [vmem:[%s5] sm:$0xf]
      %v2398 = vld [vmem:[%s5 + $0x4] sm:$0xf]
      %v2399 = vld [vmem:[%s5 + $0x8] sm:$0xf]
      %v2400 = vld [vmem:[%s5 + $0xc] sm:$0xf]
      %v2401 = vld [vmem:[%s5 + $0x10] sm:$0xf]
      %v2402 = vld [vmem:[%s5 + $0x14] sm:$0xf]
      %v2403 = vld [vmem:[%s5 + $0x18] sm:$0xf]
      %v2404 = vld [vmem:[%s5 + $0x1c] sm:$0xf]
      %v2405 = vld [vmem:[#allocation3 + $0x30] sm:$0x1f]
      %s2406 = scalar_lea.vmem %s5, 32
      %v2407 = vld [vmem:[%s2406] sm:$0xf]
      %v2408 = vld [vmem:[%s2406 + $0x4] sm:$0xf]
      %v2409 = vld [vmem:[%s2406 + $0x8] sm:$0xf]
      %v2410 = vld [vmem:[%s2406 + $0xc] sm:$0xf]
      %v2411 = vld [vmem:[%s2406 + $0x10] sm:$0xf]
      %v2412 = vld [vmem:[%s2406 + $0x14] sm:$0xf]
      %v2413 = vld [vmem:[%s2406 + $0x18] sm:$0xf]
      %v2414 = vld [vmem:[%s2406 + $0x1c] sm:$0xf]
      %v2416 = vshrl.u32 %v2390, 16
      %v2418 = vshll.u32 %v2390, 16
      %v2420 = vrot.slane %v2418, 1
      %v2421 = vor.u32 %v2416, %v2420
      %v2423 = vshll.u32 %v2391, 16
      %v2425 = vrot.slane %v2423, 1
      %v2426 = vsel %vm374, %v2421, %v2425
      %v2427 = vshrl.u32 %v2391, 16
      %v2429 = vor.u32 %v2427, %v2425
      %v2431 = vshll.u32 %v2392, 16
      %v2433 = vrot.slane %v2431, 1
      %v2434 = vsel %vm374, %v2429, %v2433
      %v2435 = vshrl.u32 %v2392, 16
      %v2437 = vor.u32 %v2435, %v2433
      %v2439 = vshll.u32 %v2393, 16
      %v2441 = vrot.slane %v2439, 1
      %v2442 = vsel %vm374, %v2437, %v2441
      %v2443 = vshrl.u32 %v2393, 16
      %v2445 = vor.u32 %v2443, %v2441
      %v2447 = vshll.u32 %v2394, 16
      %v2449 = vrot.slane %v2447, 1
      %v2450 = vsel %vm374, %v2445, %v2449
      %v2451 = vshrl.u32 %v2394, 16
      %v2453 = vor.u32 %v2451, %v2449
      %v2455 = vshll.u32 %v2395, 16
      %v2457 = vrot.slane %v2455, 1
      %v2458 = vsel %vm374, %v2453, %v2457
      %v2459 = vshrl.u32 %v2395, 16
      %v2461 = vor.u32 %v2459, %v2457
      %v2463 = vshll.u32 %v2405, 16
      %v2465 = vrot.slane %v2463, 1
      %v2466 = vsel %vm374, %v2461, %v2465
      %v2467 = vshrl.u32 %v2405, 16
      %v2469 = vor.u32 %v2467, %v2465
      %v2478 = vunpack.c.l.b16 %v2407
      %v2479 = vunpack.c.l.b16 %v2408
      %v2480 = vunpack.c.l.b16 %v2409
      %v2481 = vunpack.c.l.b16 %v2410
      %v2482 = vunpack.c.l.b16 %v2411
      %v2483 = vunpack.c.l.b16 %v2412
      %v2484 = vunpack.c.l.b16 %v2413
      %v2485 = vunpack.c.l.b16 %v2414
      %v2486 = vpack.c.b16 %v2479, %v2478
      %v2487 = vpack.c.b16 %v2481, %v2480
      %v2488 = vpack.c.b16 %v2483, %v2482
      %v2489 = vpack.c.b16 %v2485, %v2484
      %v2495 = vsel %vm2382, %v2426, 0
      %v2498 = vsel %vm2382, %v2434, 0
      %v2501 = vsel %vm2382, %v2442, 0
      %v2504 = vsel %vm2382, %v2450, 0
      %v2507 = vsel %vm2382, %v2458, 0
      %v2510 = vsel %vm2382, %v2466, 0
      %v2513 = vsel %vm2382, %v2469, 0
      %2515 = vmatprep.subr.bf16.mxu0 0
      %2516 = vmatpush1.bf16.msra.mxu0 %v2486
      %2517 = vmatprep.subr.bf16.mxu0 0
      %2518 = vmatpush1.bf16.msra.mxu0 %v2487
      %2519 = vmatprep.subr.bf16.mxu0 0
      %2520 = vmatpush1.bf16.msra.mxu0 %v2488
      %2521 = vmatprep.subr.bf16.mxu0 0
      %2522 = vmatpush1.bf16.msra.mxu0 %v2489
      %2523 = vmatprep.subr.bf16.mxu0 0
      %2524 = vmatpush1.bf16.msra.mxu0 0
      %2525 = vmatprep.subr.bf16.mxu0 0
      %2526 = vmatpush1.bf16.msra.mxu0 0
      %2527 = vmatprep.subr.bf16.mxu0 0
      %2528 = vmatpush1.bf16.msra.mxu0 0
      %2529 = vmatprep.subr.bf16.mxu0 0
      %2530 = vmatpush1.bf16.msra.mxu0 0
      %2531 = vmatprep.subr.bf16.mxu0 0
      %2532 = vmatpush1.bf16.msra.mxu0 0
      %2533 = vmatprep.subr.bf16.mxu0 0
      %2534 = vmatpush1.bf16.msra.mxu0 0
      %2535 = vmatprep.subr.bf16.mxu0 0
      %2536 = vmatpush1.bf16.msra.mxu0 0
      %2537 = vmatprep.subr.bf16.mxu0 0
      %2538 = vmatpush1.bf16.msra.mxu0 0
      %2539 = vmatprep.subr.bf16.mxu0 0
      %2540 = vmatpush1.bf16.msra.mxu0 0
      %2541 = vmatprep.subr.bf16.mxu0 0
      %2542 = vmatpush1.bf16.msra.mxu0 0
      %2543 = vmatprep.subr.bf16.mxu0 0
      %2544 = vmatpush1.bf16.msra.mxu0 0
      %2545 = vmatprep.subr.bf16.mxu0 0
      %2546 = vmatpush1.bf16.msra.mxu0 0
      %2547 = vmatprep.mubr.bf16.mxu0 0
      %2548 = vmatmul.mubr.bf16.gmra.mrb[0].mxu0 %v2495
      %v2549 = vpop.f32.mrb[0].mxu0
      %v2550 = vadd.f32 0.0, %v2549
      %v2551 = vpop.f32.mrb[0].mxu0
      %v2552 = vpop.f32.mrb[0].mxu0
      %v2553 = vadd.f32 0.0, %v2552
      %v2554 = vpop.f32.mrb[0].mxu0
      %2555 = vmatprep.mubr.bf16.mxu0 0
      %2556 = vmatmul.mubr.bf16.gmra.mrb[0].mxu0 %v2498
      %v2557 = vpop.f32.mrb[0].mxu0
      %v2558 = vadd.f32 0.0, %v2557
      %v2559 = vpop.f32.mrb[0].mxu0
      %v2560 = vpop.f32.mrb[0].mxu0
      %v2561 = vadd.f32 0.0, %v2560
      %v2562 = vpop.f32.mrb[0].mxu0
      %2563 = vmatprep.mubr.bf16.mxu0 0
      %2564 = vmatmul.mubr.bf16.gmra.mrb[0].mxu0 %v2501
      %v2565 = vpop.f32.mrb[0].mxu0
      %v2566 = vadd.f32 0.0, %v2565
      %v2567 = vpop.f32.mrb[0].mxu0
      %v2568 = vpop.f32.mrb[0].mxu0
      %v2569 = vadd.f32 0.0, %v2568
      %v2570 = vpop.f32.mrb[0].mxu0
      %2571 = vmatprep.mubr.bf16.mxu0 0
      %2572 = vmatmul.mubr.bf16.gmra.mrb[0].mxu0 %v2504
      %v2573 = vpop.f32.mrb[0].mxu0
      %v2574 = vadd.f32 0.0, %v2573
      %v2575 = vpop.f32.mrb[0].mxu0
      %v2576 = vpop.f32.mrb[0].mxu0
      %v2577 = vadd.f32 0.0, %v2576
      %v2578 = vpop.f32.mrb[0].mxu0
      %2579 = vmatprep.mubr.bf16.mxu0 0
      %2580 = vmatmul.mubr.bf16.gmra.mrb[0].mxu0 %v2507
      %v2581 = vpop.f32.mrb[0].mxu0
      %v2582 = vadd.f32 0.0, %v2581
      %v2583 = vpop.f32.mrb[0].mxu0
      %v2584 = vpop.f32.mrb[0].mxu0
      %v2585 = vadd.f32 0.0, %v2584
      %v2586 = vpop.f32.mrb[0].mxu0
      %2587 = vmatprep.mubr.bf16.mxu0 0
      %2588 = vmatmul.mubr.bf16.gmra.mrb[0].mxu0 %v2510
      %v2589 = vpop.f32.mrb[0].mxu0
      %v2590 = vpop.f32.mrb[0].mxu0
      %v2591 = vpop.f32.mrb[0].mxu0
      %v2592 = vpop.f32.mrb[0].mxu0
      %2593 = vmatprep.mubr.bf16.mxu0 0
      %2594 = vmatmul.mubr.bf16.gmra.mrb[0].mxu0 %v2513
      %v2595 = vpop.f32.mrb[0].mxu0
      %v2596 = vpop.f32.mrb[0].mxu0
      %v2597 = vpop.f32.mrb[0].mxu0
      %v2598 = vpop.f32.mrb[0].mxu0
      %2599 = vdwg.mxu0
      %v2608 = vunpack.c.l.b16 %v2397
      %v2609 = vunpack.c.l.b16 %v2398
      %v2610 = vunpack.c.l.b16 %v2399
      %v2611 = vunpack.c.l.b16 %v2400
      %v2612 = vunpack.c.l.b16 %v2401
      %v2613 = vunpack.c.l.b16 %v2402
      %v2614 = vunpack.c.l.b16 %v2403
      %v2615 = vunpack.c.l.b16 %v2404
      %v2616 = vpack.c.b16 %v2609, %v2608
      %v2617 = vpack.c.b16 %v2611, %v2610
      %v2618 = vpack.c.b16 %v2613, %v2612
      %v2619 = vpack.c.b16 %v2615, %v2614
      %v2624 = vsel %vm2382, %v2390, 0
      %v2626 = vsel %vm2382, %v2391, 0
      %v2628 = vsel %vm2382, %v2392, 0
      %v2630 = vsel %vm2382, %v2393, 0
      %v2632 = vsel %vm2382, %v2394, 0
      %v2634 = vsel %vm2382, %v2395, 0
      %v2637 = vsel %vm2382, %v2396, 0
      %2639 = vmatprep.subr.bf16.mxu0 0
      %2640 = vmatpush1.bf16.msra.mxu0 %v2616
      %2641 = vmatprep.subr.bf16.mxu0 0
      %2642 = vmatpush1.bf16.msra.mxu0 %v2617
      %2643 = vmatprep.subr.bf16.mxu0 0
      %2644 = vmatpush1.bf16.msra.mxu0 %v2618
      %2645 = vmatprep.subr.bf16.mxu0 0
      %2646 = vmatpush1.bf16.msra.mxu0 %v2619
      %2647 = vmatprep.subr.bf16.mxu0 0
      %2648 = vmatpush1.bf16.msra.mxu0 0
      %2649 = vmatprep.subr.bf16.mxu0 0
      %2650 = vmatpush1.bf16.msra.mxu0 0
      %2651 = vmatprep.subr.bf16.mxu0 0
      %2652 = vmatpush1.bf16.msra.mxu0 0
      %2653 = vmatprep.subr.bf16.mxu0 0
      %2654 = vmatpush1.bf16.msra.mxu0 0
      %2655 = vmatprep.subr.bf16.mxu0 0
      %2656 = vmatpush1.bf16.msra.mxu0 0
      %2657 = vmatprep.subr.bf16.mxu0 0
      %2658 = vmatpush1.bf16.msra.mxu0 0
      %2659 = vmatprep.subr.bf16.mxu0 0
      %2660 = vmatpush1.bf16.msra.mxu0 0
      %2661 = vmatprep.subr.bf16.mxu0 0
      %2662 = vmatpush1.bf16.msra.mxu0 0
      %2663 = vmatprep.subr.bf16.mxu0 0
      %2664 = vmatpush1.bf16.msra.mxu0 0
      %2665 = vmatprep.subr.bf16.mxu0 0
      %2666 = vmatpush1.bf16.msra.mxu0 0
      %2667 = vmatprep.subr.bf16.mxu0 0
      %2668 = vmatpush1.bf16.msra.mxu0 0
      %2669 = vmatprep.subr.bf16.mxu0 0
      %2670 = vmatpush1.bf16.msra.mxu0 0
      %2671 = vmatprep.mubr.bf16.mxu0 0
      %2672 = vmatmul.mubr.bf16.gmra.mrb[0].mxu0 %v2624
      %v2673 = vpop.f32.mrb[0].mxu0
      %v2674 = vadd.f32 %v2550, %v2673
      %v2675 = vpop.f32.mrb[0].mxu0
      %v2676 = vpop.f32.mrb[0].mxu0
      %v2677 = vadd.f32 %v2553, %v2676
      %v2678 = vpop.f32.mrb[0].mxu0
      %2679 = vmatprep.mubr.bf16.mxu0 0
      %2680 = vmatmul.mubr.bf16.gmra.mrb[0].mxu0 %v2626
      %v2681 = vpop.f32.mrb[0].mxu0
      %v2682 = vadd.f32 %v2558, %v2681
      %v2683 = vpop.f32.mrb[0].mxu0
      %v2684 = vpop.f32.mrb[0].mxu0
      %v2685 = vadd.f32 %v2561, %v2684
      %v2686 = vpop.f32.mrb[0].mxu0
      %2687 = vmatprep.mubr.bf16.mxu0 0
      %2688 = vmatmul.mubr.bf16.gmra.mrb[0].mxu0 %v2628
      %v2689 = vpop.f32.mrb[0].mxu0
      %v2690 = vadd.f32 %v2566, %v2689
      %v2691 = vpop.f32.mrb[0].mxu0
      %v2692 = vpop.f32.mrb[0].mxu0
      %v2693 = vadd.f32 %v2569, %v2692
      %v2694 = vpop.f32.mrb[0].mxu0
      %2695 = vmatprep.mubr.bf16.mxu0 0
      %2696 = vmatmul.mubr.bf16.gmra.mrb[0].mxu0 %v2630
      %v2697 = vpop.f32.mrb[0].mxu0
      %v2698 = vadd.f32 %v2574, %v2697
      %v2699 = vpop.f32.mrb[0].mxu0
      %v2700 = vpop.f32.mrb[0].mxu0
      %v2701 = vadd.f32 %v2577, %v2700
      %v2702 = vpop.f32.mrb[0].mxu0
      %2703 = vmatprep.mubr.bf16.mxu0 0
      %2704 = vmatmul.mubr.bf16.gmra.mrb[0].mxu0 %v2632
      %v2705 = vpop.f32.mrb[0].mxu0
      %v2706 = vadd.f32 %v2582, %v2705
      %v2707 = vpop.f32.mrb[0].mxu0
      %v2708 = vpop.f32.mrb[0].mxu0
      %v2709 = vadd.f32 %v2585, %v2708
      %v2710 = vpop.f32.mrb[0].mxu0
      %2711 = vmatprep.mubr.bf16.mxu0 0
      %2712 = vmatmul.mubr.bf16.gmra.mrb[0].mxu0 %v2634
      %v2713 = vpop.f32.mrb[0].mxu0
      %v2714 = vpop.f32.mrb[0].mxu0
      %v2715 = vpop.f32.mrb[0].mxu0
      %v2716 = vpop.f32.mrb[0].mxu0
      %2717 = vmatprep.mubr.bf16.mxu0 0
      %2718 = vmatmul.mubr.bf16.gmra.mrb[0].mxu0 %v2637
      %v2719 = vpop.f32.mrb[0].mxu0
      %v2720 = vpop.f32.mrb[0].mxu0
      %v2721 = vpop.f32.mrb[0].mxu0
      %v2722 = vpop.f32.mrb[0].mxu0
      %2723 = vdwg.mxu0
      %v2724 = vld [vmem:[#allocation3] sm:$0xfe]
      %s2725 = scalar_lea.vmem %s5, 64
      %v2726 = vld [vmem:[%s2725] sm:$0xf]
      %v2727 = vld [vmem:[%s2725 + $0x4] sm:$0xf]
      %v2728 = vld [vmem:[%s2725 + $0x8] sm:$0xf]
      %v2729 = vld [vmem:[%s2725 + $0xc] sm:$0xf]
      %v2730 = vld [vmem:[%s2725 + $0x10] sm:$0xf]
      %v2731 = vld [vmem:[%s2725 + $0x14] sm:$0xf]
      %v2732 = vld [vmem:[%s2725 + $0x18] sm:$0xf]
      %v2733 = vld [vmem:[%s2725 + $0x1c] sm:$0xf]
      %vm2741 = vcmask 1046528
      %v2742 = vrot.slane %v2724, 1
      %v2743 = vrot.slane %v2391, 1
      %v2744 = vsel %vm2741, %v2742, %v2743
      %v2745 = vrot.slane %v2392, 1
      %v2746 = vsel %vm2741, %v2743, %v2745
      %v2747 = vrot.slane %v2393, 1
      %v2748 = vsel %vm2741, %v2745, %v2747
      %v2749 = vrot.slane %v2394, 1
      %v2750 = vsel %vm2741, %v2747, %v2749
      %v2751 = vrot.slane %v2395, 1
      %v2752 = vsel %vm2741, %v2749, %v2751
      %v2753 = vrot.slane %v2405, 1
      %v2754 = vsel %vm2741, %v2751, %v2753
      %v2763 = vunpack.c.l.b16 %v2726
      %v2764 = vunpack.c.l.b16 %v2727
      %v2765 = vunpack.c.l.b16 %v2728
      %v2766 = vunpack.c.l.b16 %v2729
      %v2767 = vunpack.c.l.b16 %v2730
      %v2768 = vunpack.c.l.b16 %v2731
      %v2769 = vunpack.c.l.b16 %v2732
      %v2770 = vunpack.c.l.b16 %v2733
      %v2771 = vpack.c.b16 %v2764, %v2763
      %v2772 = vpack.c.b16 %v2766, %v2765
      %v2773 = vpack.c.b16 %v2768, %v2767
      %v2774 = vpack.c.b16 %v2770, %v2769
      %v2780 = vsel %vm2382, %v2744, 0
      %v2783 = vsel %vm2382, %v2746, 0
      %v2786 = vsel %vm2382, %v2748, 0
      %v2789 = vsel %vm2382, %v2750, 0
      %v2792 = vsel %vm2382, %v2752, 0
      %v2795 = vsel %vm2382, %v2754, 0
      %v2798 = vsel %vm2382, %v2753, 0
      %2800 = vmatprep.subr.bf16.mxu0 0
      %2801 = vmatpush1.bf16.msra.mxu0 %v2771
      %2802 = vmatprep.subr.bf16.mxu0 0
      %2803 = vmatpush1.bf16.msra.mxu0 %v2772
      %2804 = vmatprep.subr.bf16.mxu0 0
      %2805 = vmatpush1.bf16.msra.mxu0 %v2773
      %2806 = vmatprep.subr.bf16.mxu0 0
      %2807 = vmatpush1.bf16.msra.mxu0 %v2774
      %2808 = vmatprep.subr.bf16.mxu0 0
      %2809 = vmatpush1.bf16.msra.mxu0 0
      %2810 = vmatprep.subr.bf16.mxu0 0
      %2811 = vmatpush1.bf16.msra.mxu0 0
      %2812 = vmatprep.subr.bf16.mxu0 0
      %2813 = vmatpush1.bf16.msra.mxu0 0
      %2814 = vmatprep.subr.bf16.mxu0 0
      %2815 = vmatpush1.bf16.msra.mxu0 0
      %2816 = vmatprep.subr.bf16.mxu0 0
      %2817 = vmatpush1.bf16.msra.mxu0 0
      %2818 = vmatprep.subr.bf16.mxu0 0
      %2819 = vmatpush1.bf16.msra.mxu0 0
      %2820 = vmatprep.subr.bf16.mxu0 0
      %2821 = vmatpush1.bf16.msra.mxu0 0
      %2822 = vmatprep.subr.bf16.mxu0 0
      %2823 = vmatpush1.bf16.msra.mxu0 0
      %2824 = vmatprep.subr.bf16.mxu0 0
      %2825 = vmatpush1.bf16.msra.mxu0 0
      %2826 = vmatprep.subr.bf16.mxu0 0
      %2827 = vmatpush1.bf16.msra.mxu0 0
      %2828 = vmatprep.subr.bf16.mxu0 0
      %2829 = vmatpush1.bf16.msra.mxu0 0
      %2830 = vmatprep.subr.bf16.mxu0 0
      %2831 = vmatpush1.bf16.msra.mxu0 0
      %2832 = vmatprep.mubr.bf16.mxu0 0
      %2833 = vmatmul.mubr.bf16.gmra.mrb[0].mxu0 %v2780
      %v2834 = vpop.f32.mrb[0].mxu0
      %v2835 = vadd.f32 0.0, %v2834
      %v2836 = vpop.f32.mrb[0].mxu0
      %v2837 = vpop.f32.mrb[0].mxu0
      %v2838 = vadd.f32 0.0, %v2837
      %v2839 = vpop.f32.mrb[0].mxu0
      %2840 = vmatprep.mubr.bf16.mxu0 0
      %2841 = vmatmul.mubr.bf16.gmra.mrb[0].mxu0 %v2783
      %v2842 = vpop.f32.mrb[0].mxu0
      %v2843 = vadd.f32 0.0, %v2842
      %v2844 = vpop.f32.mrb[0].mxu0
      %v2845 = vpop.f32.mrb[0].mxu0
      %v2846 = vadd.f32 0.0, %v2845
      %v2847 = vpop.f32.mrb[0].mxu0
      %2848 = vmatprep.mubr.bf16.mxu0 0
      %2849 = vmatmul.mubr.bf16.gmra.mrb[0].mxu0 %v2786
      %v2850 = vpop.f32.mrb[0].mxu0
      %v2851 = vadd.f32 0.0, %v2850
      %v2852 = vpop.f32.mrb[0].mxu0
      %v2853 = vpop.f32.mrb[0].mxu0
      %v2854 = vadd.f32 0.0, %v2853
      %v2855 = vpop.f32.mrb[0].mxu0
      %2856 = vmatprep.mubr.bf16.mxu0 0
      %2857 = vmatmul.mubr.bf16.gmra.mrb[0].mxu0 %v2789
      %v2858 = vpop.f32.mrb[0].mxu0
      %v2859 = vadd.f32 0.0, %v2858
      %v2860 = vpop.f32.mrb[0].mxu0
      %v2861 = vpop.f32.mrb[0].mxu0
      %v2862 = vadd.f32 0.0, %v2861
      %v2863 = vpop.f32.mrb[0].mxu0
      %2864 = vmatprep.mubr.bf16.mxu0 0
      %2865 = vmatmul.mubr.bf16.gmra.mrb[0].mxu0 %v2792
      %v2866 = vpop.f32.mrb[0].mxu0
      %v2867 = vadd.f32 0.0, %v2866
      %v2868 = vpop.f32.mrb[0].mxu0
      %v2869 = vpop.f32.mrb[0].mxu0
      %v2870 = vadd.f32 0.0, %v2869
      %v2871 = vpop.f32.mrb[0].mxu0
      %2872 = vmatprep.mubr.bf16.mxu0 0
      %2873 = vmatmul.mubr.bf16.gmra.mrb[0].mxu0 %v2795
      %v2874 = vpop.f32.mrb[0].mxu0
      %v2875 = vpop.f32.mrb[0].mxu0
      %v2876 = vpop.f32.mrb[0].mxu0
      %v2877 = vpop.f32.mrb[0].mxu0
      %2878 = vmatprep.mubr.bf16.mxu0 0
      %2879 = vmatmul.mubr.bf16.gmra.mrb[0].mxu0 %v2798
      %v2880 = vpop.f32.mrb[0].mxu0
      %v2881 = vpop.f32.mrb[0].mxu0
      %v2882 = vpop.f32.mrb[0].mxu0
      %v2883 = vpop.f32.mrb[0].mxu0
      %2884 = vdwg.mxu0
      %v2885 = vadd.f32 %v2674, %v2835
      %v2886 = vadd.f32 %v2677, %v2838
      %v2887 = vadd.f32 %v2682, %v2843
      %v2888 = vadd.f32 %v2685, %v2846
      %v2889 = vadd.f32 %v2690, %v2851
      %v2890 = vadd.f32 %v2693, %v2854
      %v2891 = vadd.f32 %v2698, %v2859
      %v2892 = vadd.f32 %v2701, %v2862
      %v2893 = vadd.f32 %v2706, %v2867
      %v2894 = vadd.f32 %v2709, %v2870
      %v2895 = vld [vmem:[#allocation3] sm:$0xe0]
      %v2896 = vld [vmem:[#allocation3 + $0x8] sm:$0xff]
      %v2897 = vld [vmem:[#allocation3 + $0x10] sm:$0xff]
      %v2898 = vld [vmem:[#allocation3 + $0x18] sm:$0xff]
      %v2899 = vld [vmem:[#allocation3 + $0x20] sm:$0xff]
      %v2900 = vld [vmem:[#allocation3 + $0x28] sm:$0xff]
      %v2901 = vld [vmem:[#allocation3 + $0x30] sm:$0xff]
      %v2902 = vld [vmem:[#allocation3 + $0x38] sm:$0x3]
      %s2903 = scalar_lea.vmem %s5, 96
      %v2904 = vld [vmem:[%s2903] sm:$0xf]
      %v2905 = vld [vmem:[%s2903 + $0x4] sm:$0xf]
      %v2906 = vld [vmem:[%s2903 + $0x8] sm:$0xf]
      %v2907 = vld [vmem:[%s2903 + $0xc] sm:$0xf]
      %v2908 = vld [vmem:[%s2903 + $0x10] sm:$0xf]
      %v2909 = vld [vmem:[%s2903 + $0x14] sm:$0xf]
      %v2910 = vld [vmem:[%s2903 + $0x18] sm:$0xf]
      %v2911 = vld [vmem:[%s2903 + $0x1c] sm:$0xf]
      %v2913 = vshrl.u32 %v2895, 16
      %v2915 = vrot.slane %v2913, 5
      %v2916 = vshll.u32 %v2895, 16
      %v2918 = vrot.slane %v2916, 6
      %v2919 = vor.u32 %v2915, %v2918
      %v2921 = vshrl.u32 %v2896, 16
      %v2923 = vrot.slane %v2921, 5
      %v2924 = vshll.u32 %v2896, 16
      %v2926 = vrot.slane %v2924, 6
      %v2927 = vor.u32 %v2923, %v2926
      %v2928 = vsel %vm912, %v2919, %v2927
      %v2930 = vshrl.u32 %v2897, 16
      %v2932 = vrot.slane %v2930, 5
      %v2933 = vshll.u32 %v2897, 16
      %v2935 = vrot.slane %v2933, 6
      %v2936 = vor.u32 %v2932, %v2935
      %v2937 = vsel %vm912, %v2927, %v2936
      %v2939 = vshrl.u32 %v2898, 16
      %v2941 = vrot.slane %v2939, 5
      %v2942 = vshll.u32 %v2898, 16
      %v2944 = vrot.slane %v2942, 6
      %v2945 = vor.u32 %v2941, %v2944
      %v2946 = vsel %vm912, %v2936, %v2945
      %v2948 = vshrl.u32 %v2899, 16
      %v2950 = vrot.slane %v2948, 5
      %v2951 = vshll.u32 %v2899, 16
      %v2953 = vrot.slane %v2951, 6
      %v2954 = vor.u32 %v2950, %v2953
      %v2955 = vsel %vm912, %v2945, %v2954
      %v2957 = vshrl.u32 %v2900, 16
      %v2959 = vrot.slane %v2957, 5
      %v2960 = vshll.u32 %v2900, 16
      %v2962 = vrot.slane %v2960, 6
      %v2963 = vor.u32 %v2959, %v2962
      %v2964 = vsel %vm912, %v2954, %v2963
      %v2966 = vshrl.u32 %v2901, 16
      %v2968 = vrot.slane %v2966, 5
      %v2969 = vshll.u32 %v2901, 16
      %v2971 = vrot.slane %v2969, 6
      %v2972 = vor.u32 %v2968, %v2971
      %v2973 = vsel %vm912, %v2963, %v2972
      %v2975 = vshrl.u32 %v2902, 16
      %v2977 = vrot.slane %v2975, 5
      %v2978 = vshll.u32 %v2902, 16
      %v2980 = vrot.slane %v2978, 6
      %v2981 = vor.u32 %v2977, %v2980
      %v2982 = vsel %vm912, %v2972, %v2981
      %v2991 = vunpack.c.l.b16 %v2904
      %v2992 = vunpack.c.l.b16 %v2905
      %v2993 = vunpack.c.l.b16 %v2906
      %v2994 = vunpack.c.l.b16 %v2907
      %v2995 = vunpack.c.l.b16 %v2908
      %v2996 = vunpack.c.l.b16 %v2909
      %v2997 = vunpack.c.l.b16 %v2910
      %v2998 = vunpack.c.l.b16 %v2911
      %v2999 = vpack.c.b16 %v2992, %v2991
      %v3000 = vpack.c.b16 %v2994, %v2993
      %v3001 = vpack.c.b16 %v2996, %v2995
      %v3002 = vpack.c.b16 %v2998, %v2997
      %v3008 = vsel %vm2382, %v2928, 0
      %v3011 = vsel %vm2382, %v2937, 0
      %v3014 = vsel %vm2382, %v2946, 0
      %v3017 = vsel %vm2382, %v2955, 0
      %v3020 = vsel %vm2382, %v2964, 0
      %v3023 = vsel %vm2382, %v2973, 0
      %v3026 = vsel %vm2382, %v2982, 0
      %3028 = vmatprep.subr.bf16.mxu0 0
      %3029 = vmatpush1.bf16.msra.mxu0 %v2999
      %3030 = vmatprep.subr.bf16.mxu0 0
      %3031 = vmatpush1.bf16.msra.mxu0 %v3000
      %3032 = vmatprep.subr.bf16.mxu0 0
      %3033 = vmatpush1.bf16.msra.mxu0 %v3001
      %3034 = vmatprep.subr.bf16.mxu0 0
      %3035 = vmatpush1.bf16.msra.mxu0 %v3002
      %3036 = vmatprep.subr.bf16.mxu0 0
      %3037 = vmatpush1.bf16.msra.mxu0 0
      %3038 = vmatprep.subr.bf16.mxu0 0
      %3039 = vmatpush1.bf16.msra.mxu0 0
      %3040 = vmatprep.subr.bf16.mxu0 0
      %3041 = vmatpush1.bf16.msra.mxu0 0
      %3042 = vmatprep.subr.bf16.mxu0 0
      %3043 = vmatpush1.bf16.msra.mxu0 0
      %3044 = vmatprep.subr.bf16.mxu0 0
      %3045 = vmatpush1.bf16.msra.mxu0 0
      %3046 = vmatprep.subr.bf16.mxu0 0
      %3047 = vmatpush1.bf16.msra.mxu0 0
      %3048 = vmatprep.subr.bf16.mxu0 0
      %3049 = vmatpush1.bf16.msra.mxu0 0
      %3050 = vmatprep.subr.bf16.mxu0 0
      %3051 = vmatpush1.bf16.msra.mxu0 0
      %3052 = vmatprep.subr.bf16.mxu0 0
      %3053 = vmatpush1.bf16.msra.mxu0 0
      %3054 = vmatprep.subr.bf16.mxu0 0
      %3055 = vmatpush1.bf16.msra.mxu0 0
      %3056 = vmatprep.subr.bf16.mxu0 0
      %3057 = vmatpush1.bf16.msra.mxu0 0
      %3058 = vmatprep.subr.bf16.mxu0 0
      %3059 = vmatpush1.bf16.msra.mxu0 0
      %3060 = vmatprep.mubr.bf16.mxu0 0
      %3061 = vmatmul.mubr.bf16.gmra.mrb[0].mxu0 %v3008
      %v3062 = vpop.f32.mrb[0].mxu0
      %v3063 = vadd.f32 0.0, %v3062
      %v3064 = vpop.f32.mrb[0].mxu0
      %v3065 = vpop.f32.mrb[0].mxu0
      %v3066 = vadd.f32 0.0, %v3065
      %v3067 = vpop.f32.mrb[0].mxu0
      %3068 = vmatprep.mubr.bf16.mxu0 0
      %3069 = vmatmul.mubr.bf16.gmra.mrb[0].mxu0 %v3011
      %v3070 = vpop.f32.mrb[0].mxu0
      %v3071 = vadd.f32 0.0, %v3070
      %v3072 = vpop.f32.mrb[0].mxu0
      %v3073 = vpop.f32.mrb[0].mxu0
      %v3074 = vadd.f32 0.0, %v3073
      %v3075 = vpop.f32.mrb[0].mxu0
      %3076 = vmatprep.mubr.bf16.mxu0 0
      %3077 = vmatmul.mubr.bf16.gmra.mrb[0].mxu0 %v3014
      %v3078 = vpop.f32.mrb[0].mxu0
      %v3079 = vadd.f32 0.0, %v3078
      %v3080 = vpop.f32.mrb[0].mxu0
      %v3081 = vpop.f32.mrb[0].mxu0
      %v3082 = vadd.f32 0.0, %v3081
      %v3083 = vpop.f32.mrb[0].mxu0
      %3084 = vmatprep.mubr.bf16.mxu0 0
      %3085 = vmatmul.mubr.bf16.gmra.mrb[0].mxu0 %v3017
      %v3086 = vpop.f32.mrb[0].mxu0
      %v3087 = vadd.f32 0.0, %v3086
      %v3088 = vpop.f32.mrb[0].mxu0
      %v3089 = vpop.f32.mrb[0].mxu0
      %v3090 = vadd.f32 0.0, %v3089
      %v3091 = vpop.f32.mrb[0].mxu0
      %3092 = vmatprep.mubr.bf16.mxu0 0
      %3093 = vmatmul.mubr.bf16.gmra.mrb[0].mxu0 %v3020
      %v3094 = vpop.f32.mrb[0].mxu0
      %v3095 = vadd.f32 0.0, %v3094
      %v3096 = vpop.f32.mrb[0].mxu0
      %v3097 = vpop.f32.mrb[0].mxu0
      %v3098 = vadd.f32 0.0, %v3097
      %v3099 = vpop.f32.mrb[0].mxu0
      %3100 = vmatprep.mubr.bf16.mxu0 0
      %3101 = vmatmul.mubr.bf16.gmra.mrb[0].mxu0 %v3023
      %v3102 = vpop.f32.mrb[0].mxu0
      %v3103 = vpop.f32.mrb[0].mxu0
      %v3104 = vpop.f32.mrb[0].mxu0
      %v3105 = vpop.f32.mrb[0].mxu0
      %3106 = vmatprep.mubr.bf16.mxu0 0
      %3107 = vmatmul.mubr.bf16.gmra.mrb[0].mxu0 %v3026
      %v3108 = vpop.f32.mrb[0].mxu0
      %v3109 = vpop.f32.mrb[0].mxu0
      %v3110 = vpop.f32.mrb[0].mxu0
      %v3111 = vpop.f32.mrb[0].mxu0
      %3112 = vdwg.mxu0
      %v3113 = vadd.f32 %v2885, %v3063
      %v3114 = vadd.f32 %v2886, %v3066
      %v3115 = vadd.f32 %v2887, %v3071
      %v3116 = vadd.f32 %v2888, %v3074
      %v3117 = vadd.f32 %v2889, %v3079
      %v3118 = vadd.f32 %v2890, %v3082
      %v3119 = vadd.f32 %v2891, %v3087
      %v3120 = vadd.f32 %v2892, %v3090
      %v3121 = vadd.f32 %v2893, %v3095
      %v3122 = vadd.f32 %v2894, %v3098
      %v3123 = vld [vmem:[#allocation3] sm:$0xc0]
      %s3124 = scalar_lea.vmem %s5, 128
      %v3125 = vld [vmem:[%s3124] sm:$0xf]
      %v3126 = vld [vmem:[%s3124 + $0x4] sm:$0xf]
      %v3127 = vld [vmem:[%s3124 + $0x8] sm:$0xf]
      %v3128 = vld [vmem:[%s3124 + $0xc] sm:$0xf]
      %v3129 = vld [vmem:[%s3124 + $0x10] sm:$0xf]
      %v3130 = vld [vmem:[%s3124 + $0x14] sm:$0xf]
      %v3131 = vld [vmem:[%s3124 + $0x18] sm:$0xf]
      %v3132 = vld [vmem:[%s3124 + $0x1c] sm:$0xf]
      %v3141 = vrot.slane %v3123, 6
      %v3142 = vrot.slane %v2896, 6
      %v3143 = vsel %vm1241, %v3141, %v3142
      %v3144 = vrot.slane %v2897, 6
      %v3145 = vsel %vm1241, %v3142, %v3144
      %v3146 = vrot.slane %v2898, 6
      %v3147 = vsel %vm1241, %v3144, %v3146
      %v3148 = vrot.slane %v2899, 6
      %v3149 = vsel %vm1241, %v3146, %v3148
      %v3150 = vrot.slane %v2900, 6
      %v3151 = vsel %vm1241, %v3148, %v3150
      %v3152 = vrot.slane %v2901, 6
      %v3153 = vsel %vm1241, %v3150, %v3152
      %v3154 = vrot.slane %v2902, 6
      %v3155 = vsel %vm1241, %v3152, %v3154
      %v3164 = vunpack.c.l.b16 %v3125
      %v3165 = vunpack.c.l.b16 %v3126
      %v3166 = vunpack.c.l.b16 %v3127
      %v3167 = vunpack.c.l.b16 %v3128
      %v3168 = vunpack.c.l.b16 %v3129
      %v3169 = vunpack.c.l.b16 %v3130
      %v3170 = vunpack.c.l.b16 %v3131
      %v3171 = vunpack.c.l.b16 %v3132
      %v3172 = vpack.c.b16 %v3165, %v3164
      %v3173 = vpack.c.b16 %v3167, %v3166
      %v3174 = vpack.c.b16 %v3169, %v3168
      %v3175 = vpack.c.b16 %v3171, %v3170
      %v3181 = vsel %vm2382, %v3143, 0
      %v3184 = vsel %vm2382, %v3145, 0
      %v3187 = vsel %vm2382, %v3147, 0
      %v3190 = vsel %vm2382, %v3149, 0
      %v3193 = vsel %vm2382, %v3151, 0
      %v3196 = vsel %vm2382, %v3153, 0
      %v3199 = vsel %vm2382, %v3155, 0
      %3201 = vmatprep.subr.bf16.mxu0 0
      %3202 = vmatpush1.bf16.msra.mxu0 %v3172
      %3203 = vmatprep.subr.bf16.mxu0 0
      %3204 = vmatpush1.bf16.msra.mxu0 %v3173
      %3205 = vmatprep.subr.bf16.mxu0 0
      %3206 = vmatpush1.bf16.msra.mxu0 %v3174
      %3207 = vmatprep.subr.bf16.mxu0 0
      %3208 = vmatpush1.bf16.msra.mxu0 %v3175
      %3209 = vmatprep.subr.bf16.mxu0 0
      %3210 = vmatpush1.bf16.msra.mxu0 0
      %3211 = vmatprep.subr.bf16.mxu0 0
      %3212 = vmatpush1.bf16.msra.mxu0 0
      %3213 = vmatprep.subr.bf16.mxu0 0
      %3214 = vmatpush1.bf16.msra.mxu0 0
      %3215 = vmatprep.subr.bf16.mxu0 0
      %3216 = vmatpush1.bf16.msra.mxu0 0
      %3217 = vmatprep.subr.bf16.mxu0 0
      %3218 = vmatpush1.bf16.msra.mxu0 0
      %3219 = vmatprep.subr.bf16.mxu0 0
      %3220 = vmatpush1.bf16.msra.mxu0 0
      %3221 = vmatprep.subr.bf16.mxu0 0
      %3222 = vmatpush1.bf16.msra.mxu0 0
      %3223 = vmatprep.subr.bf16.mxu0 0
      %3224 = vmatpush1.bf16.msra.mxu0 0
      %3225 = vmatprep.subr.bf16.mxu0 0
      %3226 = vmatpush1.bf16.msra.mxu0 0
      %3227 = vmatprep.subr.bf16.mxu0 0
      %3228 = vmatpush1.bf16.msra.mxu0 0
      %3229 = vmatprep.subr.bf16.mxu0 0
      %3230 = vmatpush1.bf16.msra.mxu0 0
      %3231 = vmatprep.subr.bf16.mxu0 0
      %3232 = vmatpush1.bf16.msra.mxu0 0
      %3233 = vmatprep.mubr.bf16.mxu0 0
      %3234 = vmatmul.mubr.bf16.gmra.mrb[0].mxu0 %v3181
      %v3235 = vpop.f32.mrb[0].mxu0
      %v3236 = vadd.f32 0.0, %v3235
      %v3237 = vpop.f32.mrb[0].mxu0
      %v3238 = vpop.f32.mrb[0].mxu0
      %v3239 = vadd.f32 0.0, %v3238
      %v3240 = vpop.f32.mrb[0].mxu0
      %3241 = vmatprep.mubr.bf16.mxu0 0
      %3242 = vmatmul.mubr.bf16.gmra.mrb[0].mxu0 %v3184
      %v3243 = vpop.f32.mrb[0].mxu0
      %v3244 = vadd.f32 0.0, %v3243
      %v3245 = vpop.f32.mrb[0].mxu0
      %v3246 = vpop.f32.mrb[0].mxu0
      %v3247 = vadd.f32 0.0, %v3246
      %v3248 = vpop.f32.mrb[0].mxu0
      %3249 = vmatprep.mubr.bf16.mxu0 0
      %3250 = vmatmul.mubr.bf16.gmra.mrb[0].mxu0 %v3187
      %v3251 = vpop.f32.mrb[0].mxu0
      %v3252 = vadd.f32 0.0, %v3251
      %v3253 = vpop.f32.mrb[0].mxu0
      %v3254 = vpop.f32.mrb[0].mxu0
      %v3255 = vadd.f32 0.0, %v3254
      %v3256 = vpop.f32.mrb[0].mxu0
      %3257 = vmatprep.mubr.bf16.mxu0 0
      %3258 = vmatmul.mubr.bf16.gmra.mrb[0].mxu0 %v3190
      %v3259 = vpop.f32.mrb[0].mxu0
      %v3260 = vadd.f32 0.0, %v3259
      %v3261 = vpop.f32.mrb[0].mxu0
      %v3262 = vpop.f32.mrb[0].mxu0
      %v3263 = vadd.f32 0.0, %v3262
      %v3264 = vpop.f32.mrb[0].mxu0
      %3265 = vmatprep.mubr.bf16.mxu0 0
      %3266 = vmatmul.mubr.bf16.gmra.mrb[0].mxu0 %v3193
      %v3267 = vpop.f32.mrb[0].mxu0
      %v3268 = vadd.f32 0.0, %v3267
      %v3269 = vpop.f32.mrb[0].mxu0
      %v3270 = vpop.f32.mrb[0].mxu0
      %v3271 = vadd.f32 0.0, %v3270
      %v3272 = vpop.f32.mrb[0].mxu0
      %3273 = vmatprep.mubr.bf16.mxu0 0
      %3274 = vmatmul.mubr.bf16.gmra.mrb[0].mxu0 %v3196
      %v3275 = vpop.f32.mrb[0].mxu0
      %v3276 = vpop.f32.mrb[0].mxu0
      %v3277 = vpop.f32.mrb[0].mxu0
      %v3278 = vpop.f32.mrb[0].mxu0
      %3279 = vmatprep.mubr.bf16.mxu0 0
      %3280 = vmatmul.mubr.bf16.gmra.mrb[0].mxu0 %v3199
      %v3281 = vpop.f32.mrb[0].mxu0
      %v3282 = vpop.f32.mrb[0].mxu0
      %v3283 = vpop.f32.mrb[0].mxu0
      %v3284 = vpop.f32.mrb[0].mxu0
      %3285 = vdwg.mxu0
      %v3286 = vadd.f32 %v3113, %v3236
      %v3287 = vadd.f32 %v3114, %v3239
      %v3288 = vadd.f32 %v3115, %v3244
      %v3289 = vadd.f32 %v3116, %v3247
      %v3290 = vadd.f32 %v3117, %v3252
      %v3291 = vadd.f32 %v3118, %v3255
      %v3292 = vadd.f32 %v3119, %v3260
      %v3293 = vadd.f32 %v3120, %v3263
      %v3294 = vadd.f32 %v3121, %v3268
      %v3295 = vadd.f32 %v3122, %v3271
      %v3296 = vld [vmem:[#allocation3 + $0x38] sm:$0x7]
      %s3297 = scalar_lea.vmem %s5, 160
      %v3298 = vld [vmem:[%s3297] sm:$0xf]
      %v3299 = vld [vmem:[%s3297 + $0x4] sm:$0xf]
      %v3300 = vld [vmem:[%s3297 + $0x8] sm:$0xf]
      %v3301 = vld [vmem:[%s3297 + $0xc] sm:$0xf]
      %v3302 = vld [vmem:[%s3297 + $0x10] sm:$0xf]
      %v3303 = vld [vmem:[%s3297 + $0x14] sm:$0xf]
      %v3304 = vld [vmem:[%s3297 + $0x18] sm:$0xf]
      %v3305 = vld [vmem:[%s3297 + $0x1c] sm:$0xf]
      %vm3306 = vsmask.f32 1280
      %v3308 = vshrl.u32 %v3123, 16
      %v3310 = vrot.slane %v3308, 6
      %v3311 = vshll.u32 %v3123, 16
      %v3313 = vrot.slane %v3311, 7
      %v3314 = vor.u32 %v3310, %v3313
      %v3315 = vrot.slane %v2921, 6
      %v3316 = vrot.slane %v2924, 7
      %v3317 = vor.u32 %v3315, %v3316
      %v3318 = vsel %vm3306, %v3314, %v3317
      %v3319 = vrot.slane %v2930, 6
      %v3320 = vrot.slane %v2933, 7
      %v3321 = vor.u32 %v3319, %v3320
      %v3322 = vsel %vm3306, %v3317, %v3321
      %v3323 = vrot.slane %v2939, 6
      %v3324 = vrot.slane %v2942, 7
      %v3325 = vor.u32 %v3323, %v3324
      %v3326 = vsel %vm3306, %v3321, %v3325
      %v3327 = vrot.slane %v2948, 6
      %v3328 = vrot.slane %v2951, 7
      %v3329 = vor.u32 %v3327, %v3328
      %v3330 = vsel %vm3306, %v3325, %v3329
      %v3331 = vrot.slane %v2957, 6
      %v3332 = vrot.slane %v2960, 7
      %v3333 = vor.u32 %v3331, %v3332
      %v3334 = vsel %vm3306, %v3329, %v3333
      %v3335 = vrot.slane %v2966, 6
      %v3336 = vrot.slane %v2969, 7
      %v3337 = vor.u32 %v3335, %v3336
      %v3338 = vsel %vm3306, %v3333, %v3337
      %v3340 = vshrl.u32 %v3296, 16
      %v3342 = vrot.slane %v3340, 6
      %v3343 = vshll.u32 %v3296, 16
      %v3345 = vrot.slane %v3343, 7
      %v3346 = vor.u32 %v3342, %v3345
      %v3347 = vsel %vm3306, %v3337, %v3346
      %v3356 = vunpack.c.l.b16 %v3298
      %v3357 = vunpack.c.l.b16 %v3299
      %v3358 = vunpack.c.l.b16 %v3300
      %v3359 = vunpack.c.l.b16 %v3301
      %v3360 = vunpack.c.l.b16 %v3302
      %v3361 = vunpack.c.l.b16 %v3303
      %v3362 = vunpack.c.l.b16 %v3304
      %v3363 = vunpack.c.l.b16 %v3305
      %v3364 = vpack.c.b16 %v3357, %v3356
      %v3365 = vpack.c.b16 %v3359, %v3358
      %v3366 = vpack.c.b16 %v3361, %v3360
      %v3367 = vpack.c.b16 %v3363, %v3362
      %v3373 = vsel %vm2382, %v3318, 0
      %v3376 = vsel %vm2382, %v3322, 0
      %v3379 = vsel %vm2382, %v3326, 0
      %v3382 = vsel %vm2382, %v3330, 0
      %v3385 = vsel %vm2382, %v3334, 0
      %v3388 = vsel %vm2382, %v3338, 0
      %v3391 = vsel %vm2382, %v3347, 0
      %3393 = vmatprep.subr.bf16.mxu0 0
      %3394 = vmatpush1.bf16.msra.mxu0 %v3364
      %3395 = vmatprep.subr.bf16.mxu0 0
      %3396 = vmatpush1.bf16.msra.mxu0 %v3365
      %3397 = vmatprep.subr.bf16.mxu0 0
      %3398 = vmatpush1.bf16.msra.mxu0 %v3366
      %3399 = vmatprep.subr.bf16.mxu0 0
      %3400 = vmatpush1.bf16.msra.mxu0 %v3367
      %3401 = vmatprep.subr.bf16.mxu0 0
      %3402 = vmatpush1.bf16.msra.mxu0 0
      %3403 = vmatprep.subr.bf16.mxu0 0
      %3404 = vmatpush1.bf16.msra.mxu0 0
      %3405 = vmatprep.subr.bf16.mxu0 0
      %3406 = vmatpush1.bf16.msra.mxu0 0
      %3407 = vmatprep.subr.bf16.mxu0 0
      %3408 = vmatpush1.bf16.msra.mxu0 0
      %3409 = vmatprep.subr.bf16.mxu0 0
      %3410 = vmatpush1.bf16.msra.mxu0 0
      %3411 = vmatprep.subr.bf16.mxu0 0
      %3412 = vmatpush1.bf16.msra.mxu0 0
      %3413 = vmatprep.subr.bf16.mxu0 0
      %3414 = vmatpush1.bf16.msra.mxu0 0
      %3415 = vmatprep.subr.bf16.mxu0 0
      %3416 = vmatpush1.bf16.msra.mxu0 0
      %3417 = vmatprep.subr.bf16.mxu0 0
      %3418 = vmatpush1.bf16.msra.mxu0 0
      %3419 = vmatprep.subr.bf16.mxu0 0
      %3420 = vmatpush1.bf16.msra.mxu0 0
      %3421 = vmatprep.subr.bf16.mxu0 0
      %3422 = vmatpush1.bf16.msra.mxu0 0
      %3423 = vmatprep.subr.bf16.mxu0 0
      %3424 = vmatpush1.bf16.msra.mxu0 0
      %3425 = vmatprep.mubr.bf16.mxu0 0
      %3426 = vmatmul.mubr.bf16.gmra.mrb[0].mxu0 %v3373
      %v3427 = vpop.f32.mrb[0].mxu0
      %v3428 = vadd.f32 0.0, %v3427
      %v3429 = vpop.f32.mrb[0].mxu0
      %v3430 = vpop.f32.mrb[0].mxu0
      %v3431 = vadd.f32 0.0, %v3430
      %v3432 = vpop.f32.mrb[0].mxu0
      %3433 = vmatprep.mubr.bf16.mxu0 0
      %3434 = vmatmul.mubr.bf16.gmra.mrb[0].mxu0 %v3376
      %v3435 = vpop.f32.mrb[0].mxu0
      %v3436 = vadd.f32 0.0, %v3435
      %v3437 = vpop.f32.mrb[0].mxu0
      %v3438 = vpop.f32.mrb[0].mxu0
      %v3439 = vadd.f32 0.0, %v3438
      %v3440 = vpop.f32.mrb[0].mxu0
      %3441 = vmatprep.mubr.bf16.mxu0 0
      %3442 = vmatmul.mubr.bf16.gmra.mrb[0].mxu0 %v3379
      %v3443 = vpop.f32.mrb[0].mxu0
      %v3444 = vadd.f32 0.0, %v3443
      %v3445 = vpop.f32.mrb[0].mxu0
      %v3446 = vpop.f32.mrb[0].mxu0
      %v3447 = vadd.f32 0.0, %v3446
      %v3448 = vpop.f32.mrb[0].mxu0
      %3449 = vmatprep.mubr.bf16.mxu0 0
      %3450 = vmatmul.mubr.bf16.gmra.mrb[0].mxu0 %v3382
      %v3451 = vpop.f32.mrb[0].mxu0
      %v3452 = vadd.f32 0.0, %v3451
      %v3453 = vpop.f32.mrb[0].mxu0
      %v3454 = vpop.f32.mrb[0].mxu0
      %v3455 = vadd.f32 0.0, %v3454
      %v3456 = vpop.f32.mrb[0].mxu0
      %3457 = vmatprep.mubr.bf16.mxu0 0
      %3458 = vmatmul.mubr.bf16.gmra.mrb[0].mxu0 %v3385
      %v3459 = vpop.f32.mrb[0].mxu0
      %v3460 = vadd.f32 0.0, %v3459
      %v3461 = vpop.f32.mrb[0].mxu0
      %v3462 = vpop.f32.mrb[0].mxu0
      %v3463 = vadd.f32 0.0, %v3462
      %v3464 = vpop.f32.mrb[0].mxu0
      %3465 = vmatprep.mubr.bf16.mxu0 0
      %3466 = vmatmul.mubr.bf16.gmra.mrb[0].mxu0 %v3388
      %v3467 = vpop.f32.mrb[0].mxu0
      %v3468 = vpop.f32.mrb[0].mxu0
      %v3469 = vpop.f32.mrb[0].mxu0
      %v3470 = vpop.f32.mrb[0].mxu0
      %3471 = vmatprep.mubr.bf16.mxu0 0
      %3472 = vmatmul.mubr.bf16.gmra.mrb[0].mxu0 %v3391
      %v3473 = vpop.f32.mrb[0].mxu0
      %v3474 = vpop.f32.mrb[0].mxu0
      %v3475 = vpop.f32.mrb[0].mxu0
      %v3476 = vpop.f32.mrb[0].mxu0
      %3477 = vdwg.mxu0
      %v3478 = vadd.f32 %v3286, %v3428
      %v3479 = vadd.f32 %v3287, %v3431
      %v3480 = vadd.f32 %v3288, %v3436
      %v3481 = vadd.f32 %v3289, %v3439
      %v3482 = vadd.f32 %v3290, %v3444
      %v3483 = vadd.f32 %v3291, %v3447
      %v3484 = vadd.f32 %v3292, %v3452
      %v3485 = vadd.f32 %v3293, %v3455
      %v3486 = vadd.f32 %v3294, %v3460
      %v3487 = vadd.f32 %v3295, %v3463
      %v3488 = vld [vmem:[#allocation3 + $0x8] sm:$0xf8]
      %v3489 = vld [vmem:[#allocation3 + $0x38] sm:$0x7f]
      %s3490 = scalar_lea.vmem %s5, 192
      %v3491 = vld [vmem:[%s3490] sm:$0xf]
      %v3492 = vld [vmem:[%s3490 + $0x4] sm:$0xf]
      %v3493 = vld [vmem:[%s3490 + $0x8] sm:$0xf]
      %v3494 = vld [vmem:[%s3490 + $0xc] sm:$0xf]
      %v3495 = vld [vmem:[%s3490 + $0x10] sm:$0xf]
      %v3496 = vld [vmem:[%s3490 + $0x14] sm:$0xf]
      %v3497 = vld [vmem:[%s3490 + $0x18] sm:$0xf]
      %v3498 = vld [vmem:[%s3490 + $0x1c] sm:$0xf]
      %vm3501 = vcmask 1044480
      %v3502 = vrot.slane %v3488, 3
      %v3503 = vrot.slane %v2897, 3
      %v3504 = vsel %vm3501, %v3502, %v3503
      %v3505 = vrot.slane %v2898, 3
      %v3506 = vsel %vm3501, %v3503, %v3505
      %v3507 = vrot.slane %v2899, 3
      %v3508 = vsel %vm3501, %v3505, %v3507
      %v3509 = vrot.slane %v2900, 3
      %v3510 = vsel %vm3501, %v3507, %v3509
      %v3511 = vrot.slane %v2901, 3
      %v3512 = vsel %vm3501, %v3509, %v3511
      %v3513 = vrot.slane %v3489, 3
      %v3514 = vsel %vm3501, %v3511, %v3513
      %v3523 = vunpack.c.l.b16 %v3491
      %v3524 = vunpack.c.l.b16 %v3492
      %v3525 = vunpack.c.l.b16 %v3493
      %v3526 = vunpack.c.l.b16 %v3494
      %v3527 = vunpack.c.l.b16 %v3495
      %v3528 = vunpack.c.l.b16 %v3496
      %v3529 = vunpack.c.l.b16 %v3497
      %v3530 = vunpack.c.l.b16 %v3498
      %v3531 = vpack.c.b16 %v3524, %v3523
      %v3532 = vpack.c.b16 %v3526, %v3525
      %v3533 = vpack.c.b16 %v3528, %v3527
      %v3534 = vpack.c.b16 %v3530, %v3529
      %v3540 = vsel %vm2382, %v3504, 0
      %v3543 = vsel %vm2382, %v3506, 0
      %v3546 = vsel %vm2382, %v3508, 0
      %v3549 = vsel %vm2382, %v3510, 0
      %v3552 = vsel %vm2382, %v3512, 0
      %v3555 = vsel %vm2382, %v3514, 0
      %v3558 = vsel %vm2382, %v3513, 0
      %3560 = vmatprep.subr.bf16.mxu0 0
      %3561 = vmatpush1.bf16.msra.mxu0 %v3531
      %3562 = vmatprep.subr.bf16.mxu0 0
      %3563 = vmatpush1.bf16.msra.mxu0 %v3532
      %3564 = vmatprep.subr.bf16.mxu0 0
      %3565 = vmatpush1.bf16.msra.mxu0 %v3533
      %3566 = vmatprep.subr.bf16.mxu0 0
      %3567 = vmatpush1.bf16.msra.mxu0 %v3534
      %3568 = vmatprep.subr.bf16.mxu0 0
      %3569 = vmatpush1.bf16.msra.mxu0 0
      %3570 = vmatprep.subr.bf16.mxu0 0
      %3571 = vmatpush1.bf16.msra.mxu0 0
      %3572 = vmatprep.subr.bf16.mxu0 0
      %3573 = vmatpush1.bf16.msra.mxu0 0
      %3574 = vmatprep.subr.bf16.mxu0 0
      %3575 = vmatpush1.bf16.msra.mxu0 0
      %3576 = vmatprep.subr.bf16.mxu0 0
      %3577 = vmatpush1.bf16.msra.mxu0 0
      %3578 = vmatprep.subr.bf16.mxu0 0
      %3579 = vmatpush1.bf16.msra.mxu0 0
      %3580 = vmatprep.subr.bf16.mxu0 0
      %3581 = vmatpush1.bf16.msra.mxu0 0
      %3582 = vmatprep.subr.bf16.mxu0 0
      %3583 = vmatpush1.bf16.msra.mxu0 0
      %3584 = vmatprep.subr.bf16.mxu0 0
      %3585 = vmatpush1.bf16.msra.mxu0 0
      %3586 = vmatprep.subr.bf16.mxu0 0
      %3587 = vmatpush1.bf16.msra.mxu0 0
      %3588 = vmatprep.subr.bf16.mxu0 0
      %3589 = vmatpush1.bf16.msra.mxu0 0
      %3590 = vmatprep.subr.bf16.mxu0 0
      %3591 = vmatpush1.bf16.msra.mxu0 0
      %3592 = vmatprep.mubr.bf16.mxu0 0
      %3593 = vmatmul.mubr.bf16.gmra.mrb[0].mxu0 %v3540
      %v3594 = vpop.f32.mrb[0].mxu0
      %v3595 = vadd.f32 0.0, %v3594
      %v3596 = vpop.f32.mrb[0].mxu0
      %v3597 = vpop.f32.mrb[0].mxu0
      %v3598 = vadd.f32 0.0, %v3597
      %v3599 = vpop.f32.mrb[0].mxu0
      %3600 = vmatprep.mubr.bf16.mxu0 0
      %3601 = vmatmul.mubr.bf16.gmra.mrb[0].mxu0 %v3543
      %v3602 = vpop.f32.mrb[0].mxu0
      %v3603 = vadd.f32 0.0, %v3602
      %v3604 = vpop.f32.mrb[0].mxu0
      %v3605 = vpop.f32.mrb[0].mxu0
      %v3606 = vadd.f32 0.0, %v3605
      %v3607 = vpop.f32.mrb[0].mxu0
      %3608 = vmatprep.mubr.bf16.mxu0 0
      %3609 = vmatmul.mubr.bf16.gmra.mrb[0].mxu0 %v3546
      %v3610 = vpop.f32.mrb[0].mxu0
      %v3611 = vadd.f32 0.0, %v3610
      %v3612 = vpop.f32.mrb[0].mxu0
      %v3613 = vpop.f32.mrb[0].mxu0
      %v3614 = vadd.f32 0.0, %v3613
      %v3615 = vpop.f32.mrb[0].mxu0
      %3616 = vmatprep.mubr.bf16.mxu0 0
      %3617 = vmatmul.mubr.bf16.gmra.mrb[0].mxu0 %v3549
      %v3618 = vpop.f32.mrb[0].mxu0
      %v3619 = vadd.f32 0.0, %v3618
      %v3620 = vpop.f32.mrb[0].mxu0
      %v3621 = vpop.f32.mrb[0].mxu0
      %v3622 = vadd.f32 0.0, %v3621
      %v3623 = vpop.f32.mrb[0].mxu0
      %3624 = vmatprep.mubr.bf16.mxu0 0
      %3625 = vmatmul.mubr.bf16.gmra.mrb[0].mxu0 %v3552
      %v3626 = vpop.f32.mrb[0].mxu0
      %v3627 = vadd.f32 0.0, %v3626
      %v3628 = vpop.f32.mrb[0].mxu0
      %v3629 = vpop.f32.mrb[0].mxu0
      %v3630 = vadd.f32 0.0, %v3629
      %v3631 = vpop.f32.mrb[0].mxu0
      %3632 = vmatprep.mubr.bf16.mxu0 0
      %3633 = vmatmul.mubr.bf16.gmra.mrb[0].mxu0 %v3555
      %v3634 = vpop.f32.mrb[0].mxu0
      %v3635 = vpop.f32.mrb[0].mxu0
      %v3636 = vpop.f32.mrb[0].mxu0
      %v3637 = vpop.f32.mrb[0].mxu0
      %3638 = vmatprep.mubr.bf16.mxu0 0
      %3639 = vmatmul.mubr.bf16.gmra.mrb[0].mxu0 %v3558
      %v3640 = vpop.f32.mrb[0].mxu0
      %v3641 = vpop.f32.mrb[0].mxu0
      %v3642 = vpop.f32.mrb[0].mxu0
      %v3643 = vpop.f32.mrb[0].mxu0
      %3644 = vdwg.mxu0
      %v3645 = vadd.f32 %v3478, %v3595
      %v3646 = vadd.f32 %v3479, %v3598
      %v3647 = vadd.f32 %v3480, %v3603
      %v3648 = vadd.f32 %v3481, %v3606
      %v3649 = vadd.f32 %v3482, %v3611
      %v3650 = vadd.f32 %v3483, %v3614
      %v3651 = vadd.f32 %v3484, %v3619
      %v3652 = vadd.f32 %v3485, %v3622
      %v3653 = vadd.f32 %v3486, %v3627
      %v3654 = vadd.f32 %v3487, %v3630
      %v3655 = vld [vmem:[#allocation3 + $0x38] sm:$0xff]
      %s3656 = scalar_lea.vmem %s5, 224
      %v3657 = vld [vmem:[%s3656] sm:$0xf]
      %v3658 = vld [vmem:[%s3656 + $0x4] sm:$0xf]
      %v3659 = vld [vmem:[%s3656 + $0x8] sm:$0xf]
      %v3660 = vld [vmem:[%s3656 + $0xc] sm:$0xf]
      %v3661 = vld [vmem:[%s3656 + $0x10] sm:$0xf]
      %v3662 = vld [vmem:[%s3656 + $0x14] sm:$0xf]
      %v3663 = vld [vmem:[%s3656 + $0x18] sm:$0xf]
      %v3664 = vld [vmem:[%s3656 + $0x1c] sm:$0xf]
      %vm3665 = vsmask.f32 4352
      %v3667 = vshrl.u32 %v3488, 16
      %v3669 = vrot.slane %v3667, 3
      %v3670 = vshll.u32 %v3488, 16
      %v3672 = vrot.slane %v3670, 4
      %v3673 = vor.u32 %v3669, %v3672
      %v3674 = vrot.slane %v2930, 3
      %v3675 = vrot.slane %v2933, 4
      %v3676 = vor.u32 %v3674, %v3675
      %v3677 = vsel %vm3665, %v3673, %v3676
      %v3678 = vrot.slane %v2939, 3
      %v3679 = vrot.slane %v2942, 4
      %v3680 = vor.u32 %v3678, %v3679
      %v3681 = vsel %vm3665, %v3676, %v3680
      %v3682 = vrot.slane %v2948, 3
      %v3683 = vrot.slane %v2951, 4
      %v3684 = vor.u32 %v3682, %v3683
      %v3685 = vsel %vm3665, %v3680, %v3684
      %v3686 = vrot.slane %v2957, 3
      %v3687 = vrot.slane %v2960, 4
      %v3688 = vor.u32 %v3686, %v3687
      %v3689 = vsel %vm3665, %v3684, %v3688
      %v3690 = vrot.slane %v2966, 3
      %v3691 = vrot.slane %v2969, 4
      %v3692 = vor.u32 %v3690, %v3691
      %v3693 = vsel %vm3665, %v3688, %v3692
      %v3695 = vshrl.u32 %v3655, 16
      %v3697 = vrot.slane %v3695, 3
      %v3698 = vshll.u32 %v3655, 16
      %v3700 = vrot.slane %v3698, 4
      %v3701 = vor.u32 %v3697, %v3700
      %v3702 = vsel %vm3665, %v3692, %v3701
      %v3711 = vunpack.c.l.b16 %v3657
      %v3712 = vunpack.c.l.b16 %v3658
      %v3713 = vunpack.c.l.b16 %v3659
      %v3714 = vunpack.c.l.b16 %v3660
      %v3715 = vunpack.c.l.b16 %v3661
      %v3716 = vunpack.c.l.b16 %v3662
      %v3717 = vunpack.c.l.b16 %v3663
      %v3718 = vunpack.c.l.b16 %v3664
      %v3719 = vpack.c.b16 %v3712, %v3711
      %v3720 = vpack.c.b16 %v3714, %v3713
      %v3721 = vpack.c.b16 %v3716, %v3715
      %v3722 = vpack.c.b16 %v3718, %v3717
      %v3728 = vsel %vm2382, %v3677, 0
      %v3731 = vsel %vm2382, %v3681, 0
      %v3734 = vsel %vm2382, %v3685, 0
      %v3737 = vsel %vm2382, %v3689, 0
      %v3740 = vsel %vm2382, %v3693, 0
      %v3743 = vsel %vm2382, %v3702, 0
      %v3746 = vsel %vm2382, %v3701, 0
      %3748 = vmatprep.subr.bf16.mxu0 0
      %3749 = vmatpush1.bf16.msra.mxu0 %v3719
      %3750 = vmatprep.subr.bf16.mxu0 0
      %3751 = vmatpush1.bf16.msra.mxu0 %v3720
      %3752 = vmatprep.subr.bf16.mxu0 0
      %3753 = vmatpush1.bf16.msra.mxu0 %v3721
      %3754 = vmatprep.subr.bf16.mxu0 0
      %3755 = vmatpush1.bf16.msra.mxu0 %v3722
      %3756 = vmatprep.subr.bf16.mxu0 0
      %3757 = vmatpush1.bf16.msra.mxu0 0
      %3758 = vmatprep.subr.bf16.mxu0 0
      %3759 = vmatpush1.bf16.msra.mxu0 0
      %3760 = vmatprep.subr.bf16.mxu0 0
      %3761 = vmatpush1.bf16.msra.mxu0 0
      %3762 = vmatprep.subr.bf16.mxu0 0
      %3763 = vmatpush1.bf16.msra.mxu0 0
      %3764 = vmatprep.subr.bf16.mxu0 0
      %3765 = vmatpush1.bf16.msra.mxu0 0
      %3766 = vmatprep.subr.bf16.mxu0 0
      %3767 = vmatpush1.bf16.msra.mxu0 0
      %3768 = vmatprep.subr.bf16.mxu0 0
      %3769 = vmatpush1.bf16.msra.mxu0 0
      %3770 = vmatprep.subr.bf16.mxu0 0
      %3771 = vmatpush1.bf16.msra.mxu0 0
      %3772 = vmatprep.subr.bf16.mxu0 0
      %3773 = vmatpush1.bf16.msra.mxu0 0
      %3774 = vmatprep.subr.bf16.mxu0 0
      %3775 = vmatpush1.bf16.msra.mxu0 0
      %3776 = vmatprep.subr.bf16.mxu0 0
      %3777 = vmatpush1.bf16.msra.mxu0 0
      %3778 = vmatprep.subr.bf16.mxu0 0
      %3779 = vmatpush1.bf16.msra.mxu0 0
      %3780 = vmatprep.mubr.bf16.mxu0 0
      %3781 = vmatmul.mubr.bf16.gmra.mrb[0].mxu0 %v3728
      %v3782 = vpop.f32.mrb[0].mxu0
      %v3783 = vadd.f32 0.0, %v3782
      %v3784 = vpop.f32.mrb[0].mxu0
      %v3785 = vpop.f32.mrb[0].mxu0
      %v3786 = vadd.f32 0.0, %v3785
      %v3787 = vpop.f32.mrb[0].mxu0
      %3788 = vmatprep.mubr.bf16.mxu0 0
      %3789 = vmatmul.mubr.bf16.gmra.mrb[0].mxu0 %v3731
      %v3790 = vpop.f32.mrb[0].mxu0
      %v3791 = vadd.f32 0.0, %v3790
      %v3792 = vpop.f32.mrb[0].mxu0
      %v3793 = vpop.f32.mrb[0].mxu0
      %v3794 = vadd.f32 0.0, %v3793
      %v3795 = vpop.f32.mrb[0].mxu0
      %3796 = vmatprep.mubr.bf16.mxu0 0
      %3797 = vmatmul.mubr.bf16.gmra.mrb[0].mxu0 %v3734
      %v3798 = vpop.f32.mrb[0].mxu0
      %v3799 = vadd.f32 0.0, %v3798
      %v3800 = vpop.f32.mrb[0].mxu0
      %v3801 = vpop.f32.mrb[0].mxu0
      %v3802 = vadd.f32 0.0, %v3801
      %v3803 = vpop.f32.mrb[0].mxu0
      %3804 = vmatprep.mubr.bf16.mxu0 0
      %3805 = vmatmul.mubr.bf16.gmra.mrb[0].mxu0 %v3737
      %v3806 = vpop.f32.mrb[0].mxu0
      %v3807 = vadd.f32 0.0, %v3806
      %v3808 = vpop.f32.mrb[0].mxu0
      %v3809 = vpop.f32.mrb[0].mxu0
      %v3810 = vadd.f32 0.0, %v3809
      %v3811 = vpop.f32.mrb[0].mxu0
      %3812 = vmatprep.mubr.bf16.mxu0 0
      %3813 = vmatmul.mubr.bf16.gmra.mrb[0].mxu0 %v3740
      %v3814 = vpop.f32.mrb[0].mxu0
      %v3815 = vadd.f32 0.0, %v3814
      %v3816 = vpop.f32.mrb[0].mxu0
      %v3817 = vpop.f32.mrb[0].mxu0
      %v3818 = vadd.f32 0.0, %v3817
      %v3819 = vpop.f32.mrb[0].mxu0
      %3820 = vmatprep.mubr.bf16.mxu0 0
      %3821 = vmatmul.mubr.bf16.gmra.mrb[0].mxu0 %v3743
      %v3822 = vpop.f32.mrb[0].mxu0
      %v3823 = vpop.f32.mrb[0].mxu0
      %v3824 = vpop.f32.mrb[0].mxu0
      %v3825 = vpop.f32.mrb[0].mxu0
      %3826 = vmatprep.mubr.bf16.mxu0 0
      %3827 = vmatmul.mubr.bf16.gmra.mrb[0].mxu0 %v3746
      %v3828 = vpop.f32.mrb[0].mxu0
      %v3829 = vpop.f32.mrb[0].mxu0
      %v3830 = vpop.f32.mrb[0].mxu0
      %v3831 = vpop.f32.mrb[0].mxu0
      %3832 = vdwg.mxu0
      %v3833 = vadd.f32 %v3645, %v3783
      %v3834 = vadd.f32 %v3646, %v3786
      %v3835 = vadd.f32 %v3647, %v3791
      %v3836 = vadd.f32 %v3648, %v3794
      %v3837 = vadd.f32 %v3649, %v3799
      %v3838 = vadd.f32 %v3650, %v3802
      %v3839 = vadd.f32 %v3651, %v3807
      %v3840 = vadd.f32 %v3652, %v3810
      %v3841 = vadd.f32 %v3653, %v3815
      %v3842 = vadd.f32 %v3654, %v3818
      %v3843 = vld [vmem:[#allocation3 + $0x8] sm:$0xf0]
      %s3844 = scalar_lea.vmem %s5, 256
      %v3845 = vld [vmem:[%s3844] sm:$0xf]
      %v3846 = vld [vmem:[%s3844 + $0x4] sm:$0xf]
      %v3847 = vld [vmem:[%s3844 + $0x8] sm:$0xf]
      %v3848 = vld [vmem:[%s3844 + $0xc] sm:$0xf]
      %v3849 = vld [vmem:[%s3844 + $0x10] sm:$0xf]
      %v3850 = vld [vmem:[%s3844 + $0x14] sm:$0xf]
      %v3851 = vld [vmem:[%s3844 + $0x18] sm:$0xf]
      %v3852 = vld [vmem:[%s3844 + $0x1c] sm:$0xf]
      %vm3855 = vcmask 1043456
      %v3856 = vrot.slane %v3843, 4
      %v3857 = vrot.slane %v2897, 4
      %v3858 = vsel %vm3855, %v3856, %v3857
      %v3859 = vrot.slane %v2898, 4
      %v3860 = vsel %vm3855, %v3857, %v3859
      %v3861 = vrot.slane %v2899, 4
      %v3862 = vsel %vm3855, %v3859, %v3861
      %v3863 = vrot.slane %v2900, 4
      %v3864 = vsel %vm3855, %v3861, %v3863
      %v3865 = vrot.slane %v2901, 4
      %v3866 = vsel %vm3855, %v3863, %v3865
      %v3867 = vrot.slane %v3655, 4
      %v3868 = vsel %vm3855, %v3865, %v3867
      %v3877 = vunpack.c.l.b16 %v3845
      %v3878 = vunpack.c.l.b16 %v3846
      %v3879 = vunpack.c.l.b16 %v3847
      %v3880 = vunpack.c.l.b16 %v3848
      %v3881 = vunpack.c.l.b16 %v3849
      %v3882 = vunpack.c.l.b16 %v3850
      %v3883 = vunpack.c.l.b16 %v3851
      %v3884 = vunpack.c.l.b16 %v3852
      %v3885 = vpack.c.b16 %v3878, %v3877
      %v3886 = vpack.c.b16 %v3880, %v3879
      %v3887 = vpack.c.b16 %v3882, %v3881
      %v3888 = vpack.c.b16 %v3884, %v3883
      %v3894 = vsel %vm2382, %v3858, 0
      %v3897 = vsel %vm2382, %v3860, 0
      %v3900 = vsel %vm2382, %v3862, 0
      %v3903 = vsel %vm2382, %v3864, 0
      %v3906 = vsel %vm2382, %v3866, 0
      %v3909 = vsel %vm2382, %v3868, 0
      %v3912 = vsel %vm2382, %v3867, 0
      %3914 = vmatprep.subr.bf16.mxu0 0
      %3915 = vmatpush1.bf16.msra.mxu0 %v3885
      %3916 = vmatprep.subr.bf16.mxu0 0
      %3917 = vmatpush1.bf16.msra.mxu0 %v3886
      %3918 = vmatprep.subr.bf16.mxu0 0
      %3919 = vmatpush1.bf16.msra.mxu0 %v3887
      %3920 = vmatprep.subr.bf16.mxu0 0
      %3921 = vmatpush1.bf16.msra.mxu0 %v3888
      %3922 = vmatprep.subr.bf16.mxu0 0
      %3923 = vmatpush1.bf16.msra.mxu0 0
      %3924 = vmatprep.subr.bf16.mxu0 0
      %3925 = vmatpush1.bf16.msra.mxu0 0
      %3926 = vmatprep.subr.bf16.mxu0 0
      %3927 = vmatpush1.bf16.msra.mxu0 0
      %3928 = vmatprep.subr.bf16.mxu0 0
      %3929 = vmatpush1.bf16.msra.mxu0 0
      %3930 = vmatprep.subr.bf16.mxu0 0
      %3931 = vmatpush1.bf16.msra.mxu0 0
      %3932 = vmatprep.subr.bf16.mxu0 0
      %3933 = vmatpush1.bf16.msra.mxu0 0
      %3934 = vmatprep.subr.bf16.mxu0 0
      %3935 = vmatpush1.bf16.msra.mxu0 0
      %3936 = vmatprep.subr.bf16.mxu0 0
      %3937 = vmatpush1.bf16.msra.mxu0 0
      %3938 = vmatprep.subr.bf16.mxu0 0
      %3939 = vmatpush1.bf16.msra.mxu0 0
      %3940 = vmatprep.subr.bf16.mxu0 0
      %3941 = vmatpush1.bf16.msra.mxu0 0
      %3942 = vmatprep.subr.bf16.mxu0 0
      %3943 = vmatpush1.bf16.msra.mxu0 0
      %3944 = vmatprep.subr.bf16.mxu0 0
      %3945 = vmatpush1.bf16.msra.mxu0 0
      %3946 = vmatprep.mubr.bf16.mxu0 0
      %3947 = vmatmul.mubr.bf16.gmra.mrb[0].mxu0 %v3894
      %v3948 = vpop.f32.mrb[0].mxu0
      %v3949 = vadd.f32 0.0, %v3948
      %v3950 = vpop.f32.mrb[0].mxu0
      %v3951 = vpop.f32.mrb[0].mxu0
      %v3952 = vadd.f32 0.0, %v3951
      %v3953 = vpop.f32.mrb[0].mxu0
      %3954 = vmatprep.mubr.bf16.mxu0 0
      %3955 = vmatmul.mubr.bf16.gmra.mrb[0].mxu0 %v3897
      %v3956 = vpop.f32.mrb[0].mxu0
      %v3957 = vadd.f32 0.0, %v3956
      %v3958 = vpop.f32.mrb[0].mxu0
      %v3959 = vpop.f32.mrb[0].mxu0
      %v3960 = vadd.f32 0.0, %v3959
      %v3961 = vpop.f32.mrb[0].mxu0
      %3962 = vmatprep.mubr.bf16.mxu0 0
      %3963 = vmatmul.mubr.bf16.gmra.mrb[0].mxu0 %v3900
      %v3964 = vpop.f32.mrb[0].mxu0
      %v3965 = vadd.f32 0.0, %v3964
      %v3966 = vpop.f32.mrb[0].mxu0
      %v3967 = vpop.f32.mrb[0].mxu0
      %v3968 = vadd.f32 0.0, %v3967
      %v3969 = vpop.f32.mrb[0].mxu0
      %3970 = vmatprep.mubr.bf16.mxu0 0
      %3971 = vmatmul.mubr.bf16.gmra.mrb[0].mxu0 %v3903
      %v3972 = vpop.f32.mrb[0].mxu0
      %v3973 = vadd.f32 0.0, %v3972
      %v3974 = vpop.f32.mrb[0].mxu0
      %v3975 = vpop.f32.mrb[0].mxu0
      %v3976 = vadd.f32 0.0, %v3975
      %v3977 = vpop.f32.mrb[0].mxu0
      %3978 = vmatprep.mubr.bf16.mxu0 0
      %3979 = vmatmul.mubr.bf16.gmra.mrb[0].mxu0 %v3906
      %v3980 = vpop.f32.mrb[0].mxu0
      %v3981 = vadd.f32 0.0, %v3980
      %v3982 = vpop.f32.mrb[0].mxu0
      %v3983 = vpop.f32.mrb[0].mxu0
      %v3984 = vadd.f32 0.0, %v3983
      %v3985 = vpop.f32.mrb[0].mxu0
      %3986 = vmatprep.mubr.bf16.mxu0 0
      %3987 = vmatmul.mubr.bf16.gmra.mrb[0].mxu0 %v3909
      %v3988 = vpop.f32.mrb[0].mxu0
      %v3989 = vpop.f32.mrb[0].mxu0
      %v3990 = vpop.f32.mrb[0].mxu0
      %v3991 = vpop.f32.mrb[0].mxu0
      %3992 = vmatprep.mubr.bf16.mxu0 0
      %3993 = vmatmul.mubr.bf16.gmra.mrb[0].mxu0 %v3912
      %v3994 = vpop.f32.mrb[0].mxu0
      %v3995 = vpop.f32.mrb[0].mxu0
      %v3996 = vpop.f32.mrb[0].mxu0
      %v3997 = vpop.f32.mrb[0].mxu0
      %3998 = vdwg.mxu0
      %v3999 = vadd.f32 %v3833, %v3949
      %v4000 = vadd.f32 %v3834, %v3952
      %v4001 = vadd.f32 %v3835, %v3957
      %v4002 = vadd.f32 %v3836, %v3960
      %v4003 = vadd.f32 %v3837, %v3965
      %v4004 = vadd.f32 %v3838, %v3968
      %v4005 = vadd.f32 %v3839, %v3973
      %v4006 = vadd.f32 %v3840, %v3976
      %v4007 = vadd.f32 %v3841, %v3981
      %v4008 = vadd.f32 %v3842, %v3984
      %v4009 = vld [vmem:[%s6] sm:$0x1]
      %v4011 = vlaneseq
      %v4012 = vshrl.u32 %v4011, 7
      %v4013 = vsub.s32 0, %v4012
      %v4014 = vrot.slane %v4009, %v4013
      %v4016 = vadd.f32 %v3999, %v4014
      %v4017 = vadd.f32 %v4000, %v4014
      %v4018 = vadd.f32 %v4001, %v4014
      %v4019 = vadd.f32 %v4002, %v4014
      %v4020 = vadd.f32 %v4003, %v4014
      %v4021 = vadd.f32 %v4004, %v4014
      %v4022 = vadd.f32 %v4005, %v4014
      %v4023 = vadd.f32 %v4006, %v4014
      %v4024 = vadd.f32 %v4007, %v4014
      %v4025 = vadd.f32 %v4008, %v4014
      %v4026 = vmax.f32 %v4016, 0.0
      %v4027 = vmax.f32 %v4017, 0.0
      %v4028 = vmax.f32 %v4018, 0.0
      %v4029 = vmax.f32 %v4019, 0.0
      %v4030 = vmax.f32 %v4020, 0.0
      %v4031 = vmax.f32 %v4021, 0.0
      %v4032 = vmax.f32 %v4022, 0.0
      %v4033 = vmax.f32 %v4023, 0.0
      %v4034 = vmax.f32 %v4024, 0.0
      %v4035 = vmax.f32 %v4025, 0.0
      %v4036 = vpack.c.bf16 %v4027, %v4026
      %v4037 = vpack.c.bf16 %v4029, %v4028
      %v4038 = vpack.c.bf16 %v4031, %v4030
      %v4039 = vpack.c.bf16 %v4033, %v4032
      %v4040 = vpack.c.bf16 %v4035, %v4034
      %vm4041 = vcmask 519168
      %vm4042 = vsmask.f32 3328
      %vm4043 = vmand %vm4041, %vm4042
      %v4044 = vld [vmem:[%s283] sm:$0xf]
      %v4045 = vsel %vm4043, %v4036, %v4044
      %4046 = vst [vmem:[%s283] sm:$0xf] %v4045
      %v4049 = vunpack.c.h.b16 %v4036
      %v4050 = vunpack.c.l.b16 %v4037
      %v4051 = vpack.c.b16 %v4049, %v4049
      %v4052 = vpack.c.b16 %v4050, %v4050
      %vm4053 = vsmask.f32 6416
      %vm4054 = vmor %vm912, %vm4053
      %v4056 = vshrl.u32 %v4051, 16
      %v4058 = vrot.slane %v4056, 5
      %v4059 = vshll.u32 %v4051, 16
      %v4061 = vrot.slane %v4059, 6
      %v4062 = vor.u32 %v4058, %v4061
      %v4063 = vrot.slane %v4062, 4
      %v4065 = vshrl.u32 %v4052, 16
      %v4067 = vrot.slane %v4065, 5
      %v4068 = vshll.u32 %v4052, 16
      %v4070 = vrot.slane %v4068, 6
      %v4071 = vor.u32 %v4067, %v4070
      %v4072 = vsel %vm4054, %v4063, %v4071
      %s4074 = scalar_lea.vmem %s283, 4
      %v4075 = vld [vmem:[%s4074] sm:$0xf]
      %v4076 = vsel %vm4043, %v4072, %v4075
      %4077 = vst [vmem:[%s4074] sm:$0xf] %v4076
      %v4078 = vunpack.c.h.b16 %v4037
      %v4079 = vpack.c.b16 %v4078, %v4078
      %vm4080 = vcmask 1040384
      %vm4081 = vcmask 1044484
      %vm4082 = vmor %vm4080, %vm4081
      %v4083 = vrot.slane %v4052, 7
      %v4084 = vrot.slane %v4083, 4
      %v4085 = vrot.slane %v4079, 7
      %v4086 = vsel %vm4082, %v4084, %v4085
      %s4088 = scalar_lea.vmem %s283, 8
      %v4089 = vld [vmem:[%s4088] sm:$0xf]
      %v4090 = vsel %vm4043, %v4086, %v4089
      %4091 = vst [vmem:[%s4088] sm:$0xf] %v4090
      %v4093 = vunpack.c.l.b16 %v4038
      %v4094 = vpack.c.b16 %v4093, %v4093
      %v4096 = vshrl.u32 %v4094, 16
      %v4098 = vrot.slane %v4096, 4
      %v4099 = vshll.u32 %v4094, 16
      %v4101 = vrot.slane %v4099, 5
      %v4102 = vor.u32 %v4098, %v4101
      %v4103 = vrot.slane %v4102, 4
      %s4105 = scalar_lea.vmem %s283, 12
      %v4106 = vld [vmem:[%s4105] sm:$0xf]
      %v4107 = vsel %vm4043, %v4103, %v4106
      %4108 = vst [vmem:[%s4105] sm:$0xf] %v4107
      %v4110 = vunpack.c.h.b16 %v4038
      %v4111 = vunpack.c.l.b16 %v4039
      %v4112 = vpack.c.b16 %v4110, %v4110
      %v4113 = vpack.c.b16 %v4111, %v4111
      %vm4114 = vcmask 1045508
      %vm4115 = vmor %vm1241, %vm4114
      %v4116 = vrot.slane %v4112, 6
      %v4117 = vrot.slane %v4116, 4
      %v4118 = vrot.slane %v4113, 6
      %v4119 = vsel %vm4115, %v4117, %v4118
      %s4121 = scalar_lea.vmem %s283, 16
      %v4122 = vld [vmem:[%s4121] sm:$0xf]
      %v4123 = vsel %vm4043, %v4119, %v4122
      %4124 = vst [vmem:[%s4121] sm:$0xf] %v4123
      %v4125 = vunpack.c.h.b16 %v4039
      %v4126 = vpack.c.b16 %v4125, %v4125
      %vm4127 = vsmask.f32 256
      %vm4128 = vsmask.f32 4368
      %vm4129 = vmor %vm4127, %vm4128
      %v4131 = vshrl.u32 %v4113, 16
      %v4133 = vrot.slane %v4131, 7
      %v4134 = vrot.slane %v4133, 4
      %v4136 = vshrl.u32 %v4126, 16
      %v4138 = vrot.slane %v4136, 7
      %v4139 = vshll.u32 %v4126, 16
      %v4141 = vor.u32 %v4138, %v4139
      %v4142 = vsel %vm4129, %v4134, %v4141
      %s4144 = scalar_lea.vmem %s283, 20
      %v4145 = vld [vmem:[%s4144] sm:$0xf]
      %v4146 = vsel %vm4043, %v4142, %v4145
      %4147 = vst [vmem:[%s4144] sm:$0xf] %v4146
      %v4149 = vunpack.c.l.b16 %v4040
      %v4150 = vunpack.c.h.b16 %v4040
      %v4151 = vpack.c.b16 %v4149, %v4149
      %v4152 = vpack.c.b16 %v4150, %v4150
      %vm4153 = vcmask 1042432
      %vm4154 = vcmask 1046532
      %vm4155 = vmor %vm4153, %vm4154
      %v4156 = vrot.slane %v4151, 5
      %v4157 = vrot.slane %v4156, 4
      %v4158 = vrot.slane %v4152, 5
      %v4159 = vsel %vm4155, %v4157, %v4158
      %s4161 = scalar_lea.vmem %s283, 24
      %v4162 = vld [vmem:[%s4161] sm:$0xf]
      %v4163 = vsel %vm4043, %v4159, %v4162
      %4164 = vst [vmem:[%s4161] sm:$0xf] %v4163
      %p4165 = scmp.lt.s32.totalorder %s18, 1
      %s4166 = scalar_select %p4165, %s18, 1
      %s4167 = smul.addr %s4166, 7
      %s4168 = smul.addr %s4167, 4
      %s4169 = scalar_lea.vmem %s7, %s4168
      // Predicated region
      $region49: #{atari_net_forward.2} parent=47 // pred_check
        %p4170 = pneg %p188
      $region50: #{atari_net_forward.2} parent=47 // pred_check_branch
        %4172 = sbr.rel (%p4170) target = $region52
      $region51: #{atari_net_forward.2} parent=47 // pred_region
        _
      $region52: #{atari_net_forward.2} parent=47 // pred_fallthru
        _
    $region48: #{atari_net_forward.2} parent=5 // pred_fallthru
      _
    %p4173 = scmp.le.s32.totalorder 2, %s13
    // Predicated region
    $region53: #{atari_net_forward.2} parent=5 // pred_check
      %p4174 = pneg %p4173
    $region54: #{atari_net_forward.2} parent=5 // pred_check_branch
      %4176 = sbr.rel (%p4174) target = $region56
    $region55: #{atari_net_forward.2} parent=5 // pred_region
      %s4177 = ssub.s32 %s13, 2
      // Predicated region
      $region57: #{atari_net_forward.2} parent=55 // pred_check
        %p4178 = pneg %p194
      $region58: #{atari_net_forward.2} parent=55 // pred_check_branch
        %4180 = sbr.rel (%p4178) target = $region60
      $region59: #{atari_net_forward.2} parent=55 // pred_region
        %p4181 = scmp.lt.s32.totalorder %s19, 1
        %s4182 = scalar_select %p4181, %s19, 1
        %s4183 = smul.addr %s4182, 7
        %s4184 = smul.addr %s4183, 4
        %s4185 = scalar_lea.vmem %s7, %s4184
      $region60: #{atari_net_forward.2} parent=55 // pred_fallthru
        _
    $region56: #{atari_net_forward.2} parent=5 // pred_fallthru
      _
  $region6: #{atari_net_forward.2} parent=0 // loop_footer
    %s17 = sadd.s32 1, %s13
  $region7: #{atari_net_forward.2} parent=0 // loop_footer_branch
    %12 = sbr.rel target = $region3
  $region8: #{atari_net_forward.2} parent=0 // loop_exit
    _

// kernel: atari_net_forward.3
$region0: #{atari_net_forward.3}
  #allocation0 [shape = 'u32[]', space=smem, size = 0x4, offset = 0x4, fixed_abs, tag = 'smem constant byte address 0x4 - core index']
  #allocation1 [shape = 'u32[144,128]{1,0:T(1,128)}', space=vmem, size = 0x12000, scoped, tag = 'internal scratch']
  %s0 = inlined_call_operand.vmem [shape: bf16[2,3136], index: 0, kind: input, shape index: {}]
  %s1 = inlined_call_operand.vmem [shape: bf16[3136,512], index: 1, kind: input, shape index: {}]
  %s2 = inlined_call_operand.vmem [shape: f32[1,512], index: 2, kind: input, shape index: {}]
  %s3 = inlined_call_operand.vmem [shape: bf16[512,128], index: 3, kind: input, shape index: {}]
  %s4 = inlined_call_operand.vmem [shape: f32[1,128], index: 4, kind: input, shape index: {}]
  %s5 = inlined_call_operand.hbm [shape: f32[2,128], index: 5, kind: output, shape index: {}]
  %s6 = sld [smem:[#allocation0]]
  $region30: #{atari_net_forward.3} parent=0
    _
  %s8 = ssub.s32 1, %s6
  %s9 = scalar_select 0, %s8, %s6
  $region1: #{atari_net_forward.3} parent=0
    #allocation2 [shape = 'u8[1024]{0}', space=vmem, size = 0x400, scoped, tag = 'output window, operand 0, single buffered']
    #allocation3 [shape = 's32[1]{0}', space=sflag, size = 0x4, scoped, tag = 'scoped memory for atari_net_forward.3']
    %10 = vsyncpa [#allocation3], 0
    // Predicated region
    $region2: #{atari_net_forward.3} parent=1 // pred_check
      _
    $region3: #{atari_net_forward.3} parent=1 // pred_check_branch
      %12 = sbr.rel (0) target = $region5
    $region4: #{atari_net_forward.3} parent=1 // pred_region
      _
    $region5: #{atari_net_forward.3} parent=1 // pred_fallthru
      _
    // Predicated region
    $region6: #{atari_net_forward.3} parent=1 // pred_check
      _
    $region7: #{atari_net_forward.3} parent=1 // pred_check_branch
      %14 = sbr.rel (0) target = $region9
    $region8: #{atari_net_forward.3} parent=1 // pred_region
      _
    $region9: #{atari_net_forward.3} parent=1 // pred_fallthru
      _
    // Predicated region
    $region10: #{atari_net_forward.3} parent=1 // pred_check
      _
    $region11: #{atari_net_forward.3} parent=1 // pred_check_branch
      %16 = sbr.rel (0) target = $region13
    $region12: #{atari_net_forward.3} parent=1 // pred_region
      _
    $region13: #{atari_net_forward.3} parent=1 // pred_fallthru
      _
    // Predicated region
    $region14: #{atari_net_forward.3} parent=1 // pred_check
      _
    $region15: #{atari_net_forward.3} parent=1 // pred_check_branch
      %18 = sbr.rel (0) target = $region17
    $region16: #{atari_net_forward.3} parent=1 // pred_region
      _
    $region17: #{atari_net_forward.3} parent=1 // pred_fallthru
      _
    // Predicated region
    $region18: #{atari_net_forward.3} parent=1 // pred_check
      _
    $region19: #{atari_net_forward.3} parent=1 // pred_check_branch
      %20 = sbr.rel (0) target = $region21
    $region20: #{atari_net_forward.3} parent=1 // pred_region
      _
    $region21: #{atari_net_forward.3} parent=1 // pred_fallthru
      _
    %v22 = vld [vmem:[%s0] sm:$0xff]
    %v23 = vld [vmem:[%s0 + $0x8] sm:$0xff]
    %v24 = vld [vmem:[%s0 + $0x10] sm:$0xff]
    %v25 = vld [vmem:[%s0 + $0x18] sm:$0x1]
    %v26 = vld [vmem:[%s1] sm:$0xff]
    %v27 = vld [vmem:[%s1 + $0x8] sm:$0xff]
    %v28 = vld [vmem:[%s1 + $0x10] sm:$0xff]
    %v29 = vld [vmem:[%s1 + $0x18] sm:$0xff]
    %v30 = vld [vmem:[%s1 + $0x20] sm:$0xff]
    %v31 = vld [vmem:[%s1 + $0x28] sm:$0xff]
    %v32 = vld [vmem:[%s1 + $0x30] sm:$0xff]
    %v33 = vld [vmem:[%s1 + $0x38] sm:$0xff]
    %v34 = vld [vmem:[%s1 + $0x40] sm:$0xff]
    %v35 = vld [vmem:[%s1 + $0x48] sm:$0xff]
    %v36 = vld [vmem:[%s1 + $0x50] sm:$0xff]
    %v37 = vld [vmem:[%s1 + $0x58] sm:$0xff]
    %v38 = vld [vmem:[%s1 + $0x60] sm:$0xff]
    %v39 = vld [vmem:[%s1 + $0x68] sm:$0xff]
    %v40 = vld [vmem:[%s1 + $0x70] sm:$0xff]
    %v41 = vld [vmem:[%s1 + $0x78] sm:$0xff]
    %v42 = vld [vmem:[%s1 + $0x80] sm:$0xff]
    %v43 = vld [vmem:[%s1 + $0x88] sm:$0xff]
    %v44 = vld [vmem:[%s1 + $0x90] sm:$0xff]
    %v45 = vld [vmem:[%s1 + $0x98] sm:$0xff]
    %v46 = vld [vmem:[%s1 + $0xa0] sm:$0xff]
    %v47 = vld [vmem:[%s1 + $0xa8] sm:$0xff]
    %v48 = vld [vmem:[%s1 + $0xb0] sm:$0xff]
    %v49 = vld [vmem:[%s1 + $0xb8] sm:$0xff]
    %v50 = vld [vmem:[%s1 + $0xc0] sm:$0xff]
    %v51 = vld [vmem:[%s1 + $0xc8] sm:$0xff]
    %v52 = vld [vmem:[%s1 + $0xd0] sm:$0xff]
    %v53 = vld [vmem:[%s1 + $0xd8] sm:$0xff]
    %v54 = vld [vmem:[%s1 + $0xe0] sm:$0xff]
    %v55 = vld [vmem:[%s1 + $0xe8] sm:$0xff]
    %v56 = vld [vmem:[%s1 + $0xf0] sm:$0xff]
    %v57 = vld [vmem:[%s1 + $0xf8] sm:$0xff]
    %v58 = vld [vmem:[%s1 + $0x100] sm:$0xff]
    %v59 = vld [vmem:[%s1 + $0x108] sm:$0xff]
    %v60 = vld [vmem:[%s1 + $0x110] sm:$0xff]
    %v61 = vld [vmem:[%s1 + $0x118] sm:$0xff]
    %v62 = vld [vmem:[%s1 + $0x120] sm:$0xff]
    %v63 = vld [vmem:[%s1 + $0x128] sm:$0xff]
    %v64 = vld [vmem:[%s1 + $0x130] sm:$0xff]
    %v65 = vld [vmem:[%s1 + $0x138] sm:$0xff]
    %v66 = vld [vmem:[%s1 + $0x140] sm:$0xff]
    %v67 = vld [vmem:[%s1 + $0x148] sm:$0xff]
    %v68 = vld [vmem:[%s1 + $0x150] sm:$0xff]
    %v69 = vld [vmem:[%s1 + $0x158] sm:$0xff]
    %v70 = vld [vmem:[%s1 + $0x160] sm:$0xff]
    %v71 = vld [vmem:[%s1 + $0x168] sm:$0xff]
    %v72 = vld [vmem:[%s1 + $0x170] sm:$0xff]
    %v73 = vld [vmem:[%s1 + $0x178] sm:$0xff]
    %v74 = vld [vmem:[%s1 + $0x180] sm:$0xff]
    %v75 = vld [vmem:[%s1 + $0x188] sm:$0xff]
    %v76 = vld [vmem:[%s1 + $0x190] sm:$0xff]
    %v77 = vld [vmem:[%s1 + $0x198] sm:$0xff]
    %v78 = vld [vmem:[%s1 + $0x1a0] sm:$0xff]
    %v79 = vld [vmem:[%s1 + $0x1a8] sm:$0xff]
    %v80 = vld [vmem:[%s1 + $0x1b0] sm:$0xff]
    %v81 = vld [vmem:[%s1 + $0x1b8] sm:$0xff]
    %v82 = vld [vmem:[%s1 + $0x1c0] sm:$0xff]
    %v83 = vld [vmem:[%s1 + $0x1c8] sm:$0xff]
    %v84 = vld [vmem:[%s1 + $0x1d0] sm:$0xff]
    %v85 = vld [vmem:[%s1 + $0x1d8] sm:$0xff]
    %v86 = vld [vmem:[%s1 + $0x1e0] sm:$0xff]
    %v87 = vld [vmem:[%s1 + $0x1e8] sm:$0xff]
    %v88 = vld [vmem:[%s1 + $0x1f0] sm:$0xff]
    %v89 = vld [vmem:[%s1 + $0x1f8] sm:$0xff]
    %v90 = vld [vmem:[%s1 + $0x200] sm:$0xff]
    %v91 = vld [vmem:[%s1 + $0x208] sm:$0xff]
    %v92 = vld [vmem:[%s1 + $0x210] sm:$0xff]
    %v93 = vld [vmem:[%s1 + $0x218] sm:$0xff]
    %v94 = vld [vmem:[%s1 + $0x220] sm:$0xff]
    %v95 = vld [vmem:[%s1 + $0x228] sm:$0xff]
    %v96 = vld [vmem:[%s1 + $0x230] sm:$0xff]
    %v97 = vld [vmem:[%s1 + $0x238] sm:$0xff]
    %v98 = vld [vmem:[%s1 + $0x240] sm:$0xff]
    %v99 = vld [vmem:[%s1 + $0x248] sm:$0xff]
    %v100 = vld [vmem:[%s1 + $0x250] sm:$0xff]
    %v101 = vld [vmem:[%s1 + $0x258] sm:$0xff]
    %v102 = vld [vmem:[%s1 + $0x260] sm:$0xff]
    %v103 = vld [vmem:[%s1 + $0x268] sm:$0xff]
    %v104 = vld [vmem:[%s1 + $0x270] sm:$0xff]
    %v105 = vld [vmem:[%s1 + $0x278] sm:$0xff]
    %v106 = vld [vmem:[%s1 + $0x280] sm:$0xff]
    %v107 = vld [vmem:[%s1 + $0x288] sm:$0xff]
    %v108 = vld [vmem:[%s1 + $0x290] sm:$0xff]
    %v109 = vld [vmem:[%s1 + $0x298] sm:$0xff]
    %v110 = vld [vmem:[%s1 + $0x2a0] sm:$0xff]
    %v111 = vld [vmem:[%s1 + $0x2a8] sm:$0xff]
    %v112 = vld [vmem:[%s1 + $0x2b0] sm:$0xff]
    %v113 = vld [vmem:[%s1 + $0x2b8] sm:$0xff]
    %v114 = vld [vmem:[%s1 + $0x2c0] sm:$0xff]
    %v115 = vld [vmem:[%s1 + $0x2c8] sm:$0xff]
    %v116 = vld [vmem:[%s1 + $0x2d0] sm:$0xff]
    %v117 = vld [vmem:[%s1 + $0x2d8] sm:$0xff]
    %v118 = vld [vmem:[%s1 + $0x2e0] sm:$0xff]
    %v119 = vld [vmem:[%s1 + $0x2e8] sm:$0xff]
    %v120 = vld [vmem:[%s1 + $0x2f0] sm:$0xff]
    %v121 = vld [vmem:[%s1 + $0x2f8] sm:$0xff]
    %v122 = vld [vmem:[%s1 + $0x300] sm:$0xff]
    %v123 = vld [vmem:[%s1 + $0x308] sm:$0xff]
    %v124 = vld [vmem:[%s1 + $0x310] sm:$0xff]
    %v125 = vld [vmem:[%s1 + $0x318] sm:$0xff]
    %v126 = vld [vmem:[%s1 + $0x320] sm:$0xff]
    %v127 = vld [vmem:[%s1 + $0x328] sm:$0xff]
    %v128 = vld [vmem:[%s1 + $0x330] sm:$0xff]
    %v129 = vld [vmem:[%s1 + $0x338] sm:$0xff]
    %v130 = vld [vmem:[%s1 + $0x340] sm:$0xff]
    %v131 = vld [vmem:[%s1 + $0x348] sm:$0xff]
    %v132 = vld [vmem:[%s1 + $0x350] sm:$0xff]
    %v133 = vld [vmem:[%s1 + $0x358] sm:$0xff]
    %v134 = vld [vmem:[%s1 + $0x360] sm:$0xff]
    %v135 = vld [vmem:[%s1 + $0x368] sm:$0xff]
    %v136 = vld [vmem:[%s1 + $0x370] sm:$0xff]
    %v137 = vld [vmem:[%s1 + $0x378] sm:$0xff]
    %v138 = vld [vmem:[%s1 + $0x380] sm:$0xff]
    %v139 = vld [vmem:[%s1 + $0x388] sm:$0xff]
    %v140 = vld [vmem:[%s1 + $0x390] sm:$0xff]
    %v141 = vld [vmem:[%s1 + $0x398] sm:$0xff]
    %v142 = vld [vmem:[%s1 + $0x3a0] sm:$0xff]
    %v143 = vld [vmem:[%s1 + $0x3a8] sm:$0xff]
    %v144 = vld [vmem:[%s1 + $0x3b0] sm:$0xff]
    %v145 = vld [vmem:[%s1 + $0x3b8] sm:$0xff]
    %v146 = vld [vmem:[%s1 + $0x3c0] sm:$0xff]
    %v147 = vld [vmem:[%s1 + $0x3c8] sm:$0xff]
    %v148 = vld [vmem:[%s1 + $0x3d0] sm:$0xff]
    %v149 = vld [vmem:[%s1 + $0x3d8] sm:$0xff]
    %v150 = vld [vmem:[%s1 + $0x3e0] sm:$0xff]
    %v151 = vld [vmem:[%s1 + $0x3e8] sm:$0xff]
    %v152 = vld [vmem:[%s1 + $0x3f0] sm:$0xff]
    %v153 = vld [vmem:[%s1 + $0x3f8] sm:$0xff]
    %v154 = vld [vmem:[%s1 + $0x400] sm:$0xff]
    %v155 = vld [vmem:[%s1 + $0x408] sm:$0xff]
    %v156 = vld [vmem:[%s1 + $0x410] sm:$0xff]
    %v157 = vld [vmem:[%s1 + $0x418] sm:$0xff]
    %v158 = vld [vmem:[%s1 + $0x420] sm:$0xff]
    %v159 = vld [vmem:[%s1 + $0x428] sm:$0xff]
    %v160 = vld [vmem:[%s1 + $0x430] sm:$0xff]
    %v161 = vld [vmem:[%s1 + $0x438] sm:$0xff]
    %v162 = vld [vmem:[%s1 + $0x440] sm:$0xff]
    %v163 = vld [vmem:[%s1 + $0x448] sm:$0xff]
    %v164 = vld [vmem:[%s1 + $0x450] sm:$0xff]
    %v165 = vld [vmem:[%s1 + $0x458] sm:$0xff]
    %v166 = vld [vmem:[%s1 + $0x460] sm:$0xff]
    %v167 = vld [vmem:[%s1 + $0x468] sm:$0xff]
    %v168 = vld [vmem:[%s1 + $0x470] sm:$0xff]
    %v169 = vld [vmem:[%s1 + $0x478] sm:$0xff]
    %v170 = vld [vmem:[%s1 + $0x480] sm:$0xff]
    %v171 = vld [vmem:[%s1 + $0x488] sm:$0xff]
    %v172 = vld [vmem:[%s1 + $0x490] sm:$0xff]
    %v173 = vld [vmem:[%s1 + $0x498] sm:$0xff]
    %v174 = vld [vmem:[%s1 + $0x4a0] sm:$0xff]
    %v175 = vld [vmem:[%s1 + $0x4a8] sm:$0xff]
    %v176 = vld [vmem:[%s1 + $0x4b0] sm:$0xff]
    %v177 = vld [vmem:[%s1 + $0x4b8] sm:$0xff]
    %v178 = vld [vmem:[%s1 + $0x4c0] sm:$0xff]
    %v179 = vld [vmem:[%s1 + $0x4c8] sm:$0xff]
    %v180 = vld [vmem:[%s1 + $0x4d0] sm:$0xff]
    %v181 = vld [vmem:[%s1 + $0x4d8] sm:$0xff]
    %v182 = vld [vmem:[%s1 + $0x4e0] sm:$0xff]
    %v183 = vld [vmem:[%s1 + $0x4e8] sm:$0xff]
    %v184 = vld [vmem:[%s1 + $0x4f0] sm:$0xff]
    %v185 = vld [vmem:[%s1 + $0x4f8] sm:$0xff]
    %v186 = vld [vmem:[%s1 + $0x500] sm:$0xff]
    %v187 = vld [vmem:[%s1 + $0x508] sm:$0xff]
    %v188 = vld [vmem:[%s1 + $0x510] sm:$0xff]
    %v189 = vld [vmem:[%s1 + $0x518] sm:$0xff]
    %v190 = vld [vmem:[%s1 + $0x520] sm:$0xff]
    %v191 = vld [vmem:[%s1 + $0x528] sm:$0xff]
    %v192 = vld [vmem:[%s1 + $0x530] sm:$0xff]
    %v193 = vld [vmem:[%s1 + $0x538] sm:$0xff]
    %v194 = vld [vmem:[%s1 + $0x540] sm:$0xff]
    %v195 = vld [vmem:[%s1 + $0x548] sm:$0xff]
    %v196 = vld [vmem:[%s1 + $0x550] sm:$0xff]
    %v197 = vld [vmem:[%s1 + $0x558] sm:$0xff]
    %v198 = vld [vmem:[%s1 + $0x560] sm:$0xff]
    %v199 = vld [vmem:[%s1 + $0x568] sm:$0xff]
    %v200 = vld [vmem:[%s1 + $0x570] sm:$0xff]
    %v201 = vld [vmem:[%s1 + $0x578] sm:$0xff]
    %v202 = vld [vmem:[%s1 + $0x580] sm:$0xff]
    %v203 = vld [vmem:[%s1 + $0x588] sm:$0xff]
    %v204 = vld [vmem:[%s1 + $0x590] sm:$0xff]
    %v205 = vld [vmem:[%s1 + $0x598] sm:$0xff]
    %v206 = vld [vmem:[%s1 + $0x5a0] sm:$0xff]
    %v207 = vld [vmem:[%s1 + $0x5a8] sm:$0xff]
    %v208 = vld [vmem:[%s1 + $0x5b0] sm:$0xff]
    %v209 = vld [vmem:[%s1 + $0x5b8] sm:$0xff]
    %v210 = vld [vmem:[%s1 + $0x5c0] sm:$0xff]
    %v211 = vld [vmem:[%s1 + $0x5c8] sm:$0xff]
    %v212 = vld [vmem:[%s1 + $0x5d0] sm:$0xff]
    %v213 = vld [vmem:[%s1 + $0x5d8] sm:$0xff]
    %v214 = vld [vmem:[%s1 + $0x5e0] sm:$0xff]
    %v215 = vld [vmem:[%s1 + $0x5e8] sm:$0xff]
    %v216 = vld [vmem:[%s1 + $0x5f0] sm:$0xff]
    %v217 = vld [vmem:[%s1 + $0x5f8] sm:$0xff]
    %v218 = vld [vmem:[%s1 + $0x600] sm:$0xff]
    %v219 = vld [vmem:[%s1 + $0x608] sm:$0xff]
    %v220 = vld [vmem:[%s1 + $0x610] sm:$0xff]
    %v221 = vld [vmem:[%s1 + $0x618] sm:$0xff]
    %v222 = vld [vmem:[%s1 + $0x620] sm:$0xff]
    %v223 = vld [vmem:[%s1 + $0x628] sm:$0xff]
    %v224 = vld [vmem:[%s1 + $0x630] sm:$0xff]
    %v225 = vld [vmem:[%s1 + $0x638] sm:$0xff]
    %v226 = vld [vmem:[%s1 + $0x640] sm:$0xff]
    %v227 = vld [vmem:[%s1 + $0x648] sm:$0xff]
    %v228 = vld [vmem:[%s1 + $0x650] sm:$0xff]
    %v229 = vld [vmem:[%s1 + $0x658] sm:$0xff]
    %v230 = vld [vmem:[%s1 + $0x660] sm:$0xff]
    %v231 = vld [vmem:[%s1 + $0x668] sm:$0xff]
    %v232 = vld [vmem:[%s1 + $0x670] sm:$0xff]
    %v233 = vld [vmem:[%s1 + $0x678] sm:$0xff]
    %v234 = vld [vmem:[%s1 + $0x680] sm:$0xff]
    %v235 = vld [vmem:[%s1 + $0x688] sm:$0xff]
    %v236 = vld [vmem:[%s1 + $0x690] sm:$0xff]
    %v237 = vld [vmem:[%s1 + $0x698] sm:$0xff]
    %v238 = vld [vmem:[%s1 + $0x6a0] sm:$0xff]
    %v239 = vld [vmem:[%s1 + $0x6a8] sm:$0xff]
    %v240 = vld [vmem:[%s1 + $0x6b0] sm:$0xff]
    %v241 = vld [vmem:[%s1 + $0x6b8] sm:$0xff]
    %v242 = vld [vmem:[%s1 + $0x6c0] sm:$0xff]
    %v243 = vld [vmem:[%s1 + $0x6c8] sm:$0xff]
    %v244 = vld [vmem:[%s1 + $0x6d0] sm:$0xff]
    %v245 = vld [vmem:[%s1 + $0x6d8] sm:$0xff]
    %v246 = vld [vmem:[%s1 + $0x6e0] sm:$0xff]
    %v247 = vld [vmem:[%s1 + $0x6e8] sm:$0xff]
    %v248 = vld [vmem:[%s1 + $0x6f0] sm:$0xff]
    %v249 = vld [vmem:[%s1 + $0x6f8] sm:$0xff]
    %v250 = vld [vmem:[%s1 + $0x700] sm:$0xff]
    %v251 = vld [vmem:[%s1 + $0x708] sm:$0xff]
    %v252 = vld [vmem:[%s1 + $0x710] sm:$0xff]
    %v253 = vld [vmem:[%s1 + $0x718] sm:$0xff]
    %v254 = vld [vmem:[%s1 + $0x720] sm:$0xff]
    %v255 = vld [vmem:[%s1 + $0x728] sm:$0xff]
    %v256 = vld [vmem:[%s1 + $0x730] sm:$0xff]
    %v257 = vld [vmem:[%s1 + $0x738] sm:$0xff]
    %v258 = vld [vmem:[%s1 + $0x740] sm:$0xff]
    %v259 = vld [vmem:[%s1 + $0x748] sm:$0xff]
    %v260 = vld [vmem:[%s1 + $0x750] sm:$0xff]
    %v261 = vld [vmem:[%s1 + $0x758] sm:$0xff]
    %v262 = vld [vmem:[%s1 + $0x760] sm:$0xff]
    %v263 = vld [vmem:[%s1 + $0x768] sm:$0xff]
    %v264 = vld [vmem:[%s1 + $0x770] sm:$0xff]
    %v265 = vld [vmem:[%s1 + $0x778] sm:$0xff]
    %v266 = vld [vmem:[%s1 + $0x780] sm:$0xff]
    %v267 = vld [vmem:[%s1 + $0x788] sm:$0xff]
    %v268 = vld [vmem:[%s1 + $0x790] sm:$0xff]
    %v269 = vld [vmem:[%s1 + $0x798] sm:$0xff]
    %v270 = vld [vmem:[%s1 + $0x7a0] sm:$0xff]
    %v271 = vld [vmem:[%s1 + $0x7a8] sm:$0xff]
    %v272 = vld [vmem:[%s1 + $0x7b0] sm:$0xff]
    %v273 = vld [vmem:[%s1 + $0x7b8] sm:$0xff]
    %v274 = vld [vmem:[%s1 + $0x7c0] sm:$0xff]
    %v275 = vld [vmem:[%s1 + $0x7c8] sm:$0xff]
    %v276 = vld [vmem:[%s1 + $0x7d0] sm:$0xff]
    %v277 = vld [vmem:[%s1 + $0x7d8] sm:$0xff]
    %v278 = vld [vmem:[%s1 + $0x7e0] sm:$0xff]
    %v279 = vld [vmem:[%s1 + $0x7e8] sm:$0xff]
    %v280 = vld [vmem:[%s1 + $0x7f0] sm:$0xff]
    %v281 = vld [vmem:[%s1 + $0x7f8] sm:$0xff]
    %v282 = vld [vmem:[%s1 + $0x800] sm:$0xff]
    %v283 = vld [vmem:[%s1 + $0x808] sm:$0xff]
    %v284 = vld [vmem:[%s1 + $0x810] sm:$0xff]
    %v285 = vld [vmem:[%s1 + $0x818] sm:$0xff]
    %v286 = vld [vmem:[%s1 + $0x820] sm:$0xff]
    %v287 = vld [vmem:[%s1 + $0x828] sm:$0xff]
    %v288 = vld [vmem:[%s1 + $0x830] sm:$0xff]
    %v289 = vld [vmem:[%s1 + $0x838] sm:$0xff]
    %v290 = vld [vmem:[%s1 + $0x840] sm:$0xff]
    %v291 = vld [vmem:[%s1 + $0x848] sm:$0xff]
    %v292 = vld [vmem:[%s1 + $0x850] sm:$0xff]
    %v293 = vld [vmem:[%s1 + $0x858] sm:$0xff]
    %v294 = vld [vmem:[%s1 + $0x860] sm:$0xff]
    %v295 = vld [vmem:[%s1 + $0x868] sm:$0xff]
    %v296 = vld [vmem:[%s1 + $0x870] sm:$0xff]
    %v297 = vld [vmem:[%s1 + $0x878] sm:$0xff]
    %v298 = vld [vmem:[%s1 + $0x880] sm:$0xff]
    %v299 = vld [vmem:[%s1 + $0x888] sm:$0xff]
    %v300 = vld [vmem:[%s1 + $0x890] sm:$0xff]
    %v301 = vld [vmem:[%s1 + $0x898] sm:$0xff]
    %v302 = vld [vmem:[%s1 + $0x8a0] sm:$0xff]
    %v303 = vld [vmem:[%s1 + $0x8a8] sm:$0xff]
    %v304 = vld [vmem:[%s1 + $0x8b0] sm:$0xff]
    %v305 = vld [vmem:[%s1 + $0x8b8] sm:$0xff]
    %v306 = vld [vmem:[%s1 + $0x8c0] sm:$0xff]
    %v307 = vld [vmem:[%s1 + $0x8c8] sm:$0xff]
    %v308 = vld [vmem:[%s1 + $0x8d0] sm:$0xff]
    %v309 = vld [vmem:[%s1 + $0x8d8] sm:$0xff]
    %v310 = vld [vmem:[%s1 + $0x8e0] sm:$0xff]
    %v311 = vld [vmem:[%s1 + $0x8e8] sm:$0xff]
    %v312 = vld [vmem:[%s1 + $0x8f0] sm:$0xff]
    %v313 = vld [vmem:[%s1 + $0x8f8] sm:$0xff]
    %v314 = vld [vmem:[%s1 + $0x900] sm:$0xff]
    %v315 = vld [vmem:[%s1 + $0x908] sm:$0xff]
    %v316 = vld [vmem:[%s1 + $0x910] sm:$0xff]
    %v317 = vld [vmem:[%s1 + $0x918] sm:$0xff]
    %v318 = vld [vmem:[%s1 + $0x920] sm:$0xff]
    %v319 = vld [vmem:[%s1 + $0x928] sm:$0xff]
    %v320 = vld [vmem:[%s1 + $0x930] sm:$0xff]
    %v321 = vld [vmem:[%s1 + $0x938] sm:$0xff]
    %v322 = vld [vmem:[%s1 + $0x940] sm:$0xff]
    %v323 = vld [vmem:[%s1 + $0x948] sm:$0xff]
    %v324 = vld [vmem:[%s1 + $0x950] sm:$0xff]
    %v325 = vld [vmem:[%s1 + $0x958] sm:$0xff]
    %v326 = vld [vmem:[%s1 + $0x960] sm:$0xff]
    %v327 = vld [vmem:[%s1 + $0x968] sm:$0xff]
    %v328 = vld [vmem:[%s1 + $0x970] sm:$0xff]
    %v329 = vld [vmem:[%s1 + $0x978] sm:$0xff]
    %v330 = vld [vmem:[%s1 + $0x980] sm:$0xff]
    %v331 = vld [vmem:[%s1 + $0x988] sm:$0xff]
    %v332 = vld [vmem:[%s1 + $0x990] sm:$0xff]
    %v333 = vld [vmem:[%s1 + $0x998] sm:$0xff]
    %v334 = vld [vmem:[%s1 + $0x9a0] sm:$0xff]
    %v335 = vld [vmem:[%s1 + $0x9a8] sm:$0xff]
    %v336 = vld [vmem:[%s1 + $0x9b0] sm:$0xff]
    %v337 = vld [vmem:[%s1 + $0x9b8] sm:$0xff]
    %v338 = vld [vmem:[%s1 + $0x9c0] sm:$0xff]
    %v339 = vld [vmem:[%s1 + $0x9c8] sm:$0xff]
    %v340 = vld [vmem:[%s1 + $0x9d0] sm:$0xff]
    %v341 = vld [vmem:[%s1 + $0x9d8] sm:$0xff]
    %v342 = vld [vmem:[%s1 + $0x9e0] sm:$0xff]
    %v343 = vld [vmem:[%s1 + $0x9e8] sm:$0xff]
    %v344 = vld [vmem:[%s1 + $0x9f0] sm:$0xff]
    %v345 = vld [vmem:[%s1 + $0x9f8] sm:$0xff]
    %v346 = vld [vmem:[%s1 + $0xa00] sm:$0xff]
    %v347 = vld [vmem:[%s1 + $0xa08] sm:$0xff]
    %v348 = vld [vmem:[%s1 + $0xa10] sm:$0xff]
    %v349 = vld [vmem:[%s1 + $0xa18] sm:$0xff]
    %v350 = vld [vmem:[%s1 + $0xa20] sm:$0xff]
    %v351 = vld [vmem:[%s1 + $0xa28] sm:$0xff]
    %v352 = vld [vmem:[%s1 + $0xa30] sm:$0xff]
    %v353 = vld [vmem:[%s1 + $0xa38] sm:$0xff]
    %v354 = vld [vmem:[%s1 + $0xa40] sm:$0xff]
    %v355 = vld [vmem:[%s1 + $0xa48] sm:$0xff]
    %v356 = vld [vmem:[%s1 + $0xa50] sm:$0xff]
    %v357 = vld [vmem:[%s1 + $0xa58] sm:$0xff]
    %v358 = vld [vmem:[%s1 + $0xa60] sm:$0xff]
    %v359 = vld [vmem:[%s1 + $0xa68] sm:$0xff]
    %v360 = vld [vmem:[%s1 + $0xa70] sm:$0xff]
    %v361 = vld [vmem:[%s1 + $0xa78] sm:$0xff]
    %v362 = vld [vmem:[%s1 + $0xa80] sm:$0xff]
    %v363 = vld [vmem:[%s1 + $0xa88] sm:$0xff]
    %v364 = vld [vmem:[%s1 + $0xa90] sm:$0xff]
    %v365 = vld [vmem:[%s1 + $0xa98] sm:$0xff]
    %v366 = vld [vmem:[%s1 + $0xaa0] sm:$0xff]
    %v367 = vld [vmem:[%s1 + $0xaa8] sm:$0xff]
    %v368 = vld [vmem:[%s1 + $0xab0] sm:$0xff]
    %v369 = vld [vmem:[%s1 + $0xab8] sm:$0xff]
    %v370 = vld [vmem:[%s1 + $0xac0] sm:$0xff]
    %v371 = vld [vmem:[%s1 + $0xac8] sm:$0xff]
    %v372 = vld [vmem:[%s1 + $0xad0] sm:$0xff]
    %v373 = vld [vmem:[%s1 + $0xad8] sm:$0xff]
    %v374 = vld [vmem:[%s1 + $0xae0] sm:$0xff]
    %v375 = vld [vmem:[%s1 + $0xae8] sm:$0xff]
    %v376 = vld [vmem:[%s1 + $0xaf0] sm:$0xff]
    %v377 = vld [vmem:[%s1 + $0xaf8] sm:$0xff]
    %v378 = vld [vmem:[%s1 + $0xb00] sm:$0xff]
    %v379 = vld [vmem:[%s1 + $0xb08] sm:$0xff]
    %v380 = vld [vmem:[%s1 + $0xb10] sm:$0xff]
    %v381 = vld [vmem:[%s1 + $0xb18] sm:$0xff]
    %v382 = vld [vmem:[%s1 + $0xb20] sm:$0xff]
    %v383 = vld [vmem:[%s1 + $0xb28] sm:$0xff]
    %v384 = vld [vmem:[%s1 + $0xb30] sm:$0xff]
    %v385 = vld [vmem:[%s1 + $0xb38] sm:$0xff]
    %v386 = vld [vmem:[%s1 + $0xb40] sm:$0xff]
    %v387 = vld [vmem:[%s1 + $0xb48] sm:$0xff]
    %v388 = vld [vmem:[%s1 + $0xb50] sm:$0xff]
    %v389 = vld [vmem:[%s1 + $0xb58] sm:$0xff]
    %v390 = vld [vmem:[%s1 + $0xb60] sm:$0xff]
    %v391 = vld [vmem:[%s1 + $0xb68] sm:$0xff]
    %v392 = vld [vmem:[%s1 + $0xb70] sm:$0xff]
    %v393 = vld [vmem:[%s1 + $0xb78] sm:$0xff]
    %v394 = vld [vmem:[%s1 + $0xb80] sm:$0xff]
    %v395 = vld [vmem:[%s1 + $0xb88] sm:$0xff]
    %v396 = vld [vmem:[%s1 + $0xb90] sm:$0xff]
    %v397 = vld [vmem:[%s1 + $0xb98] sm:$0xff]
    %v398 = vld [vmem:[%s1 + $0xba0] sm:$0xff]
    %v399 = vld [vmem:[%s1 + $0xba8] sm:$0xff]
    %v400 = vld [vmem:[%s1 + $0xbb0] sm:$0xff]
    %v401 = vld [vmem:[%s1 + $0xbb8] sm:$0xff]
    %v402 = vld [vmem:[%s1 + $0xbc0] sm:$0xff]
    %v403 = vld [vmem:[%s1 + $0xbc8] sm:$0xff]
    %v404 = vld [vmem:[%s1 + $0xbd0] sm:$0xff]
    %v405 = vld [vmem:[%s1 + $0xbd8] sm:$0xff]
    %v406 = vld [vmem:[%s1 + $0xbe0] sm:$0xff]
    %v407 = vld [vmem:[%s1 + $0xbe8] sm:$0xff]
    %v408 = vld [vmem:[%s1 + $0xbf0] sm:$0xff]
    %v409 = vld [vmem:[%s1 + $0xbf8] sm:$0xff]
    %v410 = vld [vmem:[%s1 + $0xc00] sm:$0xff]
    %v411 = vld [vmem:[%s1 + $0xc08] sm:$0xff]
    %v412 = vld [vmem:[%s1 + $0xc10] sm:$0xff]
    %v413 = vld [vmem:[%s1 + $0xc18] sm:$0xff]
    %v414 = vld [vmem:[%s1 + $0xc20] sm:$0xff]
    %v415 = vld [vmem:[%s1 + $0xc28] sm:$0xff]
    %v416 = vld [vmem:[%s1 + $0xc30] sm:$0xff]
    %v417 = vld [vmem:[%s1 + $0xc38] sm:$0xff]
    %v418 = vld [vmem:[%s1 + $0xc40] sm:$0xff]
    %v419 = vld [vmem:[%s1 + $0xc48] sm:$0xff]
    %v420 = vld [vmem:[%s1 + $0xc50] sm:$0xff]
    %v421 = vld [vmem:[%s1 + $0xc58] sm:$0xff]
    %v422 = vld [vmem:[%s1 + $0xc60] sm:$0xff]
    %v423 = vld [vmem:[%s1 + $0xc68] sm:$0xff]
    %v424 = vld [vmem:[%s1 + $0xc70] sm:$0xff]
    %v425 = vld [vmem:[%s1 + $0xc78] sm:$0xff]
    %v426 = vld [vmem:[%s1 + $0xc80] sm:$0xff]
    %v427 = vld [vmem:[%s1 + $0xc88] sm:$0xff]
    %v428 = vld [vmem:[%s1 + $0xc90] sm:$0xff]
    %v429 = vld [vmem:[%s1 + $0xc98] sm:$0xff]
    %v430 = vld [vmem:[%s1 + $0xca0] sm:$0xff]
    %v431 = vld [vmem:[%s1 + $0xca8] sm:$0xff]
    %v432 = vld [vmem:[%s1 + $0xcb0] sm:$0xff]
    %v433 = vld [vmem:[%s1 + $0xcb8] sm:$0xff]
    %v434 = vld [vmem:[%s1 + $0xcc0] sm:$0xff]
    %v435 = vld [vmem:[%s1 + $0xcc8] sm:$0xff]
    %v436 = vld [vmem:[%s1 + $0xcd0] sm:$0xff]
    %v437 = vld [vmem:[%s1 + $0xcd8] sm:$0xff]
    %v438 = vld [vmem:[%s1 + $0xce0] sm:$0xff]
    %v439 = vld [vmem:[%s1 + $0xce8] sm:$0xff]
    %v440 = vld [vmem:[%s1 + $0xcf0] sm:$0xff]
    %v441 = vld [vmem:[%s1 + $0xcf8] sm:$0xff]
    %v442 = vld [vmem:[%s1 + $0xd00] sm:$0xff]
    %v443 = vld [vmem:[%s1 + $0xd08] sm:$0xff]
    %v444 = vld [vmem:[%s1 + $0xd10] sm:$0xff]
    %v445 = vld [vmem:[%s1 + $0xd18] sm:$0xff]
    %v446 = vld [vmem:[%s1 + $0xd20] sm:$0xff]
    %v447 = vld [vmem:[%s1 + $0xd28] sm:$0xff]
    %v448 = vld [vmem:[%s1 + $0xd30] sm:$0xff]
    %v449 = vld [vmem:[%s1 + $0xd38] sm:$0xff]
    %v450 = vld [vmem:[%s1 + $0xd40] sm:$0xff]
    %v451 = vld [vmem:[%s1 + $0xd48] sm:$0xff]
    %v452 = vld [vmem:[%s1 + $0xd50] sm:$0xff]
    %v453 = vld [vmem:[%s1 + $0xd58] sm:$0xff]
    %v454 = vld [vmem:[%s1 + $0xd60] sm:$0xff]
    %v455 = vld [vmem:[%s1 + $0xd68] sm:$0xff]
    %v456 = vld [vmem:[%s1 + $0xd70] sm:$0xff]
    %v457 = vld [vmem:[%s1 + $0xd78] sm:$0xff]
    %v458 = vld [vmem:[%s1 + $0xd80] sm:$0xff]
    %v459 = vld [vmem:[%s1 + $0xd88] sm:$0xff]
    %v460 = vld [vmem:[%s1 + $0xd90] sm:$0xff]
    %v461 = vld [vmem:[%s1 + $0xd98] sm:$0xff]
    %v462 = vld [vmem:[%s1 + $0xda0] sm:$0xff]
    %v463 = vld [vmem:[%s1 + $0xda8] sm:$0xff]
    %v464 = vld [vmem:[%s1 + $0xdb0] sm:$0xff]
    %v465 = vld [vmem:[%s1 + $0xdb8] sm:$0xff]
    %v466 = vld [vmem:[%s1 + $0xdc0] sm:$0xff]
    %v467 = vld [vmem:[%s1 + $0xdc8] sm:$0xff]
    %v468 = vld [vmem:[%s1 + $0xdd0] sm:$0xff]
    %v469 = vld [vmem:[%s1 + $0xdd8] sm:$0xff]
    %v470 = vld [vmem:[%s1 + $0xde0] sm:$0xff]
    %v471 = vld [vmem:[%s1 + $0xde8] sm:$0xff]
    %v472 = vld [vmem:[%s1 + $0xdf0] sm:$0xff]
    %v473 = vld [vmem:[%s1 + $0xdf8] sm:$0xff]
    %v474 = vld [vmem:[%s1 + $0xe00] sm:$0xff]
    %v475 = vld [vmem:[%s1 + $0xe08] sm:$0xff]
    %v476 = vld [vmem:[%s1 + $0xe10] sm:$0xff]
    %v477 = vld [vmem:[%s1 + $0xe18] sm:$0xff]
    %v478 = vld [vmem:[%s1 + $0xe20] sm:$0xff]
    %v479 = vld [vmem:[%s1 + $0xe28] sm:$0xff]
    %v480 = vld [vmem:[%s1 + $0xe30] sm:$0xff]
    %v481 = vld [vmem:[%s1 + $0xe38] sm:$0xff]
    %v482 = vld [vmem:[%s1 + $0xe40] sm:$0xff]
    %v483 = vld [vmem:[%s1 + $0xe48] sm:$0xff]
    %v484 = vld [vmem:[%s1 + $0xe50] sm:$0xff]
    %v485 = vld [vmem:[%s1 + $0xe58] sm:$0xff]
    %v486 = vld [vmem:[%s1 + $0xe60] sm:$0xff]
    %v487 = vld [vmem:[%s1 + $0xe68] sm:$0xff]
    %v488 = vld [vmem:[%s1 + $0xe70] sm:$0xff]
    %v489 = vld [vmem:[%s1 + $0xe78] sm:$0xff]
    %v490 = vld [vmem:[%s1 + $0xe80] sm:$0xff]
    %v491 = vld [vmem:[%s1 + $0xe88] sm:$0xff]
    %v492 = vld [vmem:[%s1 + $0xe90] sm:$0xff]
    %v493 = vld [vmem:[%s1 + $0xe98] sm:$0xff]
    %v494 = vld [vmem:[%s1 + $0xea0] sm:$0xff]
    %v495 = vld [vmem:[%s1 + $0xea8] sm:$0xff]
    %v496 = vld [vmem:[%s1 + $0xeb0] sm:$0xff]
    %v497 = vld [vmem:[%s1 + $0xeb8] sm:$0xff]
    %v498 = vld [vmem:[%s1 + $0xec0] sm:$0xff]
    %v499 = vld [vmem:[%s1 + $0xec8] sm:$0xff]
    %v500 = vld [vmem:[%s1 + $0xed0] sm:$0xff]
    %v501 = vld [vmem:[%s1 + $0xed8] sm:$0xff]
    %v502 = vld [vmem:[%s1 + $0xee0] sm:$0xff]
    %v503 = vld [vmem:[%s1 + $0xee8] sm:$0xff]
    %v504 = vld [vmem:[%s1 + $0xef0] sm:$0xff]
    %v505 = vld [vmem:[%s1 + $0xef8] sm:$0xff]
    %v506 = vld [vmem:[%s1 + $0xf00] sm:$0xff]
    %v507 = vld [vmem:[%s1 + $0xf08] sm:$0xff]
    %v508 = vld [vmem:[%s1 + $0xf10] sm:$0xff]
    %v509 = vld [vmem:[%s1 + $0xf18] sm:$0xff]
    %v510 = vld [vmem:[%s1 + $0xf20] sm:$0xff]
    %v511 = vld [vmem:[%s1 + $0xf28] sm:$0xff]
    %v512 = vld [vmem:[%s1 + $0xf30] sm:$0xff]
    %v513 = vld [vmem:[%s1 + $0xf38] sm:$0xff]
    %v514 = vld [vmem:[%s1 + $0xf40] sm:$0xff]
    %v515 = vld [vmem:[%s1 + $0xf48] sm:$0xff]
    %v516 = vld [vmem:[%s1 + $0xf50] sm:$0xff]
    %v517 = vld [vmem:[%s1 + $0xf58] sm:$0xff]
    %v518 = vld [vmem:[%s1 + $0xf60] sm:$0xff]
    %v519 = vld [vmem:[%s1 + $0xf68] sm:$0xff]
    %v520 = vld [vmem:[%s1 + $0xf70] sm:$0xff]
    %v521 = vld [vmem:[%s1 + $0xf78] sm:$0xff]
    %v522 = vld [vmem:[%s1 + $0xf80] sm:$0xff]
    %v523 = vld [vmem:[%s1 + $0xf88] sm:$0xff]
    %v524 = vld [vmem:[%s1 + $0xf90] sm:$0xff]
    %v525 = vld [vmem:[%s1 + $0xf98] sm:$0xff]
    %v526 = vld [vmem:[%s1 + $0xfa0] sm:$0xff]
    %v527 = vld [vmem:[%s1 + $0xfa8] sm:$0xff]
    %v528 = vld [vmem:[%s1 + $0xfb0] sm:$0xff]
    %v529 = vld [vmem:[%s1 + $0xfb8] sm:$0xff]
    %v530 = vld [vmem:[%s1 + $0xfc0] sm:$0xff]
    %v531 = vld [vmem:[%s1 + $0xfc8] sm:$0xff]
    %v532 = vld [vmem:[%s1 + $0xfd0] sm:$0xff]
    %v533 = vld [vmem:[%s1 + $0xfd8] sm:$0xff]
    %v534 = vld [vmem:[%s1 + $0xfe0] sm:$0xff]
    %v535 = vld [vmem:[%s1 + $0xfe8] sm:$0xff]
    %v536 = vld [vmem:[%s1 + $0xff0] sm:$0xff]
    %v537 = vld [vmem:[%s1 + $0xff8] sm:$0xff]
    %v538 = vld [vmem:[%s1 + $0x1000] sm:$0xff]
    %v539 = vld [vmem:[%s1 + $0x1008] sm:$0xff]
    %v540 = vld [vmem:[%s1 + $0x1010] sm:$0xff]
    %v541 = vld [vmem:[%s1 + $0x1018] sm:$0xff]
    %v542 = vld [vmem:[%s1 + $0x1020] sm:$0xff]
    %v543 = vld [vmem:[%s1 + $0x1028] sm:$0xff]
    %v544 = vld [vmem:[%s1 + $0x1030] sm:$0xff]
    %v545 = vld [vmem:[%s1 + $0x1038] sm:$0xff]
    %v546 = vld [vmem:[%s1 + $0x1040] sm:$0xff]
    %v547 = vld [vmem:[%s1 + $0x1048] sm:$0xff]
    %v548 = vld [vmem:[%s1 + $0x1050] sm:$0xff]
    %v549 = vld [vmem:[%s1 + $0x1058] sm:$0xff]
    %v550 = vld [vmem:[%s1 + $0x1060] sm:$0xff]
    %v551 = vld [vmem:[%s1 + $0x1068] sm:$0xff]
    %v552 = vld [vmem:[%s1 + $0x1070] sm:$0xff]
    %v553 = vld [vmem:[%s1 + $0x1078] sm:$0xff]
    %v554 = vld [vmem:[%s1 + $0x1080] sm:$0xff]
    %v555 = vld [vmem:[%s1 + $0x1088] sm:$0xff]
    %v556 = vld [vmem:[%s1 + $0x1090] sm:$0xff]
    %v557 = vld [vmem:[%s1 + $0x1098] sm:$0xff]
    %v558 = vld [vmem:[%s1 + $0x10a0] sm:$0xff]
    %v559 = vld [vmem:[%s1 + $0x10a8] sm:$0xff]
    %v560 = vld [vmem:[%s1 + $0x10b0] sm:$0xff]
    %v561 = vld [vmem:[%s1 + $0x10b8] sm:$0xff]
    %v562 = vld [vmem:[%s1 + $0x10c0] sm:$0xff]
    %v563 = vld [vmem:[%s1 + $0x10c8] sm:$0xff]
    %v564 = vld [vmem:[%s1 + $0x10d0] sm:$0xff]
    %v565 = vld [vmem:[%s1 + $0x10d8] sm:$0xff]
    %v566 = vld [vmem:[%s1 + $0x10e0] sm:$0xff]
    %v567 = vld [vmem:[%s1 + $0x10e8] sm:$0xff]
    %v568 = vld [vmem:[%s1 + $0x10f0] sm:$0xff]
    %v569 = vld [vmem:[%s1 + $0x10f8] sm:$0xff]
    %v570 = vld [vmem:[%s1 + $0x1100] sm:$0xff]
    %v571 = vld [vmem:[%s1 + $0x1108] sm:$0xff]
    %v572 = vld [vmem:[%s1 + $0x1110] sm:$0xff]
    %v573 = vld [vmem:[%s1 + $0x1118] sm:$0xff]
    %v574 = vld [vmem:[%s1 + $0x1120] sm:$0xff]
    %v575 = vld [vmem:[%s1 + $0x1128] sm:$0xff]
    %v576 = vld [vmem:[%s1 + $0x1130] sm:$0xff]
    %v577 = vld [vmem:[%s1 + $0x1138] sm:$0xff]
    %v578 = vld [vmem:[%s1 + $0x1140] sm:$0xff]
    %v579 = vld [vmem:[%s1 + $0x1148] sm:$0xff]
    %v580 = vld [vmem:[%s1 + $0x1150] sm:$0xff]
    %v581 = vld [vmem:[%s1 + $0x1158] sm:$0xff]
    %v582 = vld [vmem:[%s1 + $0x1160] sm:$0xff]
    %v583 = vld [vmem:[%s1 + $0x1168] sm:$0xff]
    %v584 = vld [vmem:[%s1 + $0x1170] sm:$0xff]
    %v585 = vld [vmem:[%s1 + $0x1178] sm:$0xff]
    %v586 = vld [vmem:[%s1 + $0x1180] sm:$0xff]
    %v587 = vld [vmem:[%s1 + $0x1188] sm:$0xff]
    %v588 = vld [vmem:[%s1 + $0x1190] sm:$0xff]
    %v589 = vld [vmem:[%s1 + $0x1198] sm:$0xff]
    %v590 = vld [vmem:[%s1 + $0x11a0] sm:$0xff]
    %v591 = vld [vmem:[%s1 + $0x11a8] sm:$0xff]
    %v592 = vld [vmem:[%s1 + $0x11b0] sm:$0xff]
    %v593 = vld [vmem:[%s1 + $0x11b8] sm:$0xff]
    %v594 = vld [vmem:[%s1 + $0x11c0] sm:$0xff]
    %v595 = vld [vmem:[%s1 + $0x11c8] sm:$0xff]
    %v596 = vld [vmem:[%s1 + $0x11d0] sm:$0xff]
    %v597 = vld [vmem:[%s1 + $0x11d8] sm:$0xff]
    %v598 = vld [vmem:[%s1 + $0x11e0] sm:$0xff]
    %v599 = vld [vmem:[%s1 + $0x11e8] sm:$0xff]
    %v600 = vld [vmem:[%s1 + $0x11f0] sm:$0xff]
    %v601 = vld [vmem:[%s1 + $0x11f8] sm:$0xff]
    %v602 = vld [vmem:[%s1 + $0x1200] sm:$0xff]
    %v603 = vld [vmem:[%s1 + $0x1208] sm:$0xff]
    %v604 = vld [vmem:[%s1 + $0x1210] sm:$0xff]
    %v605 = vld [vmem:[%s1 + $0x1218] sm:$0xff]
    %v606 = vld [vmem:[%s1 + $0x1220] sm:$0xff]
    %v607 = vld [vmem:[%s1 + $0x1228] sm:$0xff]
    %v608 = vld [vmem:[%s1 + $0x1230] sm:$0xff]
    %v609 = vld [vmem:[%s1 + $0x1238] sm:$0xff]
    %v610 = vld [vmem:[%s1 + $0x1240] sm:$0xff]
    %v611 = vld [vmem:[%s1 + $0x1248] sm:$0xff]
    %v612 = vld [vmem:[%s1 + $0x1250] sm:$0xff]
    %v613 = vld [vmem:[%s1 + $0x1258] sm:$0xff]
    %v614 = vld [vmem:[%s1 + $0x1260] sm:$0xff]
    %v615 = vld [vmem:[%s1 + $0x1268] sm:$0xff]
    %v616 = vld [vmem:[%s1 + $0x1270] sm:$0xff]
    %v617 = vld [vmem:[%s1 + $0x1278] sm:$0xff]
    %v618 = vld [vmem:[%s1 + $0x1280] sm:$0xff]
    %v619 = vld [vmem:[%s1 + $0x1288] sm:$0xff]
    %v620 = vld [vmem:[%s1 + $0x1290] sm:$0xff]
    %v621 = vld [vmem:[%s1 + $0x1298] sm:$0xff]
    %v622 = vld [vmem:[%s1 + $0x12a0] sm:$0xff]
    %v623 = vld [vmem:[%s1 + $0x12a8] sm:$0xff]
    %v624 = vld [vmem:[%s1 + $0x12b0] sm:$0xff]
    %v625 = vld [vmem:[%s1 + $0x12b8] sm:$0xff]
    %v626 = vld [vmem:[%s1 + $0x12c0] sm:$0xff]
    %v627 = vld [vmem:[%s1 + $0x12c8] sm:$0xff]
    %v628 = vld [vmem:[%s1 + $0x12d0] sm:$0xff]
    %v629 = vld [vmem:[%s1 + $0x12d8] sm:$0xff]
    %v630 = vld [vmem:[%s1 + $0x12e0] sm:$0xff]
    %v631 = vld [vmem:[%s1 + $0x12e8] sm:$0xff]
    %v632 = vld [vmem:[%s1 + $0x12f0] sm:$0xff]
    %v633 = vld [vmem:[%s1 + $0x12f8] sm:$0xff]
    %v634 = vld [vmem:[%s1 + $0x1300] sm:$0xff]
    %v635 = vld [vmem:[%s1 + $0x1308] sm:$0xff]
    %v636 = vld [vmem:[%s1 + $0x1310] sm:$0xff]
    %v637 = vld [vmem:[%s1 + $0x1318] sm:$0xff]
    %v638 = vld [vmem:[%s1 + $0x1320] sm:$0xff]
    %v639 = vld [vmem:[%s1 + $0x1328] sm:$0xff]
    %v640 = vld [vmem:[%s1 + $0x1330] sm:$0xff]
    %v641 = vld [vmem:[%s1 + $0x1338] sm:$0xff]
    %v642 = vld [vmem:[%s1 + $0x1340] sm:$0xff]
    %v643 = vld [vmem:[%s1 + $0x1348] sm:$0xff]
    %v644 = vld [vmem:[%s1 + $0x1350] sm:$0xff]
    %v645 = vld [vmem:[%s1 + $0x1358] sm:$0xff]
    %v646 = vld [vmem:[%s1 + $0x1360] sm:$0xff]
    %v647 = vld [vmem:[%s1 + $0x1368] sm:$0xff]
    %v648 = vld [vmem:[%s1 + $0x1370] sm:$0xff]
    %v649 = vld [vmem:[%s1 + $0x1378] sm:$0xff]
    %v650 = vld [vmem:[%s1 + $0x1380] sm:$0xff]
    %v651 = vld [vmem:[%s1 + $0x1388] sm:$0xff]
    %v652 = vld [vmem:[%s1 + $0x1390] sm:$0xff]
    %v653 = vld [vmem:[%s1 + $0x1398] sm:$0xff]
    %v654 = vld [vmem:[%s1 + $0x13a0] sm:$0xff]
    %v655 = vld [vmem:[%s1 + $0x13a8] sm:$0xff]
    %v656 = vld [vmem:[%s1 + $0x13b0] sm:$0xff]
    %v657 = vld [vmem:[%s1 + $0x13b8] sm:$0xff]
    %v658 = vld [vmem:[%s1 + $0x13c0] sm:$0xff]
    %v659 = vld [vmem:[%s1 + $0x13c8] sm:$0xff]
    %v660 = vld [vmem:[%s1 + $0x13d0] sm:$0xff]
    %v661 = vld [vmem:[%s1 + $0x13d8] sm:$0xff]
    %v662 = vld [vmem:[%s1 + $0x13e0] sm:$0xff]
    %v663 = vld [vmem:[%s1 + $0x13e8] sm:$0xff]
    %v664 = vld [vmem:[%s1 + $0x13f0] sm:$0xff]
    %v665 = vld [vmem:[%s1 + $0x13f8] sm:$0xff]
    %v666 = vld [vmem:[%s1 + $0x1400] sm:$0xff]
    %v667 = vld [vmem:[%s1 + $0x1408] sm:$0xff]
    %v668 = vld [vmem:[%s1 + $0x1410] sm:$0xff]
    %v669 = vld [vmem:[%s1 + $0x1418] sm:$0xff]
    %v670 = vld [vmem:[%s1 + $0x1420] sm:$0xff]
    %v671 = vld [vmem:[%s1 + $0x1428] sm:$0xff]
    %v672 = vld [vmem:[%s1 + $0x1430] sm:$0xff]
    %v673 = vld [vmem:[%s1 + $0x1438] sm:$0xff]
    %v674 = vld [vmem:[%s1 + $0x1440] sm:$0xff]
    %v675 = vld [vmem:[%s1 + $0x1448] sm:$0xff]
    %v676 = vld [vmem:[%s1 + $0x1450] sm:$0xff]
    %v677 = vld [vmem:[%s1 + $0x1458] sm:$0xff]
    %v678 = vld [vmem:[%s1 + $0x1460] sm:$0xff]
    %v679 = vld [vmem:[%s1 + $0x1468] sm:$0xff]
    %v680 = vld [vmem:[%s1 + $0x1470] sm:$0xff]
    %v681 = vld [vmem:[%s1 + $0x1478] sm:$0xff]
    %v682 = vld [vmem:[%s1 + $0x1480] sm:$0xff]
    %v683 = vld [vmem:[%s1 + $0x1488] sm:$0xff]
    %v684 = vld [vmem:[%s1 + $0x1490] sm:$0xff]
    %v685 = vld [vmem:[%s1 + $0x1498] sm:$0xff]
    %v686 = vld [vmem:[%s1 + $0x14a0] sm:$0xff]
    %v687 = vld [vmem:[%s1 + $0x14a8] sm:$0xff]
    %v688 = vld [vmem:[%s1 + $0x14b0] sm:$0xff]
    %v689 = vld [vmem:[%s1 + $0x14b8] sm:$0xff]
    %v690 = vld [vmem:[%s1 + $0x14c0] sm:$0xff]
    %v691 = vld [vmem:[%s1 + $0x14c8] sm:$0xff]
    %v692 = vld [vmem:[%s1 + $0x14d0] sm:$0xff]
    %v693 = vld [vmem:[%s1 + $0x14d8] sm:$0xff]
    %v694 = vld [vmem:[%s1 + $0x14e0] sm:$0xff]
    %v695 = vld [vmem:[%s1 + $0x14e8] sm:$0xff]
    %v696 = vld [vmem:[%s1 + $0x14f0] sm:$0xff]
    %v697 = vld [vmem:[%s1 + $0x14f8] sm:$0xff]
    %v698 = vld [vmem:[%s1 + $0x1500] sm:$0xff]
    %v699 = vld [vmem:[%s1 + $0x1508] sm:$0xff]
    %v700 = vld [vmem:[%s1 + $0x1510] sm:$0xff]
    %v701 = vld [vmem:[%s1 + $0x1518] sm:$0xff]
    %v702 = vld [vmem:[%s1 + $0x1520] sm:$0xff]
    %v703 = vld [vmem:[%s1 + $0x1528] sm:$0xff]
    %v704 = vld [vmem:[%s1 + $0x1530] sm:$0xff]
    %v705 = vld [vmem:[%s1 + $0x1538] sm:$0xff]
    %v706 = vld [vmem:[%s1 + $0x1540] sm:$0xff]
    %v707 = vld [vmem:[%s1 + $0x1548] sm:$0xff]
    %v708 = vld [vmem:[%s1 + $0x1550] sm:$0xff]
    %v709 = vld [vmem:[%s1 + $0x1558] sm:$0xff]
    %v710 = vld [vmem:[%s1 + $0x1560] sm:$0xff]
    %v711 = vld [vmem:[%s1 + $0x1568] sm:$0xff]
    %v712 = vld [vmem:[%s1 + $0x1570] sm:$0xff]
    %v713 = vld [vmem:[%s1 + $0x1578] sm:$0xff]
    %v714 = vld [vmem:[%s1 + $0x1580] sm:$0xff]
    %v715 = vld [vmem:[%s1 + $0x1588] sm:$0xff]
    %v716 = vld [vmem:[%s1 + $0x1590] sm:$0xff]
    %v717 = vld [vmem:[%s1 + $0x1598] sm:$0xff]
    %v718 = vld [vmem:[%s1 + $0x15a0] sm:$0xff]
    %v719 = vld [vmem:[%s1 + $0x15a8] sm:$0xff]
    %v720 = vld [vmem:[%s1 + $0x15b0] sm:$0xff]
    %v721 = vld [vmem:[%s1 + $0x15b8] sm:$0xff]
    %v722 = vld [vmem:[%s1 + $0x15c0] sm:$0xff]
    %v723 = vld [vmem:[%s1 + $0x15c8] sm:$0xff]
    %v724 = vld [vmem:[%s1 + $0x15d0] sm:$0xff]
    %v725 = vld [vmem:[%s1 + $0x15d8] sm:$0xff]
    %v726 = vld [vmem:[%s1 + $0x15e0] sm:$0xff]
    %v727 = vld [vmem:[%s1 + $0x15e8] sm:$0xff]
    %v728 = vld [vmem:[%s1 + $0x15f0] sm:$0xff]
    %v729 = vld [vmem:[%s1 + $0x15f8] sm:$0xff]
    %v730 = vld [vmem:[%s1 + $0x1600] sm:$0xff]
    %v731 = vld [vmem:[%s1 + $0x1608] sm:$0xff]
    %v732 = vld [vmem:[%s1 + $0x1610] sm:$0xff]
    %v733 = vld [vmem:[%s1 + $0x1618] sm:$0xff]
    %v734 = vld [vmem:[%s1 + $0x1620] sm:$0xff]
    %v735 = vld [vmem:[%s1 + $0x1628] sm:$0xff]
    %v736 = vld [vmem:[%s1 + $0x1630] sm:$0xff]
    %v737 = vld [vmem:[%s1 + $0x1638] sm:$0xff]
    %v738 = vld [vmem:[%s1 + $0x1640] sm:$0xff]
    %v739 = vld [vmem:[%s1 + $0x1648] sm:$0xff]
    %v740 = vld [vmem:[%s1 + $0x1650] sm:$0xff]
    %v741 = vld [vmem:[%s1 + $0x1658] sm:$0xff]
    %v742 = vld [vmem:[%s1 + $0x1660] sm:$0xff]
    %v743 = vld [vmem:[%s1 + $0x1668] sm:$0xff]
    %v744 = vld [vmem:[%s1 + $0x1670] sm:$0xff]
    %v745 = vld [vmem:[%s1 + $0x1678] sm:$0xff]
    %v746 = vld [vmem:[%s1 + $0x1680] sm:$0xff]
    %v747 = vld [vmem:[%s1 + $0x1688] sm:$0xff]
    %v748 = vld [vmem:[%s1 + $0x1690] sm:$0xff]
    %v749 = vld [vmem:[%s1 + $0x1698] sm:$0xff]
    %v750 = vld [vmem:[%s1 + $0x16a0] sm:$0xff]
    %v751 = vld [vmem:[%s1 + $0x16a8] sm:$0xff]
    %v752 = vld [vmem:[%s1 + $0x16b0] sm:$0xff]
    %v753 = vld [vmem:[%s1 + $0x16b8] sm:$0xff]
    %v754 = vld [vmem:[%s1 + $0x16c0] sm:$0xff]
    %v755 = vld [vmem:[%s1 + $0x16c8] sm:$0xff]
    %v756 = vld [vmem:[%s1 + $0x16d0] sm:$0xff]
    %v757 = vld [vmem:[%s1 + $0x16d8] sm:$0xff]
    %v758 = vld [vmem:[%s1 + $0x16e0] sm:$0xff]
    %v759 = vld [vmem:[%s1 + $0x16e8] sm:$0xff]
    %v760 = vld [vmem:[%s1 + $0x16f0] sm:$0xff]
    %v761 = vld [vmem:[%s1 + $0x16f8] sm:$0xff]
    %v762 = vld [vmem:[%s1 + $0x1700] sm:$0xff]
    %v763 = vld [vmem:[%s1 + $0x1708] sm:$0xff]
    %v764 = vld [vmem:[%s1 + $0x1710] sm:$0xff]
    %v765 = vld [vmem:[%s1 + $0x1718] sm:$0xff]
    %v766 = vld [vmem:[%s1 + $0x1720] sm:$0xff]
    %v767 = vld [vmem:[%s1 + $0x1728] sm:$0xff]
    %v768 = vld [vmem:[%s1 + $0x1730] sm:$0xff]
    %v769 = vld [vmem:[%s1 + $0x1738] sm:$0xff]
    %v770 = vld [vmem:[%s1 + $0x1740] sm:$0xff]
    %v771 = vld [vmem:[%s1 + $0x1748] sm:$0xff]
    %v772 = vld [vmem:[%s1 + $0x1750] sm:$0xff]
    %v773 = vld [vmem:[%s1 + $0x1758] sm:$0xff]
    %v774 = vld [vmem:[%s1 + $0x1760] sm:$0xff]
    %v775 = vld [vmem:[%s1 + $0x1768] sm:$0xff]
    %v776 = vld [vmem:[%s1 + $0x1770] sm:$0xff]
    %v777 = vld [vmem:[%s1 + $0x1778] sm:$0xff]
    %v778 = vld [vmem:[%s1 + $0x1780] sm:$0xff]
    %v779 = vld [vmem:[%s1 + $0x1788] sm:$0xff]
    %v780 = vld [vmem:[%s1 + $0x1790] sm:$0xff]
    %v781 = vld [vmem:[%s1 + $0x1798] sm:$0xff]
    %v782 = vld [vmem:[%s1 + $0x17a0] sm:$0xff]
    %v783 = vld [vmem:[%s1 + $0x17a8] sm:$0xff]
    %v784 = vld [vmem:[%s1 + $0x17b0] sm:$0xff]
    %v785 = vld [vmem:[%s1 + $0x17b8] sm:$0xff]
    %v786 = vld [vmem:[%s1 + $0x17c0] sm:$0xff]
    %v787 = vld [vmem:[%s1 + $0x17c8] sm:$0xff]
    %v788 = vld [vmem:[%s1 + $0x17d0] sm:$0xff]
    %v789 = vld [vmem:[%s1 + $0x17d8] sm:$0xff]
    %v790 = vld [vmem:[%s1 + $0x17e0] sm:$0xff]
    %v791 = vld [vmem:[%s1 + $0x17e8] sm:$0xff]
    %v792 = vld [vmem:[%s1 + $0x17f0] sm:$0xff]
    %v793 = vld [vmem:[%s1 + $0x17f8] sm:$0xff]
    %v794 = vld [vmem:[%s1 + $0x1800] sm:$0xff]
    %v795 = vld [vmem:[%s1 + $0x1808] sm:$0xff]
    %v796 = vld [vmem:[%s1 + $0x1810] sm:$0xff]
    %v797 = vld [vmem:[%s1 + $0x1818] sm:$0xff]
    %v798 = vld [vmem:[%s1 + $0x1820] sm:$0xff]
    %v799 = vld [vmem:[%s1 + $0x1828] sm:$0xff]
    %v800 = vld [vmem:[%s1 + $0x1830] sm:$0xff]
    %v801 = vld [vmem:[%s1 + $0x1838] sm:$0xff]
    %v802 = vld [vmem:[%s1 + $0x1840] sm:$0xff]
    %v803 = vld [vmem:[%s1 + $0x1848] sm:$0xff]
    %v804 = vld [vmem:[%s1 + $0x1850] sm:$0xff]
    %v805 = vld [vmem:[%s1 + $0x1858] sm:$0xff]
    %v806 = vld [vmem:[%s1 + $0x1860] sm:$0xff]
    %v807 = vld [vmem:[%s1 + $0x1868] sm:$0xff]
    %v808 = vld [vmem:[%s1 + $0x1870] sm:$0xff]
    %v809 = vld [vmem:[%s1 + $0x1878] sm:$0xff]
    %v810 = vld [vmem:[%s2] sm:$0xf]
    %v812 = vlaneseq
    %v813 = vshrl.u32 %v812, 7
    %v814 = vsub.s32 0, %v813
    %v815 = vrot.slane %v810, %v814
    %v816 = vlaneseq
    %v817 = vshrl.u32 %v816, 7
    %v818 = vsub.s32 1, %v817
    %v819 = vrot.slane %v810, %v818
    %v820 = vlaneseq
    %v821 = vshrl.u32 %v820, 7
    %v822 = vsub.s32 2, %v821
    %v823 = vrot.slane %v810, %v822
    %v824 = vlaneseq
    %v825 = vshrl.u32 %v824, 7
    %v826 = vsub.s32 3, %v825
    %v827 = vrot.slane %v810, %v826
    %v836 = vcombine.high %v22, %v22
    %v838 = vunpack.c.l.s4 1966171168
    %v839 = vunpack.c.0.s8 %v838
    %v840 = vlaneseq
    %v841 = vshrl.u32 %v840, 7
    %v842 = vsub.s32 %v839, %v841
    %v843 = vrot.slane %v22, %v842
    %v845 = vunpack.c.l.s4 1966171168
    %v846 = vunpack.c.0.s8 %v845
    %v847 = vlaneseq
    %v848 = vshrl.u32 %v847, 7
    %v849 = vsub.s32 %v846, %v848
    %v850 = vrot.slane %v836, %v849
    %v851 = vcombine.high %v843, %v843
    %v852 = vcombine.high %v850, %v850
    %v854 = vunpack.c.l.s4 1966171168
    %v855 = vunpack.c.0.s8 %v854
    %v856 = vlaneseq
    %v857 = vshrl.u32 %v856, 7
    %v858 = vsub.s32 %v855, %v857
    %v859 = vrot.slane %v843, %v858
    %v861 = vunpack.c.l.s4 1966171168
    %v862 = vunpack.c.0.s8 %v861
    %v863 = vlaneseq
    %v864 = vshrl.u32 %v863, 7
    %v865 = vsub.s32 %v862, %v864
    %v866 = vrot.slane %v850, %v865
    %v868 = vunpack.c.l.s4 1966171168
    %v869 = vunpack.c.0.s8 %v868
    %v870 = vlaneseq
    %v871 = vshrl.u32 %v870, 7
    %v872 = vsub.s32 %v869, %v871
    %v873 = vrot.slane %v851, %v872
    %v875 = vunpack.c.l.s4 1966171168
    %v876 = vunpack.c.0.s8 %v875
    %v877 = vlaneseq
    %v878 = vshrl.u32 %v877, 7
    %v879 = vsub.s32 %v876, %v878
    %v880 = vrot.slane %v852, %v879
    %v881 = vcombine.high %v859, %v859
    %v882 = vcombine.high %v866, %v866
    %v883 = vcombine.high %v873, %v873
    %v884 = vcombine.high %v880, %v880
    %v885 = vcombine.high %v23, %v23
    %v887 = vunpack.c.l.s4 1966171168
    %v888 = vunpack.c.0.s8 %v887
    %v889 = vlaneseq
    %v890 = vshrl.u32 %v889, 7
    %v891 = vsub.s32 %v888, %v890
    %v892 = vrot.slane %v23, %v891
    %v894 = vunpack.c.l.s4 1966171168
    %v895 = vunpack.c.0.s8 %v894
    %v896 = vlaneseq
    %v897 = vshrl.u32 %v896, 7
    %v898 = vsub.s32 %v895, %v897
    %v899 = vrot.slane %v885, %v898
    %v900 = vcombine.high %v892, %v892
    %v901 = vcombine.high %v899, %v899
    %v903 = vunpack.c.l.s4 1966171168
    %v904 = vunpack.c.0.s8 %v903
    %v905 = vlaneseq
    %v906 = vshrl.u32 %v905, 7
    %v907 = vsub.s32 %v904, %v906
    %v908 = vrot.slane %v892, %v907
    %v910 = vunpack.c.l.s4 1966171168
    %v911 = vunpack.c.0.s8 %v910
    %v912 = vlaneseq
    %v913 = vshrl.u32 %v912, 7
    %v914 = vsub.s32 %v911, %v913
    %v915 = vrot.slane %v899, %v914
    %v917 = vunpack.c.l.s4 1966171168
    %v918 = vunpack.c.0.s8 %v917
    %v919 = vlaneseq
    %v920 = vshrl.u32 %v919, 7
    %v921 = vsub.s32 %v918, %v920
    %v922 = vrot.slane %v900, %v921
    %v924 = vunpack.c.l.s4 1966171168
    %v925 = vunpack.c.0.s8 %v924
    %v926 = vlaneseq
    %v927 = vshrl.u32 %v926, 7
    %v928 = vsub.s32 %v925, %v927
    %v929 = vrot.slane %v901, %v928
    %v930 = vcombine.high %v908, %v908
    %v931 = vcombine.high %v915, %v915
    %v932 = vcombine.high %v922, %v922
    %v933 = vcombine.high %v929, %v929
    %v934 = vcombine.high %v24, %v24
    %v936 = vunpack.c.l.s4 1966171168
    %v937 = vunpack.c.0.s8 %v936
    %v938 = vlaneseq
    %v939 = vshrl.u32 %v938, 7
    %v940 = vsub.s32 %v937, %v939
    %v941 = vrot.slane %v24, %v940
    %v943 = vunpack.c.l.s4 1966171168
    %v944 = vunpack.c.0.s8 %v943
    %v945 = vlaneseq
    %v946 = vshrl.u32 %v945, 7
    %v947 = vsub.s32 %v944, %v946
    %v948 = vrot.slane %v934, %v947
    %v949 = vcombine.high %v941, %v941
    %v950 = vcombine.high %v948, %v948
    %v952 = vunpack.c.l.s4 1966171168
    %v953 = vunpack.c.0.s8 %v952
    %v954 = vlaneseq
    %v955 = vshrl.u32 %v954, 7
    %v956 = vsub.s32 %v953, %v955
    %v957 = vrot.slane %v941, %v956
    %v959 = vunpack.c.l.s4 1966171168
    %v960 = vunpack.c.0.s8 %v959
    %v961 = vlaneseq
    %v962 = vshrl.u32 %v961, 7
    %v963 = vsub.s32 %v960, %v962
    %v964 = vrot.slane %v948, %v963
    %v966 = vunpack.c.l.s4 1966171168
    %v967 = vunpack.c.0.s8 %v966
    %v968 = vlaneseq
    %v969 = vshrl.u32 %v968, 7
    %v970 = vsub.s32 %v967, %v969
    %v971 = vrot.slane %v949, %v970
    %v973 = vunpack.c.l.s4 1966171168
    %v974 = vunpack.c.0.s8 %v973
    %v975 = vlaneseq
    %v976 = vshrl.u32 %v975, 7
    %v977 = vsub.s32 %v974, %v976
    %v978 = vrot.slane %v950, %v977
    %v979 = vcombine.high %v957, %v957
    %v980 = vcombine.high %v964, %v964
    %v981 = vcombine.high %v971, %v971
    %v982 = vcombine.high %v978, %v978
    %v984 = vunpack.c.l.s4 1966171168
    %v985 = vunpack.c.0.s8 %v984
    %v986 = vlaneseq
    %v987 = vshrl.u32 %v986, 7
    %v988 = vsub.s32 %v985, %v987
    %v989 = vrot.slane %v25, %v988
    %v991 = vunpack.c.l.s4 1966171168
    %v992 = vunpack.c.0.s8 %v991
    %v993 = vlaneseq
    %v994 = vshrl.u32 %v993, 7
    %v995 = vsub.s32 %v992, %v994
    %v996 = vrot.slane %v989, %v995
    %v1805 = vunpack.c.l.b16 %v26
    %v1806 = vunpack.c.h.b16 %v26
    %v1807 = vunpack.c.l.b16 %v27
    %v1808 = vunpack.c.h.b16 %v27
    %v1809 = vunpack.c.l.b16 %v28
    %v1810 = vunpack.c.h.b16 %v28
    %v1811 = vunpack.c.l.b16 %v29
    %v1812 = vunpack.c.h.b16 %v29
    %v1813 = vunpack.c.l.b16 %v30
    %v1814 = vunpack.c.h.b16 %v30
    %v1815 = vunpack.c.l.b16 %v31
    %v1816 = vunpack.c.h.b16 %v31
    %v1817 = vunpack.c.l.b16 %v32
    %v1818 = vunpack.c.h.b16 %v32
    %v1819 = vunpack.c.l.b16 %v33
    %v1820 = vunpack.c.h.b16 %v33
    %v1821 = vunpack.c.l.b16 %v34
    %v1822 = vunpack.c.h.b16 %v34
    %v1823 = vunpack.c.l.b16 %v35
    %v1824 = vunpack.c.h.b16 %v35
    %v1825 = vunpack.c.l.b16 %v36
    %v1826 = vunpack.c.h.b16 %v36
    %v1827 = vunpack.c.l.b16 %v37
    %v1828 = vunpack.c.h.b16 %v37
    %v1829 = vunpack.c.l.b16 %v38
    %v1830 = vunpack.c.h.b16 %v38
    %v1831 = vunpack.c.l.b16 %v39
    %v1832 = vunpack.c.h.b16 %v39
    %v1833 = vunpack.c.l.b16 %v40
    %v1834 = vunpack.c.h.b16 %v40
    %v1835 = vunpack.c.l.b16 %v41
    %v1836 = vunpack.c.h.b16 %v41
    %v1837 = vunpack.c.l.b16 %v42
    %v1838 = vunpack.c.h.b16 %v42
    %v1839 = vunpack.c.l.b16 %v43
    %v1840 = vunpack.c.h.b16 %v43
    %v1841 = vunpack.c.l.b16 %v44
    %v1842 = vunpack.c.h.b16 %v44
    %v1843 = vunpack.c.l.b16 %v45
    %v1844 = vunpack.c.h.b16 %v45
    %v1845 = vunpack.c.l.b16 %v46
    %v1846 = vunpack.c.h.b16 %v46
    %v1847 = vunpack.c.l.b16 %v47
    %v1848 = vunpack.c.h.b16 %v47
    %v1849 = vunpack.c.l.b16 %v48
    %v1850 = vunpack.c.h.b16 %v48
    %v1851 = vunpack.c.l.b16 %v49
    %v1852 = vunpack.c.h.b16 %v49
    %v1853 = vunpack.c.l.b16 %v50
    %v1854 = vunpack.c.h.b16 %v50
    %v1855 = vunpack.c.l.b16 %v51
    %v1856 = vunpack.c.h.b16 %v51
    %v1857 = vunpack.c.l.b16 %v52
    %v1858 = vunpack.c.h.b16 %v52
    %v1859 = vunpack.c.l.b16 %v53
    %v1860 = vunpack.c.h.b16 %v53
    %v1861 = vunpack.c.l.b16 %v54
    %v1862 = vunpack.c.h.b16 %v54
    %v1863 = vunpack.c.l.b16 %v55
    %v1864 = vunpack.c.h.b16 %v55
    %v1865 = vunpack.c.l.b16 %v56
    %v1866 = vunpack.c.h.b16 %v56
    %v1867 = vunpack.c.l.b16 %v57
    %v1868 = vunpack.c.h.b16 %v57
    %v1869 = vunpack.c.l.b16 %v58
    %v1870 = vunpack.c.h.b16 %v58
    %v1871 = vunpack.c.l.b16 %v59
    %v1872 = vunpack.c.h.b16 %v59
    %v1873 = vunpack.c.l.b16 %v60
    %v1874 = vunpack.c.h.b16 %v60
    %v1875 = vunpack.c.l.b16 %v61
    %v1876 = vunpack.c.h.b16 %v61
    %v1877 = vunpack.c.l.b16 %v62
    %v1878 = vunpack.c.h.b16 %v62
    %v1879 = vunpack.c.l.b16 %v63
    %v1880 = vunpack.c.h.b16 %v63
    %v1881 = vunpack.c.l.b16 %v64
    %v1882 = vunpack.c.h.b16 %v64
    %v1883 = vunpack.c.l.b16 %v65
    %v1884 = vunpack.c.h.b16 %v65
    %v1885 = vunpack.c.l.b16 %v66
    %v1886 = vunpack.c.h.b16 %v66
    %v1887 = vunpack.c.l.b16 %v67
    %v1888 = vunpack.c.h.b16 %v67
    %v1889 = vunpack.c.l.b16 %v68
    %v1890 = vunpack.c.h.b16 %v68
    %v1891 = vunpack.c.l.b16 %v69
    %v1892 = vunpack.c.h.b16 %v69
    %v1893 = vunpack.c.l.b16 %v70
    %v1894 = vunpack.c.h.b16 %v70
    %v1895 = vunpack.c.l.b16 %v71
    %v1896 = vunpack.c.h.b16 %v71
    %v1897 = vunpack.c.l.b16 %v72
    %v1898 = vunpack.c.h.b16 %v72
    %v1899 = vunpack.c.l.b16 %v73
    %v1900 = vunpack.c.h.b16 %v73
    %v1901 = vunpack.c.l.b16 %v74
    %v1902 = vunpack.c.h.b16 %v74
    %v1903 = vunpack.c.l.b16 %v75
    %v1904 = vunpack.c.h.b16 %v75
    %v1905 = vunpack.c.l.b16 %v76
    %v1906 = vunpack.c.h.b16 %v76
    %v1907 = vunpack.c.l.b16 %v77
    %v1908 = vunpack.c.h.b16 %v77
    %v1909 = vunpack.c.l.b16 %v78
    %v1910 = vunpack.c.h.b16 %v78
    %v1911 = vunpack.c.l.b16 %v79
    %v1912 = vunpack.c.h.b16 %v79
    %v1913 = vunpack.c.l.b16 %v80
    %v1914 = vunpack.c.h.b16 %v80
    %v1915 = vunpack.c.l.b16 %v81
    %v1916 = vunpack.c.h.b16 %v81
    %v1917 = vunpack.c.l.b16 %v82
    %v1918 = vunpack.c.h.b16 %v82
    %v1919 = vunpack.c.l.b16 %v83
    %v1920 = vunpack.c.h.b16 %v83
    %v1921 = vunpack.c.l.b16 %v84
    %v1922 = vunpack.c.h.b16 %v84
    %v1923 = vunpack.c.l.b16 %v85
    %v1924 = vunpack.c.h.b16 %v85
    %v1925 = vunpack.c.l.b16 %v86
    %v1926 = vunpack.c.h.b16 %v86
    %v1927 = vunpack.c.l.b16 %v87
    %v1928 = vunpack.c.h.b16 %v87
    %v1929 = vunpack.c.l.b16 %v88
    %v1930 = vunpack.c.h.b16 %v88
    %v1931 = vunpack.c.l.b16 %v89
    %v1932 = vunpack.c.h.b16 %v89
    %v1933 = vunpack.c.l.b16 %v90
    %v1934 = vunpack.c.h.b16 %v90
    %v1935 = vunpack.c.l.b16 %v91
    %v1936 = vunpack.c.h.b16 %v91
    %v1937 = vunpack.c.l.b16 %v92
    %v1938 = vunpack.c.h.b16 %v92
    %v1939 = vunpack.c.l.b16 %v93
    %v1940 = vunpack.c.h.b16 %v93
    %v1941 = vunpack.c.l.b16 %v94
    %v1942 = vunpack.c.h.b16 %v94
    %v1943 = vunpack.c.l.b16 %v95
    %v1944 = vunpack.c.h.b16 %v95
    %v1945 = vunpack.c.l.b16 %v96
    %v1946 = vunpack.c.h.b16 %v96
    %v1947 = vunpack.c.l.b16 %v97
    %v1948 = vunpack.c.h.b16 %v97
    %v1949 = vunpack.c.l.b16 %v98
    %v1950 = vunpack.c.h.b16 %v98
    %v1951 = vunpack.c.l.b16 %v99
    %v1952 = vunpack.c.h.b16 %v99
    %v1953 = vunpack.c.l.b16 %v100
    %v1954 = vunpack.c.h.b16 %v100
    %v1955 = vunpack.c.l.b16 %v101
    %v1956 = vunpack.c.h.b16 %v101
    %v1957 = vunpack.c.l.b16 %v102
    %v1958 = vunpack.c.h.b16 %v102
    %v1959 = vunpack.c.l.b16 %v103
    %v1960 = vunpack.c.h.b16 %v103
    %v1961 = vunpack.c.l.b16 %v104
    %v1962 = vunpack.c.h.b16 %v104
    %v1963 = vunpack.c.l.b16 %v105
    %v1964 = vunpack.c.h.b16 %v105
    %v1965 = vunpack.c.l.b16 %v106
    %v1966 = vunpack.c.h.b16 %v106
    %v1967 = vunpack.c.l.b16 %v107
    %v1968 = vunpack.c.h.b16 %v107
    %v1969 = vunpack.c.l.b16 %v108
    %v1970 = vunpack.c.h.b16 %v108
    %v1971 = vunpack.c.l.b16 %v109
    %v1972 = vunpack.c.h.b16 %v109
    %v1973 = vunpack.c.l.b16 %v110
    %v1974 = vunpack.c.h.b16 %v110
    %v1975 = vunpack.c.l.b16 %v111
    %v1976 = vunpack.c.h.b16 %v111
    %v1977 = vunpack.c.l.b16 %v112
    %v1978 = vunpack.c.h.b16 %v112
    %v1979 = vunpack.c.l.b16 %v113
    %v1980 = vunpack.c.h.b16 %v113
    %v1981 = vunpack.c.l.b16 %v114
    %v1982 = vunpack.c.h.b16 %v114
    %v1983 = vunpack.c.l.b16 %v115
    %v1984 = vunpack.c.h.b16 %v115
    %v1985 = vunpack.c.l.b16 %v116
    %v1986 = vunpack.c.h.b16 %v116
    %v1987 = vunpack.c.l.b16 %v117
    %v1988 = vunpack.c.h.b16 %v117
    %v1989 = vunpack.c.l.b16 %v118
    %v1990 = vunpack.c.h.b16 %v118
    %v1991 = vunpack.c.l.b16 %v119
    %v1992 = vunpack.c.h.b16 %v119
    %v1993 = vunpack.c.l.b16 %v120
    %v1994 = vunpack.c.h.b16 %v120
    %v1995 = vunpack.c.l.b16 %v121
    %v1996 = vunpack.c.h.b16 %v121
    %v1997 = vunpack.c.l.b16 %v122
    %v1998 = vunpack.c.h.b16 %v122
    %v1999 = vunpack.c.l.b16 %v123
    %v2000 = vunpack.c.h.b16 %v123
    %v2001 = vunpack.c.l.b16 %v124
    %v2002 = vunpack.c.h.b16 %v124
    %v2003 = vunpack.c.l.b16 %v125
    %v2004 = vunpack.c.h.b16 %v125
    %v2005 = vunpack.c.l.b16 %v126
    %v2006 = vunpack.c.h.b16 %v126
    %v2007 = vunpack.c.l.b16 %v127
    %v2008 = vunpack.c.h.b16 %v127
    %v2009 = vunpack.c.l.b16 %v128
    %v2010 = vunpack.c.h.b16 %v128
    %v2011 = vunpack.c.l.b16 %v129
    %v2012 = vunpack.c.h.b16 %v129
    %v2013 = vunpack.c.l.b16 %v130
    %v2014 = vunpack.c.h.b16 %v130
    %v2015 = vunpack.c.l.b16 %v131
    %v2016 = vunpack.c.h.b16 %v131
    %v2017 = vunpack.c.l.b16 %v132
    %v2018 = vunpack.c.h.b16 %v132
    %v2019 = vunpack.c.l.b16 %v133
    %v2020 = vunpack.c.h.b16 %v133
    %v2021 = vunpack.c.l.b16 %v134
    %v2022 = vunpack.c.h.b16 %v134
    %v2023 = vunpack.c.l.b16 %v135
    %v2024 = vunpack.c.h.b16 %v135
    %v2025 = vunpack.c.l.b16 %v136
    %v2026 = vunpack.c.h.b16 %v136
    %v2027 = vunpack.c.l.b16 %v137
    %v2028 = vunpack.c.h.b16 %v137
    %v2029 = vunpack.c.l.b16 %v138
    %v2030 = vunpack.c.h.b16 %v138
    %v2031 = vunpack.c.l.b16 %v139
    %v2032 = vunpack.c.h.b16 %v139
    %v2033 = vunpack.c.l.b16 %v140
    %v2034 = vunpack.c.h.b16 %v140
    %v2035 = vunpack.c.l.b16 %v141
    %v2036 = vunpack.c.h.b16 %v141
    %v2037 = vunpack.c.l.b16 %v142
    %v2038 = vunpack.c.h.b16 %v142
    %v2039 = vunpack.c.l.b16 %v143
    %v2040 = vunpack.c.h.b16 %v143
    %v2041 = vunpack.c.l.b16 %v144
    %v2042 = vunpack.c.h.b16 %v144
    %v2043 = vunpack.c.l.b16 %v145
    %v2044 = vunpack.c.h.b16 %v145
    %v2045 = vunpack.c.l.b16 %v146
    %v2046 = vunpack.c.h.b16 %v146
    %v2047 = vunpack.c.l.b16 %v147
    %v2048 = vunpack.c.h.b16 %v147
    %v2049 = vunpack.c.l.b16 %v148
    %v2050 = vunpack.c.h.b16 %v148
    %v2051 = vunpack.c.l.b16 %v149
    %v2052 = vunpack.c.h.b16 %v149
    %v2053 = vunpack.c.l.b16 %v150
    %v2054 = vunpack.c.h.b16 %v150
    %v2055 = vunpack.c.l.b16 %v151
    %v2056 = vunpack.c.h.b16 %v151
    %v2057 = vunpack.c.l.b16 %v152
    %v2058 = vunpack.c.h.b16 %v152
    %v2059 = vunpack.c.l.b16 %v153
    %v2060 = vunpack.c.h.b16 %v153
    %v2061 = vunpack.c.l.b16 %v154
    %v2062 = vunpack.c.h.b16 %v154
    %v2063 = vunpack.c.l.b16 %v155
    %v2064 = vunpack.c.h.b16 %v155
    %v2065 = vunpack.c.l.b16 %v156
    %v2066 = vunpack.c.h.b16 %v156
    %v2067 = vunpack.c.l.b16 %v157
    %v2068 = vunpack.c.h.b16 %v157
    %v2069 = vunpack.c.l.b16 %v158
    %v2070 = vunpack.c.h.b16 %v158
    %v2071 = vunpack.c.l.b16 %v159
    %v2072 = vunpack.c.h.b16 %v159
    %v2073 = vunpack.c.l.b16 %v160
    %v2074 = vunpack.c.h.b16 %v160
    %v2075 = vunpack.c.l.b16 %v161
    %v2076 = vunpack.c.h.b16 %v161
    %v2077 = vunpack.c.l.b16 %v162
    %v2078 = vunpack.c.h.b16 %v162
    %v2079 = vunpack.c.l.b16 %v163
    %v2080 = vunpack.c.h.b16 %v163
    %v2081 = vunpack.c.l.b16 %v164
    %v2082 = vunpack.c.h.b16 %v164
    %v2083 = vunpack.c.l.b16 %v165
    %v2084 = vunpack.c.h.b16 %v165
    %v2085 = vunpack.c.l.b16 %v166
    %v2086 = vunpack.c.h.b16 %v166
    %v2087 = vunpack.c.l.b16 %v167
    %v2088 = vunpack.c.h.b16 %v167
    %v2089 = vunpack.c.l.b16 %v168
    %v2090 = vunpack.c.h.b16 %v168
    %v2091 = vunpack.c.l.b16 %v169
    %v2092 = vunpack.c.h.b16 %v169
    %v2093 = vunpack.c.l.b16 %v170
    %v2094 = vunpack.c.h.b16 %v170
    %v2095 = vunpack.c.l.b16 %v171
    %v2096 = vunpack.c.h.b16 %v171
    %v2097 = vunpack.c.l.b16 %v172
    %v2098 = vunpack.c.h.b16 %v172
    %v2099 = vunpack.c.l.b16 %v173
    %v2100 = vunpack.c.h.b16 %v173
    %v2101 = vunpack.c.l.b16 %v174
    %v2102 = vunpack.c.h.b16 %v174
    %v2103 = vunpack.c.l.b16 %v175
    %v2104 = vunpack.c.h.b16 %v175
    %v2105 = vunpack.c.l.b16 %v176
    %v2106 = vunpack.c.h.b16 %v176
    %v2107 = vunpack.c.l.b16 %v177
    %v2108 = vunpack.c.h.b16 %v177
    %v2109 = vunpack.c.l.b16 %v178
    %v2110 = vunpack.c.h.b16 %v178
    %v2111 = vunpack.c.l.b16 %v179
    %v2112 = vunpack.c.h.b16 %v179
    %v2113 = vunpack.c.l.b16 %v180
    %v2114 = vunpack.c.h.b16 %v180
    %v2115 = vunpack.c.l.b16 %v181
    %v2116 = vunpack.c.h.b16 %v181
    %v2117 = vunpack.c.l.b16 %v182
    %v2118 = vunpack.c.h.b16 %v182
    %v2119 = vunpack.c.l.b16 %v183
    %v2120 = vunpack.c.h.b16 %v183
    %v2121 = vunpack.c.l.b16 %v184
    %v2122 = vunpack.c.h.b16 %v184
    %v2123 = vunpack.c.l.b16 %v185
    %v2124 = vunpack.c.h.b16 %v185
    %v2125 = vunpack.c.l.b16 %v186
    %v2126 = vunpack.c.h.b16 %v186
    %v2127 = vunpack.c.l.b16 %v187
    %v2128 = vunpack.c.h.b16 %v187
    %v2129 = vunpack.c.l.b16 %v188
    %v2130 = vunpack.c.h.b16 %v188
    %v2131 = vunpack.c.l.b16 %v189
    %v2132 = vunpack.c.h.b16 %v189
    %v2133 = vunpack.c.l.b16 %v190
    %v2134 = vunpack.c.h.b16 %v190
    %v2135 = vunpack.c.l.b16 %v191
    %v2136 = vunpack.c.h.b16 %v191
    %v2137 = vunpack.c.l.b16 %v192
    %v2138 = vunpack.c.h.b16 %v192
    %v2139 = vunpack.c.l.b16 %v193
    %v2140 = vunpack.c.h.b16 %v193
    %v2141 = vunpack.c.l.b16 %v194
    %v2142 = vunpack.c.h.b16 %v194
    %v2143 = vunpack.c.l.b16 %v195
    %v2144 = vunpack.c.h.b16 %v195
    %v2145 = vunpack.c.l.b16 %v196
    %v2146 = vunpack.c.h.b16 %v196
    %v2147 = vunpack.c.l.b16 %v197
    %v2148 = vunpack.c.h.b16 %v197
    %v2149 = vunpack.c.l.b16 %v198
    %v2150 = vunpack.c.h.b16 %v198
    %v2151 = vunpack.c.l.b16 %v199
    %v2152 = vunpack.c.h.b16 %v199
    %v2153 = vunpack.c.l.b16 %v200
    %v2154 = vunpack.c.h.b16 %v200
    %v2155 = vunpack.c.l.b16 %v201
    %v2156 = vunpack.c.h.b16 %v201
    %v2157 = vunpack.c.l.b16 %v202
    %v2158 = vunpack.c.h.b16 %v202
    %v2159 = vunpack.c.l.b16 %v203
    %v2160 = vunpack.c.h.b16 %v203
    %v2161 = vunpack.c.l.b16 %v204
    %v2162 = vunpack.c.h.b16 %v204
    %v2163 = vunpack.c.l.b16 %v205
    %v2164 = vunpack.c.h.b16 %v205
    %v2165 = vunpack.c.l.b16 %v206
    %v2166 = vunpack.c.h.b16 %v206
    %v2167 = vunpack.c.l.b16 %v207
    %v2168 = vunpack.c.h.b16 %v207
    %v2169 = vunpack.c.l.b16 %v208
    %v2170 = vunpack.c.h.b16 %v208
    %v2171 = vunpack.c.l.b16 %v209
    %v2172 = vunpack.c.h.b16 %v209
    %v2173 = vunpack.c.l.b16 %v210
    %v2174 = vunpack.c.h.b16 %v210
    %v2175 = vunpack.c.l.b16 %v211
    %v2176 = vunpack.c.h.b16 %v211
    %v2177 = vunpack.c.l.b16 %v212
    %v2178 = vunpack.c.h.b16 %v212
    %v2179 = vunpack.c.l.b16 %v213
    %v2180 = vunpack.c.h.b16 %v213
    %v2181 = vunpack.c.l.b16 %v214
    %v2182 = vunpack.c.h.b16 %v214
    %v2183 = vunpack.c.l.b16 %v215
    %v2184 = vunpack.c.h.b16 %v215
    %v2185 = vunpack.c.l.b16 %v216
    %v2186 = vunpack.c.h.b16 %v216
    %v2187 = vunpack.c.l.b16 %v217
    %v2188 = vunpack.c.h.b16 %v217
    %v2189 = vunpack.c.l.b16 %v218
    %v2190 = vunpack.c.h.b16 %v218
    %v2191 = vunpack.c.l.b16 %v219
    %v2192 = vunpack.c.h.b16 %v219
    %v2193 = vunpack.c.l.b16 %v220
    %v2194 = vunpack.c.h.b16 %v220
    %v2195 = vunpack.c.l.b16 %v221
    %v2196 = vunpack.c.h.b16 %v221
    %v2197 = vunpack.c.l.b16 %v222
    %v2198 = vunpack.c.h.b16 %v222
    %v2199 = vunpack.c.l.b16 %v223
    %v2200 = vunpack.c.h.b16 %v223
    %v2201 = vunpack.c.l.b16 %v224
    %v2202 = vunpack.c.h.b16 %v224
    %v2203 = vunpack.c.l.b16 %v225
    %v2204 = vunpack.c.h.b16 %v225
    %v2205 = vunpack.c.l.b16 %v226
    %v2206 = vunpack.c.h.b16 %v226
    %v2207 = vunpack.c.l.b16 %v227
    %v2208 = vunpack.c.h.b16 %v227
    %v2209 = vunpack.c.l.b16 %v228
    %v2210 = vunpack.c.h.b16 %v228
    %v2211 = vunpack.c.l.b16 %v229
    %v2212 = vunpack.c.h.b16 %v229
    %v2213 = vunpack.c.l.b16 %v230
    %v2214 = vunpack.c.h.b16 %v230
    %v2215 = vunpack.c.l.b16 %v231
    %v2216 = vunpack.c.h.b16 %v231
    %v2217 = vunpack.c.l.b16 %v232
    %v2218 = vunpack.c.h.b16 %v232
    %v2219 = vunpack.c.l.b16 %v233
    %v2220 = vunpack.c.h.b16 %v233
    %v2221 = vunpack.c.l.b16 %v234
    %v2222 = vunpack.c.h.b16 %v234
    %v2223 = vunpack.c.l.b16 %v235
    %v2224 = vunpack.c.h.b16 %v235
    %v2225 = vunpack.c.l.b16 %v236
    %v2226 = vunpack.c.h.b16 %v236
    %v2227 = vunpack.c.l.b16 %v237
    %v2228 = vunpack.c.h.b16 %v237
    %v2229 = vunpack.c.l.b16 %v238
    %v2230 = vunpack.c.h.b16 %v238
    %v2231 = vunpack.c.l.b16 %v239
    %v2232 = vunpack.c.h.b16 %v239
    %v2233 = vunpack.c.l.b16 %v240
    %v2234 = vunpack.c.h.b16 %v240
    %v2235 = vunpack.c.l.b16 %v241
    %v2236 = vunpack.c.h.b16 %v241
    %v2237 = vunpack.c.l.b16 %v242
    %v2238 = vunpack.c.h.b16 %v242
    %v2239 = vunpack.c.l.b16 %v243
    %v2240 = vunpack.c.h.b16 %v243
    %v2241 = vunpack.c.l.b16 %v244
    %v2242 = vunpack.c.h.b16 %v244
    %v2243 = vunpack.c.l.b16 %v245
    %v2244 = vunpack.c.h.b16 %v245
    %v2245 = vunpack.c.l.b16 %v246
    %v2246 = vunpack.c.h.b16 %v246
    %v2247 = vunpack.c.l.b16 %v247
    %v2248 = vunpack.c.h.b16 %v247
    %v2249 = vunpack.c.l.b16 %v248
    %v2250 = vunpack.c.h.b16 %v248
    %v2251 = vunpack.c.l.b16 %v249
    %v2252 = vunpack.c.h.b16 %v249
    %v2253 = vunpack.c.l.b16 %v250
    %v2254 = vunpack.c.h.b16 %v250
    %v2255 = vunpack.c.l.b16 %v251
    %v2256 = vunpack.c.h.b16 %v251
    %v2257 = vunpack.c.l.b16 %v252
    %v2258 = vunpack.c.h.b16 %v252
    %v2259 = vunpack.c.l.b16 %v253
    %v2260 = vunpack.c.h.b16 %v253
    %v2261 = vunpack.c.l.b16 %v254
    %v2262 = vunpack.c.h.b16 %v254
    %v2263 = vunpack.c.l.b16 %v255
    %v2264 = vunpack.c.h.b16 %v255
    %v2265 = vunpack.c.l.b16 %v256
    %v2266 = vunpack.c.h.b16 %v256
    %v2267 = vunpack.c.l.b16 %v257
    %v2268 = vunpack.c.h.b16 %v257
    %v2269 = vunpack.c.l.b16 %v258
    %v2270 = vunpack.c.h.b16 %v258
    %v2271 = vunpack.c.l.b16 %v259
    %v2272 = vunpack.c.h.b16 %v259
    %v2273 = vunpack.c.l.b16 %v260
    %v2274 = vunpack.c.h.b16 %v260
    %v2275 = vunpack.c.l.b16 %v261
    %v2276 = vunpack.c.h.b16 %v261
    %v2277 = vunpack.c.l.b16 %v262
    %v2278 = vunpack.c.h.b16 %v262
    %v2279 = vunpack.c.l.b16 %v263
    %v2280 = vunpack.c.h.b16 %v263
    %v2281 = vunpack.c.l.b16 %v264
    %v2282 = vunpack.c.h.b16 %v264
    %v2283 = vunpack.c.l.b16 %v265
    %v2284 = vunpack.c.h.b16 %v265
    %v2285 = vunpack.c.l.b16 %v266
    %v2286 = vunpack.c.h.b16 %v266
    %v2287 = vunpack.c.l.b16 %v267
    %v2288 = vunpack.c.h.b16 %v267
    %v2289 = vunpack.c.l.b16 %v268
    %v2290 = vunpack.c.h.b16 %v268
    %v2291 = vunpack.c.l.b16 %v269
    %v2292 = vunpack.c.h.b16 %v269
    %v2293 = vunpack.c.l.b16 %v270
    %v2294 = vunpack.c.h.b16 %v270
    %v2295 = vunpack.c.l.b16 %v271
    %v2296 = vunpack.c.h.b16 %v271
    %v2297 = vunpack.c.l.b16 %v272
    %v2298 = vunpack.c.h.b16 %v272
    %v2299 = vunpack.c.l.b16 %v273
    %v2300 = vunpack.c.h.b16 %v273
    %v2301 = vunpack.c.l.b16 %v274
    %v2302 = vunpack.c.h.b16 %v274
    %v2303 = vunpack.c.l.b16 %v275
    %v2304 = vunpack.c.h.b16 %v275
    %v2305 = vunpack.c.l.b16 %v276
    %v2306 = vunpack.c.h.b16 %v276
    %v2307 = vunpack.c.l.b16 %v277
    %v2308 = vunpack.c.h.b16 %v277
    %v2309 = vunpack.c.l.b16 %v278
    %v2310 = vunpack.c.h.b16 %v278
    %v2311 = vunpack.c.l.b16 %v279
    %v2312 = vunpack.c.h.b16 %v279
    %v2313 = vunpack.c.l.b16 %v280
    %v2314 = vunpack.c.h.b16 %v280
    %v2315 = vunpack.c.l.b16 %v281
    %v2316 = vunpack.c.h.b16 %v281
    %v2317 = vunpack.c.l.b16 %v282
    %v2318 = vunpack.c.h.b16 %v282
    %v2319 = vunpack.c.l.b16 %v283
    %v2320 = vunpack.c.h.b16 %v283
    %v2321 = vunpack.c.l.b16 %v284
    %v2322 = vunpack.c.h.b16 %v284
    %v2323 = vunpack.c.l.b16 %v285
    %v2324 = vunpack.c.h.b16 %v285
    %v2325 = vunpack.c.l.b16 %v286
    %v2326 = vunpack.c.h.b16 %v286
    %v2327 = vunpack.c.l.b16 %v287
    %v2328 = vunpack.c.h.b16 %v287
    %v2329 = vunpack.c.l.b16 %v288
    %v2330 = vunpack.c.h.b16 %v288
    %v2331 = vunpack.c.l.b16 %v289
    %v2332 = vunpack.c.h.b16 %v289
    %v2333 = vunpack.c.l.b16 %v290
    %v2334 = vunpack.c.h.b16 %v290
    %v2335 = vunpack.c.l.b16 %v291
    %v2336 = vunpack.c.h.b16 %v291
    %v2337 = vunpack.c.l.b16 %v292
    %v2338 = vunpack.c.h.b16 %v292
    %v2339 = vunpack.c.l.b16 %v293
    %v2340 = vunpack.c.h.b16 %v293
    %v2341 = vunpack.c.l.b16 %v294
    %v2342 = vunpack.c.h.b16 %v294
    %v2343 = vunpack.c.l.b16 %v295
    %v2344 = vunpack.c.h.b16 %v295
    %v2345 = vunpack.c.l.b16 %v296
    %v2346 = vunpack.c.h.b16 %v296
    %v2347 = vunpack.c.l.b16 %v297
    %v2348 = vunpack.c.h.b16 %v297
    %v2349 = vunpack.c.l.b16 %v298
    %v2350 = vunpack.c.h.b16 %v298
    %v2351 = vunpack.c.l.b16 %v299
    %v2352 = vunpack.c.h.b16 %v299
    %v2353 = vunpack.c.l.b16 %v300
    %v2354 = vunpack.c.h.b16 %v300
    %v2355 = vunpack.c.l.b16 %v301
    %v2356 = vunpack.c.h.b16 %v301
    %v2357 = vunpack.c.l.b16 %v302
    %v2358 = vunpack.c.h.b16 %v302
    %v2359 = vunpack.c.l.b16 %v303
    %v2360 = vunpack.c.h.b16 %v303
    %v2361 = vunpack.c.l.b16 %v304
    %v2362 = vunpack.c.h.b16 %v304
    %v2363 = vunpack.c.l.b16 %v305
    %v2364 = vunpack.c.h.b16 %v305
    %v2365 = vunpack.c.l.b16 %v306
    %v2366 = vunpack.c.h.b16 %v306
    %v2367 = vunpack.c.l.b16 %v307
    %v2368 = vunpack.c.h.b16 %v307
    %v2369 = vunpack.c.l.b16 %v308
    %v2370 = vunpack.c.h.b16 %v308
    %v2371 = vunpack.c.l.b16 %v309
    %v2372 = vunpack.c.h.b16 %v309
    %v2373 = vunpack.c.l.b16 %v310
    %v2374 = vunpack.c.h.b16 %v310
    %v2375 = vunpack.c.l.b16 %v311
    %v2376 = vunpack.c.h.b16 %v311
    %v2377 = vunpack.c.l.b16 %v312
    %v2378 = vunpack.c.h.b16 %v312
    %v2379 = vunpack.c.l.b16 %v313
    %v2380 = vunpack.c.h.b16 %v313
    %v2381 = vunpack.c.l.b16 %v314
    %v2382 = vunpack.c.h.b16 %v314
    %v2383 = vunpack.c.l.b16 %v315
    %v2384 = vunpack.c.h.b16 %v315
    %v2385 = vunpack.c.l.b16 %v316
    %v2386 = vunpack.c.h.b16 %v316
    %v2387 = vunpack.c.l.b16 %v317
    %v2388 = vunpack.c.h.b16 %v317
    %v2389 = vunpack.c.l.b16 %v318
    %v2390 = vunpack.c.h.b16 %v318
    %v2391 = vunpack.c.l.b16 %v319
    %v2392 = vunpack.c.h.b16 %v319
    %v2393 = vunpack.c.l.b16 %v320
    %v2394 = vunpack.c.h.b16 %v320
    %v2395 = vunpack.c.l.b16 %v321
    %v2396 = vunpack.c.h.b16 %v321
    %v2397 = vunpack.c.l.b16 %v322
    %v2398 = vunpack.c.h.b16 %v322
    %v2399 = vunpack.c.l.b16 %v323
    %v2400 = vunpack.c.h.b16 %v323
    %v2401 = vunpack.c.l.b16 %v324
    %v2402 = vunpack.c.h.b16 %v324
    %v2403 = vunpack.c.l.b16 %v325
    %v2404 = vunpack.c.h.b16 %v325
    %v2405 = vunpack.c.l.b16 %v326
    %v2406 = vunpack.c.h.b16 %v326
    %v2407 = vunpack.c.l.b16 %v327
    %v2408 = vunpack.c.h.b16 %v327
    %v2409 = vunpack.c.l.b16 %v328
    %v2410 = vunpack.c.h.b16 %v328
    %v2411 = vunpack.c.l.b16 %v329
    %v2412 = vunpack.c.h.b16 %v329
    %v2413 = vunpack.c.l.b16 %v330
    %v2414 = vunpack.c.h.b16 %v330
    %v2415 = vunpack.c.l.b16 %v331
    %v2416 = vunpack.c.h.b16 %v331
    %v2417 = vunpack.c.l.b16 %v332
    %v2418 = vunpack.c.h.b16 %v332
    %v2419 = vunpack.c.l.b16 %v333
    %v2420 = vunpack.c.h.b16 %v333
    %v2421 = vunpack.c.l.b16 %v334
    %v2422 = vunpack.c.h.b16 %v334
    %v2423 = vunpack.c.l.b16 %v335
    %v2424 = vunpack.c.h.b16 %v335
    %v2425 = vunpack.c.l.b16 %v336
    %v2426 = vunpack.c.h.b16 %v336
    %v2427 = vunpack.c.l.b16 %v337
    %v2428 = vunpack.c.h.b16 %v337
    %v2429 = vunpack.c.l.b16 %v338
    %v2430 = vunpack.c.h.b16 %v338
    %v2431 = vunpack.c.l.b16 %v339
    %v2432 = vunpack.c.h.b16 %v339
    %v2433 = vunpack.c.l.b16 %v340
    %v2434 = vunpack.c.h.b16 %v340
    %v2435 = vunpack.c.l.b16 %v341
    %v2436 = vunpack.c.h.b16 %v341
    %v2437 = vunpack.c.l.b16 %v342
    %v2438 = vunpack.c.h.b16 %v342
    %v2439 = vunpack.c.l.b16 %v343
    %v2440 = vunpack.c.h.b16 %v343
    %v2441 = vunpack.c.l.b16 %v344
    %v2442 = vunpack.c.h.b16 %v344
    %v2443 = vunpack.c.l.b16 %v345
    %v2444 = vunpack.c.h.b16 %v345
    %v2445 = vunpack.c.l.b16 %v346
    %v2446 = vunpack.c.h.b16 %v346
    %v2447 = vunpack.c.l.b16 %v347
    %v2448 = vunpack.c.h.b16 %v347
    %v2449 = vunpack.c.l.b16 %v348
    %v2450 = vunpack.c.h.b16 %v348
    %v2451 = vunpack.c.l.b16 %v349
    %v2452 = vunpack.c.h.b16 %v349
    %v2453 = vunpack.c.l.b16 %v350
    %v2454 = vunpack.c.h.b16 %v350
    %v2455 = vunpack.c.l.b16 %v351
    %v2456 = vunpack.c.h.b16 %v351
    %v2457 = vunpack.c.l.b16 %v352
    %v2458 = vunpack.c.h.b16 %v352
    %v2459 = vunpack.c.l.b16 %v353
    %v2460 = vunpack.c.h.b16 %v353
    %v2461 = vunpack.c.l.b16 %v354
    %v2462 = vunpack.c.h.b16 %v354
    %v2463 = vunpack.c.l.b16 %v355
    %v2464 = vunpack.c.h.b16 %v355
    %v2465 = vunpack.c.l.b16 %v356
    %v2466 = vunpack.c.h.b16 %v356
    %v2467 = vunpack.c.l.b16 %v357
    %v2468 = vunpack.c.h.b16 %v357
    %v2469 = vunpack.c.l.b16 %v358
    %v2470 = vunpack.c.h.b16 %v358
    %v2471 = vunpack.c.l.b16 %v359
    %v2472 = vunpack.c.h.b16 %v359
    %v2473 = vunpack.c.l.b16 %v360
    %v2474 = vunpack.c.h.b16 %v360
    %v2475 = vunpack.c.l.b16 %v361
    %v2476 = vunpack.c.h.b16 %v361
    %v2477 = vunpack.c.l.b16 %v362
    %v2478 = vunpack.c.h.b16 %v362
    %v2479 = vunpack.c.l.b16 %v363
    %v2480 = vunpack.c.h.b16 %v363
    %v2481 = vunpack.c.l.b16 %v364
    %v2482 = vunpack.c.h.b16 %v364
    %v2483 = vunpack.c.l.b16 %v365
    %v2484 = vunpack.c.h.b16 %v365
    %v2485 = vunpack.c.l.b16 %v366
    %v2486 = vunpack.c.h.b16 %v366
    %v2487 = vunpack.c.l.b16 %v367
    %v2488 = vunpack.c.h.b16 %v367
    %v2489 = vunpack.c.l.b16 %v368
    %v2490 = vunpack.c.h.b16 %v368
    %v2491 = vunpack.c.l.b16 %v369
    %v2492 = vunpack.c.h.b16 %v369
    %v2493 = vunpack.c.l.b16 %v370
    %v2494 = vunpack.c.h.b16 %v370
    %v2495 = vunpack.c.l.b16 %v371
    %v2496 = vunpack.c.h.b16 %v371
    %v2497 = vunpack.c.l.b16 %v372
    %v2498 = vunpack.c.h.b16 %v372
    %v2499 = vunpack.c.l.b16 %v373
    %v2500 = vunpack.c.h.b16 %v373
    %v2501 = vunpack.c.l.b16 %v374
    %v2502 = vunpack.c.h.b16 %v374
    %v2503 = vunpack.c.l.b16 %v375
    %v2504 = vunpack.c.h.b16 %v375
    %v2505 = vunpack.c.l.b16 %v376
    %v2506 = vunpack.c.h.b16 %v376
    %v2507 = vunpack.c.l.b16 %v377
    %v2508 = vunpack.c.h.b16 %v377
    %v2509 = vunpack.c.l.b16 %v378
    %v2510 = vunpack.c.h.b16 %v378
    %v2511 = vunpack.c.l.b16 %v379
    %v2512 = vunpack.c.h.b16 %v379
    %v2513 = vunpack.c.l.b16 %v380
    %v2514 = vunpack.c.h.b16 %v380
    %v2515 = vunpack.c.l.b16 %v381
    %v2516 = vunpack.c.h.b16 %v381
    %v2517 = vunpack.c.l.b16 %v382
    %v2518 = vunpack.c.h.b16 %v382
    %v2519 = vunpack.c.l.b16 %v383
    %v2520 = vunpack.c.h.b16 %v383
    %v2521 = vunpack.c.l.b16 %v384
    %v2522 = vunpack.c.h.b16 %v384
    %v2523 = vunpack.c.l.b16 %v385
    %v2524 = vunpack.c.h.b16 %v385
    %v2525 = vunpack.c.l.b16 %v386
    %v2526 = vunpack.c.h.b16 %v386
    %v2527 = vunpack.c.l.b16 %v387
    %v2528 = vunpack.c.h.b16 %v387
    %v2529 = vunpack.c.l.b16 %v388
    %v2530 = vunpack.c.h.b16 %v388
    %v2531 = vunpack.c.l.b16 %v389
    %v2532 = vunpack.c.h.b16 %v389
    %v2533 = vunpack.c.l.b16 %v390
    %v2534 = vunpack.c.h.b16 %v390
    %v2535 = vunpack.c.l.b16 %v391
    %v2536 = vunpack.c.h.b16 %v391
    %v2537 = vunpack.c.l.b16 %v392
    %v2538 = vunpack.c.h.b16 %v392
    %v2539 = vunpack.c.l.b16 %v393
    %v2540 = vunpack.c.h.b16 %v393
    %v2541 = vunpack.c.l.b16 %v394
    %v2542 = vunpack.c.h.b16 %v394
    %v2543 = vunpack.c.l.b16 %v395
    %v2544 = vunpack.c.h.b16 %v395
    %v2545 = vunpack.c.l.b16 %v396
    %v2546 = vunpack.c.h.b16 %v396
    %v2547 = vunpack.c.l.b16 %v397
    %v2548 = vunpack.c.h.b16 %v397
    %v2549 = vunpack.c.l.b16 %v398
    %v2550 = vunpack.c.h.b16 %v398
    %v2551 = vunpack.c.l.b16 %v399
    %v2552 = vunpack.c.h.b16 %v399
    %v2553 = vunpack.c.l.b16 %v400
    %v2554 = vunpack.c.h.b16 %v400
    %v2555 = vunpack.c.l.b16 %v401
    %v2556 = vunpack.c.h.b16 %v401
    %v2557 = vunpack.c.l.b16 %v402
    %v2558 = vunpack.c.h.b16 %v402
    %v2559 = vunpack.c.l.b16 %v403
    %v2560 = vunpack.c.h.b16 %v403
    %v2561 = vunpack.c.l.b16 %v404
    %v2562 = vunpack.c.h.b16 %v404
    %v2563 = vunpack.c.l.b16 %v405
    %v2564 = vunpack.c.h.b16 %v405
    %v2565 = vunpack.c.l.b16 %v406
    %v2566 = vunpack.c.h.b16 %v406
    %v2567 = vunpack.c.l.b16 %v407
    %v2568 = vunpack.c.h.b16 %v407
    %v2569 = vunpack.c.l.b16 %v408
    %v2570 = vunpack.c.h.b16 %v408
    %v2571 = vunpack.c.l.b16 %v409
    %v2572 = vunpack.c.h.b16 %v409
    %v2573 = vunpack.c.l.b16 %v410
    %v2574 = vunpack.c.h.b16 %v410
    %v2575 = vunpack.c.l.b16 %v411
    %v2576 = vunpack.c.h.b16 %v411
    %v2577 = vunpack.c.l.b16 %v412
    %v2578 = vunpack.c.h.b16 %v412
    %v2579 = vunpack.c.l.b16 %v413
    %v2580 = vunpack.c.h.b16 %v413
    %v2581 = vunpack.c.l.b16 %v414
    %v2582 = vunpack.c.h.b16 %v414
    %v2583 = vunpack.c.l.b16 %v415
    %v2584 = vunpack.c.h.b16 %v415
    %v2585 = vunpack.c.l.b16 %v416
    %v2586 = vunpack.c.h.b16 %v416
    %v2587 = vunpack.c.l.b16 %v417
    %v2588 = vunpack.c.h.b16 %v417
    %v2589 = vunpack.c.l.b16 %v418
    %v2590 = vunpack.c.h.b16 %v418
    %v2591 = vunpack.c.l.b16 %v419
    %v2592 = vunpack.c.h.b16 %v419
    %v2593 = vunpack.c.l.b16 %v420
    %v2594 = vunpack.c.h.b16 %v420
    %v2595 = vunpack.c.l.b16 %v421
    %v2596 = vunpack.c.h.b16 %v421
    %v2597 = vunpack.c.l.b16 %v422
    %v2598 = vunpack.c.h.b16 %v422
    %v2599 = vunpack.c.l.b16 %v423
    %v2600 = vunpack.c.h.b16 %v423
    %v2601 = vunpack.c.l.b16 %v424
    %v2602 = vunpack.c.h.b16 %v424
    %v2603 = vunpack.c.l.b16 %v425
    %v2604 = vunpack.c.h.b16 %v425
    %v2605 = vunpack.c.l.b16 %v426
    %v2606 = vunpack.c.h.b16 %v426
    %v2607 = vunpack.c.l.b16 %v427
    %v2608 = vunpack.c.h.b16 %v427
    %v2609 = vunpack.c.l.b16 %v428
    %v2610 = vunpack.c.h.b16 %v428
    %v2611 = vunpack.c.l.b16 %v429
    %v2612 = vunpack.c.h.b16 %v429
    %v2613 = vunpack.c.l.b16 %v430
    %v2614 = vunpack.c.h.b16 %v430
    %v2615 = vunpack.c.l.b16 %v431
    %v2616 = vunpack.c.h.b16 %v431
    %v2617 = vunpack.c.l.b16 %v432
    %v2618 = vunpack.c.h.b16 %v432
    %v2619 = vunpack.c.l.b16 %v433
    %v2620 = vunpack.c.h.b16 %v433
    %v2621 = vunpack.c.l.b16 %v434
    %v2622 = vunpack.c.h.b16 %v434
    %v2623 = vunpack.c.l.b16 %v435
    %v2624 = vunpack.c.h.b16 %v435
    %v2625 = vunpack.c.l.b16 %v436
    %v2626 = vunpack.c.h.b16 %v436
    %v2627 = vunpack.c.l.b16 %v437
    %v2628 = vunpack.c.h.b16 %v437
    %v2629 = vunpack.c.l.b16 %v438
    %v2630 = vunpack.c.h.b16 %v438
    %v2631 = vunpack.c.l.b16 %v439
    %v2632 = vunpack.c.h.b16 %v439
    %v2633 = vunpack.c.l.b16 %v440
    %v2634 = vunpack.c.h.b16 %v440
    %v2635 = vunpack.c.l.b16 %v441
    %v2636 = vunpack.c.h.b16 %v441
    %v2637 = vunpack.c.l.b16 %v442
    %v2638 = vunpack.c.h.b16 %v442
    %v2639 = vunpack.c.l.b16 %v443
    %v2640 = vunpack.c.h.b16 %v443
    %v2641 = vunpack.c.l.b16 %v444
    %v2642 = vunpack.c.h.b16 %v444
    %v2643 = vunpack.c.l.b16 %v445
    %v2644 = vunpack.c.h.b16 %v445
    %v2645 = vunpack.c.l.b16 %v446
    %v2646 = vunpack.c.h.b16 %v446
    %v2647 = vunpack.c.l.b16 %v447
    %v2648 = vunpack.c.h.b16 %v447
    %v2649 = vunpack.c.l.b16 %v448
    %v2650 = vunpack.c.h.b16 %v448
    %v2651 = vunpack.c.l.b16 %v449
    %v2652 = vunpack.c.h.b16 %v449
    %v2653 = vunpack.c.l.b16 %v450
    %v2654 = vunpack.c.h.b16 %v450
    %v2655 = vunpack.c.l.b16 %v451
    %v2656 = vunpack.c.h.b16 %v451
    %v2657 = vunpack.c.l.b16 %v452
    %v2658 = vunpack.c.h.b16 %v452
    %v2659 = vunpack.c.l.b16 %v453
    %v2660 = vunpack.c.h.b16 %v453
    %v2661 = vunpack.c.l.b16 %v454
    %v2662 = vunpack.c.h.b16 %v454
    %v2663 = vunpack.c.l.b16 %v455
    %v2664 = vunpack.c.h.b16 %v455
    %v2665 = vunpack.c.l.b16 %v456
    %v2666 = vunpack.c.h.b16 %v456
    %v2667 = vunpack.c.l.b16 %v457
    %v2668 = vunpack.c.h.b16 %v457
    %v2669 = vunpack.c.l.b16 %v458
    %v2670 = vunpack.c.h.b16 %v458
    %v2671 = vunpack.c.l.b16 %v459
    %v2672 = vunpack.c.h.b16 %v459
    %v2673 = vunpack.c.l.b16 %v460
    %v2674 = vunpack.c.h.b16 %v460
    %v2675 = vunpack.c.l.b16 %v461
    %v2676 = vunpack.c.h.b16 %v461
    %v2677 = vunpack.c.l.b16 %v462
    %v2678 = vunpack.c.h.b16 %v462
    %v2679 = vunpack.c.l.b16 %v463
    %v2680 = vunpack.c.h.b16 %v463
    %v2681 = vunpack.c.l.b16 %v464
    %v2682 = vunpack.c.h.b16 %v464
    %v2683 = vunpack.c.l.b16 %v465
    %v2684 = vunpack.c.h.b16 %v465
    %v2685 = vunpack.c.l.b16 %v466
    %v2686 = vunpack.c.h.b16 %v466
    %v2687 = vunpack.c.l.b16 %v467
    %v2688 = vunpack.c.h.b16 %v467
    %v2689 = vunpack.c.l.b16 %v468
    %v2690 = vunpack.c.h.b16 %v468
    %v2691 = vunpack.c.l.b16 %v469
    %v2692 = vunpack.c.h.b16 %v469
    %v2693 = vunpack.c.l.b16 %v470
    %v2694 = vunpack.c.h.b16 %v470
    %v2695 = vunpack.c.l.b16 %v471
    %v2696 = vunpack.c.h.b16 %v471
    %v2697 = vunpack.c.l.b16 %v472
    %v2698 = vunpack.c.h.b16 %v472
    %v2699 = vunpack.c.l.b16 %v473
    %v2700 = vunpack.c.h.b16 %v473
    %v2701 = vunpack.c.l.b16 %v474
    %v2702 = vunpack.c.h.b16 %v474
    %v2703 = vunpack.c.l.b16 %v475
    %v2704 = vunpack.c.h.b16 %v475
    %v2705 = vunpack.c.l.b16 %v476
    %v2706 = vunpack.c.h.b16 %v476
    %v2707 = vunpack.c.l.b16 %v477
    %v2708 = vunpack.c.h.b16 %v477
    %v2709 = vunpack.c.l.b16 %v478
    %v2710 = vunpack.c.h.b16 %v478
    %v2711 = vunpack.c.l.b16 %v479
    %v2712 = vunpack.c.h.b16 %v479
    %v2713 = vunpack.c.l.b16 %v480
    %v2714 = vunpack.c.h.b16 %v480
    %v2715 = vunpack.c.l.b16 %v481
    %v2716 = vunpack.c.h.b16 %v481
    %v2717 = vunpack.c.l.b16 %v482
    %v2718 = vunpack.c.h.b16 %v482
    %v2719 = vunpack.c.l.b16 %v483
    %v2720 = vunpack.c.h.b16 %v483
    %v2721 = vunpack.c.l.b16 %v484
    %v2722 = vunpack.c.h.b16 %v484
    %v2723 = vunpack.c.l.b16 %v485
    %v2724 = vunpack.c.h.b16 %v485
    %v2725 = vunpack.c.l.b16 %v486
    %v2726 = vunpack.c.h.b16 %v486
    %v2727 = vunpack.c.l.b16 %v487
    %v2728 = vunpack.c.h.b16 %v487
    %v2729 = vunpack.c.l.b16 %v488
    %v2730 = vunpack.c.h.b16 %v488
    %v2731 = vunpack.c.l.b16 %v489
    %v2732 = vunpack.c.h.b16 %v489
    %v2733 = vunpack.c.l.b16 %v490
    %v2734 = vunpack.c.h.b16 %v490
    %v2735 = vunpack.c.l.b16 %v491
    %v2736 = vunpack.c.h.b16 %v491
    %v2737 = vunpack.c.l.b16 %v492
    %v2738 = vunpack.c.h.b16 %v492
    %v2739 = vunpack.c.l.b16 %v493
    %v2740 = vunpack.c.h.b16 %v493
    %v2741 = vunpack.c.l.b16 %v494
    %v2742 = vunpack.c.h.b16 %v494
    %v2743 = vunpack.c.l.b16 %v495
    %v2744 = vunpack.c.h.b16 %v495
    %v2745 = vunpack.c.l.b16 %v496
    %v2746 = vunpack.c.h.b16 %v496
    %v2747 = vunpack.c.l.b16 %v497
    %v2748 = vunpack.c.h.b16 %v497
    %v2749 = vunpack.c.l.b16 %v498
    %v2750 = vunpack.c.h.b16 %v498
    %v2751 = vunpack.c.l.b16 %v499
    %v2752 = vunpack.c.h.b16 %v499
    %v2753 = vunpack.c.l.b16 %v500
    %v2754 = vunpack.c.h.b16 %v500
    %v2755 = vunpack.c.l.b16 %v501
    %v2756 = vunpack.c.h.b16 %v501
    %v2757 = vunpack.c.l.b16 %v502
    %v2758 = vunpack.c.h.b16 %v502
    %v2759 = vunpack.c.l.b16 %v503
    %v2760 = vunpack.c.h.b16 %v503
    %v2761 = vunpack.c.l.b16 %v504
    %v2762 = vunpack.c.h.b16 %v504
    %v2763 = vunpack.c.l.b16 %v505
    %v2764 = vunpack.c.h.b16 %v505
    %v2765 = vunpack.c.l.b16 %v506
    %v2766 = vunpack.c.h.b16 %v506
    %v2767 = vunpack.c.l.b16 %v507
    %v2768 = vunpack.c.h.b16 %v507
    %v2769 = vunpack.c.l.b16 %v508
    %v2770 = vunpack.c.h.b16 %v508
    %v2771 = vunpack.c.l.b16 %v509
    %v2772 = vunpack.c.h.b16 %v509
    %v2773 = vunpack.c.l.b16 %v510
    %v2774 = vunpack.c.h.b16 %v510
    %v2775 = vunpack.c.l.b16 %v511
    %v2776 = vunpack.c.h.b16 %v511
    %v2777 = vunpack.c.l.b16 %v512
    %v2778 = vunpack.c.h.b16 %v512
    %v2779 = vunpack.c.l.b16 %v513
    %v2780 = vunpack.c.h.b16 %v513
    %v2781 = vunpack.c.l.b16 %v514
    %v2782 = vunpack.c.h.b16 %v514
    %v2783 = vunpack.c.l.b16 %v515
    %v2784 = vunpack.c.h.b16 %v515
    %v2785 = vunpack.c.l.b16 %v516
    %v2786 = vunpack.c.h.b16 %v516
    %v2787 = vunpack.c.l.b16 %v517
    %v2788 = vunpack.c.h.b16 %v517
    %v2789 = vunpack.c.l.b16 %v518
    %v2790 = vunpack.c.h.b16 %v518
    %v2791 = vunpack.c.l.b16 %v519
    %v2792 = vunpack.c.h.b16 %v519
    %v2793 = vunpack.c.l.b16 %v520
    %v2794 = vunpack.c.h.b16 %v520
    %v2795 = vunpack.c.l.b16 %v521
    %v2796 = vunpack.c.h.b16 %v521
    %v2797 = vunpack.c.l.b16 %v522
    %v2798 = vunpack.c.h.b16 %v522
    %v2799 = vunpack.c.l.b16 %v523
    %v2800 = vunpack.c.h.b16 %v523
    %v2801 = vunpack.c.l.b16 %v524
    %v2802 = vunpack.c.h.b16 %v524
    %v2803 = vunpack.c.l.b16 %v525
    %v2804 = vunpack.c.h.b16 %v525
    %v2805 = vunpack.c.l.b16 %v526
    %v2806 = vunpack.c.h.b16 %v526
    %v2807 = vunpack.c.l.b16 %v527
    %v2808 = vunpack.c.h.b16 %v527
    %v2809 = vunpack.c.l.b16 %v528
    %v2810 = vunpack.c.h.b16 %v528
    %v2811 = vunpack.c.l.b16 %v529
    %v2812 = vunpack.c.h.b16 %v529
    %v2813 = vunpack.c.l.b16 %v530
    %v2814 = vunpack.c.h.b16 %v530
    %v2815 = vunpack.c.l.b16 %v531
    %v2816 = vunpack.c.h.b16 %v531
    %v2817 = vunpack.c.l.b16 %v532
    %v2818 = vunpack.c.h.b16 %v532
    %v2819 = vunpack.c.l.b16 %v533
    %v2820 = vunpack.c.h.b16 %v533
    %v2821 = vunpack.c.l.b16 %v534
    %v2822 = vunpack.c.h.b16 %v534
    %v2823 = vunpack.c.l.b16 %v535
    %v2824 = vunpack.c.h.b16 %v535
    %v2825 = vunpack.c.l.b16 %v536
    %v2826 = vunpack.c.h.b16 %v536
    %v2827 = vunpack.c.l.b16 %v537
    %v2828 = vunpack.c.h.b16 %v537
    %v2829 = vunpack.c.l.b16 %v538
    %v2830 = vunpack.c.h.b16 %v538
    %v2831 = vunpack.c.l.b16 %v539
    %v2832 = vunpack.c.h.b16 %v539
    %v2833 = vunpack.c.l.b16 %v540
    %v2834 = vunpack.c.h.b16 %v540
    %v2835 = vunpack.c.l.b16 %v541
    %v2836 = vunpack.c.h.b16 %v541
    %v2837 = vunpack.c.l.b16 %v542
    %v2838 = vunpack.c.h.b16 %v542
    %v2839 = vunpack.c.l.b16 %v543
    %v2840 = vunpack.c.h.b16 %v543
    %v2841 = vunpack.c.l.b16 %v544
    %v2842 = vunpack.c.h.b16 %v544
    %v2843 = vunpack.c.l.b16 %v545
    %v2844 = vunpack.c.h.b16 %v545
    %v2845 = vunpack.c.l.b16 %v546
    %v2846 = vunpack.c.h.b16 %v546
    %v2847 = vunpack.c.l.b16 %v547
    %v2848 = vunpack.c.h.b16 %v547
    %v2849 = vunpack.c.l.b16 %v548
    %v2850 = vunpack.c.h.b16 %v548
    %v2851 = vunpack.c.l.b16 %v549
    %v2852 = vunpack.c.h.b16 %v549
    %v2853 = vunpack.c.l.b16 %v550
    %v2854 = vunpack.c.h.b16 %v550
    %v2855 = vunpack.c.l.b16 %v551
    %v2856 = vunpack.c.h.b16 %v551
    %v2857 = vunpack.c.l.b16 %v552
    %v2858 = vunpack.c.h.b16 %v552
    %v2859 = vunpack.c.l.b16 %v553
    %v2860 = vunpack.c.h.b16 %v553
    %v2861 = vunpack.c.l.b16 %v554
    %v2862 = vunpack.c.h.b16 %v554
    %v2863 = vunpack.c.l.b16 %v555
    %v2864 = vunpack.c.h.b16 %v555
    %v2865 = vunpack.c.l.b16 %v556
    %v2866 = vunpack.c.h.b16 %v556
    %v2867 = vunpack.c.l.b16 %v557
    %v2868 = vunpack.c.h.b16 %v557
    %v2869 = vunpack.c.l.b16 %v558
    %v2870 = vunpack.c.h.b16 %v558
    %v2871 = vunpack.c.l.b16 %v559
    %v2872 = vunpack.c.h.b16 %v559
    %v2873 = vunpack.c.l.b16 %v560
    %v2874 = vunpack.c.h.b16 %v560
    %v2875 = vunpack.c.l.b16 %v561
    %v2876 = vunpack.c.h.b16 %v561
    %v2877 = vunpack.c.l.b16 %v562
    %v2878 = vunpack.c.h.b16 %v562
    %v2879 = vunpack.c.l.b16 %v563
    %v2880 = vunpack.c.h.b16 %v563
    %v2881 = vunpack.c.l.b16 %v564
    %v2882 = vunpack.c.h.b16 %v564
    %v2883 = vunpack.c.l.b16 %v565
    %v2884 = vunpack.c.h.b16 %v565
    %v2885 = vunpack.c.l.b16 %v566
    %v2886 = vunpack.c.h.b16 %v566
    %v2887 = vunpack.c.l.b16 %v567
    %v2888 = vunpack.c.h.b16 %v567
    %v2889 = vunpack.c.l.b16 %v568
    %v2890 = vunpack.c.h.b16 %v568
    %v2891 = vunpack.c.l.b16 %v569
    %v2892 = vunpack.c.h.b16 %v569
    %v2893 = vunpack.c.l.b16 %v570
    %v2894 = vunpack.c.h.b16 %v570
    %v2895 = vunpack.c.l.b16 %v571
    %v2896 = vunpack.c.h.b16 %v571
    %v2897 = vunpack.c.l.b16 %v572
    %v2898 = vunpack.c.h.b16 %v572
    %v2899 = vunpack.c.l.b16 %v573
    %v2900 = vunpack.c.h.b16 %v573
    %v2901 = vunpack.c.l.b16 %v574
    %v2902 = vunpack.c.h.b16 %v574
    %v2903 = vunpack.c.l.b16 %v575
    %v2904 = vunpack.c.h.b16 %v575
    %v2905 = vunpack.c.l.b16 %v576
    %v2906 = vunpack.c.h.b16 %v576
    %v2907 = vunpack.c.l.b16 %v577
    %v2908 = vunpack.c.h.b16 %v577
    %v2909 = vunpack.c.l.b16 %v578
    %v2910 = vunpack.c.h.b16 %v578
    %v2911 = vunpack.c.l.b16 %v579
    %v2912 = vunpack.c.h.b16 %v579
    %v2913 = vunpack.c.l.b16 %v580
    %v2914 = vunpack.c.h.b16 %v580
    %v2915 = vunpack.c.l.b16 %v581
    %v2916 = vunpack.c.h.b16 %v581
    %v2917 = vunpack.c.l.b16 %v582
    %v2918 = vunpack.c.h.b16 %v582
    %v2919 = vunpack.c.l.b16 %v583
    %v2920 = vunpack.c.h.b16 %v583
    %v2921 = vunpack.c.l.b16 %v584
    %v2922 = vunpack.c.h.b16 %v584
    %v2923 = vunpack.c.l.b16 %v585
    %v2924 = vunpack.c.h.b16 %v585
    %v2925 = vunpack.c.l.b16 %v586
    %v2926 = vunpack.c.h.b16 %v586
    %v2927 = vunpack.c.l.b16 %v587
    %v2928 = vunpack.c.h.b16 %v587
    %v2929 = vunpack.c.l.b16 %v588
    %v2930 = vunpack.c.h.b16 %v588
    %v2931 = vunpack.c.l.b16 %v589
    %v2932 = vunpack.c.h.b16 %v589
    %v2933 = vunpack.c.l.b16 %v590
    %v2934 = vunpack.c.h.b16 %v590
    %v2935 = vunpack.c.l.b16 %v591
    %v2936 = vunpack.c.h.b16 %v591
    %v2937 = vunpack.c.l.b16 %v592
    %v2938 = vunpack.c.h.b16 %v592
    %v2939 = vunpack.c.l.b16 %v593
    %v2940 = vunpack.c.h.b16 %v593
    %v2941 = vunpack.c.l.b16 %v594
    %v2942 = vunpack.c.h.b16 %v594
    %v2943 = vunpack.c.l.b16 %v595
    %v2944 = vunpack.c.h.b16 %v595
    %v2945 = vunpack.c.l.b16 %v596
    %v2946 = vunpack.c.h.b16 %v596
    %v2947 = vunpack.c.l.b16 %v597
    %v2948 = vunpack.c.h.b16 %v597
    %v2949 = vunpack.c.l.b16 %v598
    %v2950 = vunpack.c.h.b16 %v598
    %v2951 = vunpack.c.l.b16 %v599
    %v2952 = vunpack.c.h.b16 %v599
    %v2953 = vunpack.c.l.b16 %v600
    %v2954 = vunpack.c.h.b16 %v600
    %v2955 = vunpack.c.l.b16 %v601
    %v2956 = vunpack.c.h.b16 %v601
    %v2957 = vunpack.c.l.b16 %v602
    %v2958 = vunpack.c.h.b16 %v602
    %v2959 = vunpack.c.l.b16 %v603
    %v2960 = vunpack.c.h.b16 %v603
    %v2961 = vunpack.c.l.b16 %v604
    %v2962 = vunpack.c.h.b16 %v604
    %v2963 = vunpack.c.l.b16 %v605
    %v2964 = vunpack.c.h.b16 %v605
    %v2965 = vunpack.c.l.b16 %v606
    %v2966 = vunpack.c.h.b16 %v606
    %v2967 = vunpack.c.l.b16 %v607
    %v2968 = vunpack.c.h.b16 %v607
    %v2969 = vunpack.c.l.b16 %v608
    %v2970 = vunpack.c.h.b16 %v608
    %v2971 = vunpack.c.l.b16 %v609
    %v2972 = vunpack.c.h.b16 %v609
    %v2973 = vunpack.c.l.b16 %v610
    %v2974 = vunpack.c.h.b16 %v610
    %v2975 = vunpack.c.l.b16 %v611
    %v2976 = vunpack.c.h.b16 %v611
    %v2977 = vunpack.c.l.b16 %v612
    %v2978 = vunpack.c.h.b16 %v612
    %v2979 = vunpack.c.l.b16 %v613
    %v2980 = vunpack.c.h.b16 %v613
    %v2981 = vunpack.c.l.b16 %v614
    %v2982 = vunpack.c.h.b16 %v614
    %v2983 = vunpack.c.l.b16 %v615
    %v2984 = vunpack.c.h.b16 %v615
    %v2985 = vunpack.c.l.b16 %v616
    %v2986 = vunpack.c.h.b16 %v616
    %v2987 = vunpack.c.l.b16 %v617
    %v2988 = vunpack.c.h.b16 %v617
    %v2989 = vunpack.c.l.b16 %v618
    %v2990 = vunpack.c.h.b16 %v618
    %v2991 = vunpack.c.l.b16 %v619
    %v2992 = vunpack.c.h.b16 %v619
    %v2993 = vunpack.c.l.b16 %v620
    %v2994 = vunpack.c.h.b16 %v620
    %v2995 = vunpack.c.l.b16 %v621
    %v2996 = vunpack.c.h.b16 %v621
    %v2997 = vunpack.c.l.b16 %v622
    %v2998 = vunpack.c.h.b16 %v622
    %v2999 = vunpack.c.l.b16 %v623
    %v3000 = vunpack.c.h.b16 %v623
    %v3001 = vunpack.c.l.b16 %v624
    %v3002 = vunpack.c.h.b16 %v624
    %v3003 = vunpack.c.l.b16 %v625
    %v3004 = vunpack.c.h.b16 %v625
    %v3005 = vunpack.c.l.b16 %v626
    %v3006 = vunpack.c.h.b16 %v626
    %v3007 = vunpack.c.l.b16 %v627
    %v3008 = vunpack.c.h.b16 %v627
    %v3009 = vunpack.c.l.b16 %v628
    %v3010 = vunpack.c.h.b16 %v628
    %v3011 = vunpack.c.l.b16 %v629
    %v3012 = vunpack.c.h.b16 %v629
    %v3013 = vunpack.c.l.b16 %v630
    %v3014 = vunpack.c.h.b16 %v630
    %v3015 = vunpack.c.l.b16 %v631
    %v3016 = vunpack.c.h.b16 %v631
    %v3017 = vunpack.c.l.b16 %v632
    %v3018 = vunpack.c.h.b16 %v632
    %v3019 = vunpack.c.l.b16 %v633
    %v3020 = vunpack.c.h.b16 %v633
    %v3021 = vunpack.c.l.b16 %v634
    %v3022 = vunpack.c.h.b16 %v634
    %v3023 = vunpack.c.l.b16 %v635
    %v3024 = vunpack.c.h.b16 %v635
    %v3025 = vunpack.c.l.b16 %v636
    %v3026 = vunpack.c.h.b16 %v636
    %v3027 = vunpack.c.l.b16 %v637
    %v3028 = vunpack.c.h.b16 %v637
    %v3029 = vunpack.c.l.b16 %v638
    %v3030 = vunpack.c.h.b16 %v638
    %v3031 = vunpack.c.l.b16 %v639
    %v3032 = vunpack.c.h.b16 %v639
    %v3033 = vunpack.c.l.b16 %v640
    %v3034 = vunpack.c.h.b16 %v640
    %v3035 = vunpack.c.l.b16 %v641
    %v3036 = vunpack.c.h.b16 %v641
    %v3037 = vunpack.c.l.b16 %v642
    %v3038 = vunpack.c.h.b16 %v642
    %v3039 = vunpack.c.l.b16 %v643
    %v3040 = vunpack.c.h.b16 %v643
    %v3041 = vunpack.c.l.b16 %v644
    %v3042 = vunpack.c.h.b16 %v644
    %v3043 = vunpack.c.l.b16 %v645
    %v3044 = vunpack.c.h.b16 %v645
    %v3045 = vunpack.c.l.b16 %v646
    %v3046 = vunpack.c.h.b16 %v646
    %v3047 = vunpack.c.l.b16 %v647
    %v3048 = vunpack.c.h.b16 %v647
    %v3049 = vunpack.c.l.b16 %v648
    %v3050 = vunpack.c.h.b16 %v648
    %v3051 = vunpack.c.l.b16 %v649
    %v3052 = vunpack.c.h.b16 %v649
    %v3053 = vunpack.c.l.b16 %v650
    %v3054 = vunpack.c.h.b16 %v650
    %v3055 = vunpack.c.l.b16 %v651
    %v3056 = vunpack.c.h.b16 %v651
    %v3057 = vunpack.c.l.b16 %v652
    %v3058 = vunpack.c.h.b16 %v652
    %v3059 = vunpack.c.l.b16 %v653
    %v3060 = vunpack.c.h.b16 %v653
    %v3061 = vunpack.c.l.b16 %v654
    %v3062 = vunpack.c.h.b16 %v654
    %v3063 = vunpack.c.l.b16 %v655
    %v3064 = vunpack.c.h.b16 %v655
    %v3065 = vunpack.c.l.b16 %v656
    %v3066 = vunpack.c.h.b16 %v656
    %v3067 = vunpack.c.l.b16 %v657
    %v3068 = vunpack.c.h.b16 %v657
    %v3069 = vunpack.c.l.b16 %v658
    %v3070 = vunpack.c.h.b16 %v658
    %v3071 = vunpack.c.l.b16 %v659
    %v3072 = vunpack.c.h.b16 %v659
    %v3073 = vunpack.c.l.b16 %v660
    %v3074 = vunpack.c.h.b16 %v660
    %v3075 = vunpack.c.l.b16 %v661
    %v3076 = vunpack.c.h.b16 %v661
    %v3077 = vunpack.c.l.b16 %v662
    %v3078 = vunpack.c.h.b16 %v662
    %v3079 = vunpack.c.l.b16 %v663
    %v3080 = vunpack.c.h.b16 %v663
    %v3081 = vunpack.c.l.b16 %v664
    %v3082 = vunpack.c.h.b16 %v664
    %v3083 = vunpack.c.l.b16 %v665
    %v3084 = vunpack.c.h.b16 %v665
    %v3085 = vunpack.c.l.b16 %v666
    %v3086 = vunpack.c.h.b16 %v666
    %v3087 = vunpack.c.l.b16 %v667
    %v3088 = vunpack.c.h.b16 %v667
    %v3089 = vunpack.c.l.b16 %v668
    %v3090 = vunpack.c.h.b16 %v668
    %v3091 = vunpack.c.l.b16 %v669
    %v3092 = vunpack.c.h.b16 %v669
    %v3093 = vunpack.c.l.b16 %v670
    %v3094 = vunpack.c.h.b16 %v670
    %v3095 = vunpack.c.l.b16 %v671
    %v3096 = vunpack.c.h.b16 %v671
    %v3097 = vunpack.c.l.b16 %v672
    %v3098 = vunpack.c.h.b16 %v672
    %v3099 = vunpack.c.l.b16 %v673
    %v3100 = vunpack.c.h.b16 %v673
    %v3101 = vunpack.c.l.b16 %v674
    %v3102 = vunpack.c.h.b16 %v674
    %v3103 = vunpack.c.l.b16 %v675
    %v3104 = vunpack.c.h.b16 %v675
    %v3105 = vunpack.c.l.b16 %v676
    %v3106 = vunpack.c.h.b16 %v676
    %v3107 = vunpack.c.l.b16 %v677
    %v3108 = vunpack.c.h.b16 %v677
    %v3109 = vunpack.c.l.b16 %v678
    %v3110 = vunpack.c.h.b16 %v678
    %v3111 = vunpack.c.l.b16 %v679
    %v3112 = vunpack.c.h.b16 %v679
    %v3113 = vunpack.c.l.b16 %v680
    %v3114 = vunpack.c.h.b16 %v680
    %v3115 = vunpack.c.l.b16 %v681
    %v3116 = vunpack.c.h.b16 %v681
    %v3117 = vunpack.c.l.b16 %v682
    %v3118 = vunpack.c.h.b16 %v682
    %v3119 = vunpack.c.l.b16 %v683
    %v3120 = vunpack.c.h.b16 %v683
    %v3121 = vunpack.c.l.b16 %v684
    %v3122 = vunpack.c.h.b16 %v684
    %v3123 = vunpack.c.l.b16 %v685
    %v3124 = vunpack.c.h.b16 %v685
    %v3125 = vunpack.c.l.b16 %v686
    %v3126 = vunpack.c.h.b16 %v686
    %v3127 = vunpack.c.l.b16 %v687
    %v3128 = vunpack.c.h.b16 %v687
    %v3129 = vunpack.c.l.b16 %v688
    %v3130 = vunpack.c.h.b16 %v688
    %v3131 = vunpack.c.l.b16 %v689
    %v3132 = vunpack.c.h.b16 %v689
    %v3133 = vunpack.c.l.b16 %v690
    %v3134 = vunpack.c.h.b16 %v690
    %v3135 = vunpack.c.l.b16 %v691
    %v3136 = vunpack.c.h.b16 %v691
    %v3137 = vunpack.c.l.b16 %v692
    %v3138 = vunpack.c.h.b16 %v692
    %v3139 = vunpack.c.l.b16 %v693
    %v3140 = vunpack.c.h.b16 %v693
    %v3141 = vunpack.c.l.b16 %v694
    %v3142 = vunpack.c.h.b16 %v694
    %v3143 = vunpack.c.l.b16 %v695
    %v3144 = vunpack.c.h.b16 %v695
    %v3145 = vunpack.c.l.b16 %v696
    %v3146 = vunpack.c.h.b16 %v696
    %v3147 = vunpack.c.l.b16 %v697
    %v3148 = vunpack.c.h.b16 %v697
    %v3149 = vunpack.c.l.b16 %v698
    %v3150 = vunpack.c.h.b16 %v698
    %v3151 = vunpack.c.l.b16 %v699
    %v3152 = vunpack.c.h.b16 %v699
    %v3153 = vunpack.c.l.b16 %v700
    %v3154 = vunpack.c.h.b16 %v700
    %v3155 = vunpack.c.l.b16 %v701
    %v3156 = vunpack.c.h.b16 %v701
    %v3157 = vunpack.c.l.b16 %v702
    %v3158 = vunpack.c.h.b16 %v702
    %v3159 = vunpack.c.l.b16 %v703
    %v3160 = vunpack.c.h.b16 %v703
    %v3161 = vunpack.c.l.b16 %v704
    %v3162 = vunpack.c.h.b16 %v704
    %v3163 = vunpack.c.l.b16 %v705
    %v3164 = vunpack.c.h.b16 %v705
    %v3165 = vunpack.c.l.b16 %v706
    %v3166 = vunpack.c.h.b16 %v706
    %v3167 = vunpack.c.l.b16 %v707
    %v3168 = vunpack.c.h.b16 %v707
    %v3169 = vunpack.c.l.b16 %v708
    %v3170 = vunpack.c.h.b16 %v708
    %v3171 = vunpack.c.l.b16 %v709
    %v3172 = vunpack.c.h.b16 %v709
    %v3173 = vunpack.c.l.b16 %v710
    %v3174 = vunpack.c.h.b16 %v710
    %v3175 = vunpack.c.l.b16 %v711
    %v3176 = vunpack.c.h.b16 %v711
    %v3177 = vunpack.c.l.b16 %v712
    %v3178 = vunpack.c.h.b16 %v712
    %v3179 = vunpack.c.l.b16 %v713
    %v3180 = vunpack.c.h.b16 %v713
    %v3181 = vunpack.c.l.b16 %v714
    %v3182 = vunpack.c.h.b16 %v714
    %v3183 = vunpack.c.l.b16 %v715
    %v3184 = vunpack.c.h.b16 %v715
    %v3185 = vunpack.c.l.b16 %v716
    %v3186 = vunpack.c.h.b16 %v716
    %v3187 = vunpack.c.l.b16 %v717
    %v3188 = vunpack.c.h.b16 %v717
    %v3189 = vunpack.c.l.b16 %v718
    %v3190 = vunpack.c.h.b16 %v718
    %v3191 = vunpack.c.l.b16 %v719
    %v3192 = vunpack.c.h.b16 %v719
    %v3193 = vunpack.c.l.b16 %v720
    %v3194 = vunpack.c.h.b16 %v720
    %v3195 = vunpack.c.l.b16 %v721
    %v3196 = vunpack.c.h.b16 %v721
    %v3197 = vunpack.c.l.b16 %v722
    %v3198 = vunpack.c.h.b16 %v722
    %v3199 = vunpack.c.l.b16 %v723
    %v3200 = vunpack.c.h.b16 %v723
    %v3201 = vunpack.c.l.b16 %v724
    %v3202 = vunpack.c.h.b16 %v724
    %v3203 = vunpack.c.l.b16 %v725
    %v3204 = vunpack.c.h.b16 %v725
    %v3205 = vunpack.c.l.b16 %v726
    %v3206 = vunpack.c.h.b16 %v726
    %v3207 = vunpack.c.l.b16 %v727
    %v3208 = vunpack.c.h.b16 %v727
    %v3209 = vunpack.c.l.b16 %v728
    %v3210 = vunpack.c.h.b16 %v728
    %v3211 = vunpack.c.l.b16 %v729
    %v3212 = vunpack.c.h.b16 %v729
    %v3213 = vunpack.c.l.b16 %v730
    %v3214 = vunpack.c.h.b16 %v730
    %v3215 = vunpack.c.l.b16 %v731
    %v3216 = vunpack.c.h.b16 %v731
    %v3217 = vunpack.c.l.b16 %v732
    %v3218 = vunpack.c.h.b16 %v732
    %v3219 = vunpack.c.l.b16 %v733
    %v3220 = vunpack.c.h.b16 %v733
    %v3221 = vunpack.c.l.b16 %v734
    %v3222 = vunpack.c.h.b16 %v734
    %v3223 = vunpack.c.l.b16 %v735
    %v3224 = vunpack.c.h.b16 %v735
    %v3225 = vunpack.c.l.b16 %v736
    %v3226 = vunpack.c.h.b16 %v736
    %v3227 = vunpack.c.l.b16 %v737
    %v3228 = vunpack.c.h.b16 %v737
    %v3229 = vunpack.c.l.b16 %v738
    %v3230 = vunpack.c.h.b16 %v738
    %v3231 = vunpack.c.l.b16 %v739
    %v3232 = vunpack.c.h.b16 %v739
    %v3233 = vunpack.c.l.b16 %v740
    %v3234 = vunpack.c.h.b16 %v740
    %v3235 = vunpack.c.l.b16 %v741
    %v3236 = vunpack.c.h.b16 %v741
    %v3237 = vunpack.c.l.b16 %v742
    %v3238 = vunpack.c.h.b16 %v742
    %v3239 = vunpack.c.l.b16 %v743
    %v3240 = vunpack.c.h.b16 %v743
    %v3241 = vunpack.c.l.b16 %v744
    %v3242 = vunpack.c.h.b16 %v744
    %v3243 = vunpack.c.l.b16 %v745
    %v3244 = vunpack.c.h.b16 %v745
    %v3245 = vunpack.c.l.b16 %v746
    %v3246 = vunpack.c.h.b16 %v746
    %v3247 = vunpack.c.l.b16 %v747
    %v3248 = vunpack.c.h.b16 %v747
    %v3249 = vunpack.c.l.b16 %v748
    %v3250 = vunpack.c.h.b16 %v748
    %v3251 = vunpack.c.l.b16 %v749
    %v3252 = vunpack.c.h.b16 %v749
    %v3253 = vunpack.c.l.b16 %v750
    %v3254 = vunpack.c.h.b16 %v750
    %v3255 = vunpack.c.l.b16 %v751
    %v3256 = vunpack.c.h.b16 %v751
    %v3257 = vunpack.c.l.b16 %v752
    %v3258 = vunpack.c.h.b16 %v752
    %v3259 = vunpack.c.l.b16 %v753
    %v3260 = vunpack.c.h.b16 %v753
    %v3261 = vunpack.c.l.b16 %v754
    %v3262 = vunpack.c.h.b16 %v754
    %v3263 = vunpack.c.l.b16 %v755
    %v3264 = vunpack.c.h.b16 %v755
    %v3265 = vunpack.c.l.b16 %v756
    %v3266 = vunpack.c.h.b16 %v756
    %v3267 = vunpack.c.l.b16 %v757
    %v3268 = vunpack.c.h.b16 %v757
    %v3269 = vunpack.c.l.b16 %v758
    %v3270 = vunpack.c.h.b16 %v758
    %v3271 = vunpack.c.l.b16 %v759
    %v3272 = vunpack.c.h.b16 %v759
    %v3273 = vunpack.c.l.b16 %v760
    %v3274 = vunpack.c.h.b16 %v760
    %v3275 = vunpack.c.l.b16 %v761
    %v3276 = vunpack.c.h.b16 %v761
    %v3277 = vunpack.c.l.b16 %v762
    %v3278 = vunpack.c.h.b16 %v762
    %v3279 = vunpack.c.l.b16 %v763
    %v3280 = vunpack.c.h.b16 %v763
    %v3281 = vunpack.c.l.b16 %v764
    %v3282 = vunpack.c.h.b16 %v764
    %v3283 = vunpack.c.l.b16 %v765
    %v3284 = vunpack.c.h.b16 %v765
    %v3285 = vunpack.c.l.b16 %v766
    %v3286 = vunpack.c.h.b16 %v766
    %v3287 = vunpack.c.l.b16 %v767
    %v3288 = vunpack.c.h.b16 %v767
    %v3289 = vunpack.c.l.b16 %v768
    %v3290 = vunpack.c.h.b16 %v768
    %v3291 = vunpack.c.l.b16 %v769
    %v3292 = vunpack.c.h.b16 %v769
    %v3293 = vunpack.c.l.b16 %v770
    %v3294 = vunpack.c.h.b16 %v770
    %v3295 = vunpack.c.l.b16 %v771
    %v3296 = vunpack.c.h.b16 %v771
    %v3297 = vunpack.c.l.b16 %v772
    %v3298 = vunpack.c.h.b16 %v772
    %v3299 = vunpack.c.l.b16 %v773
    %v3300 = vunpack.c.h.b16 %v773
    %v3301 = vunpack.c.l.b16 %v774
    %v3302 = vunpack.c.h.b16 %v774
    %v3303 = vunpack.c.l.b16 %v775
    %v3304 = vunpack.c.h.b16 %v775
    %v3305 = vunpack.c.l.b16 %v776
    %v3306 = vunpack.c.h.b16 %v776
    %v3307 = vunpack.c.l.b16 %v777
    %v3308 = vunpack.c.h.b16 %v777
    %v3309 = vunpack.c.l.b16 %v778
    %v3310 = vunpack.c.h.b16 %v778
    %v3311 = vunpack.c.l.b16 %v779
    %v3312 = vunpack.c.h.b16 %v779
    %v3313 = vunpack.c.l.b16 %v780
    %v3314 = vunpack.c.h.b16 %v780
    %v3315 = vunpack.c.l.b16 %v781
    %v3316 = vunpack.c.h.b16 %v781
    %v3317 = vunpack.c.l.b16 %v782
    %v3318 = vunpack.c.h.b16 %v782
    %v3319 = vunpack.c.l.b16 %v783
    %v3320 = vunpack.c.h.b16 %v783
    %v3321 = vunpack.c.l.b16 %v784
    %v3322 = vunpack.c.h.b16 %v784
    %v3323 = vunpack.c.l.b16 %v785
    %v3324 = vunpack.c.h.b16 %v785
    %v3325 = vunpack.c.l.b16 %v786
    %v3326 = vunpack.c.h.b16 %v786
    %v3327 = vunpack.c.l.b16 %v787
    %v3328 = vunpack.c.h.b16 %v787
    %v3329 = vunpack.c.l.b16 %v788
    %v3330 = vunpack.c.h.b16 %v788
    %v3331 = vunpack.c.l.b16 %v789
    %v3332 = vunpack.c.h.b16 %v789
    %v3333 = vunpack.c.l.b16 %v790
    %v3334 = vunpack.c.h.b16 %v790
    %v3335 = vunpack.c.l.b16 %v791
    %v3336 = vunpack.c.h.b16 %v791
    %v3337 = vunpack.c.l.b16 %v792
    %v3338 = vunpack.c.h.b16 %v792
    %v3339 = vunpack.c.l.b16 %v793
    %v3340 = vunpack.c.h.b16 %v793
    %v3341 = vunpack.c.l.b16 %v794
    %v3342 = vunpack.c.h.b16 %v794
    %v3343 = vunpack.c.l.b16 %v795
    %v3344 = vunpack.c.h.b16 %v795
    %v3345 = vunpack.c.l.b16 %v796
    %v3346 = vunpack.c.h.b16 %v796
    %v3347 = vunpack.c.l.b16 %v797
    %v3348 = vunpack.c.h.b16 %v797
    %v3349 = vunpack.c.l.b16 %v798
    %v3350 = vunpack.c.h.b16 %v798
    %v3351 = vunpack.c.l.b16 %v799
    %v3352 = vunpack.c.h.b16 %v799
    %v3353 = vunpack.c.l.b16 %v800
    %v3354 = vunpack.c.h.b16 %v800
    %v3355 = vunpack.c.l.b16 %v801
    %v3356 = vunpack.c.h.b16 %v801
    %v3357 = vunpack.c.l.b16 %v802
    %v3358 = vunpack.c.h.b16 %v802
    %v3359 = vunpack.c.l.b16 %v803
    %v3360 = vunpack.c.h.b16 %v803
    %v3361 = vunpack.c.l.b16 %v804
    %v3362 = vunpack.c.h.b16 %v804
    %v3363 = vunpack.c.l.b16 %v805
    %v3364 = vunpack.c.h.b16 %v805
    %v3365 = vunpack.c.l.b16 %v806
    %v3366 = vunpack.c.h.b16 %v806
    %v3367 = vunpack.c.l.b16 %v807
    %v3368 = vunpack.c.h.b16 %v807
    %v3369 = vunpack.c.l.b16 %v808
    %v3370 = vunpack.c.h.b16 %v808
    %v3371 = vunpack.c.l.b16 %v809
    %v3372 = vunpack.c.h.b16 %v809
    %v3373 = vpack.c.b16 %v1809, %v1805
    %v3374 = vpack.c.b16 %v1810, %v1806
    %v3375 = vpack.c.b16 %v1811, %v1807
    %v3376 = vpack.c.b16 %v1812, %v1808
    %v3377 = vpack.c.b16 %v1817, %v1813
    %v3378 = vpack.c.b16 %v1818, %v1814
    %v3379 = vpack.c.b16 %v1819, %v1815
    %v3380 = vpack.c.b16 %v1820, %v1816
    %v3381 = vpack.c.b16 %v1825, %v1821
    %v3382 = vpack.c.b16 %v1826, %v1822
    %v3383 = vpack.c.b16 %v1827, %v1823
    %v3384 = vpack.c.b16 %v1828, %v1824
    %v3385 = vpack.c.b16 %v1833, %v1829
    %v3386 = vpack.c.b16 %v1834, %v1830
    %v3387 = vpack.c.b16 %v1835, %v1831
    %v3388 = vpack.c.b16 %v1836, %v1832
    %v3389 = vpack.c.b16 %v1841, %v1837
    %v3390 = vpack.c.b16 %v1842, %v1838
    %v3391 = vpack.c.b16 %v1843, %v1839
    %v3392 = vpack.c.b16 %v1844, %v1840
    %v3393 = vpack.c.b16 %v1849, %v1845
    %v3394 = vpack.c.b16 %v1850, %v1846
    %v3395 = vpack.c.b16 %v1851, %v1847
    %v3396 = vpack.c.b16 %v1852, %v1848
    %v3397 = vpack.c.b16 %v1857, %v1853
    %v3398 = vpack.c.b16 %v1858, %v1854
    %v3399 = vpack.c.b16 %v1859, %v1855
    %v3400 = vpack.c.b16 %v1860, %v1856
    %v3401 = vpack.c.b16 %v1865, %v1861
    %v3402 = vpack.c.b16 %v1866, %v1862
    %v3403 = vpack.c.b16 %v1867, %v1863
    %v3404 = vpack.c.b16 %v1868, %v1864
    %v3405 = vpack.c.b16 %v1873, %v1869
    %v3406 = vpack.c.b16 %v1874, %v1870
    %v3407 = vpack.c.b16 %v1875, %v1871
    %v3408 = vpack.c.b16 %v1876, %v1872
    %v3409 = vpack.c.b16 %v1881, %v1877
    %v3410 = vpack.c.b16 %v1882, %v1878
    %v3411 = vpack.c.b16 %v1883, %v1879
    %v3412 = vpack.c.b16 %v1884, %v1880
    %v3413 = vpack.c.b16 %v1889, %v1885
    %v3414 = vpack.c.b16 %v1890, %v1886
    %v3415 = vpack.c.b16 %v1891, %v1887
    %v3416 = vpack.c.b16 %v1892, %v1888
    %v3417 = vpack.c.b16 %v1897, %v1893
    %v3418 = vpack.c.b16 %v1898, %v1894
    %v3419 = vpack.c.b16 %v1899, %v1895
    %v3420 = vpack.c.b16 %v1900, %v1896
    %v3421 = vpack.c.b16 %v1905, %v1901
    %v3422 = vpack.c.b16 %v1906, %v1902
    %v3423 = vpack.c.b16 %v1907, %v1903
    %v3424 = vpack.c.b16 %v1908, %v1904
    %v3425 = vpack.c.b16 %v1913, %v1909
    %v3426 = vpack.c.b16 %v1914, %v1910
    %v3427 = vpack.c.b16 %v1915, %v1911
    %v3428 = vpack.c.b16 %v1916, %v1912
    %v3429 = vpack.c.b16 %v1921, %v1917
    %v3430 = vpack.c.b16 %v1922, %v1918
    %v3431 = vpack.c.b16 %v1923, %v1919
    %v3432 = vpack.c.b16 %v1924, %v1920
    %v3433 = vpack.c.b16 %v1929, %v1925
    %v3434 = vpack.c.b16 %v1930, %v1926
    %v3435 = vpack.c.b16 %v1931, %v1927
    %v3436 = vpack.c.b16 %v1932, %v1928
    %v3437 = vpack.c.b16 %v1937, %v1933
    %v3438 = vpack.c.b16 %v1938, %v1934
    %v3439 = vpack.c.b16 %v1939, %v1935
    %v3440 = vpack.c.b16 %v1940, %v1936
    %v3441 = vpack.c.b16 %v1945, %v1941
    %v3442 = vpack.c.b16 %v1946, %v1942
    %v3443 = vpack.c.b16 %v1947, %v1943
    %v3444 = vpack.c.b16 %v1948, %v1944
    %v3445 = vpack.c.b16 %v1953, %v1949
    %v3446 = vpack.c.b16 %v1954, %v1950
    %v3447 = vpack.c.b16 %v1955, %v1951
    %v3448 = vpack.c.b16 %v1956, %v1952
    %v3449 = vpack.c.b16 %v1961, %v1957
    %v3450 = vpack.c.b16 %v1962, %v1958
    %v3451 = vpack.c.b16 %v1963, %v1959
    %v3452 = vpack.c.b16 %v1964, %v1960
    %v3453 = vpack.c.b16 %v1969, %v1965
    %v3454 = vpack.c.b16 %v1970, %v1966
    %v3455 = vpack.c.b16 %v1971, %v1967
    %v3456 = vpack.c.b16 %v1972, %v1968
    %v3457 = vpack.c.b16 %v1977, %v1973
    %v3458 = vpack.c.b16 %v1978, %v1974
    %v3459 = vpack.c.b16 %v1979, %v1975
    %v3460 = vpack.c.b16 %v1980, %v1976
    %v3461 = vpack.c.b16 %v1985, %v1981
    %v3462 = vpack.c.b16 %v1986, %v1982
    %v3463 = vpack.c.b16 %v1987, %v1983
    %v3464 = vpack.c.b16 %v1988, %v1984
    %v3465 = vpack.c.b16 %v1993, %v1989
    %v3466 = vpack.c.b16 %v1994, %v1990
    %v3467 = vpack.c.b16 %v1995, %v1991
    %v3468 = vpack.c.b16 %v1996, %v1992
    %v3469 = vpack.c.b16 %v2001, %v1997
    %v3470 = vpack.c.b16 %v2002, %v1998
    %v3471 = vpack.c.b16 %v2003, %v1999
    %v3472 = vpack.c.b16 %v2004, %v2000
    %v3473 = vpack.c.b16 %v2009, %v2005
    %v3474 = vpack.c.b16 %v2010, %v2006
    %v3475 = vpack.c.b16 %v2011, %v2007
    %v3476 = vpack.c.b16 %v2012, %v2008
    %v3477 = vpack.c.b16 %v2017, %v2013
    %v3478 = vpack.c.b16 %v2018, %v2014
    %v3479 = vpack.c.b16 %v2019, %v2015
    %v3480 = vpack.c.b16 %v2020, %v2016
    %v3481 = vpack.c.b16 %v2025, %v2021
    %v3482 = vpack.c.b16 %v2026, %v2022
    %v3483 = vpack.c.b16 %v2027, %v2023
    %v3484 = vpack.c.b16 %v2028, %v2024
    %v3485 = vpack.c.b16 %v2033, %v2029
    %v3486 = vpack.c.b16 %v2034, %v2030
    %v3487 = vpack.c.b16 %v2035, %v2031
    %v3488 = vpack.c.b16 %v2036, %v2032
    %v3489 = vpack.c.b16 %v2041, %v2037
    %v3490 = vpack.c.b16 %v2042, %v2038
    %v3491 = vpack.c.b16 %v2043, %v2039
    %v3492 = vpack.c.b16 %v2044, %v2040
    %v3493 = vpack.c.b16 %v2049, %v2045
    %v3494 = vpack.c.b16 %v2050, %v2046
    %v3495 = vpack.c.b16 %v2051, %v2047
    %v3496 = vpack.c.b16 %v2052, %v2048
    %v3497 = vpack.c.b16 %v2057, %v2053
    %v3498 = vpack.c.b16 %v2058, %v2054
    %v3499 = vpack.c.b16 %v2059, %v2055
    %v3500 = vpack.c.b16 %v2060, %v2056
    %v3501 = vpack.c.b16 %v2065, %v2061
    %v3502 = vpack.c.b16 %v2066, %v2062
    %v3503 = vpack.c.b16 %v2067, %v2063
    %v3504 = vpack.c.b16 %v2068, %v2064
    %v3505 = vpack.c.b16 %v2073, %v2069
    %v3506 = vpack.c.b16 %v2074, %v2070
    %v3507 = vpack.c.b16 %v2075, %v2071
    %v3508 = vpack.c.b16 %v2076, %v2072
    %v3509 = vpack.c.b16 %v2081, %v2077
    %v3510 = vpack.c.b16 %v2082, %v2078
    %v3511 = vpack.c.b16 %v2083, %v2079
    %v3512 = vpack.c.b16 %v2084, %v2080
    %v3513 = vpack.c.b16 %v2089, %v2085
    %v3514 = vpack.c.b16 %v2090, %v2086
    %v3515 = vpack.c.b16 %v2091, %v2087
    %v3516 = vpack.c.b16 %v2092, %v2088
    %v3517 = vpack.c.b16 %v2097, %v2093
    %v3518 = vpack.c.b16 %v2098, %v2094
    %v3519 = vpack.c.b16 %v2099, %v2095
    %v3520 = vpack.c.b16 %v2100, %v2096
    %v3521 = vpack.c.b16 %v2105, %v2101
    %v3522 = vpack.c.b16 %v2106, %v2102
    %v3523 = vpack.c.b16 %v2107, %v2103
    %v3524 = vpack.c.b16 %v2108, %v2104
    %v3525 = vpack.c.b16 %v2113, %v2109
    %v3526 = vpack.c.b16 %v2114, %v2110
    %v3527 = vpack.c.b16 %v2115, %v2111
    %v3528 = vpack.c.b16 %v2116, %v2112
    %v3529 = vpack.c.b16 %v2121, %v2117
    %v3530 = vpack.c.b16 %v2122, %v2118
    %v3531 = vpack.c.b16 %v2123, %v2119
    %v3532 = vpack.c.b16 %v2124, %v2120
    %v3533 = vpack.c.b16 %v2129, %v2125
    %v3534 = vpack.c.b16 %v2130, %v2126
    %v3535 = vpack.c.b16 %v2131, %v2127
    %v3536 = vpack.c.b16 %v2132, %v2128
    %v3537 = vpack.c.b16 %v2137, %v2133
    %v3538 = vpack.c.b16 %v2138, %v2134
    %v3539 = vpack.c.b16 %v2139, %v2135
    %v3540 = vpack.c.b16 %v2140, %v2136
    %v3541 = vpack.c.b16 %v2145, %v2141
    %v3542 = vpack.c.b16 %v2146, %v2142
    %v3543 = vpack.c.b16 %v2147, %v2143
    %v3544 = vpack.c.b16 %v2148, %v2144
    %v3545 = vpack.c.b16 %v2153, %v2149
    %v3546 = vpack.c.b16 %v2154, %v2150
    %v3547 = vpack.c.b16 %v2155, %v2151
    %v3548 = vpack.c.b16 %v2156, %v2152
    %v3549 = vpack.c.b16 %v2161, %v2157
    %v3550 = vpack.c.b16 %v2162, %v2158
    %v3551 = vpack.c.b16 %v2163, %v2159
    %v3552 = vpack.c.b16 %v2164, %v2160
    %v3553 = vpack.c.b16 %v2169, %v2165
    %v3554 = vpack.c.b16 %v2170, %v2166
    %v3555 = vpack.c.b16 %v2171, %v2167
    %v3556 = vpack.c.b16 %v2172, %v2168
    %v3557 = vpack.c.b16 %v2177, %v2173
    %v3558 = vpack.c.b16 %v2178, %v2174
    %v3559 = vpack.c.b16 %v2179, %v2175
    %v3560 = vpack.c.b16 %v2180, %v2176
    %v3561 = vpack.c.b16 %v2185, %v2181
    %v3562 = vpack.c.b16 %v2186, %v2182
    %v3563 = vpack.c.b16 %v2187, %v2183
    %v3564 = vpack.c.b16 %v2188, %v2184
    %v3565 = vpack.c.b16 %v2193, %v2189
    %v3566 = vpack.c.b16 %v2194, %v2190
    %v3567 = vpack.c.b16 %v2195, %v2191
    %v3568 = vpack.c.b16 %v2196, %v2192
    %v3569 = vpack.c.b16 %v2201, %v2197
    %v3570 = vpack.c.b16 %v2202, %v2198
    %v3571 = vpack.c.b16 %v2203, %v2199
    %v3572 = vpack.c.b16 %v2204, %v2200
    %v3573 = vpack.c.b16 %v2209, %v2205
    %v3574 = vpack.c.b16 %v2210, %v2206
    %v3575 = vpack.c.b16 %v2211, %v2207
    %v3576 = vpack.c.b16 %v2212, %v2208
    %v3577 = vpack.c.b16 %v2217, %v2213
    %v3578 = vpack.c.b16 %v2218, %v2214
    %v3579 = vpack.c.b16 %v2219, %v2215
    %v3580 = vpack.c.b16 %v2220, %v2216
    %v3581 = vpack.c.b16 %v2225, %v2221
    %v3582 = vpack.c.b16 %v2226, %v2222
    %v3583 = vpack.c.b16 %v2227, %v2223
    %v3584 = vpack.c.b16 %v2228, %v2224
    %v3585 = vpack.c.b16 %v2233, %v2229
    %v3586 = vpack.c.b16 %v2234, %v2230
    %v3587 = vpack.c.b16 %v2235, %v2231
    %v3588 = vpack.c.b16 %v2236, %v2232
    %v3589 = vpack.c.b16 %v2241, %v2237
    %v3590 = vpack.c.b16 %v2242, %v2238
    %v3591 = vpack.c.b16 %v2243, %v2239
    %v3592 = vpack.c.b16 %v2244, %v2240
    %v3593 = vpack.c.b16 %v2249, %v2245
    %v3594 = vpack.c.b16 %v2250, %v2246
    %v3595 = vpack.c.b16 %v2251, %v2247
    %v3596 = vpack.c.b16 %v2252, %v2248
    %v3597 = vpack.c.b16 %v2257, %v2253
    %v3598 = vpack.c.b16 %v2258, %v2254
    %v3599 = vpack.c.b16 %v2259, %v2255
    %v3600 = vpack.c.b16 %v2260, %v2256
    %v3601 = vpack.c.b16 %v2265, %v2261
    %v3602 = vpack.c.b16 %v2266, %v2262
    %v3603 = vpack.c.b16 %v2267, %v2263
    %v3604 = vpack.c.b16 %v2268, %v2264
    %v3605 = vpack.c.b16 %v2273, %v2269
    %v3606 = vpack.c.b16 %v2274, %v2270
    %v3607 = vpack.c.b16 %v2275, %v2271
    %v3608 = vpack.c.b16 %v2276, %v2272
    %v3609 = vpack.c.b16 %v2281, %v2277
    %v3610 = vpack.c.b16 %v2282, %v2278
    %v3611 = vpack.c.b16 %v2283, %v2279
    %v3612 = vpack.c.b16 %v2284, %v2280
    %v3613 = vpack.c.b16 %v2289, %v2285
    %v3614 = vpack.c.b16 %v2290, %v2286
    %v3615 = vpack.c.b16 %v2291, %v2287
    %v3616 = vpack.c.b16 %v2292, %v2288
    %v3617 = vpack.c.b16 %v2297, %v2293
    %v3618 = vpack.c.b16 %v2298, %v2294
    %v3619 = vpack.c.b16 %v2299, %v2295
    %v3620 = vpack.c.b16 %v2300, %v2296
    %v3621 = vpack.c.b16 %v2305, %v2301
    %v3622 = vpack.c.b16 %v2306, %v2302
    %v3623 = vpack.c.b16 %v2307, %v2303
    %v3624 = vpack.c.b16 %v2308, %v2304
    %v3625 = vpack.c.b16 %v2313, %v2309
    %v3626 = vpack.c.b16 %v2314, %v2310
    %v3627 = vpack.c.b16 %v2315, %v2311
    %v3628 = vpack.c.b16 %v2316, %v2312
    %v3629 = vpack.c.b16 %v2321, %v2317
    %v3630 = vpack.c.b16 %v2322, %v2318
    %v3631 = vpack.c.b16 %v2323, %v2319
    %v3632 = vpack.c.b16 %v2324, %v2320
    %v3633 = vpack.c.b16 %v2329, %v2325
    %v3634 = vpack.c.b16 %v2330, %v2326
    %v3635 = vpack.c.b16 %v2331, %v2327
    %v3636 = vpack.c.b16 %v2332, %v2328
    %v3637 = vpack.c.b16 %v2337, %v2333
    %v3638 = vpack.c.b16 %v2338, %v2334
    %v3639 = vpack.c.b16 %v2339, %v2335
    %v3640 = vpack.c.b16 %v2340, %v2336
    %v3641 = vpack.c.b16 %v2345, %v2341
    %v3642 = vpack.c.b16 %v2346, %v2342
    %v3643 = vpack.c.b16 %v2347, %v2343
    %v3644 = vpack.c.b16 %v2348, %v2344
    %v3645 = vpack.c.b16 %v2353, %v2349
    %v3646 = vpack.c.b16 %v2354, %v2350
    %v3647 = vpack.c.b16 %v2355, %v2351
    %v3648 = vpack.c.b16 %v2356, %v2352
    %v3649 = vpack.c.b16 %v2361, %v2357
    %v3650 = vpack.c.b16 %v2362, %v2358
    %v3651 = vpack.c.b16 %v2363, %v2359
    %v3652 = vpack.c.b16 %v2364, %v2360
    %v3653 = vpack.c.b16 %v2369, %v2365
    %v3654 = vpack.c.b16 %v2370, %v2366
    %v3655 = vpack.c.b16 %v2371, %v2367
    %v3656 = vpack.c.b16 %v2372, %v2368
    %v3657 = vpack.c.b16 %v2377, %v2373
    %v3658 = vpack.c.b16 %v2378, %v2374
    %v3659 = vpack.c.b16 %v2379, %v2375
    %v3660 = vpack.c.b16 %v2380, %v2376
    %v3661 = vpack.c.b16 %v2385, %v2381
    %v3662 = vpack.c.b16 %v2386, %v2382
    %v3663 = vpack.c.b16 %v2387, %v2383
    %v3664 = vpack.c.b16 %v2388, %v2384
    %v3665 = vpack.c.b16 %v2393, %v2389
    %v3666 = vpack.c.b16 %v2394, %v2390
    %v3667 = vpack.c.b16 %v2395, %v2391
    %v3668 = vpack.c.b16 %v2396, %v2392
    %v3669 = vpack.c.b16 %v2401, %v2397
    %v3670 = vpack.c.b16 %v2402, %v2398
    %v3671 = vpack.c.b16 %v2403, %v2399
    %v3672 = vpack.c.b16 %v2404, %v2400
    %v3673 = vpack.c.b16 %v2409, %v2405
    %v3674 = vpack.c.b16 %v2410, %v2406
    %v3675 = vpack.c.b16 %v2411, %v2407
    %v3676 = vpack.c.b16 %v2412, %v2408
    %v3677 = vpack.c.b16 %v2417, %v2413
    %v3678 = vpack.c.b16 %v2418, %v2414
    %v3679 = vpack.c.b16 %v2419, %v2415
    %v3680 = vpack.c.b16 %v2420, %v2416
    %v3681 = vpack.c.b16 %v2425, %v2421
    %v3682 = vpack.c.b16 %v2426, %v2422
    %v3683 = vpack.c.b16 %v2427, %v2423
    %v3684 = vpack.c.b16 %v2428, %v2424
    %v3685 = vpack.c.b16 %v2433, %v2429
    %v3686 = vpack.c.b16 %v2434, %v2430
    %v3687 = vpack.c.b16 %v2435, %v2431
    %v3688 = vpack.c.b16 %v2436, %v2432
    %v3689 = vpack.c.b16 %v2441, %v2437
    %v3690 = vpack.c.b16 %v2442, %v2438
    %v3691 = vpack.c.b16 %v2443, %v2439
    %v3692 = vpack.c.b16 %v2444, %v2440
    %v3693 = vpack.c.b16 %v2449, %v2445
    %v3694 = vpack.c.b16 %v2450, %v2446
    %v3695 = vpack.c.b16 %v2451, %v2447
    %v3696 = vpack.c.b16 %v2452, %v2448
    %v3697 = vpack.c.b16 %v2457, %v2453
    %v3698 = vpack.c.b16 %v2458, %v2454
    %v3699 = vpack.c.b16 %v2459, %v2455
    %v3700 = vpack.c.b16 %v2460, %v2456
    %v3701 = vpack.c.b16 %v2465, %v2461
    %v3702 = vpack.c.b16 %v2466, %v2462
    %v3703 = vpack.c.b16 %v2467, %v2463
    %v3704 = vpack.c.b16 %v2468, %v2464
    %v3705 = vpack.c.b16 %v2473, %v2469
    %v3706 = vpack.c.b16 %v2474, %v2470
    %v3707 = vpack.c.b16 %v2475, %v2471
    %v3708 = vpack.c.b16 %v2476, %v2472
    %v3709 = vpack.c.b16 %v2481, %v2477
    %v3710 = vpack.c.b16 %v2482, %v2478
    %v3711 = vpack.c.b16 %v2483, %v2479
    %v3712 = vpack.c.b16 %v2484, %v2480
    %v3713 = vpack.c.b16 %v2489, %v2485
    %v3714 = vpack.c.b16 %v2490, %v2486
    %v3715 = vpack.c.b16 %v2491, %v2487
    %v3716 = vpack.c.b16 %v2492, %v2488
    %v3717 = vpack.c.b16 %v2497, %v2493
    %v3718 = vpack.c.b16 %v2498, %v2494
    %v3719 = vpack.c.b16 %v2499, %v2495
    %v3720 = vpack.c.b16 %v2500, %v2496
    %v3721 = vpack.c.b16 %v2505, %v2501
    %v3722 = vpack.c.b16 %v2506, %v2502
    %v3723 = vpack.c.b16 %v2507, %v2503
    %v3724 = vpack.c.b16 %v2508, %v2504
    %v3725 = vpack.c.b16 %v2513, %v2509
    %v3726 = vpack.c.b16 %v2514, %v2510
    %v3727 = vpack.c.b16 %v2515, %v2511
    %v3728 = vpack.c.b16 %v2516, %v2512
    %v3729 = vpack.c.b16 %v2521, %v2517
    %v3730 = vpack.c.b16 %v2522, %v2518
    %v3731 = vpack.c.b16 %v2523, %v2519
    %v3732 = vpack.c.b16 %v2524, %v2520
    %v3733 = vpack.c.b16 %v2529, %v2525
    %v3734 = vpack.c.b16 %v2530, %v2526
    %v3735 = vpack.c.b16 %v2531, %v2527
    %v3736 = vpack.c.b16 %v2532, %v2528
    %v3737 = vpack.c.b16 %v2537, %v2533
    %v3738 = vpack.c.b16 %v2538, %v2534
    %v3739 = vpack.c.b16 %v2539, %v2535
    %v3740 = vpack.c.b16 %v2540, %v2536
    %v3741 = vpack.c.b16 %v2545, %v2541
    %v3742 = vpack.c.b16 %v2546, %v2542
    %v3743 = vpack.c.b16 %v2547, %v2543
    %v3744 = vpack.c.b16 %v2548, %v2544
    %v3745 = vpack.c.b16 %v2553, %v2549
    %v3746 = vpack.c.b16 %v2554, %v2550
    %v3747 = vpack.c.b16 %v2555, %v2551
    %v3748 = vpack.c.b16 %v2556, %v2552
    %v3749 = vpack.c.b16 %v2561, %v2557
    %v3750 = vpack.c.b16 %v2562, %v2558
    %v3751 = vpack.c.b16 %v2563, %v2559
    %v3752 = vpack.c.b16 %v2564, %v2560
    %v3753 = vpack.c.b16 %v2569, %v2565
    %v3754 = vpack.c.b16 %v2570, %v2566
    %v3755 = vpack.c.b16 %v2571, %v2567
    %v3756 = vpack.c.b16 %v2572, %v2568
    %v3757 = vpack.c.b16 %v2577, %v2573
    %v3758 = vpack.c.b16 %v2578, %v2574
    %v3759 = vpack.c.b16 %v2579, %v2575
    %v3760 = vpack.c.b16 %v2580, %v2576
    %v3761 = vpack.c.b16 %v2585, %v2581
    %v3762 = vpack.c.b16 %v2586, %v2582
    %v3763 = vpack.c.b16 %v2587, %v2583
    %v3764 = vpack.c.b16 %v2588, %v2584
    %v3765 = vpack.c.b16 %v2593, %v2589
    %v3766 = vpack.c.b16 %v2594, %v2590
    %v3767 = vpack.c.b16 %v2595, %v2591
    %v3768 = vpack.c.b16 %v2596, %v2592
    %v3769 = vpack.c.b16 %v2601, %v2597
    %v3770 = vpack.c.b16 %v2602, %v2598
    %v3771 = vpack.c.b16 %v2603, %v2599
    %v3772 = vpack.c.b16 %v2604, %v2600
    %v3773 = vpack.c.b16 %v2609, %v2605
    %v3774 = vpack.c.b16 %v2610, %v2606
    %v3775 = vpack.c.b16 %v2611, %v2607
    %v3776 = vpack.c.b16 %v2612, %v2608
    %v3777 = vpack.c.b16 %v2617, %v2613
    %v3778 = vpack.c.b16 %v2618, %v2614
    %v3779 = vpack.c.b16 %v2619, %v2615
    %v3780 = vpack.c.b16 %v2620, %v2616
    %v3781 = vpack.c.b16 %v2625, %v2621
    %v3782 = vpack.c.b16 %v2626, %v2622
    %v3783 = vpack.c.b16 %v2627, %v2623
    %v3784 = vpack.c.b16 %v2628, %v2624
    %v3785 = vpack.c.b16 %v2633, %v2629
    %v3786 = vpack.c.b16 %v2634, %v2630
    %v3787 = vpack.c.b16 %v2635, %v2631
    %v3788 = vpack.c.b16 %v2636, %v2632
    %v3789 = vpack.c.b16 %v2641, %v2637
    %v3790 = vpack.c.b16 %v2642, %v2638
    %v3791 = vpack.c.b16 %v2643, %v2639
    %v3792 = vpack.c.b16 %v2644, %v2640
    %v3793 = vpack.c.b16 %v2649, %v2645
    %v3794 = vpack.c.b16 %v2650, %v2646
    %v3795 = vpack.c.b16 %v2651, %v2647
    %v3796 = vpack.c.b16 %v2652, %v2648
    %v3797 = vpack.c.b16 %v2657, %v2653
    %v3798 = vpack.c.b16 %v2658, %v2654
    %v3799 = vpack.c.b16 %v2659, %v2655
    %v3800 = vpack.c.b16 %v2660, %v2656
    %v3801 = vpack.c.b16 %v2665, %v2661
    %v3802 = vpack.c.b16 %v2666, %v2662
    %v3803 = vpack.c.b16 %v2667, %v2663
    %v3804 = vpack.c.b16 %v2668, %v2664
    %v3805 = vpack.c.b16 %v2673, %v2669
    %v3806 = vpack.c.b16 %v2674, %v2670
    %v3807 = vpack.c.b16 %v2675, %v2671
    %v3808 = vpack.c.b16 %v2676, %v2672
    %v3809 = vpack.c.b16 %v2681, %v2677
    %v3810 = vpack.c.b16 %v2682, %v2678
    %v3811 = vpack.c.b16 %v2683, %v2679
    %v3812 = vpack.c.b16 %v2684, %v2680
    %v3813 = vpack.c.b16 %v2689, %v2685
    %v3814 = vpack.c.b16 %v2690, %v2686
    %v3815 = vpack.c.b16 %v2691, %v2687
    %v3816 = vpack.c.b16 %v2692, %v2688
    %v3817 = vpack.c.b16 %v2697, %v2693
    %v3818 = vpack.c.b16 %v2698, %v2694
    %v3819 = vpack.c.b16 %v2699, %v2695
    %v3820 = vpack.c.b16 %v2700, %v2696
    %v3821 = vpack.c.b16 %v2705, %v2701
    %v3822 = vpack.c.b16 %v2706, %v2702
    %v3823 = vpack.c.b16 %v2707, %v2703
    %v3824 = vpack.c.b16 %v2708, %v2704
    %v3825 = vpack.c.b16 %v2713, %v2709
    %v3826 = vpack.c.b16 %v2714, %v2710
    %v3827 = vpack.c.b16 %v2715, %v2711
    %v3828 = vpack.c.b16 %v2716, %v2712
    %v3829 = vpack.c.b16 %v2721, %v2717
    %v3830 = vpack.c.b16 %v2722, %v2718
    %v3831 = vpack.c.b16 %v2723, %v2719
    %v3832 = vpack.c.b16 %v2724, %v2720
    %v3833 = vpack.c.b16 %v2729, %v2725
    %v3834 = vpack.c.b16 %v2730, %v2726
    %v3835 = vpack.c.b16 %v2731, %v2727
    %v3836 = vpack.c.b16 %v2732, %v2728
    %v3837 = vpack.c.b16 %v2737, %v2733
    %v3838 = vpack.c.b16 %v2738, %v2734
    %v3839 = vpack.c.b16 %v2739, %v2735
    %v3840 = vpack.c.b16 %v2740, %v2736
    %v3841 = vpack.c.b16 %v2745, %v2741
    %v3842 = vpack.c.b16 %v2746, %v2742
    %v3843 = vpack.c.b16 %v2747, %v2743
    %v3844 = vpack.c.b16 %v2748, %v2744
    %v3845 = vpack.c.b16 %v2753, %v2749
    %v3846 = vpack.c.b16 %v2754, %v2750
    %v3847 = vpack.c.b16 %v2755, %v2751
    %v3848 = vpack.c.b16 %v2756, %v2752
    %v3849 = vpack.c.b16 %v2761, %v2757
    %v3850 = vpack.c.b16 %v2762, %v2758
    %v3851 = vpack.c.b16 %v2763, %v2759
    %v3852 = vpack.c.b16 %v2764, %v2760
    %v3853 = vpack.c.b16 %v2769, %v2765
    %v3854 = vpack.c.b16 %v2770, %v2766
    %v3855 = vpack.c.b16 %v2771, %v2767
    %v3856 = vpack.c.b16 %v2772, %v2768
    %v3857 = vpack.c.b16 %v2777, %v2773
    %v3858 = vpack.c.b16 %v2778, %v2774
    %v3859 = vpack.c.b16 %v2779, %v2775
    %v3860 = vpack.c.b16 %v2780, %v2776
    %v3861 = vpack.c.b16 %v2785, %v2781
    %v3862 = vpack.c.b16 %v2786, %v2782
    %v3863 = vpack.c.b16 %v2787, %v2783
    %v3864 = vpack.c.b16 %v2788, %v2784
    %v3865 = vpack.c.b16 %v2793, %v2789
    %v3866 = vpack.c.b16 %v2794, %v2790
    %v3867 = vpack.c.b16 %v2795, %v2791
    %v3868 = vpack.c.b16 %v2796, %v2792
    %v3869 = vpack.c.b16 %v2801, %v2797
    %v3870 = vpack.c.b16 %v2802, %v2798
    %v3871 = vpack.c.b16 %v2803, %v2799
    %v3872 = vpack.c.b16 %v2804, %v2800
    %v3873 = vpack.c.b16 %v2809, %v2805
    %v3874 = vpack.c.b16 %v2810, %v2806
    %v3875 = vpack.c.b16 %v2811, %v2807
    %v3876 = vpack.c.b16 %v2812, %v2808
    %v3877 = vpack.c.b16 %v2817, %v2813
    %v3878 = vpack.c.b16 %v2818, %v2814
    %v3879 = vpack.c.b16 %v2819, %v2815
    %v3880 = vpack.c.b16 %v2820, %v2816
    %v3881 = vpack.c.b16 %v2825, %v2821
    %v3882 = vpack.c.b16 %v2826, %v2822
    %v3883 = vpack.c.b16 %v2827, %v2823
    %v3884 = vpack.c.b16 %v2828, %v2824
    %v3885 = vpack.c.b16 %v2833, %v2829
    %v3886 = vpack.c.b16 %v2834, %v2830
    %v3887 = vpack.c.b16 %v2835, %v2831
    %v3888 = vpack.c.b16 %v2836, %v2832
    %v3889 = vpack.c.b16 %v2841, %v2837
    %v3890 = vpack.c.b16 %v2842, %v2838
    %v3891 = vpack.c.b16 %v2843, %v2839
    %v3892 = vpack.c.b16 %v2844, %v2840
    %v3893 = vpack.c.b16 %v2849, %v2845
    %v3894 = vpack.c.b16 %v2850, %v2846
    %v3895 = vpack.c.b16 %v2851, %v2847
    %v3896 = vpack.c.b16 %v2852, %v2848
    %v3897 = vpack.c.b16 %v2857, %v2853
    %v3898 = vpack.c.b16 %v2858, %v2854
    %v3899 = vpack.c.b16 %v2859, %v2855
    %v3900 = vpack.c.b16 %v2860, %v2856
    %v3901 = vpack.c.b16 %v2865, %v2861
    %v3902 = vpack.c.b16 %v2866, %v2862
    %v3903 = vpack.c.b16 %v2867, %v2863
    %v3904 = vpack.c.b16 %v2868, %v2864
    %v3905 = vpack.c.b16 %v2873, %v2869
    %v3906 = vpack.c.b16 %v2874, %v2870
    %v3907 = vpack.c.b16 %v2875, %v2871
    %v3908 = vpack.c.b16 %v2876, %v2872
    %v3909 = vpack.c.b16 %v2881, %v2877
    %v3910 = vpack.c.b16 %v2882, %v2878
    %v3911 = vpack.c.b16 %v2883, %v2879
    %v3912 = vpack.c.b16 %v2884, %v2880
    %v3913 = vpack.c.b16 %v2889, %v2885
    %v3914 = vpack.c.b16 %v2890, %v2886
    %v3915 = vpack.c.b16 %v2891, %v2887
    %v3916 = vpack.c.b16 %v2892, %v2888
    %v3917 = vpack.c.b16 %v2897, %v2893
    %v3918 = vpack.c.b16 %v2898, %v2894
    %v3919 = vpack.c.b16 %v2899, %v2895
    %v3920 = vpack.c.b16 %v2900, %v2896
    %v3921 = vpack.c.b16 %v2905, %v2901
    %v3922 = vpack.c.b16 %v2906, %v2902
    %v3923 = vpack.c.b16 %v2907, %v2903
    %v3924 = vpack.c.b16 %v2908, %v2904
    %v3925 = vpack.c.b16 %v2913, %v2909
    %v3926 = vpack.c.b16 %v2914, %v2910
    %v3927 = vpack.c.b16 %v2915, %v2911
    %v3928 = vpack.c.b16 %v2916, %v2912
    %v3929 = vpack.c.b16 %v2921, %v2917
    %v3930 = vpack.c.b16 %v2922, %v2918
    %v3931 = vpack.c.b16 %v2923, %v2919
    %v3932 = vpack.c.b16 %v2924, %v2920
    %v3933 = vpack.c.b16 %v2929, %v2925
    %v3934 = vpack.c.b16 %v2930, %v2926
    %v3935 = vpack.c.b16 %v2931, %v2927
    %v3936 = vpack.c.b16 %v2932, %v2928
    %v3937 = vpack.c.b16 %v2937, %v2933
    %v3938 = vpack.c.b16 %v2938, %v2934
    %v3939 = vpack.c.b16 %v2939, %v2935
    %v3940 = vpack.c.b16 %v2940, %v2936
    %v3941 = vpack.c.b16 %v2945, %v2941
    %v3942 = vpack.c.b16 %v2946, %v2942
    %v3943 = vpack.c.b16 %v2947, %v2943
    %v3944 = vpack.c.b16 %v2948, %v2944
    %v3945 = vpack.c.b16 %v2953, %v2949
    %v3946 = vpack.c.b16 %v2954, %v2950
    %v3947 = vpack.c.b16 %v2955, %v2951
    %v3948 = vpack.c.b16 %v2956, %v2952
    %v3949 = vpack.c.b16 %v2961, %v2957
    %v3950 = vpack.c.b16 %v2962, %v2958
    %v3951 = vpack.c.b16 %v2963, %v2959
    %v3952 = vpack.c.b16 %v2964, %v2960
    %v3953 = vpack.c.b16 %v2969, %v2965
    %v3954 = vpack.c.b16 %v2970, %v2966
    %v3955 = vpack.c.b16 %v2971, %v2967
    %v3956 = vpack.c.b16 %v2972, %v2968
    %v3957 = vpack.c.b16 %v2977, %v2973
    %v3958 = vpack.c.b16 %v2978, %v2974
    %v3959 = vpack.c.b16 %v2979, %v2975
    %v3960 = vpack.c.b16 %v2980, %v2976
    %v3961 = vpack.c.b16 %v2985, %v2981
    %v3962 = vpack.c.b16 %v2986, %v2982
    %v3963 = vpack.c.b16 %v2987, %v2983
    %v3964 = vpack.c.b16 %v2988, %v2984
    %v3965 = vpack.c.b16 %v2993, %v2989
    %v3966 = vpack.c.b16 %v2994, %v2990
    %v3967 = vpack.c.b16 %v2995, %v2991
    %v3968 = vpack.c.b16 %v2996, %v2992
    %v3969 = vpack.c.b16 %v3001, %v2997
    %v3970 = vpack.c.b16 %v3002, %v2998
    %v3971 = vpack.c.b16 %v3003, %v2999
    %v3972 = vpack.c.b16 %v3004, %v3000
    %v3973 = vpack.c.b16 %v3009, %v3005
    %v3974 = vpack.c.b16 %v3010, %v3006
    %v3975 = vpack.c.b16 %v3011, %v3007
    %v3976 = vpack.c.b16 %v3012, %v3008
    %v3977 = vpack.c.b16 %v3017, %v3013
    %v3978 = vpack.c.b16 %v3018, %v3014
    %v3979 = vpack.c.b16 %v3019, %v3015
    %v3980 = vpack.c.b16 %v3020, %v3016
    %v3981 = vpack.c.b16 %v3025, %v3021
    %v3982 = vpack.c.b16 %v3026, %v3022
    %v3983 = vpack.c.b16 %v3027, %v3023
    %v3984 = vpack.c.b16 %v3028, %v3024
    %v3985 = vpack.c.b16 %v3033, %v3029
    %v3986 = vpack.c.b16 %v3034, %v3030
    %v3987 = vpack.c.b16 %v3035, %v3031
    %v3988 = vpack.c.b16 %v3036, %v3032
    %v3989 = vpack.c.b16 %v3041, %v3037
    %v3990 = vpack.c.b16 %v3042, %v3038
    %v3991 = vpack.c.b16 %v3043, %v3039
    %v3992 = vpack.c.b16 %v3044, %v3040
    %v3993 = vpack.c.b16 %v3049, %v3045
    %v3994 = vpack.c.b16 %v3050, %v3046
    %v3995 = vpack.c.b16 %v3051, %v3047
    %v3996 = vpack.c.b16 %v3052, %v3048
    %v3997 = vpack.c.b16 %v3057, %v3053
    %v3998 = vpack.c.b16 %v3058, %v3054
    %v3999 = vpack.c.b16 %v3059, %v3055
    %v4000 = vpack.c.b16 %v3060, %v3056
    %v4001 = vpack.c.b16 %v3065, %v3061
    %v4002 = vpack.c.b16 %v3066, %v3062
    %v4003 = vpack.c.b16 %v3067, %v3063
    %v4004 = vpack.c.b16 %v3068, %v3064
    %v4005 = vpack.c.b16 %v3073, %v3069
    %v4006 = vpack.c.b16 %v3074, %v3070
    %v4007 = vpack.c.b16 %v3075, %v3071
    %v4008 = vpack.c.b16 %v3076, %v3072
    %v4009 = vpack.c.b16 %v3081, %v3077
    %v4010 = vpack.c.b16 %v3082, %v3078
    %v4011 = vpack.c.b16 %v3083, %v3079
    %v4012 = vpack.c.b16 %v3084, %v3080
    %v4013 = vpack.c.b16 %v3089, %v3085
    %v4014 = vpack.c.b16 %v3090, %v3086
    %v4015 = vpack.c.b16 %v3091, %v3087
    %v4016 = vpack.c.b16 %v3092, %v3088
    %v4017 = vpack.c.b16 %v3097, %v3093
    %v4018 = vpack.c.b16 %v3098, %v3094
    %v4019 = vpack.c.b16 %v3099, %v3095
    %v4020 = vpack.c.b16 %v3100, %v3096
    %v4021 = vpack.c.b16 %v3105, %v3101
    %v4022 = vpack.c.b16 %v3106, %v3102
    %v4023 = vpack.c.b16 %v3107, %v3103
    %v4024 = vpack.c.b16 %v3108, %v3104
    %v4025 = vpack.c.b16 %v3113, %v3109
    %v4026 = vpack.c.b16 %v3114, %v3110
    %v4027 = vpack.c.b16 %v3115, %v3111
    %v4028 = vpack.c.b16 %v3116, %v3112
    %v4029 = vpack.c.b16 %v3121, %v3117
    %v4030 = vpack.c.b16 %v3122, %v3118
    %v4031 = vpack.c.b16 %v3123, %v3119
    %v4032 = vpack.c.b16 %v3124, %v3120
    %v4033 = vpack.c.b16 %v3129, %v3125
    %v4034 = vpack.c.b16 %v3130, %v3126
    %v4035 = vpack.c.b16 %v3131, %v3127
    %v4036 = vpack.c.b16 %v3132, %v3128
    %v4037 = vpack.c.b16 %v3137, %v3133
    %v4038 = vpack.c.b16 %v3138, %v3134
    %v4039 = vpack.c.b16 %v3139, %v3135
    %v4040 = vpack.c.b16 %v3140, %v3136
    %v4041 = vpack.c.b16 %v3145, %v3141
    %v4042 = vpack.c.b16 %v3146, %v3142
    %v4043 = vpack.c.b16 %v3147, %v3143
    %v4044 = vpack.c.b16 %v3148, %v3144
    %v4045 = vpack.c.b16 %v3153, %v3149
    %v4046 = vpack.c.b16 %v3154, %v3150
    %v4047 = vpack.c.b16 %v3155, %v3151
    %v4048 = vpack.c.b16 %v3156, %v3152
    %v4049 = vpack.c.b16 %v3161, %v3157
    %v4050 = vpack.c.b16 %v3162, %v3158
    %v4051 = vpack.c.b16 %v3163, %v3159
    %v4052 = vpack.c.b16 %v3164, %v3160
    %v4053 = vpack.c.b16 %v3169, %v3165
    %v4054 = vpack.c.b16 %v3170, %v3166
    %v4055 = vpack.c.b16 %v3171, %v3167
    %v4056 = vpack.c.b16 %v3172, %v3168
    %v4057 = vpack.c.b16 %v3177, %v3173
    %v4058 = vpack.c.b16 %v3178, %v3174
    %v4059 = vpack.c.b16 %v3179, %v3175
    %v4060 = vpack.c.b16 %v3180, %v3176
    %v4061 = vpack.c.b16 %v3185, %v3181
    %v4062 = vpack.c.b16 %v3186, %v3182
    %v4063 = vpack.c.b16 %v3187, %v3183
    %v4064 = vpack.c.b16 %v3188, %v3184
    %v4065 = vpack.c.b16 %v3193, %v3189
    %v4066 = vpack.c.b16 %v3194, %v3190
    %v4067 = vpack.c.b16 %v3195, %v3191
    %v4068 = vpack.c.b16 %v3196, %v3192
    %v4069 = vpack.c.b16 %v3201, %v3197
    %v4070 = vpack.c.b16 %v3202, %v3198
    %v4071 = vpack.c.b16 %v3203, %v3199
    %v4072 = vpack.c.b16 %v3204, %v3200
    %v4073 = vpack.c.b16 %v3209, %v3205
    %v4074 = vpack.c.b16 %v3210, %v3206
    %v4075 = vpack.c.b16 %v3211, %v3207
    %v4076 = vpack.c.b16 %v3212, %v3208
    %v4077 = vpack.c.b16 %v3217, %v3213
    %v4078 = vpack.c.b16 %v3218, %v3214
    %v4079 = vpack.c.b16 %v3219, %v3215
    %v4080 = vpack.c.b16 %v3220, %v3216
    %v4081 = vpack.c.b16 %v3225, %v3221
    %v4082 = vpack.c.b16 %v3226, %v3222
    %v4083 = vpack.c.b16 %v3227, %v3223
    %v4084 = vpack.c.b16 %v3228, %v3224
    %v4085 = vpack.c.b16 %v3233, %v3229
    %v4086 = vpack.c.b16 %v3234, %v3230
    %v4087 = vpack.c.b16 %v3235, %v3231
    %v4088 = vpack.c.b16 %v3236, %v3232
    %v4089 = vpack.c.b16 %v3241, %v3237
    %v4090 = vpack.c.b16 %v3242, %v3238
    %v4091 = vpack.c.b16 %v3243, %v3239
    %v4092 = vpack.c.b16 %v3244, %v3240
    %v4093 = vpack.c.b16 %v3249, %v3245
    %v4094 = vpack.c.b16 %v3250, %v3246
    %v4095 = vpack.c.b16 %v3251, %v3247
    %v4096 = vpack.c.b16 %v3252, %v3248
    %v4097 = vpack.c.b16 %v3257, %v3253
    %v4098 = vpack.c.b16 %v3258, %v3254
    %v4099 = vpack.c.b16 %v3259, %v3255
    %v4100 = vpack.c.b16 %v3260, %v3256
    %v4101 = vpack.c.b16 %v3265, %v3261
    %v4102 = vpack.c.b16 %v3266, %v3262
    %v4103 = vpack.c.b16 %v3267, %v3263
    %v4104 = vpack.c.b16 %v3268, %v3264
    %v4105 = vpack.c.b16 %v3273, %v3269
    %v4106 = vpack.c.b16 %v3274, %v3270
    %v4107 = vpack.c.b16 %v3275, %v3271
    %v4108 = vpack.c.b16 %v3276, %v3272
    %v4109 = vpack.c.b16 %v3281, %v3277
    %v4110 = vpack.c.b16 %v3282, %v3278
    %v4111 = vpack.c.b16 %v3283, %v3279
    %v4112 = vpack.c.b16 %v3284, %v3280
    %v4113 = vpack.c.b16 %v3289, %v3285
    %v4114 = vpack.c.b16 %v3290, %v3286
    %v4115 = vpack.c.b16 %v3291, %v3287
    %v4116 = vpack.c.b16 %v3292, %v3288
    %v4117 = vpack.c.b16 %v3297, %v3293
    %v4118 = vpack.c.b16 %v3298, %v3294
    %v4119 = vpack.c.b16 %v3299, %v3295
    %v4120 = vpack.c.b16 %v3300, %v3296
    %v4121 = vpack.c.b16 %v3305, %v3301
    %v4122 = vpack.c.b16 %v3306, %v3302
    %v4123 = vpack.c.b16 %v3307, %v3303
    %v4124 = vpack.c.b16 %v3308, %v3304
    %v4125 = vpack.c.b16 %v3313, %v3309
    %v4126 = vpack.c.b16 %v3314, %v3310
    %v4127 = vpack.c.b16 %v3315, %v3311
    %v4128 = vpack.c.b16 %v3316, %v3312
    %v4129 = vpack.c.b16 %v3321, %v3317
    %v4130 = vpack.c.b16 %v3322, %v3318
    %v4131 = vpack.c.b16 %v3323, %v3319
    %v4132 = vpack.c.b16 %v3324, %v3320
    %v4133 = vpack.c.b16 %v3329, %v3325
    %v4134 = vpack.c.b16 %v3330, %v3326
    %v4135 = vpack.c.b16 %v3331, %v3327
    %v4136 = vpack.c.b16 %v3332, %v3328
    %v4137 = vpack.c.b16 %v3337, %v3333
    %v4138 = vpack.c.b16 %v3338, %v3334
    %v4139 = vpack.c.b16 %v3339, %v3335
    %v4140 = vpack.c.b16 %v3340, %v3336
    %v4141 = vpack.c.b16 %v3345, %v3341
    %v4142 = vpack.c.b16 %v3346, %v3342
    %v4143 = vpack.c.b16 %v3347, %v3343
    %v4144 = vpack.c.b16 %v3348, %v3344
    %v4145 = vpack.c.b16 %v3353, %v3349
    %v4146 = vpack.c.b16 %v3354, %v3350
    %v4147 = vpack.c.b16 %v3355, %v3351
    %v4148 = vpack.c.b16 %v3356, %v3352
    %v4149 = vpack.c.b16 %v3361, %v3357
    %v4150 = vpack.c.b16 %v3362, %v3358
    %v4151 = vpack.c.b16 %v3363, %v3359
    %v4152 = vpack.c.b16 %v3364, %v3360
    %v4153 = vpack.c.b16 %v3369, %v3365
    %v4154 = vpack.c.b16 %v3370, %v3366
    %v4155 = vpack.c.b16 %v3371, %v3367
    %v4156 = vpack.c.b16 %v3372, %v3368
    %vm4941 = vcmask 523264
    %v4943 = vsel %vm4941, %v996, 0
    %4945 = vmatprep.subr.bf16.mxu0 %v3374
    %4946 = vmatpush1.bf16.msra.mxu0 %v3373
    %4947 = vmatprep.subr.bf16.mxu0 %v3378
    %4948 = vmatpush1.bf16.msra.mxu0 %v3377
    %4949 = vmatprep.subr.bf16.mxu0 %v3382
    %4950 = vmatpush1.bf16.msra.mxu0 %v3381
    %4951 = vmatprep.subr.bf16.mxu0 %v3386
    %4952 = vmatpush1.bf16.msra.mxu0 %v3385
    %4953 = vmatprep.subr.bf16.mxu0 %v3390
    %4954 = vmatpush1.bf16.msra.mxu0 %v3389
    %4955 = vmatprep.subr.bf16.mxu0 %v3394
    %4956 = vmatpush1.bf16.msra.mxu0 %v3393
    %4957 = vmatprep.subr.bf16.mxu0 %v3398
    %4958 = vmatpush1.bf16.msra.mxu0 %v3397
    %4959 = vmatprep.subr.bf16.mxu0 %v3402
    %4960 = vmatpush1.bf16.msra.mxu0 %v3401
    %4961 = vmatprep.subr.bf16.mxu0 %v3406
    %4962 = vmatpush1.bf16.msra.mxu0 %v3405
    %4963 = vmatprep.subr.bf16.mxu0 %v3410
    %4964 = vmatpush1.bf16.msra.mxu0 %v3409
    %4965 = vmatprep.subr.bf16.mxu0 %v3414
    %4966 = vmatpush1.bf16.msra.mxu0 %v3413
    %4967 = vmatprep.subr.bf16.mxu0 %v3418
    %4968 = vmatpush1.bf16.msra.mxu0 %v3417
    %4969 = vmatprep.subr.bf16.mxu0 %v3422
    %4970 = vmatpush1.bf16.msra.mxu0 %v3421
    %4971 = vmatprep.subr.bf16.mxu0 %v3426
    %4972 = vmatpush1.bf16.msra.mxu0 %v3425
    %4973 = vmatprep.subr.bf16.mxu0 %v3430
    %4974 = vmatpush1.bf16.msra.mxu0 %v3429
    %4975 = vmatprep.subr.bf16.mxu0 %v3434
    %4976 = vmatpush1.bf16.msra.mxu0 %v3433
    %4977 = vmatprep.mubr.bf16.mxu0 %v873
    %4978 = vmatmul.mubr.bf16.gmra.mrb[0].mxu0 %v859
    %v4979 = vpop.f32.mrb[0].mxu0
    %v4980 = vadd.f32 %v815, %v4979
    %v4981 = vpop.f32.mrb[0].mxu0
    %v4982 = vadd.f32 %v819, %v4981
    %v4983 = vpop.f32.mrb[0].mxu0
    %v4984 = vpop.f32.mrb[0].mxu0
    %4985 = vdwg.mxu0
    %4986 = vmatprep.subr.bf16.mxu0 %v3438
    %4987 = vmatpush1.bf16.msra.mxu0 %v3437
    %4988 = vmatprep.subr.bf16.mxu0 %v3442
    %4989 = vmatpush1.bf16.msra.mxu0 %v3441
    %4990 = vmatprep.subr.bf16.mxu0 %v3446
    %4991 = vmatpush1.bf16.msra.mxu0 %v3445
    %4992 = vmatprep.subr.bf16.mxu0 %v3450
    %4993 = vmatpush1.bf16.msra.mxu0 %v3449
    %4994 = vmatprep.subr.bf16.mxu0 %v3454
    %4995 = vmatpush1.bf16.msra.mxu0 %v3453
    %4996 = vmatprep.subr.bf16.mxu0 %v3458
    %4997 = vmatpush1.bf16.msra.mxu0 %v3457
    %4998 = vmatprep.subr.bf16.mxu0 %v3462
    %4999 = vmatpush1.bf16.msra.mxu0 %v3461
    %5000 = vmatprep.subr.bf16.mxu0 %v3466
    %5001 = vmatpush1.bf16.msra.mxu0 %v3465
    %5002 = vmatprep.subr.bf16.mxu0 %v3470
    %5003 = vmatpush1.bf16.msra.mxu0 %v3469
    %5004 = vmatprep.subr.bf16.mxu0 %v3474
    %5005 = vmatpush1.bf16.msra.mxu0 %v3473
    %5006 = vmatprep.subr.bf16.mxu0 %v3478
    %5007 = vmatpush1.bf16.msra.mxu0 %v3477
    %5008 = vmatprep.subr.bf16.mxu0 %v3482
    %5009 = vmatpush1.bf16.msra.mxu0 %v3481
    %5010 = vmatprep.subr.bf16.mxu0 %v3486
    %5011 = vmatpush1.bf16.msra.mxu0 %v3485
    %5012 = vmatprep.subr.bf16.mxu0 %v3490
    %5013 = vmatpush1.bf16.msra.mxu0 %v3489
    %5014 = vmatprep.subr.bf16.mxu0 %v3494
    %5015 = vmatpush1.bf16.msra.mxu0 %v3493
    %5016 = vmatprep.subr.bf16.mxu0 %v3498
    %5017 = vmatpush1.bf16.msra.mxu0 %v3497
    %5018 = vmatprep.mubr.bf16.mxu0 %v883
    %5019 = vmatmul.mubr.bf16.gmra.mrb[0].mxu0 %v881
    %v5020 = vpop.f32.mrb[0].mxu0
    %v5021 = vadd.f32 %v4980, %v5020
    %v5022 = vpop.f32.mrb[0].mxu0
    %v5023 = vadd.f32 %v4982, %v5022
    %v5024 = vpop.f32.mrb[0].mxu0
    %v5025 = vpop.f32.mrb[0].mxu0
    %5026 = vdwg.mxu0
    %5027 = vmatprep.subr.bf16.mxu0 %v3502
    %5028 = vmatpush1.bf16.msra.mxu0 %v3501
    %5029 = vmatprep.subr.bf16.mxu0 %v3506
    %5030 = vmatpush1.bf16.msra.mxu0 %v3505
    %5031 = vmatprep.subr.bf16.mxu0 %v3510
    %5032 = vmatpush1.bf16.msra.mxu0 %v3509
    %5033 = vmatprep.subr.bf16.mxu0 %v3514
    %5034 = vmatpush1.bf16.msra.mxu0 %v3513
    %5035 = vmatprep.subr.bf16.mxu0 %v3518
    %5036 = vmatpush1.bf16.msra.mxu0 %v3517
    %5037 = vmatprep.subr.bf16.mxu0 %v3522
    %5038 = vmatpush1.bf16.msra.mxu0 %v3521
    %5039 = vmatprep.subr.bf16.mxu0 %v3526
    %5040 = vmatpush1.bf16.msra.mxu0 %v3525
    %5041 = vmatprep.subr.bf16.mxu0 %v3530
    %5042 = vmatpush1.bf16.msra.mxu0 %v3529
    %5043 = vmatprep.subr.bf16.mxu0 %v3534
    %5044 = vmatpush1.bf16.msra.mxu0 %v3533
    %5045 = vmatprep.subr.bf16.mxu0 %v3538
    %5046 = vmatpush1.bf16.msra.mxu0 %v3537
    %5047 = vmatprep.subr.bf16.mxu0 %v3542
    %5048 = vmatpush1.bf16.msra.mxu0 %v3541
    %5049 = vmatprep.subr.bf16.mxu0 %v3546
    %5050 = vmatpush1.bf16.msra.mxu0 %v3545
    %5051 = vmatprep.subr.bf16.mxu0 %v3550
    %5052 = vmatpush1.bf16.msra.mxu0 %v3549
    %5053 = vmatprep.subr.bf16.mxu0 %v3554
    %5054 = vmatpush1.bf16.msra.mxu0 %v3553
    %5055 = vmatprep.subr.bf16.mxu0 %v3558
    %5056 = vmatpush1.bf16.msra.mxu0 %v3557
    %5057 = vmatprep.subr.bf16.mxu0 %v3562
    %5058 = vmatpush1.bf16.msra.mxu0 %v3561
    %5059 = vmatprep.mubr.bf16.mxu0 %v880
    %5060 = vmatmul.mubr.bf16.gmra.mrb[0].mxu0 %v866
    %v5061 = vpop.f32.mrb[0].mxu0
    %v5062 = vadd.f32 %v5021, %v5061
    %v5063 = vpop.f32.mrb[0].mxu0
    %v5064 = vadd.f32 %v5023, %v5063
    %v5065 = vpop.f32.mrb[0].mxu0
    %v5066 = vpop.f32.mrb[0].mxu0
    %5067 = vdwg.mxu0
    %5068 = vmatprep.subr.bf16.mxu0 %v3566
    %5069 = vmatpush1.bf16.msra.mxu0 %v3565
    %5070 = vmatprep.subr.bf16.mxu0 %v3570
    %5071 = vmatpush1.bf16.msra.mxu0 %v3569
    %5072 = vmatprep.subr.bf16.mxu0 %v3574
    %5073 = vmatpush1.bf16.msra.mxu0 %v3573
    %5074 = vmatprep.subr.bf16.mxu0 %v3578
    %5075 = vmatpush1.bf16.msra.mxu0 %v3577
    %5076 = vmatprep.subr.bf16.mxu0 %v3582
    %5077 = vmatpush1.bf16.msra.mxu0 %v3581
    %5078 = vmatprep.subr.bf16.mxu0 %v3586
    %5079 = vmatpush1.bf16.msra.mxu0 %v3585
    %5080 = vmatprep.subr.bf16.mxu0 %v3590
    %5081 = vmatpush1.bf16.msra.mxu0 %v3589
    %5082 = vmatprep.subr.bf16.mxu0 %v3594
    %5083 = vmatpush1.bf16.msra.mxu0 %v3593
    %5084 = vmatprep.subr.bf16.mxu0 %v3598
    %5085 = vmatpush1.bf16.msra.mxu0 %v3597
    %5086 = vmatprep.subr.bf16.mxu0 %v3602
    %5087 = vmatpush1.bf16.msra.mxu0 %v3601
    %5088 = vmatprep.subr.bf16.mxu0 %v3606
    %5089 = vmatpush1.bf16.msra.mxu0 %v3605
    %5090 = vmatprep.subr.bf16.mxu0 %v3610
    %5091 = vmatpush1.bf16.msra.mxu0 %v3609
    %5092 = vmatprep.subr.bf16.mxu0 %v3614
    %5093 = vmatpush1.bf16.msra.mxu0 %v3613
    %5094 = vmatprep.subr.bf16.mxu0 %v3618
    %5095 = vmatpush1.bf16.msra.mxu0 %v3617
    %5096 = vmatprep.subr.bf16.mxu0 %v3622
    %5097 = vmatpush1.bf16.msra.mxu0 %v3621
    %5098 = vmatprep.subr.bf16.mxu0 %v3626
    %5099 = vmatpush1.bf16.msra.mxu0 %v3625
    %5100 = vmatprep.mubr.bf16.mxu0 %v884
    %5101 = vmatmul.mubr.bf16.gmra.mrb[0].mxu0 %v882
    %v5102 = vpop.f32.mrb[0].mxu0
    %v5103 = vadd.f32 %v5062, %v5102
    %v5104 = vpop.f32.mrb[0].mxu0
    %v5105 = vadd.f32 %v5064, %v5104
    %v5106 = vpop.f32.mrb[0].mxu0
    %v5107 = vpop.f32.mrb[0].mxu0
    %5108 = vdwg.mxu0
    %5109 = vmatprep.subr.bf16.mxu0 %v3630
    %5110 = vmatpush1.bf16.msra.mxu0 %v3629
    %5111 = vmatprep.subr.bf16.mxu0 %v3634
    %5112 = vmatpush1.bf16.msra.mxu0 %v3633
    %5113 = vmatprep.subr.bf16.mxu0 %v3638
    %5114 = vmatpush1.bf16.msra.mxu0 %v3637
    %5115 = vmatprep.subr.bf16.mxu0 %v3642
    %5116 = vmatpush1.bf16.msra.mxu0 %v3641
    %5117 = vmatprep.subr.bf16.mxu0 %v3646
    %5118 = vmatpush1.bf16.msra.mxu0 %v3645
    %5119 = vmatprep.subr.bf16.mxu0 %v3650
    %5120 = vmatpush1.bf16.msra.mxu0 %v3649
    %5121 = vmatprep.subr.bf16.mxu0 %v3654
    %5122 = vmatpush1.bf16.msra.mxu0 %v3653
    %5123 = vmatprep.subr.bf16.mxu0 %v3658
    %5124 = vmatpush1.bf16.msra.mxu0 %v3657
    %5125 = vmatprep.subr.bf16.mxu0 %v3662
    %5126 = vmatpush1.bf16.msra.mxu0 %v3661
    %5127 = vmatprep.subr.bf16.mxu0 %v3666
    %5128 = vmatpush1.bf16.msra.mxu0 %v3665
    %5129 = vmatprep.subr.bf16.mxu0 %v3670
    %5130 = vmatpush1.bf16.msra.mxu0 %v3669
    %5131 = vmatprep.subr.bf16.mxu0 %v3674
    %5132 = vmatpush1.bf16.msra.mxu0 %v3673
    %5133 = vmatprep.subr.bf16.mxu0 %v3678
    %5134 = vmatpush1.bf16.msra.mxu0 %v3677
    %5135 = vmatprep.subr.bf16.mxu0 %v3682
    %5136 = vmatpush1.bf16.msra.mxu0 %v3681
    %5137 = vmatprep.subr.bf16.mxu0 %v3686
    %5138 = vmatpush1.bf16.msra.mxu0 %v3685
    %5139 = vmatprep.subr.bf16.mxu0 %v3690
    %5140 = vmatpush1.bf16.msra.mxu0 %v3689
    %5141 = vmatprep.mubr.bf16.mxu0 %v922
    %5142 = vmatmul.mubr.bf16.gmra.mrb[0].mxu0 %v908
    %v5143 = vpop.f32.mrb[0].mxu0
    %v5144 = vadd.f32 %v5103, %v5143
    %v5145 = vpop.f32.mrb[0].mxu0
    %v5146 = vadd.f32 %v5105, %v5145
    %v5147 = vpop.f32.mrb[0].mxu0
    %v5148 = vpop.f32.mrb[0].mxu0
    %5149 = vdwg.mxu0
    %5150 = vmatprep.subr.bf16.mxu0 %v3694
    %5151 = vmatpush1.bf16.msra.mxu0 %v3693
    %5152 = vmatprep.subr.bf16.mxu0 %v3698
    %5153 = vmatpush1.bf16.msra.mxu0 %v3697
    %5154 = vmatprep.subr.bf16.mxu0 %v3702
    %5155 = vmatpush1.bf16.msra.mxu0 %v3701
    %5156 = vmatprep.subr.bf16.mxu0 %v3706
    %5157 = vmatpush1.bf16.msra.mxu0 %v3705
    %5158 = vmatprep.subr.bf16.mxu0 %v3710
    %5159 = vmatpush1.bf16.msra.mxu0 %v3709
    %5160 = vmatprep.subr.bf16.mxu0 %v3714
    %5161 = vmatpush1.bf16.msra.mxu0 %v3713
    %5162 = vmatprep.subr.bf16.mxu0 %v3718
    %5163 = vmatpush1.bf16.msra.mxu0 %v3717
    %5164 = vmatprep.subr.bf16.mxu0 %v3722
    %5165 = vmatpush1.bf16.msra.mxu0 %v3721
    %5166 = vmatprep.subr.bf16.mxu0 %v3726
    %5167 = vmatpush1.bf16.msra.mxu0 %v3725
    %5168 = vmatprep.subr.bf16.mxu0 %v3730
    %5169 = vmatpush1.bf16.msra.mxu0 %v3729
    %5170 = vmatprep.subr.bf16.mxu0 %v3734
    %5171 = vmatpush1.bf16.msra.mxu0 %v3733
    %5172 = vmatprep.subr.bf16.mxu0 %v3738
    %5173 = vmatpush1.bf16.msra.mxu0 %v3737
    %5174 = vmatprep.subr.bf16.mxu0 %v3742
    %5175 = vmatpush1.bf16.msra.mxu0 %v3741
    %5176 = vmatprep.subr.bf16.mxu0 %v3746
    %5177 = vmatpush1.bf16.msra.mxu0 %v3745
    %5178 = vmatprep.subr.bf16.mxu0 %v3750
    %5179 = vmatpush1.bf16.msra.mxu0 %v3749
    %5180 = vmatprep.subr.bf16.mxu0 %v3754
    %5181 = vmatpush1.bf16.msra.mxu0 %v3753
    %5182 = vmatprep.mubr.bf16.mxu0 %v932
    %5183 = vmatmul.mubr.bf16.gmra.mrb[0].mxu0 %v930
    %v5184 = vpop.f32.mrb[0].mxu0
    %v5185 = vadd.f32 %v5144, %v5184
    %v5186 = vpop.f32.mrb[0].mxu0
    %v5187 = vadd.f32 %v5146, %v5186
    %v5188 = vpop.f32.mrb[0].mxu0
    %v5189 = vpop.f32.mrb[0].mxu0
    %5190 = vdwg.mxu0
    %5191 = vmatprep.subr.bf16.mxu0 %v3758
    %5192 = vmatpush1.bf16.msra.mxu0 %v3757
    %5193 = vmatprep.subr.bf16.mxu0 %v3762
    %5194 = vmatpush1.bf16.msra.mxu0 %v3761
    %5195 = vmatprep.subr.bf16.mxu0 %v3766
    %5196 = vmatpush1.bf16.msra.mxu0 %v3765
    %5197 = vmatprep.subr.bf16.mxu0 %v3770
    %5198 = vmatpush1.bf16.msra.mxu0 %v3769
    %5199 = vmatprep.subr.bf16.mxu0 %v3774
    %5200 = vmatpush1.bf16.msra.mxu0 %v3773
    %5201 = vmatprep.subr.bf16.mxu0 %v3778
    %5202 = vmatpush1.bf16.msra.mxu0 %v3777
    %5203 = vmatprep.subr.bf16.mxu0 %v3782
    %5204 = vmatpush1.bf16.msra.mxu0 %v3781
    %5205 = vmatprep.subr.bf16.mxu0 %v3786
    %5206 = vmatpush1.bf16.msra.mxu0 %v3785
    %5207 = vmatprep.subr.bf16.mxu0 %v3790
    %5208 = vmatpush1.bf16.msra.mxu0 %v3789
    %5209 = vmatprep.subr.bf16.mxu0 %v3794
    %5210 = vmatpush1.bf16.msra.mxu0 %v3793
    %5211 = vmatprep.subr.bf16.mxu0 %v3798
    %5212 = vmatpush1.bf16.msra.mxu0 %v3797
    %5213 = vmatprep.subr.bf16.mxu0 %v3802
    %5214 = vmatpush1.bf16.msra.mxu0 %v3801
    %5215 = vmatprep.subr.bf16.mxu0 %v3806
    %5216 = vmatpush1.bf16.msra.mxu0 %v3805
    %5217 = vmatprep.subr.bf16.mxu0 %v3810
    %5218 = vmatpush1.bf16.msra.mxu0 %v3809
    %5219 = vmatprep.subr.bf16.mxu0 %v3814
    %5220 = vmatpush1.bf16.msra.mxu0 %v3813
    %5221 = vmatprep.subr.bf16.mxu0 %v3818
    %5222 = vmatpush1.bf16.msra.mxu0 %v3817
    %5223 = vmatprep.mubr.bf16.mxu0 %v929
    %5224 = vmatmul.mubr.bf16.gmra.mrb[0].mxu0 %v915
    %v5225 = vpop.f32.mrb[0].mxu0
    %v5226 = vadd.f32 %v5185, %v5225
    %v5227 = vpop.f32.mrb[0].mxu0
    %v5228 = vadd.f32 %v5187, %v5227
    %v5229 = vpop.f32.mrb[0].mxu0
    %v5230 = vpop.f32.mrb[0].mxu0
    %5231 = vdwg.mxu0
    %5232 = vmatprep.subr.bf16.mxu0 %v3822
    %5233 = vmatpush1.bf16.msra.mxu0 %v3821
    %5234 = vmatprep.subr.bf16.mxu0 %v3826
    %5235 = vmatpush1.bf16.msra.mxu0 %v3825
    %5236 = vmatprep.subr.bf16.mxu0 %v3830
    %5237 = vmatpush1.bf16.msra.mxu0 %v3829
    %5238 = vmatprep.subr.bf16.mxu0 %v3834
    %5239 = vmatpush1.bf16.msra.mxu0 %v3833
    %5240 = vmatprep.subr.bf16.mxu0 %v3838
    %5241 = vmatpush1.bf16.msra.mxu0 %v3837
    %5242 = vmatprep.subr.bf16.mxu0 %v3842
    %5243 = vmatpush1.bf16.msra.mxu0 %v3841
    %5244 = vmatprep.subr.bf16.mxu0 %v3846
    %5245 = vmatpush1.bf16.msra.mxu0 %v3845
    %5246 = vmatprep.subr.bf16.mxu0 %v3850
    %5247 = vmatpush1.bf16.msra.mxu0 %v3849
    %5248 = vmatprep.subr.bf16.mxu0 %v3854
    %5249 = vmatpush1.bf16.msra.mxu0 %v3853
    %5250 = vmatprep.subr.bf16.mxu0 %v3858
    %5251 = vmatpush1.bf16.msra.mxu0 %v3857
    %5252 = vmatprep.subr.bf16.mxu0 %v3862
    %5253 = vmatpush1.bf16.msra.mxu0 %v3861
    %5254 = vmatprep.subr.bf16.mxu0 %v3866
    %5255 = vmatpush1.bf16.msra.mxu0 %v3865
    %5256 = vmatprep.subr.bf16.mxu0 %v3870
    %5257 = vmatpush1.bf16.msra.mxu0 %v3869
    %5258 = vmatprep.subr.bf16.mxu0 %v3874
    %5259 = vmatpush1.bf16.msra.mxu0 %v3873
    %5260 = vmatprep.subr.bf16.mxu0 %v3878
    %5261 = vmatpush1.bf16.msra.mxu0 %v3877
    %5262 = vmatprep.subr.bf16.mxu0 %v3882
    %5263 = vmatpush1.bf16.msra.mxu0 %v3881
    %5264 = vmatprep.mubr.bf16.mxu0 %v933
    %5265 = vmatmul.mubr.bf16.gmra.mrb[0].mxu0 %v931
    %v5266 = vpop.f32.mrb[0].mxu0
    %v5267 = vadd.f32 %v5226, %v5266
    %v5268 = vpop.f32.mrb[0].mxu0
    %v5269 = vadd.f32 %v5228, %v5268
    %v5270 = vpop.f32.mrb[0].mxu0
    %v5271 = vpop.f32.mrb[0].mxu0
    %5272 = vdwg.mxu0
    %5273 = vmatprep.subr.bf16.mxu0 %v3886
    %5274 = vmatpush1.bf16.msra.mxu0 %v3885
    %5275 = vmatprep.subr.bf16.mxu0 %v3890
    %5276 = vmatpush1.bf16.msra.mxu0 %v3889
    %5277 = vmatprep.subr.bf16.mxu0 %v3894
    %5278 = vmatpush1.bf16.msra.mxu0 %v3893
    %5279 = vmatprep.subr.bf16.mxu0 %v3898
    %5280 = vmatpush1.bf16.msra.mxu0 %v3897
    %5281 = vmatprep.subr.bf16.mxu0 %v3902
    %5282 = vmatpush1.bf16.msra.mxu0 %v3901
    %5283 = vmatprep.subr.bf16.mxu0 %v3906
    %5284 = vmatpush1.bf16.msra.mxu0 %v3905
    %5285 = vmatprep.subr.bf16.mxu0 %v3910
    %5286 = vmatpush1.bf16.msra.mxu0 %v3909
    %5287 = vmatprep.subr.bf16.mxu0 %v3914
    %5288 = vmatpush1.bf16.msra.mxu0 %v3913
    %5289 = vmatprep.subr.bf16.mxu0 %v3918
    %5290 = vmatpush1.bf16.msra.mxu0 %v3917
    %5291 = vmatprep.subr.bf16.mxu0 %v3922
    %5292 = vmatpush1.bf16.msra.mxu0 %v3921
    %5293 = vmatprep.subr.bf16.mxu0 %v3926
    %5294 = vmatpush1.bf16.msra.mxu0 %v3925
    %5295 = vmatprep.subr.bf16.mxu0 %v3930
    %5296 = vmatpush1.bf16.msra.mxu0 %v3929
    %5297 = vmatprep.subr.bf16.mxu0 %v3934
    %5298 = vmatpush1.bf16.msra.mxu0 %v3933
    %5299 = vmatprep.subr.bf16.mxu0 %v3938
    %5300 = vmatpush1.bf16.msra.mxu0 %v3937
    %5301 = vmatprep.subr.bf16.mxu0 %v3942
    %5302 = vmatpush1.bf16.msra.mxu0 %v3941
    %5303 = vmatprep.subr.bf16.mxu0 %v3946
    %5304 = vmatpush1.bf16.msra.mxu0 %v3945
    %5305 = vmatprep.mubr.bf16.mxu0 %v971
    %5306 = vmatmul.mubr.bf16.gmra.mrb[0].mxu0 %v957
    %v5307 = vpop.f32.mrb[0].mxu0
    %v5308 = vadd.f32 %v5267, %v5307
    %v5309 = vpop.f32.mrb[0].mxu0
    %v5310 = vadd.f32 %v5269, %v5309
    %v5311 = vpop.f32.mrb[0].mxu0
    %v5312 = vpop.f32.mrb[0].mxu0
    %5313 = vdwg.mxu0
    %5314 = vmatprep.subr.bf16.mxu0 %v3950
    %5315 = vmatpush1.bf16.msra.mxu0 %v3949
    %5316 = vmatprep.subr.bf16.mxu0 %v3954
    %5317 = vmatpush1.bf16.msra.mxu0 %v3953
    %5318 = vmatprep.subr.bf16.mxu0 %v3958
    %5319 = vmatpush1.bf16.msra.mxu0 %v3957
    %5320 = vmatprep.subr.bf16.mxu0 %v3962
    %5321 = vmatpush1.bf16.msra.mxu0 %v3961
    %5322 = vmatprep.subr.bf16.mxu0 %v3966
    %5323 = vmatpush1.bf16.msra.mxu0 %v3965
    %5324 = vmatprep.subr.bf16.mxu0 %v3970
    %5325 = vmatpush1.bf16.msra.mxu0 %v3969
    %5326 = vmatprep.subr.bf16.mxu0 %v3974
    %5327 = vmatpush1.bf16.msra.mxu0 %v3973
    %5328 = vmatprep.subr.bf16.mxu0 %v3978
    %5329 = vmatpush1.bf16.msra.mxu0 %v3977
    %5330 = vmatprep.subr.bf16.mxu0 %v3982
    %5331 = vmatpush1.bf16.msra.mxu0 %v3981
    %5332 = vmatprep.subr.bf16.mxu0 %v3986
    %5333 = vmatpush1.bf16.msra.mxu0 %v3985
    %5334 = vmatprep.subr.bf16.mxu0 %v3990
    %5335 = vmatpush1.bf16.msra.mxu0 %v3989
    %5336 = vmatprep.subr.bf16.mxu0 %v3994
    %5337 = vmatpush1.bf16.msra.mxu0 %v3993
    %5338 = vmatprep.subr.bf16.mxu0 %v3998
    %5339 = vmatpush1.bf16.msra.mxu0 %v3997
    %5340 = vmatprep.subr.bf16.mxu0 %v4002
    %5341 = vmatpush1.bf16.msra.mxu0 %v4001
    %5342 = vmatprep.subr.bf16.mxu0 %v4006
    %5343 = vmatpush1.bf16.msra.mxu0 %v4005
    %5344 = vmatprep.subr.bf16.mxu0 %v4010
    %5345 = vmatpush1.bf16.msra.mxu0 %v4009
    %5346 = vmatprep.mubr.bf16.mxu0 %v981
    %5347 = vmatmul.mubr.bf16.gmra.mrb[0].mxu0 %v979
    %v5348 = vpop.f32.mrb[0].mxu0
    %v5349 = vadd.f32 %v5308, %v5348
    %v5350 = vpop.f32.mrb[0].mxu0
    %v5351 = vadd.f32 %v5310, %v5350
    %v5352 = vpop.f32.mrb[0].mxu0
    %v5353 = vpop.f32.mrb[0].mxu0
    %5354 = vdwg.mxu0
    %5355 = vmatprep.subr.bf16.mxu0 %v4014
    %5356 = vmatpush1.bf16.msra.mxu0 %v4013
    %5357 = vmatprep.subr.bf16.mxu0 %v4018
    %5358 = vmatpush1.bf16.msra.mxu0 %v4017
    %5359 = vmatprep.subr.bf16.mxu0 %v4022
    %5360 = vmatpush1.bf16.msra.mxu0 %v4021
    %5361 = vmatprep.subr.bf16.mxu0 %v4026
    %5362 = vmatpush1.bf16.msra.mxu0 %v4025
    %5363 = vmatprep.subr.bf16.mxu0 %v4030
    %5364 = vmatpush1.bf16.msra.mxu0 %v4029
    %5365 = vmatprep.subr.bf16.mxu0 %v4034
    %5366 = vmatpush1.bf16.msra.mxu0 %v4033
    %5367 = vmatprep.subr.bf16.mxu0 %v4038
    %5368 = vmatpush1.bf16.msra.mxu0 %v4037
    %5369 = vmatprep.subr.bf16.mxu0 %v4042
    %5370 = vmatpush1.bf16.msra.mxu0 %v4041
    %5371 = vmatprep.subr.bf16.mxu0 %v4046
    %5372 = vmatpush1.bf16.msra.mxu0 %v4045
    %5373 = vmatprep.subr.bf16.mxu0 %v4050
    %5374 = vmatpush1.bf16.msra.mxu0 %v4049
    %5375 = vmatprep.subr.bf16.mxu0 %v4054
    %5376 = vmatpush1.bf16.msra.mxu0 %v4053
    %5377 = vmatprep.subr.bf16.mxu0 %v4058
    %5378 = vmatpush1.bf16.msra.mxu0 %v4057
    %5379 = vmatprep.subr.bf16.mxu0 %v4062
    %5380 = vmatpush1.bf16.msra.mxu0 %v4061
    %5381 = vmatprep.subr.bf16.mxu0 %v4066
    %5382 = vmatpush1.bf16.msra.mxu0 %v4065
    %5383 = vmatprep.subr.bf16.mxu0 %v4070
    %5384 = vmatpush1.bf16.msra.mxu0 %v4069
    %5385 = vmatprep.subr.bf16.mxu0 %v4074
    %5386 = vmatpush1.bf16.msra.mxu0 %v4073
    %5387 = vmatprep.mubr.bf16.mxu0 %v978
    %5388 = vmatmul.mubr.bf16.gmra.mrb[0].mxu0 %v964
    %v5389 = vpop.f32.mrb[0].mxu0
    %v5390 = vadd.f32 %v5349, %v5389
    %v5391 = vpop.f32.mrb[0].mxu0
    %v5392 = vadd.f32 %v5351, %v5391
    %v5393 = vpop.f32.mrb[0].mxu0
    %v5394 = vpop.f32.mrb[0].mxu0
    %5395 = vdwg.mxu0
    %5396 = vmatprep.subr.bf16.mxu0 %v4078
    %5397 = vmatpush1.bf16.msra.mxu0 %v4077
    %5398 = vmatprep.subr.bf16.mxu0 %v4082
    %5399 = vmatpush1.bf16.msra.mxu0 %v4081
    %5400 = vmatprep.subr.bf16.mxu0 %v4086
    %5401 = vmatpush1.bf16.msra.mxu0 %v4085
    %5402 = vmatprep.subr.bf16.mxu0 %v4090
    %5403 = vmatpush1.bf16.msra.mxu0 %v4089
    %5404 = vmatprep.subr.bf16.mxu0 %v4094
    %5405 = vmatpush1.bf16.msra.mxu0 %v4093
    %5406 = vmatprep.subr.bf16.mxu0 %v4098
    %5407 = vmatpush1.bf16.msra.mxu0 %v4097
    %5408 = vmatprep.subr.bf16.mxu0 %v4102
    %5409 = vmatpush1.bf16.msra.mxu0 %v4101
    %5410 = vmatprep.subr.bf16.mxu0 %v4106
    %5411 = vmatpush1.bf16.msra.mxu0 %v4105
    %5412 = vmatprep.subr.bf16.mxu0 %v4110
    %5413 = vmatpush1.bf16.msra.mxu0 %v4109
    %5414 = vmatprep.subr.bf16.mxu0 %v4114
    %5415 = vmatpush1.bf16.msra.mxu0 %v4113
    %5416 = vmatprep.subr.bf16.mxu0 %v4118
    %5417 = vmatpush1.bf16.msra.mxu0 %v4117
    %5418 = vmatprep.subr.bf16.mxu0 %v4122
    %5419 = vmatpush1.bf16.msra.mxu0 %v4121
    %5420 = vmatprep.subr.bf16.mxu0 %v4126
    %5421 = vmatpush1.bf16.msra.mxu0 %v4125
    %5422 = vmatprep.subr.bf16.mxu0 %v4130
    %5423 = vmatpush1.bf16.msra.mxu0 %v4129
    %5424 = vmatprep.subr.bf16.mxu0 %v4134
    %5425 = vmatpush1.bf16.msra.mxu0 %v4133
    %5426 = vmatprep.subr.bf16.mxu0 %v4138
    %5427 = vmatpush1.bf16.msra.mxu0 %v4137
    %5428 = vmatprep.mubr.bf16.mxu0 %v982
    %5429 = vmatmul.mubr.bf16.gmra.mrb[0].mxu0 %v980
    %v5430 = vpop.f32.mrb[0].mxu0
    %v5431 = vadd.f32 %v5390, %v5430
    %v5432 = vpop.f32.mrb[0].mxu0
    %v5433 = vadd.f32 %v5392, %v5432
    %v5434 = vpop.f32.mrb[0].mxu0
    %v5435 = vpop.f32.mrb[0].mxu0
    %5436 = vdwg.mxu0
    %5437 = vmatprep.subr.bf16.mxu0 %v4142
    %5438 = vmatpush1.bf16.msra.mxu0 %v4141
    %5439 = vmatprep.subr.bf16.mxu0 %v4146
    %5440 = vmatpush1.bf16.msra.mxu0 %v4145
    %5441 = vmatprep.subr.bf16.mxu0 %v4150
    %5442 = vmatpush1.bf16.msra.mxu0 %v4149
    %5443 = vmatprep.subr.bf16.mxu0 %v4154
    %5444 = vmatpush1.bf16.msra.mxu0 %v4153
    %5445 = vmatprep.subr.bf16.mxu0 0
    %5446 = vmatpush1.bf16.msra.mxu0 0
    %5447 = vmatprep.subr.bf16.mxu0 0
    %5448 = vmatpush1.bf16.msra.mxu0 0
    %5449 = vmatprep.subr.bf16.mxu0 0
    %5450 = vmatpush1.bf16.msra.mxu0 0
    %5451 = vmatprep.subr.bf16.mxu0 0
    %5452 = vmatpush1.bf16.msra.mxu0 0
    %5453 = vmatprep.subr.bf16.mxu0 0
    %5454 = vmatpush1.bf16.msra.mxu0 0
    %5455 = vmatprep.subr.bf16.mxu0 0
    %5456 = vmatpush1.bf16.msra.mxu0 0
    %5457 = vmatprep.subr.bf16.mxu0 0
    %5458 = vmatpush1.bf16.msra.mxu0 0
    %5459 = vmatprep.subr.bf16.mxu0 0
    %5460 = vmatpush1.bf16.msra.mxu0 0
    %5461 = vmatprep.subr.bf16.mxu0 0
    %5462 = vmatpush1.bf16.msra.mxu0 0
    %5463 = vmatprep.subr.bf16.mxu0 0
    %5464 = vmatpush1.bf16.msra.mxu0 0
    %5465 = vmatprep.subr.bf16.mxu0 0
    %5466 = vmatpush1.bf16.msra.mxu0 0
    %5467 = vmatprep.subr.bf16.mxu0 0
    %5468 = vmatpush1.bf16.msra.mxu0 0
    %5469 = vmatprep.mubr.bf16.mxu0 0
    %5470 = vmatmul.mubr.bf16.gmra.mrb[0].mxu0 %v4943
    %v5471 = vpop.f32.mrb[0].mxu0
    %v5472 = vadd.f32 %v5431, %v5471
    %v5473 = vpop.f32.mrb[0].mxu0
    %v5474 = vadd.f32 %v5433, %v5473
    %v5475 = vpop.f32.mrb[0].mxu0
    %v5476 = vpop.f32.mrb[0].mxu0
    %5477 = vdwg.mxu0
    %5478 = vmatprep.subr.bf16.mxu0 %v3376
    %5479 = vmatpush1.bf16.msra.mxu0 %v3375
    %5480 = vmatprep.subr.bf16.mxu0 %v3380
    %5481 = vmatpush1.bf16.msra.mxu0 %v3379
    %5482 = vmatprep.subr.bf16.mxu0 %v3384
    %5483 = vmatpush1.bf16.msra.mxu0 %v3383
    %5484 = vmatprep.subr.bf16.mxu0 %v3388
    %5485 = vmatpush1.bf16.msra.mxu0 %v3387
    %5486 = vmatprep.subr.bf16.mxu0 %v3392
    %5487 = vmatpush1.bf16.msra.mxu0 %v3391
    %5488 = vmatprep.subr.bf16.mxu0 %v3396
    %5489 = vmatpush1.bf16.msra.mxu0 %v3395
    %5490 = vmatprep.subr.bf16.mxu0 %v3400
    %5491 = vmatpush1.bf16.msra.mxu0 %v3399
    %5492 = vmatprep.subr.bf16.mxu0 %v3404
    %5493 = vmatpush1.bf16.msra.mxu0 %v3403
    %5494 = vmatprep.subr.bf16.mxu0 %v3408
    %5495 = vmatpush1.bf16.msra.mxu0 %v3407
    %5496 = vmatprep.subr.bf16.mxu0 %v3412
    %5497 = vmatpush1.bf16.msra.mxu0 %v3411
    %5498 = vmatprep.subr.bf16.mxu0 %v3416
    %5499 = vmatpush1.bf16.msra.mxu0 %v3415
    %5500 = vmatprep.subr.bf16.mxu0 %v3420
    %5501 = vmatpush1.bf16.msra.mxu0 %v3419
    %5502 = vmatprep.subr.bf16.mxu0 %v3424
    %5503 = vmatpush1.bf16.msra.mxu0 %v3423
    %5504 = vmatprep.subr.bf16.mxu0 %v3428
    %5505 = vmatpush1.bf16.msra.mxu0 %v3427
    %5506 = vmatprep.subr.bf16.mxu0 %v3432
    %5507 = vmatpush1.bf16.msra.mxu0 %v3431
    %5508 = vmatprep.subr.bf16.mxu0 %v3436
    %5509 = vmatpush1.bf16.msra.mxu0 %v3435
    %5510 = vmatprep.mubr.bf16.mxu0 %v873
    %5511 = vmatmul.mubr.bf16.gmra.mrb[0].mxu0 %v859
    %v5512 = vpop.f32.mrb[0].mxu0
    %v5513 = vadd.f32 %v823, %v5512
    %v5514 = vpop.f32.mrb[0].mxu0
    %v5515 = vadd.f32 %v827, %v5514
    %v5516 = vpop.f32.mrb[0].mxu0
    %v5517 = vpop.f32.mrb[0].mxu0
    %5518 = vdwg.mxu0
    %5519 = vmatprep.subr.bf16.mxu0 %v3440
    %5520 = vmatpush1.bf16.msra.mxu0 %v3439
    %5521 = vmatprep.subr.bf16.mxu0 %v3444
    %5522 = vmatpush1.bf16.msra.mxu0 %v3443
    %5523 = vmatprep.subr.bf16.mxu0 %v3448
    %5524 = vmatpush1.bf16.msra.mxu0 %v3447
    %5525 = vmatprep.subr.bf16.mxu0 %v3452
    %5526 = vmatpush1.bf16.msra.mxu0 %v3451
    %5527 = vmatprep.subr.bf16.mxu0 %v3456
    %5528 = vmatpush1.bf16.msra.mxu0 %v3455
    %5529 = vmatprep.subr.bf16.mxu0 %v3460
    %5530 = vmatpush1.bf16.msra.mxu0 %v3459
    %5531 = vmatprep.subr.bf16.mxu0 %v3464
    %5532 = vmatpush1.bf16.msra.mxu0 %v3463
    %5533 = vmatprep.subr.bf16.mxu0 %v3468
    %5534 = vmatpush1.bf16.msra.mxu0 %v3467
    %5535 = vmatprep.subr.bf16.mxu0 %v3472
    %5536 = vmatpush1.bf16.msra.mxu0 %v3471
    %5537 = vmatprep.subr.bf16.mxu0 %v3476
    %5538 = vmatpush1.bf16.msra.mxu0 %v3475
    %5539 = vmatprep.subr.bf16.mxu0 %v3480
    %5540 = vmatpush1.bf16.msra.mxu0 %v3479
    %5541 = vmatprep.subr.bf16.mxu0 %v3484
    %5542 = vmatpush1.bf16.msra.mxu0 %v3483
    %5543 = vmatprep.subr.bf16.mxu0 %v3488
    %5544 = vmatpush1.bf16.msra.mxu0 %v3487
    %5545 = vmatprep.subr.bf16.mxu0 %v3492
    %5546 = vmatpush1.bf16.msra.mxu0 %v3491
    %5547 = vmatprep.subr.bf16.mxu0 %v3496
    %5548 = vmatpush1.bf16.msra.mxu0 %v3495
    %5549 = vmatprep.subr.bf16.mxu0 %v3500
    %5550 = vmatpush1.bf16.msra.mxu0 %v3499
    %5551 = vmatprep.mubr.bf16.mxu0 %v883
    %5552 = vmatmul.mubr.bf16.gmra.mrb[0].mxu0 %v881
    %v5553 = vpop.f32.mrb[0].mxu0
    %v5554 = vadd.f32 %v5513, %v5553
    %v5555 = vpop.f32.mrb[0].mxu0
    %v5556 = vadd.f32 %v5515, %v5555
    %v5557 = vpop.f32.mrb[0].mxu0
    %v5558 = vpop.f32.mrb[0].mxu0
    %5559 = vdwg.mxu0
    %5560 = vmatprep.subr.bf16.mxu0 %v3504
    %5561 = vmatpush1.bf16.msra.mxu0 %v3503
    %5562 = vmatprep.subr.bf16.mxu0 %v3508
    %5563 = vmatpush1.bf16.msra.mxu0 %v3507
    %5564 = vmatprep.subr.bf16.mxu0 %v3512
    %5565 = vmatpush1.bf16.msra.mxu0 %v3511
    %5566 = vmatprep.subr.bf16.mxu0 %v3516
    %5567 = vmatpush1.bf16.msra.mxu0 %v3515
    %5568 = vmatprep.subr.bf16.mxu0 %v3520
    %5569 = vmatpush1.bf16.msra.mxu0 %v3519
    %5570 = vmatprep.subr.bf16.mxu0 %v3524
    %5571 = vmatpush1.bf16.msra.mxu0 %v3523
    %5572 = vmatprep.subr.bf16.mxu0 %v3528
    %5573 = vmatpush1.bf16.msra.mxu0 %v3527
    %5574 = vmatprep.subr.bf16.mxu0 %v3532
    %5575 = vmatpush1.bf16.msra.mxu0 %v3531
    %5576 = vmatprep.subr.bf16.mxu0 %v3536
    %5577 = vmatpush1.bf16.msra.mxu0 %v3535
    %5578 = vmatprep.subr.bf16.mxu0 %v3540
    %5579 = vmatpush1.bf16.msra.mxu0 %v3539
    %5580 = vmatprep.subr.bf16.mxu0 %v3544
    %5581 = vmatpush1.bf16.msra.mxu0 %v3543
    %5582 = vmatprep.subr.bf16.mxu0 %v3548
    %5583 = vmatpush1.bf16.msra.mxu0 %v3547
    %5584 = vmatprep.subr.bf16.mxu0 %v3552
    %5585 = vmatpush1.bf16.msra.mxu0 %v3551
    %5586 = vmatprep.subr.bf16.mxu0 %v3556
    %5587 = vmatpush1.bf16.msra.mxu0 %v3555
    %5588 = vmatprep.subr.bf16.mxu0 %v3560
    %5589 = vmatpush1.bf16.msra.mxu0 %v3559
    %5590 = vmatprep.subr.bf16.mxu0 %v3564
    %5591 = vmatpush1.bf16.msra.mxu0 %v3563
    %5592 = vmatprep.mubr.bf16.mxu0 %v880
    %5593 = vmatmul.mubr.bf16.gmra.mrb[0].mxu0 %v866
    %v5594 = vpop.f32.mrb[0].mxu0
    %v5595 = vadd.f32 %v5554, %v5594
    %v5596 = vpop.f32.mrb[0].mxu0
    %v5597 = vadd.f32 %v5556, %v5596
    %v5598 = vpop.f32.mrb[0].mxu0
    %v5599 = vpop.f32.mrb[0].mxu0
    %5600 = vdwg.mxu0
    %5601 = vmatprep.subr.bf16.mxu0 %v3568
    %5602 = vmatpush1.bf16.msra.mxu0 %v3567
    %5603 = vmatprep.subr.bf16.mxu0 %v3572
    %5604 = vmatpush1.bf16.msra.mxu0 %v3571
    %5605 = vmatprep.subr.bf16.mxu0 %v3576
    %5606 = vmatpush1.bf16.msra.mxu0 %v3575
    %5607 = vmatprep.subr.bf16.mxu0 %v3580
    %5608 = vmatpush1.bf16.msra.mxu0 %v3579
    %5609 = vmatprep.subr.bf16.mxu0 %v3584
    %5610 = vmatpush1.bf16.msra.mxu0 %v3583
    %5611 = vmatprep.subr.bf16.mxu0 %v3588
    %5612 = vmatpush1.bf16.msra.mxu0 %v3587
    %5613 = vmatprep.subr.bf16.mxu0 %v3592
    %5614 = vmatpush1.bf16.msra.mxu0 %v3591
    %5615 = vmatprep.subr.bf16.mxu0 %v3596
    %5616 = vmatpush1.bf16.msra.mxu0 %v3595
    %5617 = vmatprep.subr.bf16.mxu0 %v3600
    %5618 = vmatpush1.bf16.msra.mxu0 %v3599
    %5619 = vmatprep.subr.bf16.mxu0 %v3604
    %5620 = vmatpush1.bf16.msra.mxu0 %v3603
    %5621 = vmatprep.subr.bf16.mxu0 %v3608
    %5622 = vmatpush1.bf16.msra.mxu0 %v3607
    %5623 = vmatprep.subr.bf16.mxu0 %v3612
    %5624 = vmatpush1.bf16.msra.mxu0 %v3611
    %5625 = vmatprep.subr.bf16.mxu0 %v3616
    %5626 = vmatpush1.bf16.msra.mxu0 %v3615
    %5627 = vmatprep.subr.bf16.mxu0 %v3620
    %5628 = vmatpush1.bf16.msra.mxu0 %v3619
    %5629 = vmatprep.subr.bf16.mxu0 %v3624
    %5630 = vmatpush1.bf16.msra.mxu0 %v3623
    %5631 = vmatprep.subr.bf16.mxu0 %v3628
    %5632 = vmatpush1.bf16.msra.mxu0 %v3627
    %5633 = vmatprep.mubr.bf16.mxu0 %v884
    %5634 = vmatmul.mubr.bf16.gmra.mrb[0].mxu0 %v882
    %v5635 = vpop.f32.mrb[0].mxu0
    %v5636 = vadd.f32 %v5595, %v5635
    %v5637 = vpop.f32.mrb[0].mxu0
    %v5638 = vadd.f32 %v5597, %v5637
    %v5639 = vpop.f32.mrb[0].mxu0
    %v5640 = vpop.f32.mrb[0].mxu0
    %5641 = vdwg.mxu0
    %5642 = vmatprep.subr.bf16.mxu0 %v3632
    %5643 = vmatpush1.bf16.msra.mxu0 %v3631
    %5644 = vmatprep.subr.bf16.mxu0 %v3636
    %5645 = vmatpush1.bf16.msra.mxu0 %v3635
    %5646 = vmatprep.subr.bf16.mxu0 %v3640
    %5647 = vmatpush1.bf16.msra.mxu0 %v3639
    %5648 = vmatprep.subr.bf16.mxu0 %v3644
    %5649 = vmatpush1.bf16.msra.mxu0 %v3643
    %5650 = vmatprep.subr.bf16.mxu0 %v3648
    %5651 = vmatpush1.bf16.msra.mxu0 %v3647
    %5652 = vmatprep.subr.bf16.mxu0 %v3652
    %5653 = vmatpush1.bf16.msra.mxu0 %v3651
    %5654 = vmatprep.subr.bf16.mxu0 %v3656
    %5655 = vmatpush1.bf16.msra.mxu0 %v3655
    %5656 = vmatprep.subr.bf16.mxu0 %v3660
    %5657 = vmatpush1.bf16.msra.mxu0 %v3659
    %5658 = vmatprep.subr.bf16.mxu0 %v3664
    %5659 = vmatpush1.bf16.msra.mxu0 %v3663
    %5660 = vmatprep.subr.bf16.mxu0 %v3668
    %5661 = vmatpush1.bf16.msra.mxu0 %v3667
    %5662 = vmatprep.subr.bf16.mxu0 %v3672
    %5663 = vmatpush1.bf16.msra.mxu0 %v3671
    %5664 = vmatprep.subr.bf16.mxu0 %v3676
    %5665 = vmatpush1.bf16.msra.mxu0 %v3675
    %5666 = vmatprep.subr.bf16.mxu0 %v3680
    %5667 = vmatpush1.bf16.msra.mxu0 %v3679
    %5668 = vmatprep.subr.bf16.mxu0 %v3684
    %5669 = vmatpush1.bf16.msra.mxu0 %v3683
    %5670 = vmatprep.subr.bf16.mxu0 %v3688
    %5671 = vmatpush1.bf16.msra.mxu0 %v3687
    %5672 = vmatprep.subr.bf16.mxu0 %v3692
    %5673 = vmatpush1.bf16.msra.mxu0 %v3691
    %5674 = vmatprep.mubr.bf16.mxu0 %v922
    %5675 = vmatmul.mubr.bf16.gmra.mrb[0].mxu0 %v908
    %v5676 = vpop.f32.mrb[0].mxu0
    %v5677 = vadd.f32 %v5636, %v5676
    %v5678 = vpop.f32.mrb[0].mxu0
    %v5679 = vadd.f32 %v5638, %v5678
    %v5680 = vpop.f32.mrb[0].mxu0
    %v5681 = vpop.f32.mrb[0].mxu0
    %5682 = vdwg.mxu0
    %5683 = vmatprep.subr.bf16.mxu0 %v3696
    %5684 = vmatpush1.bf16.msra.mxu0 %v3695
    %5685 = vmatprep.subr.bf16.mxu0 %v3700
    %5686 = vmatpush1.bf16.msra.mxu0 %v3699
    %5687 = vmatprep.subr.bf16.mxu0 %v3704
    %5688 = vmatpush1.bf16.msra.mxu0 %v3703
    %5689 = vmatprep.subr.bf16.mxu0 %v3708
    %5690 = vmatpush1.bf16.msra.mxu0 %v3707
    %5691 = vmatprep.subr.bf16.mxu0 %v3712
    %5692 = vmatpush1.bf16.msra.mxu0 %v3711
    %5693 = vmatprep.subr.bf16.mxu0 %v3716
    %5694 = vmatpush1.bf16.msra.mxu0 %v3715
    %5695 = vmatprep.subr.bf16.mxu0 %v3720
    %5696 = vmatpush1.bf16.msra.mxu0 %v3719
    %5697 = vmatprep.subr.bf16.mxu0 %v3724
    %5698 = vmatpush1.bf16.msra.mxu0 %v3723
    %5699 = vmatprep.subr.bf16.mxu0 %v3728
    %5700 = vmatpush1.bf16.msra.mxu0 %v3727
    %5701 = vmatprep.subr.bf16.mxu0 %v3732
    %5702 = vmatpush1.bf16.msra.mxu0 %v3731
    %5703 = vmatprep.subr.bf16.mxu0 %v3736
    %5704 = vmatpush1.bf16.msra.mxu0 %v3735
    %5705 = vmatprep.subr.bf16.mxu0 %v3740
    %5706 = vmatpush1.bf16.msra.mxu0 %v3739
    %5707 = vmatprep.subr.bf16.mxu0 %v3744
    %5708 = vmatpush1.bf16.msra.mxu0 %v3743
    %5709 = vmatprep.subr.bf16.mxu0 %v3748
    %5710 = vmatpush1.bf16.msra.mxu0 %v3747
    %5711 = vmatprep.subr.bf16.mxu0 %v3752
    %5712 = vmatpush1.bf16.msra.mxu0 %v3751
    %5713 = vmatprep.subr.bf16.mxu0 %v3756
    %5714 = vmatpush1.bf16.msra.mxu0 %v3755
    %5715 = vmatprep.mubr.bf16.mxu0 %v932
    %5716 = vmatmul.mubr.bf16.gmra.mrb[0].mxu0 %v930
    %v5717 = vpop.f32.mrb[0].mxu0
    %v5718 = vadd.f32 %v5677, %v5717
    %v5719 = vpop.f32.mrb[0].mxu0
    %v5720 = vadd.f32 %v5679, %v5719
    %v5721 = vpop.f32.mrb[0].mxu0
    %v5722 = vpop.f32.mrb[0].mxu0
    %5723 = vdwg.mxu0
    %5724 = vmatprep.subr.bf16.mxu0 %v3760
    %5725 = vmatpush1.bf16.msra.mxu0 %v3759
    %5726 = vmatprep.subr.bf16.mxu0 %v3764
    %5727 = vmatpush1.bf16.msra.mxu0 %v3763
    %5728 = vmatprep.subr.bf16.mxu0 %v3768
    %5729 = vmatpush1.bf16.msra.mxu0 %v3767
    %5730 = vmatprep.subr.bf16.mxu0 %v3772
    %5731 = vmatpush1.bf16.msra.mxu0 %v3771
    %5732 = vmatprep.subr.bf16.mxu0 %v3776
    %5733 = vmatpush1.bf16.msra.mxu0 %v3775
    %5734 = vmatprep.subr.bf16.mxu0 %v3780
    %5735 = vmatpush1.bf16.msra.mxu0 %v3779
    %5736 = vmatprep.subr.bf16.mxu0 %v3784
    %5737 = vmatpush1.bf16.msra.mxu0 %v3783
    %5738 = vmatprep.subr.bf16.mxu0 %v3788
    %5739 = vmatpush1.bf16.msra.mxu0 %v3787
    %5740 = vmatprep.subr.bf16.mxu0 %v3792
    %5741 = vmatpush1.bf16.msra.mxu0 %v3791
    %5742 = vmatprep.subr.bf16.mxu0 %v3796
    %5743 = vmatpush1.bf16.msra.mxu0 %v3795
    %5744 = vmatprep.subr.bf16.mxu0 %v3800
    %5745 = vmatpush1.bf16.msra.mxu0 %v3799
    %5746 = vmatprep.subr.bf16.mxu0 %v3804
    %5747 = vmatpush1.bf16.msra.mxu0 %v3803
    %5748 = vmatprep.subr.bf16.mxu0 %v3808
    %5749 = vmatpush1.bf16.msra.mxu0 %v3807
    %5750 = vmatprep.subr.bf16.mxu0 %v3812
    %5751 = vmatpush1.bf16.msra.mxu0 %v3811
    %5752 = vmatprep.subr.bf16.mxu0 %v3816
    %5753 = vmatpush1.bf16.msra.mxu0 %v3815
    %5754 = vmatprep.subr.bf16.mxu0 %v3820
    %5755 = vmatpush1.bf16.msra.mxu0 %v3819
    %5756 = vmatprep.mubr.bf16.mxu0 %v929
    %5757 = vmatmul.mubr.bf16.gmra.mrb[0].mxu0 %v915
    %v5758 = vpop.f32.mrb[0].mxu0
    %v5759 = vadd.f32 %v5718, %v5758
    %v5760 = vpop.f32.mrb[0].mxu0
    %v5761 = vadd.f32 %v5720, %v5760
    %v5762 = vpop.f32.mrb[0].mxu0
    %v5763 = vpop.f32.mrb[0].mxu0
    %5764 = vdwg.mxu0
    %5765 = vmatprep.subr.bf16.mxu0 %v3824
    %5766 = vmatpush1.bf16.msra.mxu0 %v3823
    %5767 = vmatprep.subr.bf16.mxu0 %v3828
    %5768 = vmatpush1.bf16.msra.mxu0 %v3827
    %5769 = vmatprep.subr.bf16.mxu0 %v3832
    %5770 = vmatpush1.bf16.msra.mxu0 %v3831
    %5771 = vmatprep.subr.bf16.mxu0 %v3836
    %5772 = vmatpush1.bf16.msra.mxu0 %v3835
    %5773 = vmatprep.subr.bf16.mxu0 %v3840
    %5774 = vmatpush1.bf16.msra.mxu0 %v3839
    %5775 = vmatprep.subr.bf16.mxu0 %v3844
    %5776 = vmatpush1.bf16.msra.mxu0 %v3843
    %5777 = vmatprep.subr.bf16.mxu0 %v3848
    %5778 = vmatpush1.bf16.msra.mxu0 %v3847
    %5779 = vmatprep.subr.bf16.mxu0 %v3852
    %5780 = vmatpush1.bf16.msra.mxu0 %v3851
    %5781 = vmatprep.subr.bf16.mxu0 %v3856
    %5782 = vmatpush1.bf16.msra.mxu0 %v3855
    %5783 = vmatprep.subr.bf16.mxu0 %v3860
    %5784 = vmatpush1.bf16.msra.mxu0 %v3859
    %5785 = vmatprep.subr.bf16.mxu0 %v3864
    %5786 = vmatpush1.bf16.msra.mxu0 %v3863
    %5787 = vmatprep.subr.bf16.mxu0 %v3868
    %5788 = vmatpush1.bf16.msra.mxu0 %v3867
    %5789 = vmatprep.subr.bf16.mxu0 %v3872
    %5790 = vmatpush1.bf16.msra.mxu0 %v3871
    %5791 = vmatprep.subr.bf16.mxu0 %v3876
    %5792 = vmatpush1.bf16.msra.mxu0 %v3875
    %5793 = vmatprep.subr.bf16.mxu0 %v3880
    %5794 = vmatpush1.bf16.msra.mxu0 %v3879
    %5795 = vmatprep.subr.bf16.mxu0 %v3884
    %5796 = vmatpush1.bf16.msra.mxu0 %v3883
    %5797 = vmatprep.mubr.bf16.mxu0 %v933
    %5798 = vmatmul.mubr.bf16.gmra.mrb[0].mxu0 %v931
    %v5799 = vpop.f32.mrb[0].mxu0
    %v5800 = vadd.f32 %v5759, %v5799
    %v5801 = vpop.f32.mrb[0].mxu0
    %v5802 = vadd.f32 %v5761, %v5801
    %v5803 = vpop.f32.mrb[0].mxu0
    %v5804 = vpop.f32.mrb[0].mxu0
    %5805 = vdwg.mxu0
    %5806 = vmatprep.subr.bf16.mxu0 %v3888
    %5807 = vmatpush1.bf16.msra.mxu0 %v3887
    %5808 = vmatprep.subr.bf16.mxu0 %v3892
    %5809 = vmatpush1.bf16.msra.mxu0 %v3891
    %5810 = vmatprep.subr.bf16.mxu0 %v3896
    %5811 = vmatpush1.bf16.msra.mxu0 %v3895
    %5812 = vmatprep.subr.bf16.mxu0 %v3900
    %5813 = vmatpush1.bf16.msra.mxu0 %v3899
    %5814 = vmatprep.subr.bf16.mxu0 %v3904
    %5815 = vmatpush1.bf16.msra.mxu0 %v3903
    %5816 = vmatprep.subr.bf16.mxu0 %v3908
    %5817 = vmatpush1.bf16.msra.mxu0 %v3907
    %5818 = vmatprep.subr.bf16.mxu0 %v3912
    %5819 = vmatpush1.bf16.msra.mxu0 %v3911
    %5820 = vmatprep.subr.bf16.mxu0 %v3916
    %5821 = vmatpush1.bf16.msra.mxu0 %v3915
    %5822 = vmatprep.subr.bf16.mxu0 %v3920
    %5823 = vmatpush1.bf16.msra.mxu0 %v3919
    %5824 = vmatprep.subr.bf16.mxu0 %v3924
    %5825 = vmatpush1.bf16.msra.mxu0 %v3923
    %5826 = vmatprep.subr.bf16.mxu0 %v3928
    %5827 = vmatpush1.bf16.msra.mxu0 %v3927
    %5828 = vmatprep.subr.bf16.mxu0 %v3932
    %5829 = vmatpush1.bf16.msra.mxu0 %v3931
    %5830 = vmatprep.subr.bf16.mxu0 %v3936
    %5831 = vmatpush1.bf16.msra.mxu0 %v3935
    %5832 = vmatprep.subr.bf16.mxu0 %v3940
    %5833 = vmatpush1.bf16.msra.mxu0 %v3939
    %5834 = vmatprep.subr.bf16.mxu0 %v3944
    %5835 = vmatpush1.bf16.msra.mxu0 %v3943
    %5836 = vmatprep.subr.bf16.mxu0 %v3948
    %5837 = vmatpush1.bf16.msra.mxu0 %v3947
    %5838 = vmatprep.mubr.bf16.mxu0 %v971
    %5839 = vmatmul.mubr.bf16.gmra.mrb[0].mxu0 %v957
    %v5840 = vpop.f32.mrb[0].mxu0
    %v5841 = vadd.f32 %v5800, %v5840
    %v5842 = vpop.f32.mrb[0].mxu0
    %v5843 = vadd.f32 %v5802, %v5842
    %v5844 = vpop.f32.mrb[0].mxu0
    %v5845 = vpop.f32.mrb[0].mxu0
    %5846 = vdwg.mxu0
    %5847 = vmatprep.subr.bf16.mxu0 %v3952
    %5848 = vmatpush1.bf16.msra.mxu0 %v3951
    %5849 = vmatprep.subr.bf16.mxu0 %v3956
    %5850 = vmatpush1.bf16.msra.mxu0 %v3955
    %5851 = vmatprep.subr.bf16.mxu0 %v3960
    %5852 = vmatpush1.bf16.msra.mxu0 %v3959
    %5853 = vmatprep.subr.bf16.mxu0 %v3964
    %5854 = vmatpush1.bf16.msra.mxu0 %v3963
    %5855 = vmatprep.subr.bf16.mxu0 %v3968
    %5856 = vmatpush1.bf16.msra.mxu0 %v3967
    %5857 = vmatprep.subr.bf16.mxu0 %v3972
    %5858 = vmatpush1.bf16.msra.mxu0 %v3971
    %5859 = vmatprep.subr.bf16.mxu0 %v3976
    %5860 = vmatpush1.bf16.msra.mxu0 %v3975
    %5861 = vmatprep.subr.bf16.mxu0 %v3980
    %5862 = vmatpush1.bf16.msra.mxu0 %v3979
    %5863 = vmatprep.subr.bf16.mxu0 %v3984
    %5864 = vmatpush1.bf16.msra.mxu0 %v3983
    %5865 = vmatprep.subr.bf16.mxu0 %v3988
    %5866 = vmatpush1.bf16.msra.mxu0 %v3987
    %5867 = vmatprep.subr.bf16.mxu0 %v3992
    %5868 = vmatpush1.bf16.msra.mxu0 %v3991
    %5869 = vmatprep.subr.bf16.mxu0 %v3996
    %5870 = vmatpush1.bf16.msra.mxu0 %v3995
    %5871 = vmatprep.subr.bf16.mxu0 %v4000
    %5872 = vmatpush1.bf16.msra.mxu0 %v3999
    %5873 = vmatprep.subr.bf16.mxu0 %v4004
    %5874 = vmatpush1.bf16.msra.mxu0 %v4003
    %5875 = vmatprep.subr.bf16.mxu0 %v4008
    %5876 = vmatpush1.bf16.msra.mxu0 %v4007
    %5877 = vmatprep.subr.bf16.mxu0 %v4012
    %5878 = vmatpush1.bf16.msra.mxu0 %v4011
    %5879 = vmatprep.mubr.bf16.mxu0 %v981
    %5880 = vmatmul.mubr.bf16.gmra.mrb[0].mxu0 %v979
    %v5881 = vpop.f32.mrb[0].mxu0
    %v5882 = vadd.f32 %v5841, %v5881
    %v5883 = vpop.f32.mrb[0].mxu0
    %v5884 = vadd.f32 %v5843, %v5883
    %v5885 = vpop.f32.mrb[0].mxu0
    %v5886 = vpop.f32.mrb[0].mxu0
    %5887 = vdwg.mxu0
    %5888 = vmatprep.subr.bf16.mxu0 %v4016
    %5889 = vmatpush1.bf16.msra.mxu0 %v4015
    %5890 = vmatprep.subr.bf16.mxu0 %v4020
    %5891 = vmatpush1.bf16.msra.mxu0 %v4019
    %5892 = vmatprep.subr.bf16.mxu0 %v4024
    %5893 = vmatpush1.bf16.msra.mxu0 %v4023
    %5894 = vmatprep.subr.bf16.mxu0 %v4028
    %5895 = vmatpush1.bf16.msra.mxu0 %v4027
    %5896 = vmatprep.subr.bf16.mxu0 %v4032
    %5897 = vmatpush1.bf16.msra.mxu0 %v4031
    %5898 = vmatprep.subr.bf16.mxu0 %v4036
    %5899 = vmatpush1.bf16.msra.mxu0 %v4035
    %5900 = vmatprep.subr.bf16.mxu0 %v4040
    %5901 = vmatpush1.bf16.msra.mxu0 %v4039
    %5902 = vmatprep.subr.bf16.mxu0 %v4044
    %5903 = vmatpush1.bf16.msra.mxu0 %v4043
    %5904 = vmatprep.subr.bf16.mxu0 %v4048
    %5905 = vmatpush1.bf16.msra.mxu0 %v4047
    %5906 = vmatprep.subr.bf16.mxu0 %v4052
    %5907 = vmatpush1.bf16.msra.mxu0 %v4051
    %5908 = vmatprep.subr.bf16.mxu0 %v4056
    %5909 = vmatpush1.bf16.msra.mxu0 %v4055
    %5910 = vmatprep.subr.bf16.mxu0 %v4060
    %5911 = vmatpush1.bf16.msra.mxu0 %v4059
    %5912 = vmatprep.subr.bf16.mxu0 %v4064
    %5913 = vmatpush1.bf16.msra.mxu0 %v4063
    %5914 = vmatprep.subr.bf16.mxu0 %v4068
    %5915 = vmatpush1.bf16.msra.mxu0 %v4067
    %5916 = vmatprep.subr.bf16.mxu0 %v4072
    %5917 = vmatpush1.bf16.msra.mxu0 %v4071
    %5918 = vmatprep.subr.bf16.mxu0 %v4076
    %5919 = vmatpush1.bf16.msra.mxu0 %v4075
    %5920 = vmatprep.mubr.bf16.mxu0 %v978
    %5921 = vmatmul.mubr.bf16.gmra.mrb[0].mxu0 %v964
    %v5922 = vpop.f32.mrb[0].mxu0
    %v5923 = vadd.f32 %v5882, %v5922
    %v5924 = vpop.f32.mrb[0].mxu0
    %v5925 = vadd.f32 %v5884, %v5924
    %v5926 = vpop.f32.mrb[0].mxu0
    %v5927 = vpop.f32.mrb[0].mxu0
    %5928 = vdwg.mxu0
    %5929 = vmatprep.subr.bf16.mxu0 %v4080
    %5930 = vmatpush1.bf16.msra.mxu0 %v4079
    %5931 = vmatprep.subr.bf16.mxu0 %v4084
    %5932 = vmatpush1.bf16.msra.mxu0 %v4083
    %5933 = vmatprep.subr.bf16.mxu0 %v4088
    %5934 = vmatpush1.bf16.msra.mxu0 %v4087
    %5935 = vmatprep.subr.bf16.mxu0 %v4092
    %5936 = vmatpush1.bf16.msra.mxu0 %v4091
    %5937 = vmatprep.subr.bf16.mxu0 %v4096
    %5938 = vmatpush1.bf16.msra.mxu0 %v4095
    %5939 = vmatprep.subr.bf16.mxu0 %v4100
    %5940 = vmatpush1.bf16.msra.mxu0 %v4099
    %5941 = vmatprep.subr.bf16.mxu0 %v4104
    %5942 = vmatpush1.bf16.msra.mxu0 %v4103
    %5943 = vmatprep.subr.bf16.mxu0 %v4108
    %5944 = vmatpush1.bf16.msra.mxu0 %v4107
    %5945 = vmatprep.subr.bf16.mxu0 %v4112
    %5946 = vmatpush1.bf16.msra.mxu0 %v4111
    %5947 = vmatprep.subr.bf16.mxu0 %v4116
    %5948 = vmatpush1.bf16.msra.mxu0 %v4115
    %5949 = vmatprep.subr.bf16.mxu0 %v4120
    %5950 = vmatpush1.bf16.msra.mxu0 %v4119
    %5951 = vmatprep.subr.bf16.mxu0 %v4124
    %5952 = vmatpush1.bf16.msra.mxu0 %v4123
    %5953 = vmatprep.subr.bf16.mxu0 %v4128
    %5954 = vmatpush1.bf16.msra.mxu0 %v4127
    %5955 = vmatprep.subr.bf16.mxu0 %v4132
    %5956 = vmatpush1.bf16.msra.mxu0 %v4131
    %5957 = vmatprep.subr.bf16.mxu0 %v4136
    %5958 = vmatpush1.bf16.msra.mxu0 %v4135
    %5959 = vmatprep.subr.bf16.mxu0 %v4140
    %5960 = vmatpush1.bf16.msra.mxu0 %v4139
    %5961 = vmatprep.mubr.bf16.mxu0 %v982
    %5962 = vmatmul.mubr.bf16.gmra.mrb[0].mxu0 %v980
    %v5963 = vpop.f32.mrb[0].mxu0
    %v5964 = vadd.f32 %v5923, %v5963
    %v5965 = vpop.f32.mrb[0].mxu0
    %v5966 = vadd.f32 %v5925, %v5965
    %v5967 = vpop.f32.mrb[0].mxu0
    %v5968 = vpop.f32.mrb[0].mxu0
    %5969 = vdwg.mxu0
    %5970 = vmatprep.subr.bf16.mxu0 %v4144
    %5971 = vmatpush1.bf16.msra.mxu0 %v4143
    %5972 = vmatprep.subr.bf16.mxu0 %v4148
    %5973 = vmatpush1.bf16.msra.mxu0 %v4147
    %5974 = vmatprep.subr.bf16.mxu0 %v4152
    %5975 = vmatpush1.bf16.msra.mxu0 %v4151
    %5976 = vmatprep.subr.bf16.mxu0 %v4156
    %5977 = vmatpush1.bf16.msra.mxu0 %v4155
    %5978 = vmatprep.subr.bf16.mxu0 0
    %5979 = vmatpush1.bf16.msra.mxu0 0
    %5980 = vmatprep.subr.bf16.mxu0 0
    %5981 = vmatpush1.bf16.msra.mxu0 0
    %5982 = vmatprep.subr.bf16.mxu0 0
    %5983 = vmatpush1.bf16.msra.mxu0 0
    %5984 = vmatprep.subr.bf16.mxu0 0
    %5985 = vmatpush1.bf16.msra.mxu0 0
    %5986 = vmatprep.subr.bf16.mxu0 0
    %5987 = vmatpush1.bf16.msra.mxu0 0
    %5988 = vmatprep.subr.bf16.mxu0 0
    %5989 = vmatpush1.bf16.msra.mxu0 0
    %5990 = vmatprep.subr.bf16.mxu0 0
    %5991 = vmatpush1.bf16.msra.mxu0 0
    %5992 = vmatprep.subr.bf16.mxu0 0
    %5993 = vmatpush1.bf16.msra.mxu0 0
    %5994 = vmatprep.subr.bf16.mxu0 0
    %5995 = vmatpush1.bf16.msra.mxu0 0
    %5996 = vmatprep.subr.bf16.mxu0 0
    %5997 = vmatpush1.bf16.msra.mxu0 0
    %5998 = vmatprep.subr.bf16.mxu0 0
    %5999 = vmatpush1.bf16.msra.mxu0 0
    %6000 = vmatprep.subr.bf16.mxu0 0
    %6001 = vmatpush1.bf16.msra.mxu0 0
    %6002 = vmatprep.mubr.bf16.mxu0 0
    %6003 = vmatmul.mubr.bf16.gmra.mrb[0].mxu0 %v4943
    %v6004 = vpop.f32.mrb[0].mxu0
    %v6005 = vadd.f32 %v5964, %v6004
    %v6006 = vpop.f32.mrb[0].mxu0
    %v6007 = vadd.f32 %v5966, %v6006
    %v6008 = vpop.f32.mrb[0].mxu0
    %v6009 = vpop.f32.mrb[0].mxu0
    %6010 = vdwg.mxu0
    %v6011 = vmax.f32 %v5472, 0.0
    %v6012 = vmax.f32 %v5474, 0.0
    %v6013 = vmax.f32 %v6005, 0.0
    %v6014 = vmax.f32 %v6007, 0.0
    %v6015 = vpack.c.bf16 %v6011, %v6011
    %v6016 = vpack.c.bf16 %v6012, %v6012
    %v6017 = vpack.c.bf16 %v6013, %v6013
    %v6018 = vpack.c.bf16 %v6014, %v6014
    %v6019 = vld [vmem:[%s3] sm:$0xf]
    %v6020 = vld [vmem:[%s3 + $0x4] sm:$0xf]
    %v6021 = vld [vmem:[%s3 + $0x8] sm:$0xf]
    %v6022 = vld [vmem:[%s3 + $0xc] sm:$0xf]
    %v6023 = vld [vmem:[%s3 + $0x10] sm:$0xf]
    %v6024 = vld [vmem:[%s3 + $0x14] sm:$0xf]
    %v6025 = vld [vmem:[%s3 + $0x18] sm:$0xf]
    %v6026 = vld [vmem:[%s3 + $0x1c] sm:$0xf]
    %v6027 = vld [vmem:[%s3 + $0x20] sm:$0xf]
    %v6028 = vld [vmem:[%s3 + $0x24] sm:$0xf]
    %v6029 = vld [vmem:[%s3 + $0x28] sm:$0xf]
    %v6030 = vld [vmem:[%s3 + $0x2c] sm:$0xf]
    %v6031 = vld [vmem:[%s3 + $0x30] sm:$0xf]
    %v6032 = vld [vmem:[%s3 + $0x34] sm:$0xf]
    %v6033 = vld [vmem:[%s3 + $0x38] sm:$0xf]
    %v6034 = vld [vmem:[%s3 + $0x3c] sm:$0xf]
    %v6035 = vld [vmem:[%s3 + $0x40] sm:$0xf]
    %v6036 = vld [vmem:[%s3 + $0x44] sm:$0xf]
    %v6037 = vld [vmem:[%s3 + $0x48] sm:$0xf]
    %v6038 = vld [vmem:[%s3 + $0x4c] sm:$0xf]
    %v6039 = vld [vmem:[%s3 + $0x50] sm:$0xf]
    %v6040 = vld [vmem:[%s3 + $0x54] sm:$0xf]
    %v6041 = vld [vmem:[%s3 + $0x58] sm:$0xf]
    %v6042 = vld [vmem:[%s3 + $0x5c] sm:$0xf]
    %v6043 = vld [vmem:[%s3 + $0x60] sm:$0xf]
    %v6044 = vld [vmem:[%s3 + $0x64] sm:$0xf]
    %v6045 = vld [vmem:[%s3 + $0x68] sm:$0xf]
    %v6046 = vld [vmem:[%s3 + $0x6c] sm:$0xf]
    %v6047 = vld [vmem:[%s3 + $0x70] sm:$0xf]
    %v6048 = vld [vmem:[%s3 + $0x74] sm:$0xf]
    %v6049 = vld [vmem:[%s3 + $0x78] sm:$0xf]
    %v6050 = vld [vmem:[%s3 + $0x7c] sm:$0xf]
    %v6051 = vld [vmem:[%s3 + $0x80] sm:$0xf]
    %v6052 = vld [vmem:[%s3 + $0x84] sm:$0xf]
    %v6053 = vld [vmem:[%s3 + $0x88] sm:$0xf]
    %v6054 = vld [vmem:[%s3 + $0x8c] sm:$0xf]
    %v6055 = vld [vmem:[%s3 + $0x90] sm:$0xf]
    %v6056 = vld [vmem:[%s3 + $0x94] sm:$0xf]
    %v6057 = vld [vmem:[%s3 + $0x98] sm:$0xf]
    %v6058 = vld [vmem:[%s3 + $0x9c] sm:$0xf]
    %v6059 = vld [vmem:[%s3 + $0xa0] sm:$0xf]
    %v6060 = vld [vmem:[%s3 + $0xa4] sm:$0xf]
    %v6061 = vld [vmem:[%s3 + $0xa8] sm:$0xf]
    %v6062 = vld [vmem:[%s3 + $0xac] sm:$0xf]
    %v6063 = vld [vmem:[%s3 + $0xb0] sm:$0xf]
    %v6064 = vld [vmem:[%s3 + $0xb4] sm:$0xf]
    %v6065 = vld [vmem:[%s3 + $0xb8] sm:$0xf]
    %v6066 = vld [vmem:[%s3 + $0xbc] sm:$0xf]
    %v6067 = vld [vmem:[%s3 + $0xc0] sm:$0xf]
    %v6068 = vld [vmem:[%s3 + $0xc4] sm:$0xf]
    %v6069 = vld [vmem:[%s3 + $0xc8] sm:$0xf]
    %v6070 = vld [vmem:[%s3 + $0xcc] sm:$0xf]
    %v6071 = vld [vmem:[%s3 + $0xd0] sm:$0xf]
    %v6072 = vld [vmem:[%s3 + $0xd4] sm:$0xf]
    %v6073 = vld [vmem:[%s3 + $0xd8] sm:$0xf]
    %v6074 = vld [vmem:[%s3 + $0xdc] sm:$0xf]
    %v6075 = vld [vmem:[%s3 + $0xe0] sm:$0xf]
    %v6076 = vld [vmem:[%s3 + $0xe4] sm:$0xf]
    %v6077 = vld [vmem:[%s3 + $0xe8] sm:$0xf]
    %v6078 = vld [vmem:[%s3 + $0xec] sm:$0xf]
    %v6079 = vld [vmem:[%s3 + $0xf0] sm:$0xf]
    %v6080 = vld [vmem:[%s3 + $0xf4] sm:$0xf]
    %v6081 = vld [vmem:[%s3 + $0xf8] sm:$0xf]
    %v6082 = vld [vmem:[%s3 + $0xfc] sm:$0xf]
    %v6083 = vld [vmem:[%s4] sm:$0x1]
    %v6085 = vlaneseq
    %v6086 = vshrl.u32 %v6085, 7
    %v6087 = vsub.s32 0, %v6086
    %v6088 = vrot.slane %v6083, %v6087
    %v6154 = vunpack.c.l.b16 %v6019
    %v6155 = vunpack.c.l.b16 %v6020
    %v6156 = vunpack.c.l.b16 %v6021
    %v6157 = vunpack.c.l.b16 %v6022
    %v6158 = vunpack.c.l.b16 %v6023
    %v6159 = vunpack.c.l.b16 %v6024
    %v6160 = vunpack.c.l.b16 %v6025
    %v6161 = vunpack.c.l.b16 %v6026
    %v6162 = vunpack.c.l.b16 %v6027
    %v6163 = vunpack.c.l.b16 %v6028
    %v6164 = vunpack.c.l.b16 %v6029
    %v6165 = vunpack.c.l.b16 %v6030
    %v6166 = vunpack.c.l.b16 %v6031
    %v6167 = vunpack.c.l.b16 %v6032
    %v6168 = vunpack.c.l.b16 %v6033
    %v6169 = vunpack.c.l.b16 %v6034
    %v6170 = vunpack.c.l.b16 %v6035
    %v6171 = vunpack.c.l.b16 %v6036
    %v6172 = vunpack.c.l.b16 %v6037
    %v6173 = vunpack.c.l.b16 %v6038
    %v6174 = vunpack.c.l.b16 %v6039
    %v6175 = vunpack.c.l.b16 %v6040
    %v6176 = vunpack.c.l.b16 %v6041
    %v6177 = vunpack.c.l.b16 %v6042
    %v6178 = vunpack.c.l.b16 %v6043
    %v6179 = vunpack.c.l.b16 %v6044
    %v6180 = vunpack.c.l.b16 %v6045
    %v6181 = vunpack.c.l.b16 %v6046
    %v6182 = vunpack.c.l.b16 %v6047
    %v6183 = vunpack.c.l.b16 %v6048
    %v6184 = vunpack.c.l.b16 %v6049
    %v6185 = vunpack.c.l.b16 %v6050
    %v6186 = vunpack.c.l.b16 %v6051
    %v6187 = vunpack.c.l.b16 %v6052
    %v6188 = vunpack.c.l.b16 %v6053
    %v6189 = vunpack.c.l.b16 %v6054
    %v6190 = vunpack.c.l.b16 %v6055
    %v6191 = vunpack.c.l.b16 %v6056
    %v6192 = vunpack.c.l.b16 %v6057
    %v6193 = vunpack.c.l.b16 %v6058
    %v6194 = vunpack.c.l.b16 %v6059
    %v6195 = vunpack.c.l.b16 %v6060
    %v6196 = vunpack.c.l.b16 %v6061
    %v6197 = vunpack.c.l.b16 %v6062
    %v6198 = vunpack.c.l.b16 %v6063
    %v6199 = vunpack.c.l.b16 %v6064
    %v6200 = vunpack.c.l.b16 %v6065
    %v6201 = vunpack.c.l.b16 %v6066
    %v6202 = vunpack.c.l.b16 %v6067
    %v6203 = vunpack.c.l.b16 %v6068
    %v6204 = vunpack.c.l.b16 %v6069
    %v6205 = vunpack.c.l.b16 %v6070
    %v6206 = vunpack.c.l.b16 %v6071
    %v6207 = vunpack.c.l.b16 %v6072
    %v6208 = vunpack.c.l.b16 %v6073
    %v6209 = vunpack.c.l.b16 %v6074
    %v6210 = vunpack.c.l.b16 %v6075
    %v6211 = vunpack.c.l.b16 %v6076
    %v6212 = vunpack.c.l.b16 %v6077
    %v6213 = vunpack.c.l.b16 %v6078
    %v6214 = vunpack.c.l.b16 %v6079
    %v6215 = vunpack.c.l.b16 %v6080
    %v6216 = vunpack.c.l.b16 %v6081
    %v6217 = vunpack.c.l.b16 %v6082
    %v6218 = vpack.c.b16 %v6155, %v6154
    %v6219 = vpack.c.b16 %v6157, %v6156
    %v6220 = vpack.c.b16 %v6159, %v6158
    %v6221 = vpack.c.b16 %v6161, %v6160
    %v6222 = vpack.c.b16 %v6163, %v6162
    %v6223 = vpack.c.b16 %v6165, %v6164
    %v6224 = vpack.c.b16 %v6167, %v6166
    %v6225 = vpack.c.b16 %v6169, %v6168
    %v6226 = vpack.c.b16 %v6171, %v6170
    %v6227 = vpack.c.b16 %v6173, %v6172
    %v6228 = vpack.c.b16 %v6175, %v6174
    %v6229 = vpack.c.b16 %v6177, %v6176
    %v6230 = vpack.c.b16 %v6179, %v6178
    %v6231 = vpack.c.b16 %v6181, %v6180
    %v6232 = vpack.c.b16 %v6183, %v6182
    %v6233 = vpack.c.b16 %v6185, %v6184
    %v6234 = vpack.c.b16 %v6187, %v6186
    %v6235 = vpack.c.b16 %v6189, %v6188
    %v6236 = vpack.c.b16 %v6191, %v6190
    %v6237 = vpack.c.b16 %v6193, %v6192
    %v6238 = vpack.c.b16 %v6195, %v6194
    %v6239 = vpack.c.b16 %v6197, %v6196
    %v6240 = vpack.c.b16 %v6199, %v6198
    %v6241 = vpack.c.b16 %v6201, %v6200
    %v6242 = vpack.c.b16 %v6203, %v6202
    %v6243 = vpack.c.b16 %v6205, %v6204
    %v6244 = vpack.c.b16 %v6207, %v6206
    %v6245 = vpack.c.b16 %v6209, %v6208
    %v6246 = vpack.c.b16 %v6211, %v6210
    %v6247 = vpack.c.b16 %v6213, %v6212
    %v6248 = vpack.c.b16 %v6215, %v6214
    %v6249 = vpack.c.b16 %v6217, %v6216
    %6282 = vmatprep.subr.bf16.mxu0 0
    %6283 = vmatpush1.bf16.msra.mxu0 %v6218
    %6284 = vmatprep.subr.bf16.mxu0 0
    %6285 = vmatpush1.bf16.msra.mxu0 %v6219
    %6286 = vmatprep.subr.bf16.mxu0 0
    %6287 = vmatpush1.bf16.msra.mxu0 %v6220
    %6288 = vmatprep.subr.bf16.mxu0 0
    %6289 = vmatpush1.bf16.msra.mxu0 %v6221
    %6290 = vmatprep.subr.bf16.mxu0 0
    %6291 = vmatpush1.bf16.msra.mxu0 %v6222
    %6292 = vmatprep.subr.bf16.mxu0 0
    %6293 = vmatpush1.bf16.msra.mxu0 %v6223
    %6294 = vmatprep.subr.bf16.mxu0 0
    %6295 = vmatpush1.bf16.msra.mxu0 %v6224
    %6296 = vmatprep.subr.bf16.mxu0 0
    %6297 = vmatpush1.bf16.msra.mxu0 %v6225
    %6298 = vmatprep.subr.bf16.mxu0 0
    %6299 = vmatpush1.bf16.msra.mxu0 %v6226
    %6300 = vmatprep.subr.bf16.mxu0 0
    %6301 = vmatpush1.bf16.msra.mxu0 %v6227
    %6302 = vmatprep.subr.bf16.mxu0 0
    %6303 = vmatpush1.bf16.msra.mxu0 %v6228
    %6304 = vmatprep.subr.bf16.mxu0 0
    %6305 = vmatpush1.bf16.msra.mxu0 %v6229
    %6306 = vmatprep.subr.bf16.mxu0 0
    %6307 = vmatpush1.bf16.msra.mxu0 %v6230
    %6308 = vmatprep.subr.bf16.mxu0 0
    %6309 = vmatpush1.bf16.msra.mxu0 %v6231
    %6310 = vmatprep.subr.bf16.mxu0 0
    %6311 = vmatpush1.bf16.msra.mxu0 %v6232
    %6312 = vmatprep.subr.bf16.mxu0 0
    %6313 = vmatpush1.bf16.msra.mxu0 %v6233
    %6314 = vmatprep.mubr.bf16.mxu0 %v6016
    %6315 = vmatmul.mubr.bf16.gmra.mrb[0].mxu0 %v6015
    %v6316 = vpop.f32.mrb[0].mxu0
    %v6317 = vadd.f32 %v6088, %v6316
    %v6318 = vpop.f32.mrb[0].mxu0
    %v6319 = vpop.f32.mrb[0].mxu0
    %v6320 = vpop.f32.mrb[0].mxu0
    %6321 = vdwg.mxu0
    %6322 = vmatprep.subr.bf16.mxu0 0
    %6323 = vmatpush1.bf16.msra.mxu0 %v6234
    %6324 = vmatprep.subr.bf16.mxu0 0
    %6325 = vmatpush1.bf16.msra.mxu0 %v6235
    %6326 = vmatprep.subr.bf16.mxu0 0
    %6327 = vmatpush1.bf16.msra.mxu0 %v6236
    %6328 = vmatprep.subr.bf16.mxu0 0
    %6329 = vmatpush1.bf16.msra.mxu0 %v6237
    %6330 = vmatprep.subr.bf16.mxu0 0
    %6331 = vmatpush1.bf16.msra.mxu0 %v6238
    %6332 = vmatprep.subr.bf16.mxu0 0
    %6333 = vmatpush1.bf16.msra.mxu0 %v6239
    %6334 = vmatprep.subr.bf16.mxu0 0
    %6335 = vmatpush1.bf16.msra.mxu0 %v6240
    %6336 = vmatprep.subr.bf16.mxu0 0
    %6337 = vmatpush1.bf16.msra.mxu0 %v6241
    %6338 = vmatprep.subr.bf16.mxu0 0
    %6339 = vmatpush1.bf16.msra.mxu0 %v6242
    %6340 = vmatprep.subr.bf16.mxu0 0
    %6341 = vmatpush1.bf16.msra.mxu0 %v6243
    %6342 = vmatprep.subr.bf16.mxu0 0
    %6343 = vmatpush1.bf16.msra.mxu0 %v6244
    %6344 = vmatprep.subr.bf16.mxu0 0
    %6345 = vmatpush1.bf16.msra.mxu0 %v6245
    %6346 = vmatprep.subr.bf16.mxu0 0
    %6347 = vmatpush1.bf16.msra.mxu0 %v6246
    %6348 = vmatprep.subr.bf16.mxu0 0
    %6349 = vmatpush1.bf16.msra.mxu0 %v6247
    %6350 = vmatprep.subr.bf16.mxu0 0
    %6351 = vmatpush1.bf16.msra.mxu0 %v6248
    %6352 = vmatprep.subr.bf16.mxu0 0
    %6353 = vmatpush1.bf16.msra.mxu0 %v6249
    %6354 = vmatprep.mubr.bf16.mxu0 %v6018
    %6355 = vmatmul.mubr.bf16.gmra.mrb[0].mxu0 %v6017
    %v6356 = vpop.f32.mrb[0].mxu0
    %v6357 = vadd.f32 %v6317, %v6356
    %v6358 = vpop.f32.mrb[0].mxu0
    %v6359 = vpop.f32.mrb[0].mxu0
    %v6360 = vpop.f32.mrb[0].mxu0
    %6361 = vdwg.mxu0
    %6362 = vst [vmem:[#allocation2] sm:$0x3] %v6357
    // Predicated region
    $region22: #{atari_net_forward.3} parent=1 // pred_check
      _
    $region23: #{atari_net_forward.3} parent=1 // pred_check_branch
      %6364 = sbr.rel (0) target = $region25
    $region24: #{atari_net_forward.3} parent=1 // pred_region
      %s6366 = ssub.s32 32, 32
      %6367 = vsyncadd [#allocation3], %s6366
      %s6369 = sshll.u32 [#allocation2], 4
      %s6370 = int_to_ptr.vmem [resolvable:$true] %s6369
      %6372 = dma.vmem_to_hbm [thread:$0]  %s6370, 32, %s5, [#allocation3]
    $region25: #{atari_net_forward.3} parent=1 // pred_fallthru
      _
    // Predicated region
    $region26: #{atari_net_forward.3} parent=1 // pred_check
      _
    $region27: #{atari_net_forward.3} parent=1 // pred_check_branch
      %6374 = sbr.rel (0) target = $region29
    $region28: #{atari_net_forward.3} parent=1 // pred_region
      %6375 = dma.done [#allocation3], 32
    $region29: #{atari_net_forward.3} parent=1 // pred_fallthru
      _
    %6376 = vsyncpa [#allocation3], 1

</llo_original>
